<compile_context>
chip_gen: v5e
topology: v5e:2x2
jax: 0.10.0
libtpu: 0.0.40
codegen_flags: <defaults>
</compile_context>

<pallas_src>
import numpy as np

import jax
import jax.numpy as jnp
from jax.experimental import pallas as pl
from jax.experimental.pallas import tpu as pltpu

# ---------------------------------------------------------------------------
# Geometry (pinned by fc1 = 128*2*3)
# ---------------------------------------------------------------------------
_H, _W = 16, 24          # input spatial size
_PH1, _PW1 = 8, 12       # after layer1 pool
_PH2, _PW2 = 4, 6        # after layer2 pool
_PH3, _PW3 = 2, 3        # after layer3 pool
_C1, _C2, _C3 = 32, 64, 128
_LANE = 128


def _round_up(n, m):
    return (n + m - 1) // m * m


# ---------------------------------------------------------------------------
# Precomputed constant matrices (numpy, built once)
# ---------------------------------------------------------------------------
def _pool_matrix(B, Hi, Wi, in_rows, out_rows):
    """AvgPool2d(2,2) (floor mode) on flat channels-last rows, as a matrix."""
    Ho, Wo = Hi // 2, Wi // 2
    P = np.zeros((out_rows, in_rows), np.float32)
    for b in range(B):
        for i in range(Ho):
            for j in range(Wo):
                r = b * Ho * Wo + i * Wo + j
                for di in range(2):
                    for dj in range(2):
                        P[r, b * Hi * Wi + (2 * i + di) * Wi + (2 * j + dj)] = 0.25
    return P


def _tap_masks(B, H, W):
    """Per-tap row-validity masks for a 'same' 3x3 conv on flat rows: (M, 9)."""
    M = B * H * W
    m = np.zeros((M, 9), np.float32)
    for kh in range(3):
        for kw in range(3):
            t = kh * 3 + kw
            for b in range(B):
                for h in range(H):
                    for w in range(W):
                        hi, wi = h + kh - 1, w + kw - 1
                        if 0 <= hi < H and 0 <= wi < W:
                            m[b * H * W + h * W + w, t] = 1.0
    return m


# ---------------------------------------------------------------------------
# BatchNorm folding (inference mode, running statistics)
# ---------------------------------------------------------------------------
def _bn_scale_shift(bn, eps=1e-5):
    gamma, beta, mean, var = bn
    scale = gamma / jnp.sqrt(var + eps)
    return scale, beta - mean * scale


# ---------------------------------------------------------------------------
# One-time parameter preparation: fold BN, go channels-last, pad to 128 lanes,
# cast matmul operands to bf16, build pooling / mask / selector matrices.
# ---------------------------------------------------------------------------
def prepare_inputs(params, batch, n_classes):
    B = batch
    bf, f32 = jnp.bfloat16, jnp.float32

    M2 = B * _PH1 * _PW1                       # 192
    M3 = B * _PH2 * _PW2                       # 48
    MB = _round_up(B, 8)                       # 8
    NCLSp = _round_up(max(n_classes, _LANE), _LANE)   # 128

    p = {}

    # ----- layer1: Conv2d(1->32, k=2, p=1) + BN2d folded.
    # The 4 pool positions (d,e) live in the 4 lane groups de*32..de*32+31.
    s1, sh1 = _bn_scale_shift(params["bn1"])
    w1s = params["c1_w"][:, 0] * s1[:, None, None]         # (32, 2, 2) BN-scaled
    base = w1s.reshape(_C1, 4).T                           # (4, 32): row kh*2+kw
    W4 = jnp.zeros((_LANE, _LANE), f32)
    for de in range(4):
        W4 = W4.at[de * 4:de * 4 + 4, de * 32:de * 32 + 32].set(base)
    p["w4"] = W4.astype(bf)
    b1v = params["c1_b"] * s1 + sh1
    p["b1"] = jnp.tile(b1v, 4).reshape(1, _LANE).astype(f32)
    # Group-sum matrix: pool = 0.25 * sum of the 4 (post-ReLU) lane groups.
    G = np.zeros((_LANE, _LANE), np.float32)
    for de in range(4):
        for c in range(_C1):
            G[de * 32 + c, c] = 0.25
    p["g"] = jnp.asarray(G, bf)

    # ----- layer2: Conv2d(32->64, k=3, p=1) + BN2d folded, taps stacked on K --
    s2sc, sh2 = _bn_scale_shift(params["bn2"])
    w2s = params["c2_w"] * s2sc[:, None, None, None]       # (64, 32, 3, 3)
    W2 = jnp.zeros((9 * _LANE, _LANE), f32)
    for kh in range(3):
        for kw in range(3):
            t = kh * 3 + kw
            W2 = W2.at[t * _LANE:t * _LANE + _C1, :_C2].set(w2s[:, :, kh, kw].T)
    p["w2"] = W2.astype(bf)                                 # (1152, 128)
    p["b2"] = jnp.zeros((1, _LANE), f32).at[0, :_C2].set(params["c2_b"] * s2sc + sh2)
    p["m2"] = jnp.asarray(_tap_masks(B, _PH1, _PW1), f32)   # (192, 9)
    p["p2"] = jnp.asarray(_pool_matrix(B, _PH1, _PW1, M2, M3), bf)   # (48, 192)

    # ----- layer3: Conv2d(64->128, k=3, p=1) + BN2d folded -----
    s3sc, sh3 = _bn_scale_shift(params["bn3"])
    w3s = params["c3_w"] * s3sc[:, None, None, None]        # (128, 64, 3, 3)
    W3 = jnp.zeros((9 * _LANE, _LANE), f32)
    for kh in range(3):
        for kw in range(3):
            t = kh * 3 + kw
            W3 = W3.at[t * _LANE:t * _LANE + _C2, :].set(w3s[:, :, kh, kw].T)
    p["w3"] = W3.astype(bf)                                 # (1152, 128)
    p["b3"] = (params["c3_b"] * s3sc + sh3).reshape(1, _LANE).astype(f32)
    p["m3"] = jnp.asarray(_tap_masks(B, _PH2, _PW2), f32)   # (48, 9)

    # ----- pool3 straight into the fc1-input layout: (6 positions, 8, 48) ----
    P3 = np.zeros((_PH3 * _PW3, MB, M3), np.float32)
    for i in range(_PH3):
        for j in range(_PW3):
            s = i * _PW3 + j
            for b in range(B):
                for di in range(2):
                    for dj in range(2):
                        P3[s, b, b * _PH2 * _PW2 + (2 * i + di) * _PW2 + (2 * j + dj)] = 0.25
    p["p3sel"] = jnp.asarray(P3, bf)

    # ----- fc1 + BN1d folded, permuted to row order s*128 + c -----
    sf, shf = _bn_scale_shift(params["bn_fc1"])
    wf = params["fc1_w"] * sf[:, None]                      # (1024, 768)
    p["wfc1"] = jnp.transpose(wf.reshape(1024, _C3, 6), (2, 1, 0)).reshape(
        6 * _C3, 1024).astype(bf)                           # (768, 1024)
    p["bfc1"] = (params["fc1_b"] * sf + shf).reshape(1, 1024).astype(f32)

    # ----- fc2 / fc3 (fc3 lane-padded to 128 classes) -----
    p["wfc2"] = params["fc2_w"].T.astype(bf)                # (1024, 256)
    p["bfc2"] = params["fc2_b"].reshape(1, 256).astype(f32)
    p["wfc3"] = jnp.zeros((256, NCLSp), bf).at[:, :n_classes].set(
        params["fc3_w"].T.astype(bf))                       # (256, 128)
    p["bfc3"] = jnp.zeros((1, NCLSp), f32).at[0, :n_classes].set(params["fc3_b"])

    return p


# ---------------------------------------------------------------------------
# The single fused Pallas kernel
# ---------------------------------------------------------------------------
def _fused_kernel(x16_ref, w4_ref, b1_ref, g_ref,
                  m2_ref, w2_ref, b2_ref, p2_ref,
                  m3_ref, w3_ref, b3_ref, p3sel_ref,
                  wfc1_ref, bfc1_ref, wfc2_ref, bfc2_ref,
                  wfc3_ref, bfc3_ref,
                  out2_ref, out1_ref,
                  pad2_ref, pad3_ref):
    f32, bf16 = jnp.float32, jnp.bfloat16

    # ---- layer1: Conv(1->32,k2,p1)+BN+ReLU (4 pool offsets in lane groups),
    #      then AvgPool(2,2) as the 0.25-scaled group-sum matmul G. ----
    z = jnp.dot(x16_ref[...], w4_ref[...], preferred_element_type=f32)    # (192,128)
    z = jnp.maximum(z + b1_ref[...], 0.0)
    pool1 = jnp.dot(z.astype(bf16), g_ref[...], preferred_element_type=f32)  # (192,128)

    def conv3x3(x_f32, pad_ref, border, W, m_ref, w_ref, b_ref):
        """'same' 3x3 conv on a flat channels-last (M,128) activation.

        The activation is written into a zero-bordered VMEM scratch; each of
        the 9 taps is a statically-offset row window, masked by a precomputed
        per-row validity column, then all taps are lane-concatenated and fed
        to a single (M, 9*128) x (9*128, 128) MXU matmul.
        """
        M = x_f32.shape[0]
        pad_ref[...] = jnp.zeros(pad_ref.shape, f32)
        pad_ref[border:border + M, :] = x_f32
        masks = m_ref[...]                                   # (M, 9) f32
        pieces = []
        for kh in range(3):
            for kw in range(3):
                t = kh * 3 + kw
                off = (kh - 1) * W + (kw - 1)
                win = pad_ref[border + off:border + off + M, :]   # (M,128) f32
                pieces.append((win * masks[:, t:t + 1]).astype(bf16))
        xcat = jnp.concatenate(pieces, axis=1)               # (M, 1152) bf16
        pre = jnp.dot(xcat, w_ref[...], preferred_element_type=f32)
        return jnp.maximum(pre + b_ref[...], 0.0)            # (M, 128) f32

    # ---- layer2 + pool2 ----
    r2 = conv3x3(pool1, pad2_ref, 16, _PW1, m2_ref, w2_ref, b2_ref)        # (192,128)
    pool2 = jnp.dot(p2_ref[...], r2.astype(bf16), preferred_element_type=f32)  # (48,128)

    # ---- layer3 + pool3 (emitted directly in the fc1-input layout) ----
    r3 = conv3x3(pool2, pad3_ref, 8, _PW2, m3_ref, w3_ref, b3_ref).astype(bf16)  # (48,128)
    slabs = [jnp.dot(p3sel_ref[s], r3, preferred_element_type=f32).astype(bf16)
             for s in range(_PH3 * _PW3)]
    fcin = jnp.concatenate(slabs, axis=1)                    # (8, 768) bf16

    # ---- fc1 + BN1d + ReLU ----
    h1 = jnp.dot(fcin, wfc1_ref[...], preferred_element_type=f32) + bfc1_ref[...]
    h1 = jnp.maximum(h1, 0.0)                                # (8, 1024) f32
    out1_ref[...] = h1

    # ---- fc2 -> (dropout: identity in inference) -> fc3 ----
    # TODO(synk): Dropout layers act as identity (inference mode); no RNG mask applied.
    h2 = jnp.dot(h1.astype(bf16), wfc2_ref[...], preferred_element_type=f32) + bfc2_ref[...]
    out2_ref[...] = jnp.dot(h2.astype(bf16), wfc3_ref[...],
                            preferred_element_type=f32) + bfc3_ref[...]   # (8,128)


# ---------------------------------------------------------------------------
# Host wrapper: tiny layer-1 im2col (per pool position) + one fused
# pallas_call + un-pad slices.
# ---------------------------------------------------------------------------
def _im2col_l1_pooled(x):
    """x: NCHW (B,1,16,24).  For every pooled position (i,j), the 4 pool
    offsets (d,e) x 4 conv taps (kh,kw) -> 16 columns, row = b*96 + i*12 + j,
    column = (d*2+e)*4 + kh*2 + kw."""
    B = x.shape[0]
    xp = jnp.pad(x[:, 0], ((0, 0), (1, 1), (1, 1)))          # (B, 18, 26)
    cols = []
    for d in range(2):
        for e in range(2):
            for kh in range(2):
                for kw in range(2):
                    a, c = d + kh, e + kw
                    cols.append(xp[:, a:a + 15:2, c:c + 23:2])   # (B, 8, 12)
    X = jnp.stack(cols, axis=-1)                             # (B, 8, 12, 16)
    return X.reshape(B * _PH1 * _PW1, 16)


def forward(prep, x, n_classes=20):
    assert x.shape[1] == 1 and x.shape[2] == _H and x.shape[3] == _W
    B = x.shape[0]
    MB = _round_up(B, 8)
    NCLSp = prep["wfc3"].shape[1]
    M2 = B * _PH1 * _PW1

    X16 = _im2col_l1_pooled(x)
    X16p = jnp.zeros((M2, _LANE), jnp.bfloat16).at[:, :16].set(X16.astype(jnp.bfloat16))

    # Single fused kernel: every operand is a whole-array VMEM block (~3 MB of
    # bf16 weights + small activations), no intermediate HBM round-trips.
    # No grid at B=2; for large batches add an M-tile grid axis marked
    # "parallel" (v7x megacore).
    out2_p, out1_p = pl.pallas_call(
        _fused_kernel,
        out_shape=(jax.ShapeDtypeStruct((MB, NCLSp), jnp.float32),
                   jax.ShapeDtypeStruct((MB, 1024), jnp.float32)),
        scratch_shapes=[pltpu.VMEM((M2 + 32, _LANE), jnp.float32),   # layer2 pad
                        pltpu.VMEM((B * _PH2 * _PW2 + 16, _LANE), jnp.float32)],
        compiler_params=pltpu.CompilerParams(vmem_limit_bytes=32 * 1024 * 1024),
    )(X16p, prep["w4"], prep["b1"], prep["g"],
      prep["m2"], prep["w2"], prep["b2"], prep["p2"],
      prep["m3"], prep["w3"], prep["b3"], prep["p3sel"],
      prep["wfc1"], prep["bfc1"], prep["wfc2"], prep["bfc2"],
      prep["wfc3"], prep["bfc3"])

    return out2_p[:B, :n_classes], out1_p[:B]


# ---------------------------------------------------------------------------
# Pure-JAX f32 reference (mirrors the PyTorch module in eval mode)
# ---------------------------------------------------------------------------
def reference_forward(params, x, eps=1e-5):
    def bn2d(h, bn):
        g, b, m, v = bn
        s = g / jnp.sqrt(v + eps)
        return h * s[None, :, None, None] + (b - m * s)[None, :, None, None]

    def avg_pool(h):
        B, C, H, W = h.shape
        Ho, Wo = H // 2, W // 2
        h = h[:, :, :Ho * 2, :Wo * 2].reshape(B, C, Ho, 2, Wo, 2)
        return h.mean(axis=(3, 5))

    def conv(h, w, b, pad):
        out = jax.lax.conv_general_dilated(
            h, w, window_strides=(1, 1), padding=[(pad, pad), (pad, pad)],
            dimension_numbers=("NCHW", "OIHW", "NCHW"))
        return out + b[None, :, None, None]

    h = avg_pool(jnp.maximum(bn2d(conv(x, params["c1_w"], params["c1_b"], 1), params["bn1"]), 0.0))
    h = avg_pool(jnp.maximum(bn2d(conv(h, params["c2_w"], params["c2_b"], 1), params["bn2"]), 0.0))
    h = avg_pool(jnp.maximum(bn2d(conv(h, params["c3_w"], params["c3_b"], 1), params["bn3"]), 0.0))
    flat = h.reshape(h.shape[0], -1)

    g, b, m, v = params["bn_fc1"]
    s = g / jnp.sqrt(v + eps)
    out = flat @ params["fc1_w"].T + params["fc1_b"]
    out = jnp.maximum(out * s[None, :] + (b - m * s)[None, :], 0.0)
    out2 = out @ params["fc2_w"].T + params["fc2_b"]
    out2 = out2 @ params["fc3_w"].T + params["fc3_b"]
    return out2, out


# ---------------------------------------------------------------------------
# Deterministic parameter initialization (synthetic; shapes from __init__)
# ---------------------------------------------------------------------------
def init_params(key, n_channels=1, n_classes=20):
    ks = jax.random.split(key, 32)
    it = iter(range(32))

    def nrm(shape, s=0.05):
        return (s * jax.random.normal(ks[next(it)], shape)).astype(jnp.float32)

    def bn(n):
        gamma = 1.0 + 0.1 * jax.random.normal(ks[next(it)], (n,))
        beta = 0.1 * jax.random.normal(ks[next(it)], (n,))
        mean = 0.1 * jax.random.normal(ks[next(it)], (n,))
        var = 0.5 + jax.random.uniform(ks[next(it)], (n,))
        return (gamma.astype(jnp.float32), beta.astype(jnp.float32),
                mean.astype(jnp.float32), var.astype(jnp.float32))

    p = {}
    p["c1_w"], p["c1_b"], p["bn1"] = nrm((32, n_channels, 2, 2)), nrm((32,)), bn(32)
    p["c2_w"], p["c2_b"], p["bn2"] = nrm((64, 32, 3, 3)), nrm((64,)), bn(64)
    p["c3_w"], p["c3_b"], p["bn3"] = nrm((128, 64, 3, 3)), nrm((128,)), bn(128)
    p["fc1_w"], p["fc1_b"], p["bn_fc1"] = nrm((1024, 128 * 2 * 3)), nrm((1024,)), bn(1024)
    p["fc2_w"], p["fc2_b"] = nrm((256, 1024)), nrm((256,))
    p["fc3_w"], p["fc3_b"] = nrm((20, 256)), nrm((20,))
    return p


if __name__ == "__main__":
    key = jax.random.PRNGKey(0)
    k_param, k_x = jax.random.split(key)

    params = init_params(k_param, n_channels=1, n_classes=20)
    # Input size is pinned by fc1's 128*2*3 flattened feature expectation.
    x = jax.random.normal(k_x, (2, 1, _H, _W), dtype=jnp.float32)   # NCHW

    prep = prepare_inputs(params, batch=2, n_classes=20)
    out2, out = jax.jit(forward)(prep, x)
    jax.block_until_ready((out2, out))

    assert out2.shape == (2, 20) and out.shape == (2, 1024)

    # Validate the bf16-operand fused kernel against the f32 reference.
    ref_out2, ref_out = reference_forward(params, x)
    np.testing.assert_allclose(np.asarray(out), np.asarray(ref_out), rtol=5e-2, atol=5e-2)
    np.testing.assert_allclose(np.asarray(out2), np.asarray(ref_out2), rtol=5e-2, atol=5e-2)

    print("KERNEL_OK")
</pallas_src>

<mosaic_0001>
module attributes {stable_mosaic.version = 11 : i64} {
  func.func @_fused_kernel(%arg0: memref<192x128xbf16, #tpu.memory_space<vmem>>, %arg1: memref<128x128xbf16, #tpu.memory_space<vmem>>, %arg2: memref<1x128xf32, #tpu.memory_space<vmem>>, %arg3: memref<128x128xbf16, #tpu.memory_space<vmem>>, %arg4: memref<192x9xf32, #tpu.memory_space<vmem>>, %arg5: memref<1152x128xbf16, #tpu.memory_space<vmem>>, %arg6: memref<1x128xf32, #tpu.memory_space<vmem>>, %arg7: memref<48x192xbf16, #tpu.memory_space<vmem>>, %arg8: memref<48x9xf32, #tpu.memory_space<vmem>>, %arg9: memref<1152x128xbf16, #tpu.memory_space<vmem>>, %arg10: memref<1x128xf32, #tpu.memory_space<vmem>>, %arg11: memref<6x8x48xbf16, #tpu.memory_space<vmem>>, %arg12: memref<768x1024xbf16, #tpu.memory_space<vmem>>, %arg13: memref<1x1024xf32, #tpu.memory_space<vmem>>, %arg14: memref<1024x256xbf16, #tpu.memory_space<vmem>>, %arg15: memref<1x256xf32, #tpu.memory_space<vmem>>, %arg16: memref<256x128xbf16, #tpu.memory_space<vmem>>, %arg17: memref<1x128xf32, #tpu.memory_space<vmem>>, %arg18: memref<8x128xf32, #tpu.memory_space<vmem>>, %arg19: memref<8x1024xf32, #tpu.memory_space<vmem>>, %arg20: memref<224x128xf32, #tpu.memory_space<vmem>>, %arg21: memref<64x128xf32, #tpu.memory_space<vmem>>) attributes {dimension_semantics = [], scalar_prefetch = 0 : i64, scratch_operands = 2 : i64, tpu.core_type = #tpu.core_type<tc>} {
    %c0 = arith.constant 0 : index
    %c0_0 = arith.constant 0 : index
    %0 = vector.load %arg0[%c0, %c0_0] : memref<192x128xbf16, #tpu.memory_space<vmem>>, vector<192x128xbf16>
    %c0_1 = arith.constant 0 : index
    %c0_2 = arith.constant 0 : index
    %1 = vector.load %arg1[%c0_1, %c0_2] : memref<128x128xbf16, #tpu.memory_space<vmem>>, vector<128x128xbf16>
    %cst = arith.constant dense<0.000000e+00> : vector<192x128xf32>
    %2 = tpu.matmul %0, %1, %cst {dimension_numbers = #tpu.dot_dimension_numbers<[1], [0], [0], [1], [0, 0, 1, 1], [], []>} : vector<192x128xbf16>, vector<128x128xbf16>, vector<192x128xf32> -> vector<192x128xf32>
    %c0_3 = arith.constant 0 : index
    %c0_4 = arith.constant 0 : index
    %3 = vector.load %arg2[%c0_3, %c0_4] : memref<1x128xf32, #tpu.memory_space<vmem>>, vector<1x128xf32>
    %4 = vector.broadcast %3 : vector<1x128xf32> to vector<192x128xf32>
    %5 = arith.addf %2, %4 : vector<192x128xf32>
    %cst_5 = arith.constant 0.000000e+00 : f32
    %6 = vector.broadcast %cst_5 : f32 to vector<192x128xf32>
    %7 = arith.maximumf %5, %6 : vector<192x128xf32>
    %8 = arith.truncf %7 : vector<192x128xf32> to vector<192x128xbf16>
    %c0_6 = arith.constant 0 : index
    %c0_7 = arith.constant 0 : index
    %9 = vector.load %arg3[%c0_6, %c0_7] : memref<128x128xbf16, #tpu.memory_space<vmem>>, vector<128x128xbf16>
    %cst_8 = arith.constant dense<0.000000e+00> : vector<192x128xf32>
    %10 = tpu.matmul %8, %9, %cst_8 {dimension_numbers = #tpu.dot_dimension_numbers<[1], [0], [0], [1], [0, 0, 1, 1], [], []>} : vector<192x128xbf16>, vector<128x128xbf16>, vector<192x128xf32> -> vector<192x128xf32>
    %cst_9 = arith.constant 0.000000e+00 : f32
    %11 = vector.broadcast %cst_9 : f32 to vector<224x128xf32>
    %c0_10 = arith.constant 0 : index
    %c0_11 = arith.constant 0 : index
    %12 = vector.load %arg20[%c0_10, %c0_11] : memref<224x128xf32, #tpu.memory_space<vmem>>, vector<224x128xf32>
    tpu.vector_store %arg20[%c0_10, %c0_11], %11 {strides = array<i32>} : memref<224x128xf32, #tpu.memory_space<vmem>>, vector<224x128xf32>,
    %c16 = arith.constant 16 : index
    %c0_12 = arith.constant 0 : index
    %13 = vector.load %arg20[%c16, %c0_12] : memref<224x128xf32, #tpu.memory_space<vmem>>, vector<192x128xf32>
    tpu.vector_store %arg20[%c16, %c0_12], %10 {strides = array<i32>} : memref<224x128xf32, #tpu.memory_space<vmem>>, vector<192x128xf32>,
    %c0_13 = arith.constant 0 : index
    %c0_14 = arith.constant 0 : index
    %14 = vector.load %arg4[%c0_13, %c0_14] : memref<192x9xf32, #tpu.memory_space<vmem>>, vector<192x9xf32>
    %c3 = arith.constant 3 : index
    %c0_15 = arith.constant 0 : index
    %15 = vector.load %arg20[%c3, %c0_15] : memref<224x128xf32, #tpu.memory_space<vmem>>, vector<192x128xf32>
    %16 = vector.extract_strided_slice %14 {offsets = [0, 0], sizes = [192, 1], strides = [1, 1]} : vector<192x9xf32> to vector<192x1xf32>
    %17 = vector.broadcast %16 : vector<192x1xf32> to vector<192x128xf32>
    %18 = arith.mulf %15, %17 : vector<192x128xf32>
    %19 = arith.truncf %18 : vector<192x128xf32> to vector<192x128xbf16>
    %c4 = arith.constant 4 : index
    %c0_16 = arith.constant 0 : index
    %20 = vector.load %arg20[%c4, %c0_16] : memref<224x128xf32, #tpu.memory_space<vmem>>, vector<192x128xf32>
    %21 = vector.extract_strided_slice %14 {offsets = [0, 1], sizes = [192, 1], strides = [1, 1]} : vector<192x9xf32> to vector<192x1xf32>
    %22 = vector.broadcast %21 : vector<192x1xf32> to vector<192x128xf32>
    %23 = arith.mulf %20, %22 : vector<192x128xf32>
    %24 = arith.truncf %23 : vector<192x128xf32> to vector<192x128xbf16>
    %c5 = arith.constant 5 : index
    %c0_17 = arith.constant 0 : index
    %25 = vector.load %arg20[%c5, %c0_17] : memref<224x128xf32, #tpu.memory_space<vmem>>, vector<192x128xf32>
    %26 = vector.extract_strided_slice %14 {offsets = [0, 2], sizes = [192, 1], strides = [1, 1]} : vector<192x9xf32> to vector<192x1xf32>
    %27 = vector.broadcast %26 : vector<192x1xf32> to vector<192x128xf32>
    %28 = arith.mulf %25, %27 : vector<192x128xf32>
    %29 = arith.truncf %28 : vector<192x128xf32> to vector<192x128xbf16>
    %c15 = arith.constant 15 : index
    %c0_18 = arith.constant 0 : index
    %30 = vector.load %arg20[%c15, %c0_18] : memref<224x128xf32, #tpu.memory_space<vmem>>, vector<192x128xf32>
    %31 = vector.extract_strided_slice %14 {offsets = [0, 3], sizes = [192, 1], strides = [1, 1]} : vector<192x9xf32> to vector<192x1xf32>
    %32 = vector.broadcast %31 : vector<192x1xf32> to vector<192x128xf32>
    %33 = arith.mulf %30, %32 : vector<192x128xf32>
    %34 = arith.truncf %33 : vector<192x128xf32> to vector<192x128xbf16>
    %c16_19 = arith.constant 16 : index
    %c0_20 = arith.constant 0 : index
    %35 = vector.load %arg20[%c16_19, %c0_20] : memref<224x128xf32, #tpu.memory_space<vmem>>, vector<192x128xf32>
    %36 = vector.extract_strided_slice %14 {offsets = [0, 4], sizes = [192, 1], strides = [1, 1]} : vector<192x9xf32> to vector<192x1xf32>
    %37 = vector.broadcast %36 : vector<192x1xf32> to vector<192x128xf32>
    %38 = arith.mulf %35, %37 : vector<192x128xf32>
    %39 = arith.truncf %38 : vector<192x128xf32> to vector<192x128xbf16>
    %c17 = arith.constant 17 : index
    %c0_21 = arith.constant 0 : index
    %40 = vector.load %arg20[%c17, %c0_21] : memref<224x128xf32, #tpu.memory_space<vmem>>, vector<192x128xf32>
    %41 = vector.extract_strided_slice %14 {offsets = [0, 5], sizes = [192, 1], strides = [1, 1]} : vector<192x9xf32> to vector<192x1xf32>
    %42 = vector.broadcast %41 : vector<192x1xf32> to vector<192x128xf32>
    %43 = arith.mulf %40, %42 : vector<192x128xf32>
    %44 = arith.truncf %43 : vector<192x128xf32> to vector<192x128xbf16>
    %c27 = arith.constant 27 : index
    %c0_22 = arith.constant 0 : index
    %45 = vector.load %arg20[%c27, %c0_22] : memref<224x128xf32, #tpu.memory_space<vmem>>, vector<192x128xf32>
    %46 = vector.extract_strided_slice %14 {offsets = [0, 6], sizes = [192, 1], strides = [1, 1]} : vector<192x9xf32> to vector<192x1xf32>
    %47 = vector.broadcast %46 : vector<192x1xf32> to vector<192x128xf32>
    %48 = arith.mulf %45, %47 : vector<192x128xf32>
    %49 = arith.truncf %48 : vector<192x128xf32> to vector<192x128xbf16>
    %c28 = arith.constant 28 : index
    %c0_23 = arith.constant 0 : index
    %50 = vector.load %arg20[%c28, %c0_23] : memref<224x128xf32, #tpu.memory_space<vmem>>, vector<192x128xf32>
    %51 = vector.extract_strided_slice %14 {offsets = [0, 7], sizes = [192, 1], strides = [1, 1]} : vector<192x9xf32> to vector<192x1xf32>
    %52 = vector.broadcast %51 : vector<192x1xf32> to vector<192x128xf32>
    %53 = arith.mulf %50, %52 : vector<192x128xf32>
    %54 = arith.truncf %53 : vector<192x128xf32> to vector<192x128xbf16>
    %c29 = arith.constant 29 : index
    %c0_24 = arith.constant 0 : index
    %55 = vector.load %arg20[%c29, %c0_24] : memref<224x128xf32, #tpu.memory_space<vmem>>, vector<192x128xf32>
    %56 = vector.extract_strided_slice %14 {offsets = [0, 8], sizes = [192, 1], strides = [1, 1]} : vector<192x9xf32> to vector<192x1xf32>
    %57 = vector.broadcast %56 : vector<192x1xf32> to vector<192x128xf32>
    %58 = arith.mulf %55, %57 : vector<192x128xf32>
    %59 = arith.truncf %58 : vector<192x128xf32> to vector<192x128xbf16>
    %60 = tpu.concatenate %19, %24, %29, %34, %39, %44, %49, %54, %59 in 1 : vector<192x128xbf16>, vector<192x128xbf16>, vector<192x128xbf16>, vector<192x128xbf16>, vector<192x128xbf16>, vector<192x128xbf16>, vector<192x128xbf16>, vector<192x128xbf16>, vector<192x128xbf16> -> vector<192x1152xbf16>
    %c0_25 = arith.constant 0 : index
    %c0_26 = arith.constant 0 : index
    %61 = vector.load %arg5[%c0_25, %c0_26] : memref<1152x128xbf16, #tpu.memory_space<vmem>>, vector<1152x128xbf16>
    %cst_27 = arith.constant dense<0.000000e+00> : vector<192x128xf32>
    %62 = tpu.matmul %60, %61, %cst_27 {dimension_numbers = #tpu.dot_dimension_numbers<[1], [0], [0], [1], [0, 0, 1, 1], [], []>} : vector<192x1152xbf16>, vector<1152x128xbf16>, vector<192x128xf32> -> vector<192x128xf32>
    %c0_28 = arith.constant 0 : index
    %c0_29 = arith.constant 0 : index
    %63 = vector.load %arg6[%c0_28, %c0_29] : memref<1x128xf32, #tpu.memory_space<vmem>>, vector<1x128xf32>
    %64 = vector.broadcast %63 : vector<1x128xf32> to vector<192x128xf32>
    %65 = arith.addf %62, %64 : vector<192x128xf32>
    %cst_30 = arith.constant 0.000000e+00 : f32
    %66 = vector.broadcast %cst_30 : f32 to vector<192x128xf32>
    %67 = arith.maximumf %65, %66 : vector<192x128xf32>
    %c0_31 = arith.constant 0 : index
    %c0_32 = arith.constant 0 : index
    %68 = vector.load %arg7[%c0_31, %c0_32] : memref<48x192xbf16, #tpu.memory_space<vmem>>, vector<48x192xbf16>
    %69 = arith.truncf %67 : vector<192x128xf32> to vector<192x128xbf16>
    %cst_33 = arith.constant dense<0.000000e+00> : vector<48x128xf32>
    %70 = tpu.matmul %68, %69, %cst_33 {dimension_numbers = #tpu.dot_dimension_numbers<[1], [0], [0], [1], [0, 0, 1, 1], [], []>} : vector<48x192xbf16>, vector<192x128xbf16>, vector<48x128xf32> -> vector<48x128xf32>
    %cst_34 = arith.constant 0.000000e+00 : f32
    %71 = vector.broadcast %cst_34 : f32 to vector<64x128xf32>
    %c0_35 = arith.constant 0 : index
    %c0_36 = arith.constant 0 : index
    %72 = vector.load %arg21[%c0_35, %c0_36] : memref<64x128xf32, #tpu.memory_space<vmem>>, vector<64x128xf32>
    tpu.vector_store %arg21[%c0_35, %c0_36], %71 {strides = array<i32>} : memref<64x128xf32, #tpu.memory_space<vmem>>, vector<64x128xf32>,
    %c8 = arith.constant 8 : index
    %c0_37 = arith.constant 0 : index
    %73 = vector.load %arg21[%c8, %c0_37] : memref<64x128xf32, #tpu.memory_space<vmem>>, vector<48x128xf32>
    tpu.vector_store %arg21[%c8, %c0_37], %70 {strides = array<i32>} : memref<64x128xf32, #tpu.memory_space<vmem>>, vector<48x128xf32>,
    %c0_38 = arith.constant 0 : index
    %c0_39 = arith.constant 0 : index
    %74 = vector.load %arg8[%c0_38, %c0_39] : memref<48x9xf32, #tpu.memory_space<vmem>>, vector<48x9xf32>
    %c1 = arith.constant 1 : index
    %c0_40 = arith.constant 0 : index
    %75 = vector.load %arg21[%c1, %c0_40] : memref<64x128xf32, #tpu.memory_space<vmem>>, vector<48x128xf32>
    %76 = vector.extract_strided_slice %74 {offsets = [0, 0], sizes = [48, 1], strides = [1, 1]} : vector<48x9xf32> to vector<48x1xf32>
    %77 = vector.broadcast %76 : vector<48x1xf32> to vector<48x128xf32>
    %78 = arith.mulf %75, %77 : vector<48x128xf32>
    %79 = arith.truncf %78 : vector<48x128xf32> to vector<48x128xbf16>
    %c2 = arith.constant 2 : index
    %c0_41 = arith.constant 0 : index
    %80 = vector.load %arg21[%c2, %c0_41] : memref<64x128xf32, #tpu.memory_space<vmem>>, vector<48x128xf32>
    %81 = vector.extract_strided_slice %74 {offsets = [0, 1], sizes = [48, 1], strides = [1, 1]} : vector<48x9xf32> to vector<48x1xf32>
    %82 = vector.broadcast %81 : vector<48x1xf32> to vector<48x128xf32>
    %83 = arith.mulf %80, %82 : vector<48x128xf32>
    %84 = arith.truncf %83 : vector<48x128xf32> to vector<48x128xbf16>
    %c3_42 = arith.constant 3 : index
    %c0_43 = arith.constant 0 : index
    %85 = vector.load %arg21[%c3_42, %c0_43] : memref<64x128xf32, #tpu.memory_space<vmem>>, vector<48x128xf32>
    %86 = vector.extract_strided_slice %74 {offsets = [0, 2], sizes = [48, 1], strides = [1, 1]} : vector<48x9xf32> to vector<48x1xf32>
    %87 = vector.broadcast %86 : vector<48x1xf32> to vector<48x128xf32>
    %88 = arith.mulf %85, %87 : vector<48x128xf32>
    %89 = arith.truncf %88 : vector<48x128xf32> to vector<48x128xbf16>
    %c7 = arith.constant 7 : index
    %c0_44 = arith.constant 0 : index
    %90 = vector.load %arg21[%c7, %c0_44] : memref<64x128xf32, #tpu.memory_space<vmem>>, vector<48x128xf32>
    %91 = vector.extract_strided_slice %74 {offsets = [0, 3], sizes = [48, 1], strides = [1, 1]} : vector<48x9xf32> to vector<48x1xf32>
    %92 = vector.broadcast %91 : vector<48x1xf32> to vector<48x128xf32>
    %93 = arith.mulf %90, %92 : vector<48x128xf32>
    %94 = arith.truncf %93 : vector<48x128xf32> to vector<48x128xbf16>
    %c8_45 = arith.constant 8 : index
    %c0_46 = arith.constant 0 : index
    %95 = vector.load %arg21[%c8_45, %c0_46] : memref<64x128xf32, #tpu.memory_space<vmem>>, vector<48x128xf32>
    %96 = vector.extract_strided_slice %74 {offsets = [0, 4], sizes = [48, 1], strides = [1, 1]} : vector<48x9xf32> to vector<48x1xf32>
    %97 = vector.broadcast %96 : vector<48x1xf32> to vector<48x128xf32>
    %98 = arith.mulf %95, %97 : vector<48x128xf32>
    %99 = arith.truncf %98 : vector<48x128xf32> to vector<48x128xbf16>
    %c9 = arith.constant 9 : index
    %c0_47 = arith.constant 0 : index
    %100 = vector.load %arg21[%c9, %c0_47] : memref<64x128xf32, #tpu.memory_space<vmem>>, vector<48x128xf32>
    %101 = vector.extract_strided_slice %74 {offsets = [0, 5], sizes = [48, 1], strides = [1, 1]} : vector<48x9xf32> to vector<48x1xf32>
    %102 = vector.broadcast %101 : vector<48x1xf32> to vector<48x128xf32>
    %103 = arith.mulf %100, %102 : vector<48x128xf32>
    %104 = arith.truncf %103 : vector<48x128xf32> to vector<48x128xbf16>
    %c13 = arith.constant 13 : index
    %c0_48 = arith.constant 0 : index
    %105 = vector.load %arg21[%c13, %c0_48] : memref<64x128xf32, #tpu.memory_space<vmem>>, vector<48x128xf32>
    %106 = vector.extract_strided_slice %74 {offsets = [0, 6], sizes = [48, 1], strides = [1, 1]} : vector<48x9xf32> to vector<48x1xf32>
    %107 = vector.broadcast %106 : vector<48x1xf32> to vector<48x128xf32>
    %108 = arith.mulf %105, %107 : vector<48x128xf32>
    %109 = arith.truncf %108 : vector<48x128xf32> to vector<48x128xbf16>
    %c14 = arith.constant 14 : index
    %c0_49 = arith.constant 0 : index
    %110 = vector.load %arg21[%c14, %c0_49] : memref<64x128xf32, #tpu.memory_space<vmem>>, vector<48x128xf32>
    %111 = vector.extract_strided_slice %74 {offsets = [0, 7], sizes = [48, 1], strides = [1, 1]} : vector<48x9xf32> to vector<48x1xf32>
    %112 = vector.broadcast %111 : vector<48x1xf32> to vector<48x128xf32>
    %113 = arith.mulf %110, %112 : vector<48x128xf32>
    %114 = arith.truncf %113 : vector<48x128xf32> to vector<48x128xbf16>
    %c15_50 = arith.constant 15 : index
    %c0_51 = arith.constant 0 : index
    %115 = vector.load %arg21[%c15_50, %c0_51] : memref<64x128xf32, #tpu.memory_space<vmem>>, vector<48x128xf32>
    %116 = vector.extract_strided_slice %74 {offsets = [0, 8], sizes = [48, 1], strides = [1, 1]} : vector<48x9xf32> to vector<48x1xf32>
    %117 = vector.broadcast %116 : vector<48x1xf32> to vector<48x128xf32>
    %118 = arith.mulf %115, %117 : vector<48x128xf32>
    %119 = arith.truncf %118 : vector<48x128xf32> to vector<48x128xbf16>
    %120 = tpu.concatenate %79, %84, %89, %94, %99, %104, %109, %114, %119 in 1 : vector<48x128xbf16>, vector<48x128xbf16>, vector<48x128xbf16>, vector<48x128xbf16>, vector<48x128xbf16>, vector<48x128xbf16>, vector<48x128xbf16>, vector<48x128xbf16>, vector<48x128xbf16> -> vector<48x1152xbf16>
    %c0_52 = arith.constant 0 : index
    %c0_53 = arith.constant 0 : index
    %121 = vector.load %arg9[%c0_52, %c0_53] : memref<1152x128xbf16, #tpu.memory_space<vmem>>, vector<1152x128xbf16>
    %cst_54 = arith.constant dense<0.000000e+00> : vector<48x128xf32>
    %122 = tpu.matmul %120, %121, %cst_54 {dimension_numbers = #tpu.dot_dimension_numbers<[1], [0], [0], [1], [0, 0, 1, 1], [], []>} : vector<48x1152xbf16>, vector<1152x128xbf16>, vector<48x128xf32> -> vector<48x128xf32>
    %c0_55 = arith.constant 0 : index
    %c0_56 = arith.constant 0 : index
    %123 = vector.load %arg10[%c0_55, %c0_56] : memref<1x128xf32, #tpu.memory_space<vmem>>, vector<1x128xf32>
    %124 = vector.broadcast %123 : vector<1x128xf32> to vector<48x128xf32>
    %125 = arith.addf %122, %124 : vector<48x128xf32>
    %cst_57 = arith.constant 0.000000e+00 : f32
    %126 = vector.broadcast %cst_57 : f32 to vector<48x128xf32>
    %127 = arith.maximumf %125, %126 : vector<48x128xf32>
    %128 = arith.truncf %127 : vector<48x128xf32> to vector<48x128xbf16>
    %c0_58 = arith.constant 0 : index
    %c0_59 = arith.constant 0 : index
    %c0_60 = arith.constant 0 : index
    %129 = vector.load %arg11[%c0_58, %c0_59, %c0_60] : memref<6x8x48xbf16, #tpu.memory_space<vmem>>, vector<1x8x48xbf16>
    %130 = vector.shape_cast %129 : vector<1x8x48xbf16> to vector<8x48xbf16>
    %cst_61 = arith.constant dense<0.000000e+00> : vector<8x128xf32>
    %131 = tpu.matmul %130, %128, %cst_61 {dimension_numbers = #tpu.dot_dimension_numbers<[1], [0], [0], [1], [0, 0, 1, 1], [], []>} : vector<8x48xbf16>, vector<48x128xbf16>, vector<8x128xf32> -> vector<8x128xf32>
    %132 = arith.truncf %131 : vector<8x128xf32> to vector<8x128xbf16>
    %c1_62 = arith.constant 1 : index
    %c0_63 = arith.constant 0 : index
    %c0_64 = arith.constant 0 : index
    %133 = vector.load %arg11[%c1_62, %c0_63, %c0_64] : memref<6x8x48xbf16, #tpu.memory_space<vmem>>, vector<1x8x48xbf16>
    %134 = vector.shape_cast %133 : vector<1x8x48xbf16> to vector<8x48xbf16>
    %cst_65 = arith.constant dense<0.000000e+00> : vector<8x128xf32>
    %135 = tpu.matmul %134, %128, %cst_65 {dimension_numbers = #tpu.dot_dimension_numbers<[1], [0], [0], [1], [0, 0, 1, 1], [], []>} : vector<8x48xbf16>, vector<48x128xbf16>, vector<8x128xf32> -> vector<8x128xf32>
    %136 = arith.truncf %135 : vector<8x128xf32> to vector<8x128xbf16>
    %c2_66 = arith.constant 2 : index
    %c0_67 = arith.constant 0 : index
    %c0_68 = arith.constant 0 : index
    %137 = vector.load %arg11[%c2_66, %c0_67, %c0_68] : memref<6x8x48xbf16, #tpu.memory_space<vmem>>, vector<1x8x48xbf16>
    %138 = vector.shape_cast %137 : vector<1x8x48xbf16> to vector<8x48xbf16>
    %cst_69 = arith.constant dense<0.000000e+00> : vector<8x128xf32>
    %139 = tpu.matmul %138, %128, %cst_69 {dimension_numbers = #tpu.dot_dimension_numbers<[1], [0], [0], [1], [0, 0, 1, 1], [], []>} : vector<8x48xbf16>, vector<48x128xbf16>, vector<8x128xf32> -> vector<8x128xf32>
    %140 = arith.truncf %139 : vector<8x128xf32> to vector<8x128xbf16>
    %c3_70 = arith.constant 3 : index
    %c0_71 = arith.constant 0 : index
    %c0_72 = arith.constant 0 : index
    %141 = vector.load %arg11[%c3_70, %c0_71, %c0_72] : memref<6x8x48xbf16, #tpu.memory_space<vmem>>, vector<1x8x48xbf16>
    %142 = vector.shape_cast %141 : vector<1x8x48xbf16> to vector<8x48xbf16>
    %cst_73 = arith.constant dense<0.000000e+00> : vector<8x128xf32>
    %143 = tpu.matmul %142, %128, %cst_73 {dimension_numbers = #tpu.dot_dimension_numbers<[1], [0], [0], [1], [0, 0, 1, 1], [], []>} : vector<8x48xbf16>, vector<48x128xbf16>, vector<8x128xf32> -> vector<8x128xf32>
    %144 = arith.truncf %143 : vector<8x128xf32> to vector<8x128xbf16>
    %c4_74 = arith.constant 4 : index
    %c0_75 = arith.constant 0 : index
    %c0_76 = arith.constant 0 : index
    %145 = vector.load %arg11[%c4_74, %c0_75, %c0_76] : memref<6x8x48xbf16, #tpu.memory_space<vmem>>, vector<1x8x48xbf16>
    %146 = vector.shape_cast %145 : vector<1x8x48xbf16> to vector<8x48xbf16>
    %cst_77 = arith.constant dense<0.000000e+00> : vector<8x128xf32>
    %147 = tpu.matmul %146, %128, %cst_77 {dimension_numbers = #tpu.dot_dimension_numbers<[1], [0], [0], [1], [0, 0, 1, 1], [], []>} : vector<8x48xbf16>, vector<48x128xbf16>, vector<8x128xf32> -> vector<8x128xf32>
    %148 = arith.truncf %147 : vector<8x128xf32> to vector<8x128xbf16>
    %c5_78 = arith.constant 5 : index
    %c0_79 = arith.constant 0 : index
    %c0_80 = arith.constant 0 : index
    %149 = vector.load %arg11[%c5_78, %c0_79, %c0_80] : memref<6x8x48xbf16, #tpu.memory_space<vmem>>, vector<1x8x48xbf16>
    %150 = vector.shape_cast %149 : vector<1x8x48xbf16> to vector<8x48xbf16>
    %cst_81 = arith.constant dense<0.000000e+00> : vector<8x128xf32>
    %151 = tpu.matmul %150, %128, %cst_81 {dimension_numbers = #tpu.dot_dimension_numbers<[1], [0], [0], [1], [0, 0, 1, 1], [], []>} : vector<8x48xbf16>, vector<48x128xbf16>, vector<8x128xf32> -> vector<8x128xf32>
    %152 = arith.truncf %151 : vector<8x128xf32> to vector<8x128xbf16>
    %153 = tpu.concatenate %132, %136, %140, %144, %148, %152 in 1 : vector<8x128xbf16>, vector<8x128xbf16>, vector<8x128xbf16>, vector<8x128xbf16>, vector<8x128xbf16>, vector<8x128xbf16> -> vector<8x768xbf16>
    %c0_82 = arith.constant 0 : index
    %c0_83 = arith.constant 0 : index
    %154 = vector.load %arg12[%c0_82, %c0_83] : memref<768x1024xbf16, #tpu.memory_space<vmem>>, vector<768x1024xbf16>
    %cst_84 = arith.constant dense<0.000000e+00> : vector<8x1024xf32>
    %155 = tpu.matmul %153, %154, %cst_84 {dimension_numbers = #tpu.dot_dimension_numbers<[1], [0], [0], [1], [0, 0, 1, 1], [], []>} : vector<8x768xbf16>, vector<768x1024xbf16>, vector<8x1024xf32> -> vector<8x1024xf32>
    %c0_85 = arith.constant 0 : index
    %c0_86 = arith.constant 0 : index
    %156 = vector.load %arg13[%c0_85, %c0_86] : memref<1x1024xf32, #tpu.memory_space<vmem>>, vector<1x1024xf32>
    %157 = vector.broadcast %156 : vector<1x1024xf32> to vector<8x1024xf32>
    %158 = arith.addf %155, %157 : vector<8x1024xf32>
    %cst_87 = arith.constant 0.000000e+00 : f32
    %159 = vector.broadcast %cst_87 : f32 to vector<8x1024xf32>
    %160 = arith.maximumf %158, %159 : vector<8x1024xf32>
    %c0_88 = arith.constant 0 : index
    %c0_89 = arith.constant 0 : index
    %161 = vector.load %arg19[%c0_88, %c0_89] : memref<8x1024xf32, #tpu.memory_space<vmem>>, vector<8x1024xf32>
    tpu.vector_store %arg19[%c0_88, %c0_89], %160 {strides = array<i32>} : memref<8x1024xf32, #tpu.memory_space<vmem>>, vector<8x1024xf32>,
    %162 = arith.truncf %160 : vector<8x1024xf32> to vector<8x1024xbf16>
    %c0_90 = arith.constant 0 : index
    %c0_91 = arith.constant 0 : index
    %163 = vector.load %arg14[%c0_90, %c0_91] : memref<1024x256xbf16, #tpu.memory_space<vmem>>, vector<1024x256xbf16>
    %cst_92 = arith.constant dense<0.000000e+00> : vector<8x256xf32>
    %164 = tpu.matmul %162, %163, %cst_92 {dimension_numbers = #tpu.dot_dimension_numbers<[1], [0], [0], [1], [0, 0, 1, 1], [], []>} : vector<8x1024xbf16>, vector<1024x256xbf16>, vector<8x256xf32> -> vector<8x256xf32>
    %c0_93 = arith.constant 0 : index
    %c0_94 = arith.constant 0 : index
    %165 = vector.load %arg15[%c0_93, %c0_94] : memref<1x256xf32, #tpu.memory_space<vmem>>, vector<1x256xf32>
    %166 = vector.broadcast %165 : vector<1x256xf32> to vector<8x256xf32>
    %167 = arith.addf %164, %166 : vector<8x256xf32>
    %168 = arith.truncf %167 : vector<8x256xf32> to vector<8x256xbf16>
    %c0_95 = arith.constant 0 : index
    %c0_96 = arith.constant 0 : index
    %169 = vector.load %arg16[%c0_95, %c0_96] : memref<256x128xbf16, #tpu.memory_space<vmem>>, vector<256x128xbf16>
    %cst_97 = arith.constant dense<0.000000e+00> : vector<8x128xf32>
    %170 = tpu.matmul %168, %169, %cst_97 {dimension_numbers = #tpu.dot_dimension_numbers<[1], [0], [0], [1], [0, 0, 1, 1], [], []>} : vector<8x256xbf16>, vector<256x128xbf16>, vector<8x128xf32> -> vector<8x128xf32>
    %c0_98 = arith.constant 0 : index
    %c0_99 = arith.constant 0 : index
    %171 = vector.load %arg17[%c0_98, %c0_99] : memref<1x128xf32, #tpu.memory_space<vmem>>, vector<1x128xf32>
    %172 = vector.broadcast %171 : vector<1x128xf32> to vector<8x128xf32>
    %173 = arith.addf %170, %172 : vector<8x128xf32>
    %c0_100 = arith.constant 0 : index
    %c0_101 = arith.constant 0 : index
    %174 = vector.load %arg18[%c0_100, %c0_101] : memref<8x128xf32, #tpu.memory_space<vmem>>, vector<8x128xf32>
    tpu.vector_store %arg18[%c0_100, %c0_101], %173 {strides = array<i32>} : memref<8x128xf32, #tpu.memory_space<vmem>>, vector<8x128xf32>,
    return
  }
}

</mosaic_0001>

<llo_original>
// kernel: forward.1
$region0: #{forward.1}
  #allocation0 [shape = 'u32[]', space=smem, size = 0x4, offset = 0x4, fixed_abs, tag = 'smem constant byte address 0x4 - core index']
  #allocation1 [shape = 'u32[72,128]{1,0:T(1,128)}', space=vmem, size = 0x9000, scoped, tag = 'internal scratch']
  #allocation2 [shape = 'f32[224,128]{1,0:T(8,128)}', space=vmem, size = 0x1c000, scoped, tag = 'scratch operand']
  #allocation3 [shape = 'f32[64,128]{1,0:T(8,128)}', space=vmem, size = 0x8000, scoped, tag = 'scratch operand']
  %s0 = inlined_call_operand.vmem [shape: bf16[192,128], index: 0, kind: input, shape index: {}]
  %s1 = inlined_call_operand.hbm [shape: bf16[128,128], index: 1, kind: input, shape index: {}]
  %s2 = inlined_call_operand.hbm [shape: f32[1,128], index: 2, kind: input, shape index: {}]
  %s3 = inlined_call_operand.hbm [shape: bf16[128,128], index: 3, kind: input, shape index: {}]
  %s4 = inlined_call_operand.vmem [shape: f32[192,9], index: 4, kind: input, shape index: {}]
  %s5 = inlined_call_operand.hbm [shape: bf16[1152,128], index: 5, kind: input, shape index: {}]
  %s6 = inlined_call_operand.hbm [shape: f32[1,128], index: 6, kind: input, shape index: {}]
  %s7 = inlined_call_operand.hbm [shape: bf16[48,192], index: 7, kind: input, shape index: {}]
  %s8 = inlined_call_operand.vmem [shape: f32[48,9], index: 8, kind: input, shape index: {}]
  %s9 = inlined_call_operand.hbm [shape: bf16[1152,128], index: 9, kind: input, shape index: {}]
  %s10 = inlined_call_operand.hbm [shape: f32[1,128], index: 10, kind: input, shape index: {}]
  %s11 = inlined_call_operand.hbm [shape: bf16[6,8,48], index: 11, kind: input, shape index: {}]
  %s12 = inlined_call_operand.hbm [shape: bf16[768,1024], index: 12, kind: input, shape index: {}]
  %s13 = inlined_call_operand.hbm [shape: f32[1,1024], index: 13, kind: input, shape index: {}]
  %s14 = inlined_call_operand.hbm [shape: bf16[1024,256], index: 14, kind: input, shape index: {}]
  %s15 = inlined_call_operand.hbm [shape: f32[1,256], index: 15, kind: input, shape index: {}]
  %s16 = inlined_call_operand.hbm [shape: bf16[256,128], index: 16, kind: input, shape index: {}]
  %s17 = inlined_call_operand.hbm [shape: f32[1,128], index: 17, kind: input, shape index: {}]
  %s18 = inlined_call_operand.vmem [shape: f32[8,128], index: 18, kind: output, shape index: {0}]
  %s19 = inlined_call_operand.vmem [shape: f32[8,1024], index: 19, kind: output, shape index: {1}]
  %20 = xla_tuple %s18, %s19
  %s21 = sld [smem:[#allocation0]]
  $region150: #{forward.1} parent=0
    _
  %s23 = ssub.s32 1, %s21
  %s24 = scalar_select 0, %s23, %s21
  $region1: #{forward.1} parent=0
    #allocation4 [shape = 'u8[32768]{0}', space=vmem, size = 0x8000, scoped, tag = 'input window, operand 1, single buffered']
    #allocation5 [shape = 's32[1]{0}', space=sflag, size = 0x4, scoped, tag = 'scoped memory for forward.1']
    #allocation6 [shape = 'u8[512]{0}', space=vmem, size = 0x400, scoped, tag = 'input window, operand 2, single buffered']
    #allocation7 [shape = 's32[1]{0}', space=sflag, size = 0x4, scoped, tag = 'scoped memory for forward.1']
    #allocation8 [shape = 'u8[32768]{0}', space=vmem, size = 0x8000, scoped, tag = 'input window, operand 3, single buffered']
    #allocation9 [shape = 'u8[294912]{0}', space=vmem, size = 0x48000, scoped, tag = 'input window, operand 5, single buffered']
    #allocation10 [shape = 's32[1]{0}', space=sflag, size = 0x4, scoped, tag = 'scoped memory for forward.1']
    #allocation11 [shape = 'u8[512]{0}', space=vmem, size = 0x400, scoped, tag = 'input window, operand 6, single buffered']
    #allocation12 [shape = 'u8[24576]{0}', space=vmem, size = 0x6000, scoped, tag = 'input window, operand 7, single buffered']
    #allocation13 [shape = 's32[1]{0}', space=sflag, size = 0x4, scoped, tag = 'scoped memory for forward.1']
    #allocation14 [shape = 'u8[294912]{0}', space=vmem, size = 0x48000, scoped, tag = 'input window, operand 9, single buffered']
    #allocation15 [shape = 'u8[512]{0}', space=vmem, size = 0x400, scoped, tag = 'input window, operand 10, single buffered']
    #allocation16 [shape = 's32[1]{0}', space=sflag, size = 0x4, scoped, tag = 'scoped memory for forward.1']
    #allocation17 [shape = 'u8[12288]{0}', space=vmem, size = 0x3000, scoped, tag = 'input window, operand 11, single buffered']
    #allocation18 [shape = 'u8[1572864]{0}', space=vmem, size = 0x180000, scoped, tag = 'input window, operand 12, single buffered']
    #allocation19 [shape = 's32[1]{0}', space=sflag, size = 0x4, scoped, tag = 'scoped memory for forward.1']
    #allocation20 [shape = 'u8[4096]{0}', space=vmem, size = 0x1000, scoped, tag = 'input window, operand 13, single buffered']
    #allocation21 [shape = 'u8[524288]{0}', space=vmem, size = 0x80000, scoped, tag = 'input window, operand 14, single buffered']
    #allocation22 [shape = 's32[1]{0}', space=sflag, size = 0x4, scoped, tag = 'scoped memory for forward.1']
    #allocation23 [shape = 'u8[1024]{0}', space=vmem, size = 0x400, scoped, tag = 'input window, operand 15, single buffered']
    #allocation24 [shape = 'u8[65536]{0}', space=vmem, size = 0x10000, scoped, tag = 'input window, operand 16, single buffered']
    #allocation25 [shape = 's32[1]{0}', space=sflag, size = 0x4, scoped, tag = 'scoped memory for forward.1']
    #allocation26 [shape = 'u8[512]{0}', space=vmem, size = 0x400, scoped, tag = 'input window, operand 17, single buffered']
    %25 = vsyncpa [#allocation5], 0
    %26 = vsyncpa [#allocation7], 0
    %27 = vsyncpa [#allocation10], 0
    %28 = vsyncpa [#allocation13], 0
    %29 = vsyncpa [#allocation16], 0
    %30 = vsyncpa [#allocation19], 0
    %31 = vsyncpa [#allocation22], 0
    %32 = vsyncpa [#allocation25], 0
    // Predicated region
    $region2: #{forward.1} parent=1 // pred_check
      _
    $region3: #{forward.1} parent=1 // pred_check_branch
      %34 = sbr.rel (0) target = $region5
    $region4: #{forward.1} parent=1 // pred_region
      _
    $region5: #{forward.1} parent=1 // pred_fallthru
      _
    // Predicated region
    $region6: #{forward.1} parent=1 // pred_check
      _
    $region7: #{forward.1} parent=1 // pred_check_branch
      %36 = sbr.rel (0) target = $region9
    $region8: #{forward.1} parent=1 // pred_region
      %38 = vsyncadd [#allocation5], 0
      %s39 = sshll.u32 %s1, 4
      %s40 = int_to_ptr.hbm [resolvable:$true] %s39
      %s41 = sshll.u32 [#allocation4], 4
      %s42 = int_to_ptr.vmem [resolvable:$true] %s41
      %47 = dma.hbm_to_vmem [thread:$0]  %s40, 1024, %s42, [#allocation5], 64, 64, 4
    $region9: #{forward.1} parent=1 // pred_fallthru
      _
    // Predicated region
    $region10: #{forward.1} parent=1 // pred_check
      _
    $region11: #{forward.1} parent=1 // pred_check_branch
      %49 = sbr.rel (0) target = $region13
    $region12: #{forward.1} parent=1 // pred_region
      %51 = vsyncadd [#allocation7], 0
      %s53 = sshll.u32 %s2, 4
      %s54 = int_to_ptr.hbm [resolvable:$true] %s53
      %s55 = sshll.u32 [#allocation6], 4
      %s56 = int_to_ptr.vmem [resolvable:$true] %s55
      %58 = dma.hbm_to_vmem [thread:$0]  %s54, 16, %s56, [#allocation7]
    $region13: #{forward.1} parent=1 // pred_fallthru
      _
    // Predicated region
    $region14: #{forward.1} parent=1 // pred_check
      _
    $region15: #{forward.1} parent=1 // pred_check_branch
      %60 = sbr.rel (0) target = $region17
    $region16: #{forward.1} parent=1 // pred_region
      %62 = vsyncadd [#allocation7], 0
      %s63 = sshll.u32 %s3, 4
      %s64 = int_to_ptr.hbm [resolvable:$true] %s63
      %s65 = sshll.u32 [#allocation8], 4
      %s66 = int_to_ptr.vmem [resolvable:$true] %s65
      %71 = dma.hbm_to_vmem [thread:$0]  %s64, 1024, %s66, [#allocation7], 64, 64, 4
    $region17: #{forward.1} parent=1 // pred_fallthru
      _
    // Predicated region
    $region18: #{forward.1} parent=1 // pred_check
      _
    $region19: #{forward.1} parent=1 // pred_check_branch
      %73 = sbr.rel (0) target = $region21
    $region20: #{forward.1} parent=1 // pred_region
      _
    $region21: #{forward.1} parent=1 // pred_fallthru
      _
    // Predicated region
    $region22: #{forward.1} parent=1 // pred_check
      _
    $region23: #{forward.1} parent=1 // pred_check_branch
      %75 = sbr.rel (0) target = $region25
    $region24: #{forward.1} parent=1 // pred_region
      %77 = vsyncadd [#allocation10], 0
      %s78 = sshll.u32 %s5, 4
      %s79 = int_to_ptr.hbm [resolvable:$true] %s78
      %s80 = sshll.u32 [#allocation9], 4
      %s81 = int_to_ptr.vmem [resolvable:$true] %s80
      %86 = dma.hbm_to_vmem [thread:$0]  %s79, 9216, %s81, [#allocation10], 64, 64, 4
    $region25: #{forward.1} parent=1 // pred_fallthru
      _
    // Predicated region
    $region26: #{forward.1} parent=1 // pred_check
      _
    $region27: #{forward.1} parent=1 // pred_check_branch
      %88 = sbr.rel (0) target = $region29
    $region28: #{forward.1} parent=1 // pred_region
      %90 = vsyncadd [#allocation10], 0
      %s92 = sshll.u32 %s6, 4
      %s93 = int_to_ptr.hbm [resolvable:$true] %s92
      %s94 = sshll.u32 [#allocation11], 4
      %s95 = int_to_ptr.vmem [resolvable:$true] %s94
      %97 = dma.hbm_to_vmem [thread:$0]  %s93, 16, %s95, [#allocation10]
    $region29: #{forward.1} parent=1 // pred_fallthru
      _
    // Predicated region
    $region30: #{forward.1} parent=1 // pred_check
      _
    $region31: #{forward.1} parent=1 // pred_check_branch
      %99 = sbr.rel (0) target = $region33
    $region32: #{forward.1} parent=1 // pred_region
      %101 = vsyncadd [#allocation13], 0
      %s102 = sshll.u32 %s7, 4
      %s103 = int_to_ptr.hbm [resolvable:$true] %s102
      %s104 = sshll.u32 [#allocation12], 4
      %s105 = int_to_ptr.vmem [resolvable:$true] %s104
      %110 = dma.hbm_to_vmem [thread:$0]  %s103, 768, %s105, [#allocation13], 128, 128, 8
    $region33: #{forward.1} parent=1 // pred_fallthru
      _
    // Predicated region
    $region34: #{forward.1} parent=1 // pred_check
      _
    $region35: #{forward.1} parent=1 // pred_check_branch
      %112 = sbr.rel (0) target = $region37
    $region36: #{forward.1} parent=1 // pred_region
      _
    $region37: #{forward.1} parent=1 // pred_fallthru
      _
    // Predicated region
    $region38: #{forward.1} parent=1 // pred_check
      _
    $region39: #{forward.1} parent=1 // pred_check_branch
      %114 = sbr.rel (0) target = $region41
    $region40: #{forward.1} parent=1 // pred_region
      %116 = vsyncadd [#allocation13], 0
      %s117 = sshll.u32 %s9, 4
      %s118 = int_to_ptr.hbm [resolvable:$true] %s117
      %s119 = sshll.u32 [#allocation14], 4
      %s120 = int_to_ptr.vmem [resolvable:$true] %s119
      %125 = dma.hbm_to_vmem [thread:$0]  %s118, 9216, %s120, [#allocation13], 64, 64, 4
    $region41: #{forward.1} parent=1 // pred_fallthru
      _
    // Predicated region
    $region42: #{forward.1} parent=1 // pred_check
      _
    $region43: #{forward.1} parent=1 // pred_check_branch
      %127 = sbr.rel (0) target = $region45
    $region44: #{forward.1} parent=1 // pred_region
      %129 = vsyncadd [#allocation16], 0
      %s131 = sshll.u32 %s10, 4
      %s132 = int_to_ptr.hbm [resolvable:$true] %s131
      %s133 = sshll.u32 [#allocation15], 4
      %s134 = int_to_ptr.vmem [resolvable:$true] %s133
      %136 = dma.hbm_to_vmem [thread:$0]  %s132, 16, %s134, [#allocation16]
    $region45: #{forward.1} parent=1 // pred_fallthru
      _
    // Predicated region
    $region46: #{forward.1} parent=1 // pred_check
      _
    $region47: #{forward.1} parent=1 // pred_check_branch
      %138 = sbr.rel (0) target = $region49
    $region48: #{forward.1} parent=1 // pred_region
      %140 = vsyncadd [#allocation16], 0
      %s141 = sshll.u32 %s11, 4
      %s142 = int_to_ptr.hbm [resolvable:$true] %s141
      %s143 = sshll.u32 [#allocation17], 4
      %s144 = int_to_ptr.vmem [resolvable:$true] %s143
      %149 = dma.hbm_to_vmem [thread:$0]  %s142, 384, %s144, [#allocation16], 64, 64, 4
    $region49: #{forward.1} parent=1 // pred_fallthru
      _
    // Predicated region
    $region50: #{forward.1} parent=1 // pred_check
      _
    $region51: #{forward.1} parent=1 // pred_check_branch
      %151 = sbr.rel (0) target = $region53
    $region52: #{forward.1} parent=1 // pred_region
      %153 = vsyncadd [#allocation19], 0
      %s154 = sshll.u32 %s12, 4
      %s155 = int_to_ptr.hbm [resolvable:$true] %s154
      %s156 = sshll.u32 [#allocation18], 4
      %s157 = int_to_ptr.vmem [resolvable:$true] %s156
      %162 = dma.hbm_to_vmem [thread:$0]  %s155, 49152, %s157, [#allocation19], 512, 512, 32
    $region53: #{forward.1} parent=1 // pred_fallthru
      _
    // Predicated region
    $region54: #{forward.1} parent=1 // pred_check
      _
    $region55: #{forward.1} parent=1 // pred_check_branch
      %164 = sbr.rel (0) target = $region57
    $region56: #{forward.1} parent=1 // pred_region
      %166 = vsyncadd [#allocation19], 0
      %s168 = sshll.u32 %s13, 4
      %s169 = int_to_ptr.hbm [resolvable:$true] %s168
      %s170 = sshll.u32 [#allocation20], 4
      %s171 = int_to_ptr.vmem [resolvable:$true] %s170
      %173 = dma.hbm_to_vmem [thread:$0]  %s169, 128, %s171, [#allocation19]
    $region57: #{forward.1} parent=1 // pred_fallthru
      _
    // Predicated region
    $region58: #{forward.1} parent=1 // pred_check
      _
    $region59: #{forward.1} parent=1 // pred_check_branch
      %175 = sbr.rel (0) target = $region61
    $region60: #{forward.1} parent=1 // pred_region
      %177 = vsyncadd [#allocation22], 0
      %s178 = sshll.u32 %s14, 4
      %s179 = int_to_ptr.hbm [resolvable:$true] %s178
      %s180 = sshll.u32 [#allocation21], 4
      %s181 = int_to_ptr.vmem [resolvable:$true] %s180
      %186 = dma.hbm_to_vmem [thread:$0]  %s179, 16384, %s181, [#allocation22], 128, 128, 8
    $region61: #{forward.1} parent=1 // pred_fallthru
      _
    // Predicated region
    $region62: #{forward.1} parent=1 // pred_check
      _
    $region63: #{forward.1} parent=1 // pred_check_branch
      %188 = sbr.rel (0) target = $region65
    $region64: #{forward.1} parent=1 // pred_region
      %190 = vsyncadd [#allocation22], 0
      %s192 = sshll.u32 %s15, 4
      %s193 = int_to_ptr.hbm [resolvable:$true] %s192
      %s194 = sshll.u32 [#allocation23], 4
      %s195 = int_to_ptr.vmem [resolvable:$true] %s194
      %197 = dma.hbm_to_vmem [thread:$0]  %s193, 32, %s195, [#allocation22]
    $region65: #{forward.1} parent=1 // pred_fallthru
      _
    // Predicated region
    $region66: #{forward.1} parent=1 // pred_check
      _
    $region67: #{forward.1} parent=1 // pred_check_branch
      %199 = sbr.rel (0) target = $region69
    $region68: #{forward.1} parent=1 // pred_region
      %201 = vsyncadd [#allocation25], 0
      %s202 = sshll.u32 %s16, 4
      %s203 = int_to_ptr.hbm [resolvable:$true] %s202
      %s204 = sshll.u32 [#allocation24], 4
      %s205 = int_to_ptr.vmem [resolvable:$true] %s204
      %210 = dma.hbm_to_vmem [thread:$0]  %s203, 2048, %s205, [#allocation25], 64, 64, 4
    $region69: #{forward.1} parent=1 // pred_fallthru
      _
    // Predicated region
    $region70: #{forward.1} parent=1 // pred_check
      _
    $region71: #{forward.1} parent=1 // pred_check_branch
      %212 = sbr.rel (0) target = $region73
    $region72: #{forward.1} parent=1 // pred_region
      %214 = vsyncadd [#allocation25], 0
      %s216 = sshll.u32 %s17, 4
      %s217 = int_to_ptr.hbm [resolvable:$true] %s216
      %s218 = sshll.u32 [#allocation26], 4
      %s219 = int_to_ptr.vmem [resolvable:$true] %s218
      %221 = dma.hbm_to_vmem [thread:$0]  %s217, 16, %s219, [#allocation25]
    $region73: #{forward.1} parent=1 // pred_fallthru
      _
    // Predicated region
    $region74: #{forward.1} parent=1 // pred_check
      _
    $region75: #{forward.1} parent=1 // pred_check_branch
      %223 = sbr.rel (0) target = $region77
    $region76: #{forward.1} parent=1 // pred_region
      %225 = dma.done [#allocation5], 1024
    $region77: #{forward.1} parent=1 // pred_fallthru
      _
    // Predicated region
    $region78: #{forward.1} parent=1 // pred_check
      _
    $region79: #{forward.1} parent=1 // pred_check_branch
      %227 = sbr.rel (0) target = $region81
    $region80: #{forward.1} parent=1 // pred_region
      %229 = dma.done [#allocation7], 16
    $region81: #{forward.1} parent=1 // pred_fallthru
      _
    // Predicated region
    $region82: #{forward.1} parent=1 // pred_check
      _
    $region83: #{forward.1} parent=1 // pred_check_branch
      %231 = sbr.rel (0) target = $region85
    $region84: #{forward.1} parent=1 // pred_region
      %233 = dma.done [#allocation7], 1024
    $region85: #{forward.1} parent=1 // pred_fallthru
      _
    // Predicated region
    $region86: #{forward.1} parent=1 // pred_check
      _
    $region87: #{forward.1} parent=1 // pred_check_branch
      %235 = sbr.rel (0) target = $region89
    $region88: #{forward.1} parent=1 // pred_region
      %237 = dma.done [#allocation10], 9216
    $region89: #{forward.1} parent=1 // pred_fallthru
      _
    // Predicated region
    $region90: #{forward.1} parent=1 // pred_check
      _
    $region91: #{forward.1} parent=1 // pred_check_branch
      %239 = sbr.rel (0) target = $region93
    $region92: #{forward.1} parent=1 // pred_region
      %241 = dma.done [#allocation10], 16
    $region93: #{forward.1} parent=1 // pred_fallthru
      _
    // Predicated region
    $region94: #{forward.1} parent=1 // pred_check
      _
    $region95: #{forward.1} parent=1 // pred_check_branch
      %243 = sbr.rel (0) target = $region97
    $region96: #{forward.1} parent=1 // pred_region
      %245 = dma.done [#allocation13], 768
    $region97: #{forward.1} parent=1 // pred_fallthru
      _
    // Predicated region
    $region98: #{forward.1} parent=1 // pred_check
      _
    $region99: #{forward.1} parent=1 // pred_check_branch
      %247 = sbr.rel (0) target = $region101
    $region100: #{forward.1} parent=1 // pred_region
      %249 = dma.done [#allocation13], 9216
    $region101: #{forward.1} parent=1 // pred_fallthru
      _
    // Predicated region
    $region102: #{forward.1} parent=1 // pred_check
      _
    $region103: #{forward.1} parent=1 // pred_check_branch
      %251 = sbr.rel (0) target = $region105
    $region104: #{forward.1} parent=1 // pred_region
      %253 = dma.done [#allocation16], 16
    $region105: #{forward.1} parent=1 // pred_fallthru
      _
    // Predicated region
    $region106: #{forward.1} parent=1 // pred_check
      _
    $region107: #{forward.1} parent=1 // pred_check_branch
      %255 = sbr.rel (0) target = $region109
    $region108: #{forward.1} parent=1 // pred_region
      %257 = dma.done [#allocation16], 384
    $region109: #{forward.1} parent=1 // pred_fallthru
      _
    // Predicated region
    $region110: #{forward.1} parent=1 // pred_check
      _
    $region111: #{forward.1} parent=1 // pred_check_branch
      %259 = sbr.rel (0) target = $region113
    $region112: #{forward.1} parent=1 // pred_region
      %261 = dma.done [#allocation19], 49152
    $region113: #{forward.1} parent=1 // pred_fallthru
      _
    // Predicated region
    $region114: #{forward.1} parent=1 // pred_check
      _
    $region115: #{forward.1} parent=1 // pred_check_branch
      %263 = sbr.rel (0) target = $region117
    $region116: #{forward.1} parent=1 // pred_region
      %265 = dma.done [#allocation19], 128
    $region117: #{forward.1} parent=1 // pred_fallthru
      _
    // Predicated region
    $region118: #{forward.1} parent=1 // pred_check
      _
    $region119: #{forward.1} parent=1 // pred_check_branch
      %267 = sbr.rel (0) target = $region121
    $region120: #{forward.1} parent=1 // pred_region
      %269 = dma.done [#allocation22], 16384
    $region121: #{forward.1} parent=1 // pred_fallthru
      _
    // Predicated region
    $region122: #{forward.1} parent=1 // pred_check
      _
    $region123: #{forward.1} parent=1 // pred_check_branch
      %271 = sbr.rel (0) target = $region125
    $region124: #{forward.1} parent=1 // pred_region
      %273 = dma.done [#allocation22], 32
    $region125: #{forward.1} parent=1 // pred_fallthru
      _
    // Predicated region
    $region126: #{forward.1} parent=1 // pred_check
      _
    $region127: #{forward.1} parent=1 // pred_check_branch
      %275 = sbr.rel (0) target = $region129
    $region128: #{forward.1} parent=1 // pred_region
      %277 = dma.done [#allocation25], 2048
    $region129: #{forward.1} parent=1 // pred_fallthru
      _
    // Predicated region
    $region130: #{forward.1} parent=1 // pred_check
      _
    $region131: #{forward.1} parent=1 // pred_check_branch
      %279 = sbr.rel (0) target = $region133
    $region132: #{forward.1} parent=1 // pred_region
      %281 = dma.done [#allocation25], 16
    $region133: #{forward.1} parent=1 // pred_fallthru
      _
    %v283 = vld [vmem:[%s0] sm:$0xf]
    %v284 = vld [vmem:[%s0 + $0x4] sm:$0xf]
    %v285 = vld [vmem:[%s0 + $0x8] sm:$0xf]
    %v286 = vld [vmem:[%s0 + $0xc] sm:$0xf]
    %v287 = vld [vmem:[%s0 + $0x10] sm:$0xf]
    %v288 = vld [vmem:[%s0 + $0x14] sm:$0xf]
    %v289 = vld [vmem:[%s0 + $0x18] sm:$0xf]
    %v290 = vld [vmem:[%s0 + $0x1c] sm:$0xf]
    %v291 = vld [vmem:[%s0 + $0x20] sm:$0xf]
    %v292 = vld [vmem:[%s0 + $0x24] sm:$0xf]
    %v293 = vld [vmem:[%s0 + $0x28] sm:$0xf]
    %v294 = vld [vmem:[%s0 + $0x2c] sm:$0xf]
    %v295 = vld [vmem:[%s0 + $0x30] sm:$0xf]
    %v296 = vld [vmem:[%s0 + $0x34] sm:$0xf]
    %v297 = vld [vmem:[%s0 + $0x38] sm:$0xf]
    %v298 = vld [vmem:[%s0 + $0x3c] sm:$0xf]
    %v299 = vld [vmem:[%s0 + $0x40] sm:$0xf]
    %v300 = vld [vmem:[%s0 + $0x44] sm:$0xf]
    %v301 = vld [vmem:[%s0 + $0x48] sm:$0xf]
    %v302 = vld [vmem:[%s0 + $0x4c] sm:$0xf]
    %v303 = vld [vmem:[%s0 + $0x50] sm:$0xf]
    %v304 = vld [vmem:[%s0 + $0x54] sm:$0xf]
    %v305 = vld [vmem:[%s0 + $0x58] sm:$0xf]
    %v306 = vld [vmem:[%s0 + $0x5c] sm:$0xf]
    %v307 = vld [vmem:[#allocation4] sm:$0xf]
    %v308 = vld [vmem:[#allocation4 + $0x4] sm:$0xf]
    %v309 = vld [vmem:[#allocation4 + $0x8] sm:$0xf]
    %v310 = vld [vmem:[#allocation4 + $0xc] sm:$0xf]
    %v311 = vld [vmem:[#allocation4 + $0x10] sm:$0xf]
    %v312 = vld [vmem:[#allocation4 + $0x14] sm:$0xf]
    %v313 = vld [vmem:[#allocation4 + $0x18] sm:$0xf]
    %v314 = vld [vmem:[#allocation4 + $0x1c] sm:$0xf]
    %v315 = vld [vmem:[#allocation4 + $0x20] sm:$0xf]
    %v316 = vld [vmem:[#allocation4 + $0x24] sm:$0xf]
    %v317 = vld [vmem:[#allocation4 + $0x28] sm:$0xf]
    %v318 = vld [vmem:[#allocation4 + $0x2c] sm:$0xf]
    %v319 = vld [vmem:[#allocation4 + $0x30] sm:$0xf]
    %v320 = vld [vmem:[#allocation4 + $0x34] sm:$0xf]
    %v321 = vld [vmem:[#allocation4 + $0x38] sm:$0xf]
    %v322 = vld [vmem:[#allocation4 + $0x3c] sm:$0xf]
    %v323 = vld [vmem:[#allocation6] sm:$0x1]
    %v325 = vperm.slane %v323, 0
    %v351 = vunpack.c.l.b16 %v283
    %v352 = vunpack.c.l.b16 %v284
    %v353 = vunpack.c.l.b16 %v285
    %v354 = vunpack.c.l.b16 %v286
    %v355 = vunpack.c.l.b16 %v287
    %v356 = vunpack.c.l.b16 %v288
    %v357 = vunpack.c.l.b16 %v289
    %v358 = vunpack.c.l.b16 %v290
    %v359 = vunpack.c.l.b16 %v291
    %v360 = vunpack.c.l.b16 %v292
    %v361 = vunpack.c.l.b16 %v293
    %v362 = vunpack.c.l.b16 %v294
    %v363 = vunpack.c.l.b16 %v295
    %v364 = vunpack.c.l.b16 %v296
    %v365 = vunpack.c.l.b16 %v297
    %v366 = vunpack.c.l.b16 %v298
    %v367 = vunpack.c.l.b16 %v299
    %v368 = vunpack.c.l.b16 %v300
    %v369 = vunpack.c.l.b16 %v301
    %v370 = vunpack.c.l.b16 %v302
    %v371 = vunpack.c.l.b16 %v303
    %v372 = vunpack.c.l.b16 %v304
    %v373 = vunpack.c.l.b16 %v305
    %v374 = vunpack.c.l.b16 %v306
    %v375 = vpack.c.b16 %v352, %v351
    %v376 = vpack.c.b16 %v354, %v353
    %v377 = vpack.c.b16 %v356, %v355
    %v378 = vpack.c.b16 %v358, %v357
    %v379 = vpack.c.b16 %v360, %v359
    %v380 = vpack.c.b16 %v362, %v361
    %v381 = vpack.c.b16 %v364, %v363
    %v382 = vpack.c.b16 %v366, %v365
    %v383 = vpack.c.b16 %v368, %v367
    %v384 = vpack.c.b16 %v370, %v369
    %v385 = vpack.c.b16 %v372, %v371
    %v386 = vpack.c.b16 %v374, %v373
    %v415 = vunpack.c.l.b16 %v307
    %v416 = vunpack.c.l.b16 %v308
    %v417 = vunpack.c.l.b16 %v309
    %v418 = vunpack.c.l.b16 %v310
    %v419 = vunpack.c.l.b16 %v311
    %v420 = vunpack.c.l.b16 %v312
    %v421 = vunpack.c.l.b16 %v313
    %v422 = vunpack.c.l.b16 %v314
    %v423 = vunpack.c.l.b16 %v315
    %v424 = vunpack.c.l.b16 %v316
    %v425 = vunpack.c.l.b16 %v317
    %v426 = vunpack.c.l.b16 %v318
    %v427 = vunpack.c.l.b16 %v319
    %v428 = vunpack.c.l.b16 %v320
    %v429 = vunpack.c.l.b16 %v321
    %v430 = vunpack.c.l.b16 %v322
    %v431 = vpack.c.b16 %v416, %v415
    %v432 = vpack.c.b16 %v418, %v417
    %v433 = vpack.c.b16 %v420, %v419
    %v434 = vpack.c.b16 %v422, %v421
    %v435 = vpack.c.b16 %v424, %v423
    %v436 = vpack.c.b16 %v426, %v425
    %v437 = vpack.c.b16 %v428, %v427
    %v438 = vpack.c.b16 %v430, %v429
    %447 = vmatpush.bf16.msra.mxu0 %v438
    %448 = vmatpush.bf16.msra.mxu0 %v437
    %449 = vmatpush.bf16.msra.mxu0 %v436
    %450 = vmatpush.bf16.msra.mxu0 %v435
    %451 = vmatpush.bf16.msra.mxu0 %v434
    %452 = vmatpush.bf16.msra.mxu0 %v433
    %453 = vmatpush.bf16.msra.mxu0 %v432
    %454 = vmatpush.bf16.msra.mxu0 %v431
    %455 = vmatmul.bf16.gmra.mxu0 %v375
    %v456 = vpop.f32.mrf.mxu0
    %v457 = vadd.f32 %v325, %v456
    %v458 = vpop.f32.mrf.mxu0
    %v459 = vadd.f32 %v325, %v458
    %460 = vmatmul.bf16.gmra.mxu0 %v376
    %v461 = vpop.f32.mrf.mxu0
    %v462 = vadd.f32 %v325, %v461
    %v463 = vpop.f32.mrf.mxu0
    %v464 = vadd.f32 %v325, %v463
    %465 = vmatmul.bf16.gmra.mxu0 %v377
    %v466 = vpop.f32.mrf.mxu0
    %v467 = vadd.f32 %v325, %v466
    %v468 = vpop.f32.mrf.mxu0
    %v469 = vadd.f32 %v325, %v468
    %470 = vmatmul.bf16.gmra.mxu0 %v378
    %v471 = vpop.f32.mrf.mxu0
    %v472 = vadd.f32 %v325, %v471
    %v473 = vpop.f32.mrf.mxu0
    %v474 = vadd.f32 %v325, %v473
    %475 = vmatmul.bf16.gmra.mxu0 %v379
    %v476 = vpop.f32.mrf.mxu0
    %v477 = vadd.f32 %v325, %v476
    %v478 = vpop.f32.mrf.mxu0
    %v479 = vadd.f32 %v325, %v478
    %480 = vmatmul.bf16.gmra.mxu0 %v380
    %v481 = vpop.f32.mrf.mxu0
    %v482 = vadd.f32 %v325, %v481
    %v483 = vpop.f32.mrf.mxu0
    %v484 = vadd.f32 %v325, %v483
    %485 = vmatmul.bf16.gmra.mxu0 %v381
    %v486 = vpop.f32.mrf.mxu0
    %v487 = vadd.f32 %v325, %v486
    %v488 = vpop.f32.mrf.mxu0
    %v489 = vadd.f32 %v325, %v488
    %490 = vmatmul.bf16.gmra.mxu0 %v382
    %v491 = vpop.f32.mrf.mxu0
    %v492 = vadd.f32 %v325, %v491
    %v493 = vpop.f32.mrf.mxu0
    %v494 = vadd.f32 %v325, %v493
    %495 = vmatmul.bf16.gmra.mxu0 %v383
    %v496 = vpop.f32.mrf.mxu0
    %v497 = vadd.f32 %v325, %v496
    %v498 = vpop.f32.mrf.mxu0
    %v499 = vadd.f32 %v325, %v498
    %500 = vmatmul.bf16.gmra.mxu0 %v384
    %v501 = vpop.f32.mrf.mxu0
    %v502 = vadd.f32 %v325, %v501
    %v503 = vpop.f32.mrf.mxu0
    %v504 = vadd.f32 %v325, %v503
    %505 = vmatmul.bf16.gmra.mxu0 %v385
    %v506 = vpop.f32.mrf.mxu0
    %v507 = vadd.f32 %v325, %v506
    %v508 = vpop.f32.mrf.mxu0
    %v509 = vadd.f32 %v325, %v508
    %510 = vmatmul.bf16.gmra.mxu0 %v386
    %v511 = vpop.f32.mrf.mxu0
    %v512 = vadd.f32 %v325, %v511
    %v513 = vpop.f32.mrf.mxu0
    %v514 = vadd.f32 %v325, %v513
    %515 = vdwg.mxu0
    %v516 = vmax.f32 %v457, 0.0
    %v517 = vmax.f32 %v459, 0.0
    %v518 = vmax.f32 %v462, 0.0
    %v519 = vmax.f32 %v464, 0.0
    %v520 = vmax.f32 %v467, 0.0
    %v521 = vmax.f32 %v469, 0.0
    %v522 = vmax.f32 %v472, 0.0
    %v523 = vmax.f32 %v474, 0.0
    %v524 = vmax.f32 %v477, 0.0
    %v525 = vmax.f32 %v479, 0.0
    %v526 = vmax.f32 %v482, 0.0
    %v527 = vmax.f32 %v484, 0.0
    %v528 = vmax.f32 %v487, 0.0
    %v529 = vmax.f32 %v489, 0.0
    %v530 = vmax.f32 %v492, 0.0
    %v531 = vmax.f32 %v494, 0.0
    %v532 = vmax.f32 %v497, 0.0
    %v533 = vmax.f32 %v499, 0.0
    %v534 = vmax.f32 %v502, 0.0
    %v535 = vmax.f32 %v504, 0.0
    %v536 = vmax.f32 %v507, 0.0
    %v537 = vmax.f32 %v509, 0.0
    %v538 = vmax.f32 %v512, 0.0
    %v539 = vmax.f32 %v514, 0.0
    %v540 = vpack.c.bf16 %v517, %v516
    %v541 = vpack.c.bf16 %v519, %v518
    %v542 = vpack.c.bf16 %v521, %v520
    %v543 = vpack.c.bf16 %v523, %v522
    %v544 = vpack.c.bf16 %v525, %v524
    %v545 = vpack.c.bf16 %v527, %v526
    %v546 = vpack.c.bf16 %v529, %v528
    %v547 = vpack.c.bf16 %v531, %v530
    %v548 = vpack.c.bf16 %v533, %v532
    %v549 = vpack.c.bf16 %v535, %v534
    %v550 = vpack.c.bf16 %v537, %v536
    %v551 = vpack.c.bf16 %v539, %v538
    %v552 = vld [vmem:[#allocation8] sm:$0xf]
    %v553 = vld [vmem:[#allocation8 + $0x4] sm:$0xf]
    %v554 = vld [vmem:[#allocation8 + $0x8] sm:$0xf]
    %v555 = vld [vmem:[#allocation8 + $0xc] sm:$0xf]
    %v556 = vld [vmem:[#allocation8 + $0x10] sm:$0xf]
    %v557 = vld [vmem:[#allocation8 + $0x14] sm:$0xf]
    %v558 = vld [vmem:[#allocation8 + $0x18] sm:$0xf]
    %v559 = vld [vmem:[#allocation8 + $0x1c] sm:$0xf]
    %v560 = vld [vmem:[#allocation8 + $0x20] sm:$0xf]
    %v561 = vld [vmem:[#allocation8 + $0x24] sm:$0xf]
    %v562 = vld [vmem:[#allocation8 + $0x28] sm:$0xf]
    %v563 = vld [vmem:[#allocation8 + $0x2c] sm:$0xf]
    %v564 = vld [vmem:[#allocation8 + $0x30] sm:$0xf]
    %v565 = vld [vmem:[#allocation8 + $0x34] sm:$0xf]
    %v566 = vld [vmem:[#allocation8 + $0x38] sm:$0xf]
    %v567 = vld [vmem:[#allocation8 + $0x3c] sm:$0xf]
    %v584 = vunpack.c.l.b16 %v552
    %v585 = vunpack.c.l.b16 %v553
    %v586 = vunpack.c.l.b16 %v554
    %v587 = vunpack.c.l.b16 %v555
    %v588 = vunpack.c.l.b16 %v556
    %v589 = vunpack.c.l.b16 %v557
    %v590 = vunpack.c.l.b16 %v558
    %v591 = vunpack.c.l.b16 %v559
    %v592 = vunpack.c.l.b16 %v560
    %v593 = vunpack.c.l.b16 %v561
    %v594 = vunpack.c.l.b16 %v562
    %v595 = vunpack.c.l.b16 %v563
    %v596 = vunpack.c.l.b16 %v564
    %v597 = vunpack.c.l.b16 %v565
    %v598 = vunpack.c.l.b16 %v566
    %v599 = vunpack.c.l.b16 %v567
    %v600 = vpack.c.b16 %v585, %v584
    %v601 = vpack.c.b16 %v587, %v586
    %v602 = vpack.c.b16 %v589, %v588
    %v603 = vpack.c.b16 %v591, %v590
    %v604 = vpack.c.b16 %v593, %v592
    %v605 = vpack.c.b16 %v595, %v594
    %v606 = vpack.c.b16 %v597, %v596
    %v607 = vpack.c.b16 %v599, %v598
    %616 = vmatpush.bf16.msra.mxu0 %v607
    %617 = vmatpush.bf16.msra.mxu0 %v606
    %618 = vmatpush.bf16.msra.mxu0 %v605
    %619 = vmatpush.bf16.msra.mxu0 %v604
    %620 = vmatpush.bf16.msra.mxu0 %v603
    %621 = vmatpush.bf16.msra.mxu0 %v602
    %622 = vmatpush.bf16.msra.mxu0 %v601
    %623 = vmatpush.bf16.msra.mxu0 %v600
    %624 = vmatmul.bf16.gmra.mxu0 %v540
    %v625 = vpop.f32.mrf.mxu0
    %v626 = vadd.f32 0.0, %v625
    %v627 = vpop.f32.mrf.mxu0
    %v628 = vadd.f32 0.0, %v627
    %629 = vmatmul.bf16.gmra.mxu0 %v541
    %v630 = vpop.f32.mrf.mxu0
    %v631 = vadd.f32 0.0, %v630
    %v632 = vpop.f32.mrf.mxu0
    %v633 = vadd.f32 0.0, %v632
    %634 = vmatmul.bf16.gmra.mxu0 %v542
    %v635 = vpop.f32.mrf.mxu0
    %v636 = vadd.f32 0.0, %v635
    %v637 = vpop.f32.mrf.mxu0
    %v638 = vadd.f32 0.0, %v637
    %639 = vmatmul.bf16.gmra.mxu0 %v543
    %v640 = vpop.f32.mrf.mxu0
    %v641 = vadd.f32 0.0, %v640
    %v642 = vpop.f32.mrf.mxu0
    %v643 = vadd.f32 0.0, %v642
    %644 = vmatmul.bf16.gmra.mxu0 %v544
    %v645 = vpop.f32.mrf.mxu0
    %v646 = vadd.f32 0.0, %v645
    %v647 = vpop.f32.mrf.mxu0
    %v648 = vadd.f32 0.0, %v647
    %649 = vmatmul.bf16.gmra.mxu0 %v545
    %v650 = vpop.f32.mrf.mxu0
    %v651 = vadd.f32 0.0, %v650
    %v652 = vpop.f32.mrf.mxu0
    %v653 = vadd.f32 0.0, %v652
    %654 = vmatmul.bf16.gmra.mxu0 %v546
    %v655 = vpop.f32.mrf.mxu0
    %v656 = vadd.f32 0.0, %v655
    %v657 = vpop.f32.mrf.mxu0
    %v658 = vadd.f32 0.0, %v657
    %659 = vmatmul.bf16.gmra.mxu0 %v547
    %v660 = vpop.f32.mrf.mxu0
    %v661 = vadd.f32 0.0, %v660
    %v662 = vpop.f32.mrf.mxu0
    %v663 = vadd.f32 0.0, %v662
    %664 = vmatmul.bf16.gmra.mxu0 %v548
    %v665 = vpop.f32.mrf.mxu0
    %v666 = vadd.f32 0.0, %v665
    %v667 = vpop.f32.mrf.mxu0
    %v668 = vadd.f32 0.0, %v667
    %669 = vmatmul.bf16.gmra.mxu0 %v549
    %v670 = vpop.f32.mrf.mxu0
    %v671 = vadd.f32 0.0, %v670
    %v672 = vpop.f32.mrf.mxu0
    %v673 = vadd.f32 0.0, %v672
    %674 = vmatmul.bf16.gmra.mxu0 %v550
    %v675 = vpop.f32.mrf.mxu0
    %v676 = vadd.f32 0.0, %v675
    %v677 = vpop.f32.mrf.mxu0
    %v678 = vadd.f32 0.0, %v677
    %679 = vmatmul.bf16.gmra.mxu0 %v551
    %v680 = vpop.f32.mrf.mxu0
    %v681 = vadd.f32 0.0, %v680
    %v682 = vpop.f32.mrf.mxu0
    %v683 = vadd.f32 0.0, %v682
    %684 = vdwg.mxu0
    %685 = vst [vmem:[#allocation2] sm:$0xff] 0.0
    %686 = vst [vmem:[#allocation2 + $0x8] sm:$0xff] 0.0
    %687 = vst [vmem:[#allocation2 + $0x10] sm:$0xff] 0.0
    %688 = vst [vmem:[#allocation2 + $0x18] sm:$0xff] 0.0
    %689 = vst [vmem:[#allocation2 + $0x20] sm:$0xff] 0.0
    %690 = vst [vmem:[#allocation2 + $0x28] sm:$0xff] 0.0
    %691 = vst [vmem:[#allocation2 + $0x30] sm:$0xff] 0.0
    %692 = vst [vmem:[#allocation2 + $0x38] sm:$0xff] 0.0
    %693 = vst [vmem:[#allocation2 + $0x40] sm:$0xff] 0.0
    %694 = vst [vmem:[#allocation2 + $0x48] sm:$0xff] 0.0
    %695 = vst [vmem:[#allocation2 + $0x50] sm:$0xff] 0.0
    %696 = vst [vmem:[#allocation2 + $0x58] sm:$0xff] 0.0
    %697 = vst [vmem:[#allocation2 + $0x60] sm:$0xff] 0.0
    %698 = vst [vmem:[#allocation2 + $0x68] sm:$0xff] 0.0
    %699 = vst [vmem:[#allocation2 + $0x70] sm:$0xff] 0.0
    %700 = vst [vmem:[#allocation2 + $0x78] sm:$0xff] 0.0
    %701 = vst [vmem:[#allocation2 + $0x80] sm:$0xff] 0.0
    %702 = vst [vmem:[#allocation2 + $0x88] sm:$0xff] 0.0
    %703 = vst [vmem:[#allocation2 + $0x90] sm:$0xff] 0.0
    %704 = vst [vmem:[#allocation2 + $0x98] sm:$0xff] 0.0
    %705 = vst [vmem:[#allocation2 + $0xa0] sm:$0xff] 0.0
    %706 = vst [vmem:[#allocation2 + $0xa8] sm:$0xff] 0.0
    %707 = vst [vmem:[#allocation2 + $0xb0] sm:$0xff] 0.0
    %708 = vst [vmem:[#allocation2 + $0xb8] sm:$0xff] 0.0
    %709 = vst [vmem:[#allocation2 + $0xc0] sm:$0xff] 0.0
    %710 = vst [vmem:[#allocation2 + $0xc8] sm:$0xff] 0.0
    %711 = vst [vmem:[#allocation2 + $0xd0] sm:$0xff] 0.0
    %712 = vst [vmem:[#allocation2 + $0xd8] sm:$0xff] 0.0
    %713 = vst [vmem:[#allocation2 + $0x10] sm:$0xff] %v626
    %714 = vst [vmem:[#allocation2 + $0x18] sm:$0xff] %v628
    %715 = vst [vmem:[#allocation2 + $0x20] sm:$0xff] %v631
    %716 = vst [vmem:[#allocation2 + $0x28] sm:$0xff] %v633
    %717 = vst [vmem:[#allocation2 + $0x30] sm:$0xff] %v636
    %718 = vst [vmem:[#allocation2 + $0x38] sm:$0xff] %v638
    %719 = vst [vmem:[#allocation2 + $0x40] sm:$0xff] %v641
    %720 = vst [vmem:[#allocation2 + $0x48] sm:$0xff] %v643
    %721 = vst [vmem:[#allocation2 + $0x50] sm:$0xff] %v646
    %722 = vst [vmem:[#allocation2 + $0x58] sm:$0xff] %v648
    %723 = vst [vmem:[#allocation2 + $0x60] sm:$0xff] %v651
    %724 = vst [vmem:[#allocation2 + $0x68] sm:$0xff] %v653
    %725 = vst [vmem:[#allocation2 + $0x70] sm:$0xff] %v656
    %726 = vst [vmem:[#allocation2 + $0x78] sm:$0xff] %v658
    %727 = vst [vmem:[#allocation2 + $0x80] sm:$0xff] %v661
    %728 = vst [vmem:[#allocation2 + $0x88] sm:$0xff] %v663
    %729 = vst [vmem:[#allocation2 + $0x90] sm:$0xff] %v666
    %730 = vst [vmem:[#allocation2 + $0x98] sm:$0xff] %v668
    %731 = vst [vmem:[#allocation2 + $0xa0] sm:$0xff] %v671
    %732 = vst [vmem:[#allocation2 + $0xa8] sm:$0xff] %v673
    %733 = vst [vmem:[#allocation2 + $0xb0] sm:$0xff] %v676
    %734 = vst [vmem:[#allocation2 + $0xb8] sm:$0xff] %v678
    %735 = vst [vmem:[#allocation2 + $0xc0] sm:$0xff] %v681
    %736 = vst [vmem:[#allocation2 + $0xc8] sm:$0xff] %v683
    %v737 = vld [vmem:[%s4] sm:$0xff]
    %v738 = vld [vmem:[%s4 + $0x8] sm:$0xff]
    %v739 = vld [vmem:[%s4 + $0x10] sm:$0xff]
    %v740 = vld [vmem:[%s4 + $0x18] sm:$0xff]
    %v741 = vld [vmem:[%s4 + $0x20] sm:$0xff]
    %v742 = vld [vmem:[%s4 + $0x28] sm:$0xff]
    %v743 = vld [vmem:[%s4 + $0x30] sm:$0xff]
    %v744 = vld [vmem:[%s4 + $0x38] sm:$0xff]
    %v745 = vld [vmem:[%s4 + $0x40] sm:$0xff]
    %v746 = vld [vmem:[%s4 + $0x48] sm:$0xff]
    %v747 = vld [vmem:[%s4 + $0x50] sm:$0xff]
    %v748 = vld [vmem:[%s4 + $0x58] sm:$0xff]
    %v749 = vld [vmem:[%s4 + $0x60] sm:$0xff]
    %v750 = vld [vmem:[%s4 + $0x68] sm:$0xff]
    %v751 = vld [vmem:[%s4 + $0x70] sm:$0xff]
    %v752 = vld [vmem:[%s4 + $0x78] sm:$0xff]
    %v753 = vld [vmem:[%s4 + $0x80] sm:$0xff]
    %v754 = vld [vmem:[%s4 + $0x88] sm:$0xff]
    %v755 = vld [vmem:[%s4 + $0x90] sm:$0xff]
    %v756 = vld [vmem:[%s4 + $0x98] sm:$0xff]
    %v757 = vld [vmem:[%s4 + $0xa0] sm:$0xff]
    %v758 = vld [vmem:[%s4 + $0xa8] sm:$0xff]
    %v759 = vld [vmem:[%s4 + $0xb0] sm:$0xff]
    %v760 = vld [vmem:[%s4 + $0xb8] sm:$0xff]
    %v761 = vld [vmem:[#allocation2 + $0x3] sm:$0xff]
    %v762 = vld [vmem:[#allocation2 + $0xb] sm:$0xff]
    %v763 = vld [vmem:[#allocation2 + $0x13] sm:$0xff]
    %v764 = vld [vmem:[#allocation2 + $0x1b] sm:$0xff]
    %v765 = vld [vmem:[#allocation2 + $0x23] sm:$0xff]
    %v766 = vld [vmem:[#allocation2 + $0x2b] sm:$0xff]
    %v767 = vld [vmem:[#allocation2 + $0x33] sm:$0xff]
    %v768 = vld [vmem:[#allocation2 + $0x3b] sm:$0xff]
    %v769 = vld [vmem:[#allocation2 + $0x43] sm:$0xff]
    %v770 = vld [vmem:[#allocation2 + $0x4b] sm:$0xff]
    %v771 = vld [vmem:[#allocation2 + $0x53] sm:$0xff]
    %v772 = vld [vmem:[#allocation2 + $0x5b] sm:$0xff]
    %v773 = vld [vmem:[#allocation2 + $0x63] sm:$0xff]
    %v774 = vld [vmem:[#allocation2 + $0x6b] sm:$0xff]
    %v775 = vld [vmem:[#allocation2 + $0x73] sm:$0xff]
    %v776 = vld [vmem:[#allocation2 + $0x7b] sm:$0xff]
    %v777 = vld [vmem:[#allocation2 + $0x83] sm:$0xff]
    %v778 = vld [vmem:[#allocation2 + $0x8b] sm:$0xff]
    %v779 = vld [vmem:[#allocation2 + $0x93] sm:$0xff]
    %v780 = vld [vmem:[#allocation2 + $0x9b] sm:$0xff]
    %v781 = vld [vmem:[#allocation2 + $0xa3] sm:$0xff]
    %v782 = vld [vmem:[#allocation2 + $0xab] sm:$0xff]
    %v783 = vld [vmem:[#allocation2 + $0xb3] sm:$0xff]
    %v784 = vld [vmem:[#allocation2 + $0xbb] sm:$0xff]
    %786 = vset.pattern.permute.xlu0 0
    %787 = vperm.xlu0 %786, %v737
    %v788 = vpop.permute.xlu0 %787
    %791 = vset.pattern.permute.xlu0 0
    %792 = vperm.xlu0 %791, %v738
    %v793 = vpop.permute.xlu0 %792
    %796 = vset.pattern.permute.xlu0 0
    %797 = vperm.xlu0 %796, %v739
    %v798 = vpop.permute.xlu0 %797
    %801 = vset.pattern.permute.xlu0 0
    %802 = vperm.xlu0 %801, %v740
    %v803 = vpop.permute.xlu0 %802
    %806 = vset.pattern.permute.xlu0 0
    %807 = vperm.xlu0 %806, %v741
    %v808 = vpop.permute.xlu0 %807
    %811 = vset.pattern.permute.xlu0 0
    %812 = vperm.xlu0 %811, %v742
    %v813 = vpop.permute.xlu0 %812
    %816 = vset.pattern.permute.xlu0 0
    %817 = vperm.xlu0 %816, %v743
    %v818 = vpop.permute.xlu0 %817
    %821 = vset.pattern.permute.xlu0 0
    %822 = vperm.xlu0 %821, %v744
    %v823 = vpop.permute.xlu0 %822
    %826 = vset.pattern.permute.xlu0 0
    %827 = vperm.xlu0 %826, %v745
    %v828 = vpop.permute.xlu0 %827
    %831 = vset.pattern.permute.xlu0 0
    %832 = vperm.xlu0 %831, %v746
    %v833 = vpop.permute.xlu0 %832
    %836 = vset.pattern.permute.xlu0 0
    %837 = vperm.xlu0 %836, %v747
    %v838 = vpop.permute.xlu0 %837
    %841 = vset.pattern.permute.xlu0 0
    %842 = vperm.xlu0 %841, %v748
    %v843 = vpop.permute.xlu0 %842
    %846 = vset.pattern.permute.xlu0 0
    %847 = vperm.xlu0 %846, %v749
    %v848 = vpop.permute.xlu0 %847
    %851 = vset.pattern.permute.xlu0 0
    %852 = vperm.xlu0 %851, %v750
    %v853 = vpop.permute.xlu0 %852
    %856 = vset.pattern.permute.xlu0 0
    %857 = vperm.xlu0 %856, %v751
    %v858 = vpop.permute.xlu0 %857
    %861 = vset.pattern.permute.xlu0 0
    %862 = vperm.xlu0 %861, %v752
    %v863 = vpop.permute.xlu0 %862
    %866 = vset.pattern.permute.xlu0 0
    %867 = vperm.xlu0 %866, %v753
    %v868 = vpop.permute.xlu0 %867
    %871 = vset.pattern.permute.xlu0 0
    %872 = vperm.xlu0 %871, %v754
    %v873 = vpop.permute.xlu0 %872
    %876 = vset.pattern.permute.xlu0 0
    %877 = vperm.xlu0 %876, %v755
    %v878 = vpop.permute.xlu0 %877
    %881 = vset.pattern.permute.xlu0 0
    %882 = vperm.xlu0 %881, %v756
    %v883 = vpop.permute.xlu0 %882
    %886 = vset.pattern.permute.xlu0 0
    %887 = vperm.xlu0 %886, %v757
    %v888 = vpop.permute.xlu0 %887
    %891 = vset.pattern.permute.xlu0 0
    %892 = vperm.xlu0 %891, %v758
    %v893 = vpop.permute.xlu0 %892
    %896 = vset.pattern.permute.xlu0 0
    %897 = vperm.xlu0 %896, %v759
    %v898 = vpop.permute.xlu0 %897
    %901 = vset.pattern.permute.xlu0 0
    %902 = vperm.xlu0 %901, %v760
    %v903 = vpop.permute.xlu0 %902
    %v905 = vmul.f32 %v761, %v788
    %v906 = vmul.f32 %v762, %v793
    %v907 = vmul.f32 %v763, %v798
    %v908 = vmul.f32 %v764, %v803
    %v909 = vmul.f32 %v765, %v808
    %v910 = vmul.f32 %v766, %v813
    %v911 = vmul.f32 %v767, %v818
    %v912 = vmul.f32 %v768, %v823
    %v913 = vmul.f32 %v769, %v828
    %v914 = vmul.f32 %v770, %v833
    %v915 = vmul.f32 %v771, %v838
    %v916 = vmul.f32 %v772, %v843
    %v917 = vmul.f32 %v773, %v848
    %v918 = vmul.f32 %v774, %v853
    %v919 = vmul.f32 %v775, %v858
    %v920 = vmul.f32 %v776, %v863
    %v921 = vmul.f32 %v777, %v868
    %v922 = vmul.f32 %v778, %v873
    %v923 = vmul.f32 %v779, %v878
    %v924 = vmul.f32 %v780, %v883
    %v925 = vmul.f32 %v781, %v888
    %v926 = vmul.f32 %v782, %v893
    %v927 = vmul.f32 %v783, %v898
    %v928 = vmul.f32 %v784, %v903
    %v929 = vpack.c.bf16 %v905, %v905
    %v930 = vpack.c.bf16 %v906, %v906
    %v931 = vpack.c.bf16 %v907, %v907
    %v932 = vpack.c.bf16 %v908, %v908
    %v933 = vpack.c.bf16 %v909, %v909
    %v934 = vpack.c.bf16 %v910, %v910
    %v935 = vpack.c.bf16 %v911, %v911
    %v936 = vpack.c.bf16 %v912, %v912
    %v937 = vpack.c.bf16 %v913, %v913
    %v938 = vpack.c.bf16 %v914, %v914
    %v939 = vpack.c.bf16 %v915, %v915
    %v940 = vpack.c.bf16 %v916, %v916
    %v941 = vpack.c.bf16 %v917, %v917
    %v942 = vpack.c.bf16 %v918, %v918
    %v943 = vpack.c.bf16 %v919, %v919
    %v944 = vpack.c.bf16 %v920, %v920
    %v945 = vpack.c.bf16 %v921, %v921
    %v946 = vpack.c.bf16 %v922, %v922
    %v947 = vpack.c.bf16 %v923, %v923
    %v948 = vpack.c.bf16 %v924, %v924
    %v949 = vpack.c.bf16 %v925, %v925
    %v950 = vpack.c.bf16 %v926, %v926
    %v951 = vpack.c.bf16 %v927, %v927
    %v952 = vpack.c.bf16 %v928, %v928
    %v953 = vld [vmem:[#allocation2 + $0x4] sm:$0xff]
    %v954 = vld [vmem:[#allocation2 + $0xc] sm:$0xff]
    %v955 = vld [vmem:[#allocation2 + $0x14] sm:$0xff]
    %v956 = vld [vmem:[#allocation2 + $0x1c] sm:$0xff]
    %v957 = vld [vmem:[#allocation2 + $0x24] sm:$0xff]
    %v958 = vld [vmem:[#allocation2 + $0x2c] sm:$0xff]
    %v959 = vld [vmem:[#allocation2 + $0x34] sm:$0xff]
    %v960 = vld [vmem:[#allocation2 + $0x3c] sm:$0xff]
    %v961 = vld [vmem:[#allocation2 + $0x44] sm:$0xff]
    %v962 = vld [vmem:[#allocation2 + $0x4c] sm:$0xff]
    %v963 = vld [vmem:[#allocation2 + $0x54] sm:$0xff]
    %v964 = vld [vmem:[#allocation2 + $0x5c] sm:$0xff]
    %v965 = vld [vmem:[#allocation2 + $0x64] sm:$0xff]
    %v966 = vld [vmem:[#allocation2 + $0x6c] sm:$0xff]
    %v967 = vld [vmem:[#allocation2 + $0x74] sm:$0xff]
    %v968 = vld [vmem:[#allocation2 + $0x7c] sm:$0xff]
    %v969 = vld [vmem:[#allocation2 + $0x84] sm:$0xff]
    %v970 = vld [vmem:[#allocation2 + $0x8c] sm:$0xff]
    %v971 = vld [vmem:[#allocation2 + $0x94] sm:$0xff]
    %v972 = vld [vmem:[#allocation2 + $0x9c] sm:$0xff]
    %v973 = vld [vmem:[#allocation2 + $0xa4] sm:$0xff]
    %v974 = vld [vmem:[#allocation2 + $0xac] sm:$0xff]
    %v975 = vld [vmem:[#allocation2 + $0xb4] sm:$0xff]
    %v976 = vld [vmem:[#allocation2 + $0xbc] sm:$0xff]
    %977 = vset.pattern.permute.xlu0 1
    %978 = vperm.xlu0 %977, %v737
    %v979 = vpop.permute.xlu0 %978
    %981 = vset.pattern.permute.xlu0 1
    %982 = vperm.xlu0 %981, %v738
    %v983 = vpop.permute.xlu0 %982
    %985 = vset.pattern.permute.xlu0 1
    %986 = vperm.xlu0 %985, %v739
    %v987 = vpop.permute.xlu0 %986
    %989 = vset.pattern.permute.xlu0 1
    %990 = vperm.xlu0 %989, %v740
    %v991 = vpop.permute.xlu0 %990
    %993 = vset.pattern.permute.xlu0 1
    %994 = vperm.xlu0 %993, %v741
    %v995 = vpop.permute.xlu0 %994
    %997 = vset.pattern.permute.xlu0 1
    %998 = vperm.xlu0 %997, %v742
    %v999 = vpop.permute.xlu0 %998
    %1001 = vset.pattern.permute.xlu0 1
    %1002 = vperm.xlu0 %1001, %v743
    %v1003 = vpop.permute.xlu0 %1002
    %1005 = vset.pattern.permute.xlu0 1
    %1006 = vperm.xlu0 %1005, %v744
    %v1007 = vpop.permute.xlu0 %1006
    %1009 = vset.pattern.permute.xlu0 1
    %1010 = vperm.xlu0 %1009, %v745
    %v1011 = vpop.permute.xlu0 %1010
    %1013 = vset.pattern.permute.xlu0 1
    %1014 = vperm.xlu0 %1013, %v746
    %v1015 = vpop.permute.xlu0 %1014
    %1017 = vset.pattern.permute.xlu0 1
    %1018 = vperm.xlu0 %1017, %v747
    %v1019 = vpop.permute.xlu0 %1018
    %1021 = vset.pattern.permute.xlu0 1
    %1022 = vperm.xlu0 %1021, %v748
    %v1023 = vpop.permute.xlu0 %1022
    %1025 = vset.pattern.permute.xlu0 1
    %1026 = vperm.xlu0 %1025, %v749
    %v1027 = vpop.permute.xlu0 %1026
    %1029 = vset.pattern.permute.xlu0 1
    %1030 = vperm.xlu0 %1029, %v750
    %v1031 = vpop.permute.xlu0 %1030
    %1033 = vset.pattern.permute.xlu0 1
    %1034 = vperm.xlu0 %1033, %v751
    %v1035 = vpop.permute.xlu0 %1034
    %1037 = vset.pattern.permute.xlu0 1
    %1038 = vperm.xlu0 %1037, %v752
    %v1039 = vpop.permute.xlu0 %1038
    %1041 = vset.pattern.permute.xlu0 1
    %1042 = vperm.xlu0 %1041, %v753
    %v1043 = vpop.permute.xlu0 %1042
    %1045 = vset.pattern.permute.xlu0 1
    %1046 = vperm.xlu0 %1045, %v754
    %v1047 = vpop.permute.xlu0 %1046
    %1049 = vset.pattern.permute.xlu0 1
    %1050 = vperm.xlu0 %1049, %v755
    %v1051 = vpop.permute.xlu0 %1050
    %1053 = vset.pattern.permute.xlu0 1
    %1054 = vperm.xlu0 %1053, %v756
    %v1055 = vpop.permute.xlu0 %1054
    %1057 = vset.pattern.permute.xlu0 1
    %1058 = vperm.xlu0 %1057, %v757
    %v1059 = vpop.permute.xlu0 %1058
    %1061 = vset.pattern.permute.xlu0 1
    %1062 = vperm.xlu0 %1061, %v758
    %v1063 = vpop.permute.xlu0 %1062
    %1065 = vset.pattern.permute.xlu0 1
    %1066 = vperm.xlu0 %1065, %v759
    %v1067 = vpop.permute.xlu0 %1066
    %1069 = vset.pattern.permute.xlu0 1
    %1070 = vperm.xlu0 %1069, %v760
    %v1071 = vpop.permute.xlu0 %1070
    %v1073 = vmul.f32 %v953, %v979
    %v1074 = vmul.f32 %v954, %v983
    %v1075 = vmul.f32 %v955, %v987
    %v1076 = vmul.f32 %v956, %v991
    %v1077 = vmul.f32 %v957, %v995
    %v1078 = vmul.f32 %v958, %v999
    %v1079 = vmul.f32 %v959, %v1003
    %v1080 = vmul.f32 %v960, %v1007
    %v1081 = vmul.f32 %v961, %v1011
    %v1082 = vmul.f32 %v962, %v1015
    %v1083 = vmul.f32 %v963, %v1019
    %v1084 = vmul.f32 %v964, %v1023
    %v1085 = vmul.f32 %v965, %v1027
    %v1086 = vmul.f32 %v966, %v1031
    %v1087 = vmul.f32 %v967, %v1035
    %v1088 = vmul.f32 %v968, %v1039
    %v1089 = vmul.f32 %v969, %v1043
    %v1090 = vmul.f32 %v970, %v1047
    %v1091 = vmul.f32 %v971, %v1051
    %v1092 = vmul.f32 %v972, %v1055
    %v1093 = vmul.f32 %v973, %v1059
    %v1094 = vmul.f32 %v974, %v1063
    %v1095 = vmul.f32 %v975, %v1067
    %v1096 = vmul.f32 %v976, %v1071
    %v1097 = vpack.c.bf16 %v1073, %v1073
    %v1098 = vpack.c.bf16 %v1074, %v1074
    %v1099 = vpack.c.bf16 %v1075, %v1075
    %v1100 = vpack.c.bf16 %v1076, %v1076
    %v1101 = vpack.c.bf16 %v1077, %v1077
    %v1102 = vpack.c.bf16 %v1078, %v1078
    %v1103 = vpack.c.bf16 %v1079, %v1079
    %v1104 = vpack.c.bf16 %v1080, %v1080
    %v1105 = vpack.c.bf16 %v1081, %v1081
    %v1106 = vpack.c.bf16 %v1082, %v1082
    %v1107 = vpack.c.bf16 %v1083, %v1083
    %v1108 = vpack.c.bf16 %v1084, %v1084
    %v1109 = vpack.c.bf16 %v1085, %v1085
    %v1110 = vpack.c.bf16 %v1086, %v1086
    %v1111 = vpack.c.bf16 %v1087, %v1087
    %v1112 = vpack.c.bf16 %v1088, %v1088
    %v1113 = vpack.c.bf16 %v1089, %v1089
    %v1114 = vpack.c.bf16 %v1090, %v1090
    %v1115 = vpack.c.bf16 %v1091, %v1091
    %v1116 = vpack.c.bf16 %v1092, %v1092
    %v1117 = vpack.c.bf16 %v1093, %v1093
    %v1118 = vpack.c.bf16 %v1094, %v1094
    %v1119 = vpack.c.bf16 %v1095, %v1095
    %v1120 = vpack.c.bf16 %v1096, %v1096
    %v1121 = vld [vmem:[#allocation2 + $0x5] sm:$0xff]
    %v1122 = vld [vmem:[#allocation2 + $0xd] sm:$0xff]
    %v1123 = vld [vmem:[#allocation2 + $0x15] sm:$0xff]
    %v1124 = vld [vmem:[#allocation2 + $0x1d] sm:$0xff]
    %v1125 = vld [vmem:[#allocation2 + $0x25] sm:$0xff]
    %v1126 = vld [vmem:[#allocation2 + $0x2d] sm:$0xff]
    %v1127 = vld [vmem:[#allocation2 + $0x35] sm:$0xff]
    %v1128 = vld [vmem:[#allocation2 + $0x3d] sm:$0xff]
    %v1129 = vld [vmem:[#allocation2 + $0x45] sm:$0xff]
    %v1130 = vld [vmem:[#allocation2 + $0x4d] sm:$0xff]
    %v1131 = vld [vmem:[#allocation2 + $0x55] sm:$0xff]
    %v1132 = vld [vmem:[#allocation2 + $0x5d] sm:$0xff]
    %v1133 = vld [vmem:[#allocation2 + $0x65] sm:$0xff]
    %v1134 = vld [vmem:[#allocation2 + $0x6d] sm:$0xff]
    %v1135 = vld [vmem:[#allocation2 + $0x75] sm:$0xff]
    %v1136 = vld [vmem:[#allocation2 + $0x7d] sm:$0xff]
    %v1137 = vld [vmem:[#allocation2 + $0x85] sm:$0xff]
    %v1138 = vld [vmem:[#allocation2 + $0x8d] sm:$0xff]
    %v1139 = vld [vmem:[#allocation2 + $0x95] sm:$0xff]
    %v1140 = vld [vmem:[#allocation2 + $0x9d] sm:$0xff]
    %v1141 = vld [vmem:[#allocation2 + $0xa5] sm:$0xff]
    %v1142 = vld [vmem:[#allocation2 + $0xad] sm:$0xff]
    %v1143 = vld [vmem:[#allocation2 + $0xb5] sm:$0xff]
    %v1144 = vld [vmem:[#allocation2 + $0xbd] sm:$0xff]
    %1145 = vset.pattern.permute.xlu0 2
    %1146 = vperm.xlu0 %1145, %v737
    %v1147 = vpop.permute.xlu0 %1146
    %1149 = vset.pattern.permute.xlu0 2
    %1150 = vperm.xlu0 %1149, %v738
    %v1151 = vpop.permute.xlu0 %1150
    %1153 = vset.pattern.permute.xlu0 2
    %1154 = vperm.xlu0 %1153, %v739
    %v1155 = vpop.permute.xlu0 %1154
    %1157 = vset.pattern.permute.xlu0 2
    %1158 = vperm.xlu0 %1157, %v740
    %v1159 = vpop.permute.xlu0 %1158
    %1161 = vset.pattern.permute.xlu0 2
    %1162 = vperm.xlu0 %1161, %v741
    %v1163 = vpop.permute.xlu0 %1162
    %1165 = vset.pattern.permute.xlu0 2
    %1166 = vperm.xlu0 %1165, %v742
    %v1167 = vpop.permute.xlu0 %1166
    %1169 = vset.pattern.permute.xlu0 2
    %1170 = vperm.xlu0 %1169, %v743
    %v1171 = vpop.permute.xlu0 %1170
    %1173 = vset.pattern.permute.xlu0 2
    %1174 = vperm.xlu0 %1173, %v744
    %v1175 = vpop.permute.xlu0 %1174
    %1177 = vset.pattern.permute.xlu0 2
    %1178 = vperm.xlu0 %1177, %v745
    %v1179 = vpop.permute.xlu0 %1178
    %1181 = vset.pattern.permute.xlu0 2
    %1182 = vperm.xlu0 %1181, %v746
    %v1183 = vpop.permute.xlu0 %1182
    %1185 = vset.pattern.permute.xlu0 2
    %1186 = vperm.xlu0 %1185, %v747
    %v1187 = vpop.permute.xlu0 %1186
    %1189 = vset.pattern.permute.xlu0 2
    %1190 = vperm.xlu0 %1189, %v748
    %v1191 = vpop.permute.xlu0 %1190
    %1193 = vset.pattern.permute.xlu0 2
    %1194 = vperm.xlu0 %1193, %v749
    %v1195 = vpop.permute.xlu0 %1194
    %1197 = vset.pattern.permute.xlu0 2
    %1198 = vperm.xlu0 %1197, %v750
    %v1199 = vpop.permute.xlu0 %1198
    %1201 = vset.pattern.permute.xlu0 2
    %1202 = vperm.xlu0 %1201, %v751
    %v1203 = vpop.permute.xlu0 %1202
    %1205 = vset.pattern.permute.xlu0 2
    %1206 = vperm.xlu0 %1205, %v752
    %v1207 = vpop.permute.xlu0 %1206
    %1209 = vset.pattern.permute.xlu0 2
    %1210 = vperm.xlu0 %1209, %v753
    %v1211 = vpop.permute.xlu0 %1210
    %1213 = vset.pattern.permute.xlu0 2
    %1214 = vperm.xlu0 %1213, %v754
    %v1215 = vpop.permute.xlu0 %1214
    %1217 = vset.pattern.permute.xlu0 2
    %1218 = vperm.xlu0 %1217, %v755
    %v1219 = vpop.permute.xlu0 %1218
    %1221 = vset.pattern.permute.xlu0 2
    %1222 = vperm.xlu0 %1221, %v756
    %v1223 = vpop.permute.xlu0 %1222
    %1225 = vset.pattern.permute.xlu0 2
    %1226 = vperm.xlu0 %1225, %v757
    %v1227 = vpop.permute.xlu0 %1226
    %1229 = vset.pattern.permute.xlu0 2
    %1230 = vperm.xlu0 %1229, %v758
    %v1231 = vpop.permute.xlu0 %1230
    %1233 = vset.pattern.permute.xlu0 2
    %1234 = vperm.xlu0 %1233, %v759
    %v1235 = vpop.permute.xlu0 %1234
    %1237 = vset.pattern.permute.xlu0 2
    %1238 = vperm.xlu0 %1237, %v760
    %v1239 = vpop.permute.xlu0 %1238
    %v1241 = vmul.f32 %v1121, %v1147
    %v1242 = vmul.f32 %v1122, %v1151
    %v1243 = vmul.f32 %v1123, %v1155
    %v1244 = vmul.f32 %v1124, %v1159
    %v1245 = vmul.f32 %v1125, %v1163
    %v1246 = vmul.f32 %v1126, %v1167
    %v1247 = vmul.f32 %v1127, %v1171
    %v1248 = vmul.f32 %v1128, %v1175
    %v1249 = vmul.f32 %v1129, %v1179
    %v1250 = vmul.f32 %v1130, %v1183
    %v1251 = vmul.f32 %v1131, %v1187
    %v1252 = vmul.f32 %v1132, %v1191
    %v1253 = vmul.f32 %v1133, %v1195
    %v1254 = vmul.f32 %v1134, %v1199
    %v1255 = vmul.f32 %v1135, %v1203
    %v1256 = vmul.f32 %v1136, %v1207
    %v1257 = vmul.f32 %v1137, %v1211
    %v1258 = vmul.f32 %v1138, %v1215
    %v1259 = vmul.f32 %v1139, %v1219
    %v1260 = vmul.f32 %v1140, %v1223
    %v1261 = vmul.f32 %v1141, %v1227
    %v1262 = vmul.f32 %v1142, %v1231
    %v1263 = vmul.f32 %v1143, %v1235
    %v1264 = vmul.f32 %v1144, %v1239
    %v1265 = vpack.c.bf16 %v1241, %v1241
    %v1266 = vpack.c.bf16 %v1242, %v1242
    %v1267 = vpack.c.bf16 %v1243, %v1243
    %v1268 = vpack.c.bf16 %v1244, %v1244
    %v1269 = vpack.c.bf16 %v1245, %v1245
    %v1270 = vpack.c.bf16 %v1246, %v1246
    %v1271 = vpack.c.bf16 %v1247, %v1247
    %v1272 = vpack.c.bf16 %v1248, %v1248
    %v1273 = vpack.c.bf16 %v1249, %v1249
    %v1274 = vpack.c.bf16 %v1250, %v1250
    %v1275 = vpack.c.bf16 %v1251, %v1251
    %v1276 = vpack.c.bf16 %v1252, %v1252
    %v1277 = vpack.c.bf16 %v1253, %v1253
    %v1278 = vpack.c.bf16 %v1254, %v1254
    %v1279 = vpack.c.bf16 %v1255, %v1255
    %v1280 = vpack.c.bf16 %v1256, %v1256
    %v1281 = vpack.c.bf16 %v1257, %v1257
    %v1282 = vpack.c.bf16 %v1258, %v1258
    %v1283 = vpack.c.bf16 %v1259, %v1259
    %v1284 = vpack.c.bf16 %v1260, %v1260
    %v1285 = vpack.c.bf16 %v1261, %v1261
    %v1286 = vpack.c.bf16 %v1262, %v1262
    %v1287 = vpack.c.bf16 %v1263, %v1263
    %v1288 = vpack.c.bf16 %v1264, %v1264
    %v1289 = vld [vmem:[#allocation2 + $0xf] sm:$0xff]
    %v1290 = vld [vmem:[#allocation2 + $0x17] sm:$0xff]
    %v1291 = vld [vmem:[#allocation2 + $0x1f] sm:$0xff]
    %v1292 = vld [vmem:[#allocation2 + $0x27] sm:$0xff]
    %v1293 = vld [vmem:[#allocation2 + $0x2f] sm:$0xff]
    %v1294 = vld [vmem:[#allocation2 + $0x37] sm:$0xff]
    %v1295 = vld [vmem:[#allocation2 + $0x3f] sm:$0xff]
    %v1296 = vld [vmem:[#allocation2 + $0x47] sm:$0xff]
    %v1297 = vld [vmem:[#allocation2 + $0x4f] sm:$0xff]
    %v1298 = vld [vmem:[#allocation2 + $0x57] sm:$0xff]
    %v1299 = vld [vmem:[#allocation2 + $0x5f] sm:$0xff]
    %v1300 = vld [vmem:[#allocation2 + $0x67] sm:$0xff]
    %v1301 = vld [vmem:[#allocation2 + $0x6f] sm:$0xff]
    %v1302 = vld [vmem:[#allocation2 + $0x77] sm:$0xff]
    %v1303 = vld [vmem:[#allocation2 + $0x7f] sm:$0xff]
    %v1304 = vld [vmem:[#allocation2 + $0x87] sm:$0xff]
    %v1305 = vld [vmem:[#allocation2 + $0x8f] sm:$0xff]
    %v1306 = vld [vmem:[#allocation2 + $0x97] sm:$0xff]
    %v1307 = vld [vmem:[#allocation2 + $0x9f] sm:$0xff]
    %v1308 = vld [vmem:[#allocation2 + $0xa7] sm:$0xff]
    %v1309 = vld [vmem:[#allocation2 + $0xaf] sm:$0xff]
    %v1310 = vld [vmem:[#allocation2 + $0xb7] sm:$0xff]
    %v1311 = vld [vmem:[#allocation2 + $0xbf] sm:$0xff]
    %v1312 = vld [vmem:[#allocation2 + $0xc7] sm:$0xff]
    %1313 = vset.pattern.permute.xlu0 3
    %1314 = vperm.xlu0 %1313, %v737
    %v1315 = vpop.permute.xlu0 %1314
    %1317 = vset.pattern.permute.xlu0 3
    %1318 = vperm.xlu0 %1317, %v738
    %v1319 = vpop.permute.xlu0 %1318
    %1321 = vset.pattern.permute.xlu0 3
    %1322 = vperm.xlu0 %1321, %v739
    %v1323 = vpop.permute.xlu0 %1322
    %1325 = vset.pattern.permute.xlu0 3
    %1326 = vperm.xlu0 %1325, %v740
    %v1327 = vpop.permute.xlu0 %1326
    %1329 = vset.pattern.permute.xlu0 3
    %1330 = vperm.xlu0 %1329, %v741
    %v1331 = vpop.permute.xlu0 %1330
    %1333 = vset.pattern.permute.xlu0 3
    %1334 = vperm.xlu0 %1333, %v742
    %v1335 = vpop.permute.xlu0 %1334
    %1337 = vset.pattern.permute.xlu0 3
    %1338 = vperm.xlu0 %1337, %v743
    %v1339 = vpop.permute.xlu0 %1338
    %1341 = vset.pattern.permute.xlu0 3
    %1342 = vperm.xlu0 %1341, %v744
    %v1343 = vpop.permute.xlu0 %1342
    %1345 = vset.pattern.permute.xlu0 3
    %1346 = vperm.xlu0 %1345, %v745
    %v1347 = vpop.permute.xlu0 %1346
    %1349 = vset.pattern.permute.xlu0 3
    %1350 = vperm.xlu0 %1349, %v746
    %v1351 = vpop.permute.xlu0 %1350
    %1353 = vset.pattern.permute.xlu0 3
    %1354 = vperm.xlu0 %1353, %v747
    %v1355 = vpop.permute.xlu0 %1354
    %1357 = vset.pattern.permute.xlu0 3
    %1358 = vperm.xlu0 %1357, %v748
    %v1359 = vpop.permute.xlu0 %1358
    %1361 = vset.pattern.permute.xlu0 3
    %1362 = vperm.xlu0 %1361, %v749
    %v1363 = vpop.permute.xlu0 %1362
    %1365 = vset.pattern.permute.xlu0 3
    %1366 = vperm.xlu0 %1365, %v750
    %v1367 = vpop.permute.xlu0 %1366
    %1369 = vset.pattern.permute.xlu0 3
    %1370 = vperm.xlu0 %1369, %v751
    %v1371 = vpop.permute.xlu0 %1370
    %1373 = vset.pattern.permute.xlu0 3
    %1374 = vperm.xlu0 %1373, %v752
    %v1375 = vpop.permute.xlu0 %1374
    %1377 = vset.pattern.permute.xlu0 3
    %1378 = vperm.xlu0 %1377, %v753
    %v1379 = vpop.permute.xlu0 %1378
    %1381 = vset.pattern.permute.xlu0 3
    %1382 = vperm.xlu0 %1381, %v754
    %v1383 = vpop.permute.xlu0 %1382
    %1385 = vset.pattern.permute.xlu0 3
    %1386 = vperm.xlu0 %1385, %v755
    %v1387 = vpop.permute.xlu0 %1386
    %1389 = vset.pattern.permute.xlu0 3
    %1390 = vperm.xlu0 %1389, %v756
    %v1391 = vpop.permute.xlu0 %1390
    %1393 = vset.pattern.permute.xlu0 3
    %1394 = vperm.xlu0 %1393, %v757
    %v1395 = vpop.permute.xlu0 %1394
    %1397 = vset.pattern.permute.xlu0 3
    %1398 = vperm.xlu0 %1397, %v758
    %v1399 = vpop.permute.xlu0 %1398
    %1401 = vset.pattern.permute.xlu0 3
    %1402 = vperm.xlu0 %1401, %v759
    %v1403 = vpop.permute.xlu0 %1402
    %1405 = vset.pattern.permute.xlu0 3
    %1406 = vperm.xlu0 %1405, %v760
    %v1407 = vpop.permute.xlu0 %1406
    %v1409 = vmul.f32 %v1289, %v1315
    %v1410 = vmul.f32 %v1290, %v1319
    %v1411 = vmul.f32 %v1291, %v1323
    %v1412 = vmul.f32 %v1292, %v1327
    %v1413 = vmul.f32 %v1293, %v1331
    %v1414 = vmul.f32 %v1294, %v1335
    %v1415 = vmul.f32 %v1295, %v1339
    %v1416 = vmul.f32 %v1296, %v1343
    %v1417 = vmul.f32 %v1297, %v1347
    %v1418 = vmul.f32 %v1298, %v1351
    %v1419 = vmul.f32 %v1299, %v1355
    %v1420 = vmul.f32 %v1300, %v1359
    %v1421 = vmul.f32 %v1301, %v1363
    %v1422 = vmul.f32 %v1302, %v1367
    %v1423 = vmul.f32 %v1303, %v1371
    %v1424 = vmul.f32 %v1304, %v1375
    %v1425 = vmul.f32 %v1305, %v1379
    %v1426 = vmul.f32 %v1306, %v1383
    %v1427 = vmul.f32 %v1307, %v1387
    %v1428 = vmul.f32 %v1308, %v1391
    %v1429 = vmul.f32 %v1309, %v1395
    %v1430 = vmul.f32 %v1310, %v1399
    %v1431 = vmul.f32 %v1311, %v1403
    %v1432 = vmul.f32 %v1312, %v1407
    %v1433 = vpack.c.bf16 %v1409, %v1409
    %v1434 = vpack.c.bf16 %v1410, %v1410
    %v1435 = vpack.c.bf16 %v1411, %v1411
    %v1436 = vpack.c.bf16 %v1412, %v1412
    %v1437 = vpack.c.bf16 %v1413, %v1413
    %v1438 = vpack.c.bf16 %v1414, %v1414
    %v1439 = vpack.c.bf16 %v1415, %v1415
    %v1440 = vpack.c.bf16 %v1416, %v1416
    %v1441 = vpack.c.bf16 %v1417, %v1417
    %v1442 = vpack.c.bf16 %v1418, %v1418
    %v1443 = vpack.c.bf16 %v1419, %v1419
    %v1444 = vpack.c.bf16 %v1420, %v1420
    %v1445 = vpack.c.bf16 %v1421, %v1421
    %v1446 = vpack.c.bf16 %v1422, %v1422
    %v1447 = vpack.c.bf16 %v1423, %v1423
    %v1448 = vpack.c.bf16 %v1424, %v1424
    %v1449 = vpack.c.bf16 %v1425, %v1425
    %v1450 = vpack.c.bf16 %v1426, %v1426
    %v1451 = vpack.c.bf16 %v1427, %v1427
    %v1452 = vpack.c.bf16 %v1428, %v1428
    %v1453 = vpack.c.bf16 %v1429, %v1429
    %v1454 = vpack.c.bf16 %v1430, %v1430
    %v1455 = vpack.c.bf16 %v1431, %v1431
    %v1456 = vpack.c.bf16 %v1432, %v1432
    %v1457 = vld [vmem:[#allocation2 + $0x10] sm:$0xff]
    %v1458 = vld [vmem:[#allocation2 + $0x18] sm:$0xff]
    %v1459 = vld [vmem:[#allocation2 + $0x20] sm:$0xff]
    %v1460 = vld [vmem:[#allocation2 + $0x28] sm:$0xff]
    %v1461 = vld [vmem:[#allocation2 + $0x30] sm:$0xff]
    %v1462 = vld [vmem:[#allocation2 + $0x38] sm:$0xff]
    %v1463 = vld [vmem:[#allocation2 + $0x40] sm:$0xff]
    %v1464 = vld [vmem:[#allocation2 + $0x48] sm:$0xff]
    %v1465 = vld [vmem:[#allocation2 + $0x50] sm:$0xff]
    %v1466 = vld [vmem:[#allocation2 + $0x58] sm:$0xff]
    %v1467 = vld [vmem:[#allocation2 + $0x60] sm:$0xff]
    %v1468 = vld [vmem:[#allocation2 + $0x68] sm:$0xff]
    %v1469 = vld [vmem:[#allocation2 + $0x70] sm:$0xff]
    %v1470 = vld [vmem:[#allocation2 + $0x78] sm:$0xff]
    %v1471 = vld [vmem:[#allocation2 + $0x80] sm:$0xff]
    %v1472 = vld [vmem:[#allocation2 + $0x88] sm:$0xff]
    %v1473 = vld [vmem:[#allocation2 + $0x90] sm:$0xff]
    %v1474 = vld [vmem:[#allocation2 + $0x98] sm:$0xff]
    %v1475 = vld [vmem:[#allocation2 + $0xa0] sm:$0xff]
    %v1476 = vld [vmem:[#allocation2 + $0xa8] sm:$0xff]
    %v1477 = vld [vmem:[#allocation2 + $0xb0] sm:$0xff]
    %v1478 = vld [vmem:[#allocation2 + $0xb8] sm:$0xff]
    %v1479 = vld [vmem:[#allocation2 + $0xc0] sm:$0xff]
    %v1480 = vld [vmem:[#allocation2 + $0xc8] sm:$0xff]
    %1481 = vset.pattern.permute.xlu0 4
    %1482 = vperm.xlu0 %1481, %v737
    %v1483 = vpop.permute.xlu0 %1482
    %1485 = vset.pattern.permute.xlu0 4
    %1486 = vperm.xlu0 %1485, %v738
    %v1487 = vpop.permute.xlu0 %1486
    %1489 = vset.pattern.permute.xlu0 4
    %1490 = vperm.xlu0 %1489, %v739
    %v1491 = vpop.permute.xlu0 %1490
    %1493 = vset.pattern.permute.xlu0 4
    %1494 = vperm.xlu0 %1493, %v740
    %v1495 = vpop.permute.xlu0 %1494
    %1497 = vset.pattern.permute.xlu0 4
    %1498 = vperm.xlu0 %1497, %v741
    %v1499 = vpop.permute.xlu0 %1498
    %1501 = vset.pattern.permute.xlu0 4
    %1502 = vperm.xlu0 %1501, %v742
    %v1503 = vpop.permute.xlu0 %1502
    %1505 = vset.pattern.permute.xlu0 4
    %1506 = vperm.xlu0 %1505, %v743
    %v1507 = vpop.permute.xlu0 %1506
    %1509 = vset.pattern.permute.xlu0 4
    %1510 = vperm.xlu0 %1509, %v744
    %v1511 = vpop.permute.xlu0 %1510
    %1513 = vset.pattern.permute.xlu0 4
    %1514 = vperm.xlu0 %1513, %v745
    %v1515 = vpop.permute.xlu0 %1514
    %1517 = vset.pattern.permute.xlu0 4
    %1518 = vperm.xlu0 %1517, %v746
    %v1519 = vpop.permute.xlu0 %1518
    %1521 = vset.pattern.permute.xlu0 4
    %1522 = vperm.xlu0 %1521, %v747
    %v1523 = vpop.permute.xlu0 %1522
    %1525 = vset.pattern.permute.xlu0 4
    %1526 = vperm.xlu0 %1525, %v748
    %v1527 = vpop.permute.xlu0 %1526
    %1529 = vset.pattern.permute.xlu0 4
    %1530 = vperm.xlu0 %1529, %v749
    %v1531 = vpop.permute.xlu0 %1530
    %1533 = vset.pattern.permute.xlu0 4
    %1534 = vperm.xlu0 %1533, %v750
    %v1535 = vpop.permute.xlu0 %1534
    %1537 = vset.pattern.permute.xlu0 4
    %1538 = vperm.xlu0 %1537, %v751
    %v1539 = vpop.permute.xlu0 %1538
    %1541 = vset.pattern.permute.xlu0 4
    %1542 = vperm.xlu0 %1541, %v752
    %v1543 = vpop.permute.xlu0 %1542
    %1545 = vset.pattern.permute.xlu0 4
    %1546 = vperm.xlu0 %1545, %v753
    %v1547 = vpop.permute.xlu0 %1546
    %1549 = vset.pattern.permute.xlu0 4
    %1550 = vperm.xlu0 %1549, %v754
    %v1551 = vpop.permute.xlu0 %1550
    %1553 = vset.pattern.permute.xlu0 4
    %1554 = vperm.xlu0 %1553, %v755
    %v1555 = vpop.permute.xlu0 %1554
    %1557 = vset.pattern.permute.xlu0 4
    %1558 = vperm.xlu0 %1557, %v756
    %v1559 = vpop.permute.xlu0 %1558
    %1561 = vset.pattern.permute.xlu0 4
    %1562 = vperm.xlu0 %1561, %v757
    %v1563 = vpop.permute.xlu0 %1562
    %1565 = vset.pattern.permute.xlu0 4
    %1566 = vperm.xlu0 %1565, %v758
    %v1567 = vpop.permute.xlu0 %1566
    %1569 = vset.pattern.permute.xlu0 4
    %1570 = vperm.xlu0 %1569, %v759
    %v1571 = vpop.permute.xlu0 %1570
    %1573 = vset.pattern.permute.xlu0 4
    %1574 = vperm.xlu0 %1573, %v760
    %v1575 = vpop.permute.xlu0 %1574
    %v1577 = vmul.f32 %v1457, %v1483
    %v1578 = vmul.f32 %v1458, %v1487
    %v1579 = vmul.f32 %v1459, %v1491
    %v1580 = vmul.f32 %v1460, %v1495
    %v1581 = vmul.f32 %v1461, %v1499
    %v1582 = vmul.f32 %v1462, %v1503
    %v1583 = vmul.f32 %v1463, %v1507
    %v1584 = vmul.f32 %v1464, %v1511
    %v1585 = vmul.f32 %v1465, %v1515
    %v1586 = vmul.f32 %v1466, %v1519
    %v1587 = vmul.f32 %v1467, %v1523
    %v1588 = vmul.f32 %v1468, %v1527
    %v1589 = vmul.f32 %v1469, %v1531
    %v1590 = vmul.f32 %v1470, %v1535
    %v1591 = vmul.f32 %v1471, %v1539
    %v1592 = vmul.f32 %v1472, %v1543
    %v1593 = vmul.f32 %v1473, %v1547
    %v1594 = vmul.f32 %v1474, %v1551
    %v1595 = vmul.f32 %v1475, %v1555
    %v1596 = vmul.f32 %v1476, %v1559
    %v1597 = vmul.f32 %v1477, %v1563
    %v1598 = vmul.f32 %v1478, %v1567
    %v1599 = vmul.f32 %v1479, %v1571
    %v1600 = vmul.f32 %v1480, %v1575
    %v1601 = vpack.c.bf16 %v1577, %v1577
    %v1602 = vpack.c.bf16 %v1578, %v1578
    %v1603 = vpack.c.bf16 %v1579, %v1579
    %v1604 = vpack.c.bf16 %v1580, %v1580
    %v1605 = vpack.c.bf16 %v1581, %v1581
    %v1606 = vpack.c.bf16 %v1582, %v1582
    %v1607 = vpack.c.bf16 %v1583, %v1583
    %v1608 = vpack.c.bf16 %v1584, %v1584
    %v1609 = vpack.c.bf16 %v1585, %v1585
    %v1610 = vpack.c.bf16 %v1586, %v1586
    %v1611 = vpack.c.bf16 %v1587, %v1587
    %v1612 = vpack.c.bf16 %v1588, %v1588
    %v1613 = vpack.c.bf16 %v1589, %v1589
    %v1614 = vpack.c.bf16 %v1590, %v1590
    %v1615 = vpack.c.bf16 %v1591, %v1591
    %v1616 = vpack.c.bf16 %v1592, %v1592
    %v1617 = vpack.c.bf16 %v1593, %v1593
    %v1618 = vpack.c.bf16 %v1594, %v1594
    %v1619 = vpack.c.bf16 %v1595, %v1595
    %v1620 = vpack.c.bf16 %v1596, %v1596
    %v1621 = vpack.c.bf16 %v1597, %v1597
    %v1622 = vpack.c.bf16 %v1598, %v1598
    %v1623 = vpack.c.bf16 %v1599, %v1599
    %v1624 = vpack.c.bf16 %v1600, %v1600
    %v1625 = vld [vmem:[#allocation2 + $0x11] sm:$0xff]
    %v1626 = vld [vmem:[#allocation2 + $0x19] sm:$0xff]
    %v1627 = vld [vmem:[#allocation2 + $0x21] sm:$0xff]
    %v1628 = vld [vmem:[#allocation2 + $0x29] sm:$0xff]
    %v1629 = vld [vmem:[#allocation2 + $0x31] sm:$0xff]
    %v1630 = vld [vmem:[#allocation2 + $0x39] sm:$0xff]
    %v1631 = vld [vmem:[#allocation2 + $0x41] sm:$0xff]
    %v1632 = vld [vmem:[#allocation2 + $0x49] sm:$0xff]
    %v1633 = vld [vmem:[#allocation2 + $0x51] sm:$0xff]
    %v1634 = vld [vmem:[#allocation2 + $0x59] sm:$0xff]
    %v1635 = vld [vmem:[#allocation2 + $0x61] sm:$0xff]
    %v1636 = vld [vmem:[#allocation2 + $0x69] sm:$0xff]
    %v1637 = vld [vmem:[#allocation2 + $0x71] sm:$0xff]
    %v1638 = vld [vmem:[#allocation2 + $0x79] sm:$0xff]
    %v1639 = vld [vmem:[#allocation2 + $0x81] sm:$0xff]
    %v1640 = vld [vmem:[#allocation2 + $0x89] sm:$0xff]
    %v1641 = vld [vmem:[#allocation2 + $0x91] sm:$0xff]
    %v1642 = vld [vmem:[#allocation2 + $0x99] sm:$0xff]
    %v1643 = vld [vmem:[#allocation2 + $0xa1] sm:$0xff]
    %v1644 = vld [vmem:[#allocation2 + $0xa9] sm:$0xff]
    %v1645 = vld [vmem:[#allocation2 + $0xb1] sm:$0xff]
    %v1646 = vld [vmem:[#allocation2 + $0xb9] sm:$0xff]
    %v1647 = vld [vmem:[#allocation2 + $0xc1] sm:$0xff]
    %v1648 = vld [vmem:[#allocation2 + $0xc9] sm:$0xff]
    %1649 = vset.pattern.permute.xlu0 5
    %1650 = vperm.xlu0 %1649, %v737
    %v1651 = vpop.permute.xlu0 %1650
    %1653 = vset.pattern.permute.xlu0 5
    %1654 = vperm.xlu0 %1653, %v738
    %v1655 = vpop.permute.xlu0 %1654
    %1657 = vset.pattern.permute.xlu0 5
    %1658 = vperm.xlu0 %1657, %v739
    %v1659 = vpop.permute.xlu0 %1658
    %1661 = vset.pattern.permute.xlu0 5
    %1662 = vperm.xlu0 %1661, %v740
    %v1663 = vpop.permute.xlu0 %1662
    %1665 = vset.pattern.permute.xlu0 5
    %1666 = vperm.xlu0 %1665, %v741
    %v1667 = vpop.permute.xlu0 %1666
    %1669 = vset.pattern.permute.xlu0 5
    %1670 = vperm.xlu0 %1669, %v742
    %v1671 = vpop.permute.xlu0 %1670
    %1673 = vset.pattern.permute.xlu0 5
    %1674 = vperm.xlu0 %1673, %v743
    %v1675 = vpop.permute.xlu0 %1674
    %1677 = vset.pattern.permute.xlu0 5
    %1678 = vperm.xlu0 %1677, %v744
    %v1679 = vpop.permute.xlu0 %1678
    %1681 = vset.pattern.permute.xlu0 5
    %1682 = vperm.xlu0 %1681, %v745
    %v1683 = vpop.permute.xlu0 %1682
    %1685 = vset.pattern.permute.xlu0 5
    %1686 = vperm.xlu0 %1685, %v746
    %v1687 = vpop.permute.xlu0 %1686
    %1689 = vset.pattern.permute.xlu0 5
    %1690 = vperm.xlu0 %1689, %v747
    %v1691 = vpop.permute.xlu0 %1690
    %1693 = vset.pattern.permute.xlu0 5
    %1694 = vperm.xlu0 %1693, %v748
    %v1695 = vpop.permute.xlu0 %1694
    %1697 = vset.pattern.permute.xlu0 5
    %1698 = vperm.xlu0 %1697, %v749
    %v1699 = vpop.permute.xlu0 %1698
    %1701 = vset.pattern.permute.xlu0 5
    %1702 = vperm.xlu0 %1701, %v750
    %v1703 = vpop.permute.xlu0 %1702
    %1705 = vset.pattern.permute.xlu0 5
    %1706 = vperm.xlu0 %1705, %v751
    %v1707 = vpop.permute.xlu0 %1706
    %1709 = vset.pattern.permute.xlu0 5
    %1710 = vperm.xlu0 %1709, %v752
    %v1711 = vpop.permute.xlu0 %1710
    %1713 = vset.pattern.permute.xlu0 5
    %1714 = vperm.xlu0 %1713, %v753
    %v1715 = vpop.permute.xlu0 %1714
    %1717 = vset.pattern.permute.xlu0 5
    %1718 = vperm.xlu0 %1717, %v754
    %v1719 = vpop.permute.xlu0 %1718
    %1721 = vset.pattern.permute.xlu0 5
    %1722 = vperm.xlu0 %1721, %v755
    %v1723 = vpop.permute.xlu0 %1722
    %1725 = vset.pattern.permute.xlu0 5
    %1726 = vperm.xlu0 %1725, %v756
    %v1727 = vpop.permute.xlu0 %1726
    %1729 = vset.pattern.permute.xlu0 5
    %1730 = vperm.xlu0 %1729, %v757
    %v1731 = vpop.permute.xlu0 %1730
    %1733 = vset.pattern.permute.xlu0 5
    %1734 = vperm.xlu0 %1733, %v758
    %v1735 = vpop.permute.xlu0 %1734
    %1737 = vset.pattern.permute.xlu0 5
    %1738 = vperm.xlu0 %1737, %v759
    %v1739 = vpop.permute.xlu0 %1738
    %1741 = vset.pattern.permute.xlu0 5
    %1742 = vperm.xlu0 %1741, %v760
    %v1743 = vpop.permute.xlu0 %1742
    %v1745 = vmul.f32 %v1625, %v1651
    %v1746 = vmul.f32 %v1626, %v1655
    %v1747 = vmul.f32 %v1627, %v1659
    %v1748 = vmul.f32 %v1628, %v1663
    %v1749 = vmul.f32 %v1629, %v1667
    %v1750 = vmul.f32 %v1630, %v1671
    %v1751 = vmul.f32 %v1631, %v1675
    %v1752 = vmul.f32 %v1632, %v1679
    %v1753 = vmul.f32 %v1633, %v1683
    %v1754 = vmul.f32 %v1634, %v1687
    %v1755 = vmul.f32 %v1635, %v1691
    %v1756 = vmul.f32 %v1636, %v1695
    %v1757 = vmul.f32 %v1637, %v1699
    %v1758 = vmul.f32 %v1638, %v1703
    %v1759 = vmul.f32 %v1639, %v1707
    %v1760 = vmul.f32 %v1640, %v1711
    %v1761 = vmul.f32 %v1641, %v1715
    %v1762 = vmul.f32 %v1642, %v1719
    %v1763 = vmul.f32 %v1643, %v1723
    %v1764 = vmul.f32 %v1644, %v1727
    %v1765 = vmul.f32 %v1645, %v1731
    %v1766 = vmul.f32 %v1646, %v1735
    %v1767 = vmul.f32 %v1647, %v1739
    %v1768 = vmul.f32 %v1648, %v1743
    %v1769 = vpack.c.bf16 %v1745, %v1745
    %v1770 = vpack.c.bf16 %v1746, %v1746
    %v1771 = vpack.c.bf16 %v1747, %v1747
    %v1772 = vpack.c.bf16 %v1748, %v1748
    %v1773 = vpack.c.bf16 %v1749, %v1749
    %v1774 = vpack.c.bf16 %v1750, %v1750
    %v1775 = vpack.c.bf16 %v1751, %v1751
    %v1776 = vpack.c.bf16 %v1752, %v1752
    %v1777 = vpack.c.bf16 %v1753, %v1753
    %v1778 = vpack.c.bf16 %v1754, %v1754
    %v1779 = vpack.c.bf16 %v1755, %v1755
    %v1780 = vpack.c.bf16 %v1756, %v1756
    %v1781 = vpack.c.bf16 %v1757, %v1757
    %v1782 = vpack.c.bf16 %v1758, %v1758
    %v1783 = vpack.c.bf16 %v1759, %v1759
    %v1784 = vpack.c.bf16 %v1760, %v1760
    %v1785 = vpack.c.bf16 %v1761, %v1761
    %v1786 = vpack.c.bf16 %v1762, %v1762
    %v1787 = vpack.c.bf16 %v1763, %v1763
    %v1788 = vpack.c.bf16 %v1764, %v1764
    %v1789 = vpack.c.bf16 %v1765, %v1765
    %v1790 = vpack.c.bf16 %v1766, %v1766
    %v1791 = vpack.c.bf16 %v1767, %v1767
    %v1792 = vpack.c.bf16 %v1768, %v1768
    %v1793 = vld [vmem:[#allocation2 + $0x1b] sm:$0xff]
    %v1794 = vld [vmem:[#allocation2 + $0x23] sm:$0xff]
    %v1795 = vld [vmem:[#allocation2 + $0x2b] sm:$0xff]
    %v1796 = vld [vmem:[#allocation2 + $0x33] sm:$0xff]
    %v1797 = vld [vmem:[#allocation2 + $0x3b] sm:$0xff]
    %v1798 = vld [vmem:[#allocation2 + $0x43] sm:$0xff]
    %v1799 = vld [vmem:[#allocation2 + $0x4b] sm:$0xff]
    %v1800 = vld [vmem:[#allocation2 + $0x53] sm:$0xff]
    %v1801 = vld [vmem:[#allocation2 + $0x5b] sm:$0xff]
    %v1802 = vld [vmem:[#allocation2 + $0x63] sm:$0xff]
    %v1803 = vld [vmem:[#allocation2 + $0x6b] sm:$0xff]
    %v1804 = vld [vmem:[#allocation2 + $0x73] sm:$0xff]
    %v1805 = vld [vmem:[#allocation2 + $0x7b] sm:$0xff]
    %v1806 = vld [vmem:[#allocation2 + $0x83] sm:$0xff]
    %v1807 = vld [vmem:[#allocation2 + $0x8b] sm:$0xff]
    %v1808 = vld [vmem:[#allocation2 + $0x93] sm:$0xff]
    %v1809 = vld [vmem:[#allocation2 + $0x9b] sm:$0xff]
    %v1810 = vld [vmem:[#allocation2 + $0xa3] sm:$0xff]
    %v1811 = vld [vmem:[#allocation2 + $0xab] sm:$0xff]
    %v1812 = vld [vmem:[#allocation2 + $0xb3] sm:$0xff]
    %v1813 = vld [vmem:[#allocation2 + $0xbb] sm:$0xff]
    %v1814 = vld [vmem:[#allocation2 + $0xc3] sm:$0xff]
    %v1815 = vld [vmem:[#allocation2 + $0xcb] sm:$0xff]
    %v1816 = vld [vmem:[#allocation2 + $0xd3] sm:$0xff]
    %1817 = vset.pattern.permute.xlu0 6
    %1818 = vperm.xlu0 %1817, %v737
    %v1819 = vpop.permute.xlu0 %1818
    %1821 = vset.pattern.permute.xlu0 6
    %1822 = vperm.xlu0 %1821, %v738
    %v1823 = vpop.permute.xlu0 %1822
    %1825 = vset.pattern.permute.xlu0 6
    %1826 = vperm.xlu0 %1825, %v739
    %v1827 = vpop.permute.xlu0 %1826
    %1829 = vset.pattern.permute.xlu0 6
    %1830 = vperm.xlu0 %1829, %v740
    %v1831 = vpop.permute.xlu0 %1830
    %1833 = vset.pattern.permute.xlu0 6
    %1834 = vperm.xlu0 %1833, %v741
    %v1835 = vpop.permute.xlu0 %1834
    %1837 = vset.pattern.permute.xlu0 6
    %1838 = vperm.xlu0 %1837, %v742
    %v1839 = vpop.permute.xlu0 %1838
    %1841 = vset.pattern.permute.xlu0 6
    %1842 = vperm.xlu0 %1841, %v743
    %v1843 = vpop.permute.xlu0 %1842
    %1845 = vset.pattern.permute.xlu0 6
    %1846 = vperm.xlu0 %1845, %v744
    %v1847 = vpop.permute.xlu0 %1846
    %1849 = vset.pattern.permute.xlu0 6
    %1850 = vperm.xlu0 %1849, %v745
    %v1851 = vpop.permute.xlu0 %1850
    %1853 = vset.pattern.permute.xlu0 6
    %1854 = vperm.xlu0 %1853, %v746
    %v1855 = vpop.permute.xlu0 %1854
    %1857 = vset.pattern.permute.xlu0 6
    %1858 = vperm.xlu0 %1857, %v747
    %v1859 = vpop.permute.xlu0 %1858
    %1861 = vset.pattern.permute.xlu0 6
    %1862 = vperm.xlu0 %1861, %v748
    %v1863 = vpop.permute.xlu0 %1862
    %1865 = vset.pattern.permute.xlu0 6
    %1866 = vperm.xlu0 %1865, %v749
    %v1867 = vpop.permute.xlu0 %1866
    %1869 = vset.pattern.permute.xlu0 6
    %1870 = vperm.xlu0 %1869, %v750
    %v1871 = vpop.permute.xlu0 %1870
    %1873 = vset.pattern.permute.xlu0 6
    %1874 = vperm.xlu0 %1873, %v751
    %v1875 = vpop.permute.xlu0 %1874
    %1877 = vset.pattern.permute.xlu0 6
    %1878 = vperm.xlu0 %1877, %v752
    %v1879 = vpop.permute.xlu0 %1878
    %1881 = vset.pattern.permute.xlu0 6
    %1882 = vperm.xlu0 %1881, %v753
    %v1883 = vpop.permute.xlu0 %1882
    %1885 = vset.pattern.permute.xlu0 6
    %1886 = vperm.xlu0 %1885, %v754
    %v1887 = vpop.permute.xlu0 %1886
    %1889 = vset.pattern.permute.xlu0 6
    %1890 = vperm.xlu0 %1889, %v755
    %v1891 = vpop.permute.xlu0 %1890
    %1893 = vset.pattern.permute.xlu0 6
    %1894 = vperm.xlu0 %1893, %v756
    %v1895 = vpop.permute.xlu0 %1894
    %1897 = vset.pattern.permute.xlu0 6
    %1898 = vperm.xlu0 %1897, %v757
    %v1899 = vpop.permute.xlu0 %1898
    %1901 = vset.pattern.permute.xlu0 6
    %1902 = vperm.xlu0 %1901, %v758
    %v1903 = vpop.permute.xlu0 %1902
    %1905 = vset.pattern.permute.xlu0 6
    %1906 = vperm.xlu0 %1905, %v759
    %v1907 = vpop.permute.xlu0 %1906
    %1909 = vset.pattern.permute.xlu0 6
    %1910 = vperm.xlu0 %1909, %v760
    %v1911 = vpop.permute.xlu0 %1910
    %v1913 = vmul.f32 %v1793, %v1819
    %v1914 = vmul.f32 %v1794, %v1823
    %v1915 = vmul.f32 %v1795, %v1827
    %v1916 = vmul.f32 %v1796, %v1831
    %v1917 = vmul.f32 %v1797, %v1835
    %v1918 = vmul.f32 %v1798, %v1839
    %v1919 = vmul.f32 %v1799, %v1843
    %v1920 = vmul.f32 %v1800, %v1847
    %v1921 = vmul.f32 %v1801, %v1851
    %v1922 = vmul.f32 %v1802, %v1855
    %v1923 = vmul.f32 %v1803, %v1859
    %v1924 = vmul.f32 %v1804, %v1863
    %v1925 = vmul.f32 %v1805, %v1867
    %v1926 = vmul.f32 %v1806, %v1871
    %v1927 = vmul.f32 %v1807, %v1875
    %v1928 = vmul.f32 %v1808, %v1879
    %v1929 = vmul.f32 %v1809, %v1883
    %v1930 = vmul.f32 %v1810, %v1887
    %v1931 = vmul.f32 %v1811, %v1891
    %v1932 = vmul.f32 %v1812, %v1895
    %v1933 = vmul.f32 %v1813, %v1899
    %v1934 = vmul.f32 %v1814, %v1903
    %v1935 = vmul.f32 %v1815, %v1907
    %v1936 = vmul.f32 %v1816, %v1911
    %v1937 = vpack.c.bf16 %v1913, %v1913
    %v1938 = vpack.c.bf16 %v1914, %v1914
    %v1939 = vpack.c.bf16 %v1915, %v1915
    %v1940 = vpack.c.bf16 %v1916, %v1916
    %v1941 = vpack.c.bf16 %v1917, %v1917
    %v1942 = vpack.c.bf16 %v1918, %v1918
    %v1943 = vpack.c.bf16 %v1919, %v1919
    %v1944 = vpack.c.bf16 %v1920, %v1920
    %v1945 = vpack.c.bf16 %v1921, %v1921
    %v1946 = vpack.c.bf16 %v1922, %v1922
    %v1947 = vpack.c.bf16 %v1923, %v1923
    %v1948 = vpack.c.bf16 %v1924, %v1924
    %v1949 = vpack.c.bf16 %v1925, %v1925
    %v1950 = vpack.c.bf16 %v1926, %v1926
    %v1951 = vpack.c.bf16 %v1927, %v1927
    %v1952 = vpack.c.bf16 %v1928, %v1928
    %v1953 = vpack.c.bf16 %v1929, %v1929
    %v1954 = vpack.c.bf16 %v1930, %v1930
    %v1955 = vpack.c.bf16 %v1931, %v1931
    %v1956 = vpack.c.bf16 %v1932, %v1932
    %v1957 = vpack.c.bf16 %v1933, %v1933
    %v1958 = vpack.c.bf16 %v1934, %v1934
    %v1959 = vpack.c.bf16 %v1935, %v1935
    %v1960 = vpack.c.bf16 %v1936, %v1936
    %v1961 = vld [vmem:[#allocation2 + $0x1c] sm:$0xff]
    %v1962 = vld [vmem:[#allocation2 + $0x24] sm:$0xff]
    %v1963 = vld [vmem:[#allocation2 + $0x2c] sm:$0xff]
    %v1964 = vld [vmem:[#allocation2 + $0x34] sm:$0xff]
    %v1965 = vld [vmem:[#allocation2 + $0x3c] sm:$0xff]
    %v1966 = vld [vmem:[#allocation2 + $0x44] sm:$0xff]
    %v1967 = vld [vmem:[#allocation2 + $0x4c] sm:$0xff]
    %v1968 = vld [vmem:[#allocation2 + $0x54] sm:$0xff]
    %v1969 = vld [vmem:[#allocation2 + $0x5c] sm:$0xff]
    %v1970 = vld [vmem:[#allocation2 + $0x64] sm:$0xff]
    %v1971 = vld [vmem:[#allocation2 + $0x6c] sm:$0xff]
    %v1972 = vld [vmem:[#allocation2 + $0x74] sm:$0xff]
    %v1973 = vld [vmem:[#allocation2 + $0x7c] sm:$0xff]
    %v1974 = vld [vmem:[#allocation2 + $0x84] sm:$0xff]
    %v1975 = vld [vmem:[#allocation2 + $0x8c] sm:$0xff]
    %v1976 = vld [vmem:[#allocation2 + $0x94] sm:$0xff]
    %v1977 = vld [vmem:[#allocation2 + $0x9c] sm:$0xff]
    %v1978 = vld [vmem:[#allocation2 + $0xa4] sm:$0xff]
    %v1979 = vld [vmem:[#allocation2 + $0xac] sm:$0xff]
    %v1980 = vld [vmem:[#allocation2 + $0xb4] sm:$0xff]
    %v1981 = vld [vmem:[#allocation2 + $0xbc] sm:$0xff]
    %v1982 = vld [vmem:[#allocation2 + $0xc4] sm:$0xff]
    %v1983 = vld [vmem:[#allocation2 + $0xcc] sm:$0xff]
    %v1984 = vld [vmem:[#allocation2 + $0xd4] sm:$0xff]
    %1985 = vset.pattern.permute.xlu0 7
    %1986 = vperm.xlu0 %1985, %v737
    %v1987 = vpop.permute.xlu0 %1986
    %1989 = vset.pattern.permute.xlu0 7
    %1990 = vperm.xlu0 %1989, %v738
    %v1991 = vpop.permute.xlu0 %1990
    %1993 = vset.pattern.permute.xlu0 7
    %1994 = vperm.xlu0 %1993, %v739
    %v1995 = vpop.permute.xlu0 %1994
    %1997 = vset.pattern.permute.xlu0 7
    %1998 = vperm.xlu0 %1997, %v740
    %v1999 = vpop.permute.xlu0 %1998
    %2001 = vset.pattern.permute.xlu0 7
    %2002 = vperm.xlu0 %2001, %v741
    %v2003 = vpop.permute.xlu0 %2002
    %2005 = vset.pattern.permute.xlu0 7
    %2006 = vperm.xlu0 %2005, %v742
    %v2007 = vpop.permute.xlu0 %2006
    %2009 = vset.pattern.permute.xlu0 7
    %2010 = vperm.xlu0 %2009, %v743
    %v2011 = vpop.permute.xlu0 %2010
    %2013 = vset.pattern.permute.xlu0 7
    %2014 = vperm.xlu0 %2013, %v744
    %v2015 = vpop.permute.xlu0 %2014
    %2017 = vset.pattern.permute.xlu0 7
    %2018 = vperm.xlu0 %2017, %v745
    %v2019 = vpop.permute.xlu0 %2018
    %2021 = vset.pattern.permute.xlu0 7
    %2022 = vperm.xlu0 %2021, %v746
    %v2023 = vpop.permute.xlu0 %2022
    %2025 = vset.pattern.permute.xlu0 7
    %2026 = vperm.xlu0 %2025, %v747
    %v2027 = vpop.permute.xlu0 %2026
    %2029 = vset.pattern.permute.xlu0 7
    %2030 = vperm.xlu0 %2029, %v748
    %v2031 = vpop.permute.xlu0 %2030
    %2033 = vset.pattern.permute.xlu0 7
    %2034 = vperm.xlu0 %2033, %v749
    %v2035 = vpop.permute.xlu0 %2034
    %2037 = vset.pattern.permute.xlu0 7
    %2038 = vperm.xlu0 %2037, %v750
    %v2039 = vpop.permute.xlu0 %2038
    %2041 = vset.pattern.permute.xlu0 7
    %2042 = vperm.xlu0 %2041, %v751
    %v2043 = vpop.permute.xlu0 %2042
    %2045 = vset.pattern.permute.xlu0 7
    %2046 = vperm.xlu0 %2045, %v752
    %v2047 = vpop.permute.xlu0 %2046
    %2049 = vset.pattern.permute.xlu0 7
    %2050 = vperm.xlu0 %2049, %v753
    %v2051 = vpop.permute.xlu0 %2050
    %2053 = vset.pattern.permute.xlu0 7
    %2054 = vperm.xlu0 %2053, %v754
    %v2055 = vpop.permute.xlu0 %2054
    %2057 = vset.pattern.permute.xlu0 7
    %2058 = vperm.xlu0 %2057, %v755
    %v2059 = vpop.permute.xlu0 %2058
    %2061 = vset.pattern.permute.xlu0 7
    %2062 = vperm.xlu0 %2061, %v756
    %v2063 = vpop.permute.xlu0 %2062
    %2065 = vset.pattern.permute.xlu0 7
    %2066 = vperm.xlu0 %2065, %v757
    %v2067 = vpop.permute.xlu0 %2066
    %2069 = vset.pattern.permute.xlu0 7
    %2070 = vperm.xlu0 %2069, %v758
    %v2071 = vpop.permute.xlu0 %2070
    %2073 = vset.pattern.permute.xlu0 7
    %2074 = vperm.xlu0 %2073, %v759
    %v2075 = vpop.permute.xlu0 %2074
    %2077 = vset.pattern.permute.xlu0 7
    %2078 = vperm.xlu0 %2077, %v760
    %v2079 = vpop.permute.xlu0 %2078
    %v2081 = vmul.f32 %v1961, %v1987
    %v2082 = vmul.f32 %v1962, %v1991
    %v2083 = vmul.f32 %v1963, %v1995
    %v2084 = vmul.f32 %v1964, %v1999
    %v2085 = vmul.f32 %v1965, %v2003
    %v2086 = vmul.f32 %v1966, %v2007
    %v2087 = vmul.f32 %v1967, %v2011
    %v2088 = vmul.f32 %v1968, %v2015
    %v2089 = vmul.f32 %v1969, %v2019
    %v2090 = vmul.f32 %v1970, %v2023
    %v2091 = vmul.f32 %v1971, %v2027
    %v2092 = vmul.f32 %v1972, %v2031
    %v2093 = vmul.f32 %v1973, %v2035
    %v2094 = vmul.f32 %v1974, %v2039
    %v2095 = vmul.f32 %v1975, %v2043
    %v2096 = vmul.f32 %v1976, %v2047
    %v2097 = vmul.f32 %v1977, %v2051
    %v2098 = vmul.f32 %v1978, %v2055
    %v2099 = vmul.f32 %v1979, %v2059
    %v2100 = vmul.f32 %v1980, %v2063
    %v2101 = vmul.f32 %v1981, %v2067
    %v2102 = vmul.f32 %v1982, %v2071
    %v2103 = vmul.f32 %v1983, %v2075
    %v2104 = vmul.f32 %v1984, %v2079
    %v2105 = vpack.c.bf16 %v2081, %v2081
    %v2106 = vpack.c.bf16 %v2082, %v2082
    %v2107 = vpack.c.bf16 %v2083, %v2083
    %v2108 = vpack.c.bf16 %v2084, %v2084
    %v2109 = vpack.c.bf16 %v2085, %v2085
    %v2110 = vpack.c.bf16 %v2086, %v2086
    %v2111 = vpack.c.bf16 %v2087, %v2087
    %v2112 = vpack.c.bf16 %v2088, %v2088
    %v2113 = vpack.c.bf16 %v2089, %v2089
    %v2114 = vpack.c.bf16 %v2090, %v2090
    %v2115 = vpack.c.bf16 %v2091, %v2091
    %v2116 = vpack.c.bf16 %v2092, %v2092
    %v2117 = vpack.c.bf16 %v2093, %v2093
    %v2118 = vpack.c.bf16 %v2094, %v2094
    %v2119 = vpack.c.bf16 %v2095, %v2095
    %v2120 = vpack.c.bf16 %v2096, %v2096
    %v2121 = vpack.c.bf16 %v2097, %v2097
    %v2122 = vpack.c.bf16 %v2098, %v2098
    %v2123 = vpack.c.bf16 %v2099, %v2099
    %v2124 = vpack.c.bf16 %v2100, %v2100
    %v2125 = vpack.c.bf16 %v2101, %v2101
    %v2126 = vpack.c.bf16 %v2102, %v2102
    %v2127 = vpack.c.bf16 %v2103, %v2103
    %v2128 = vpack.c.bf16 %v2104, %v2104
    %v2129 = vld [vmem:[#allocation2 + $0x1d] sm:$0xff]
    %v2130 = vld [vmem:[#allocation2 + $0x25] sm:$0xff]
    %v2131 = vld [vmem:[#allocation2 + $0x2d] sm:$0xff]
    %v2132 = vld [vmem:[#allocation2 + $0x35] sm:$0xff]
    %v2133 = vld [vmem:[#allocation2 + $0x3d] sm:$0xff]
    %v2134 = vld [vmem:[#allocation2 + $0x45] sm:$0xff]
    %v2135 = vld [vmem:[#allocation2 + $0x4d] sm:$0xff]
    %v2136 = vld [vmem:[#allocation2 + $0x55] sm:$0xff]
    %v2137 = vld [vmem:[#allocation2 + $0x5d] sm:$0xff]
    %v2138 = vld [vmem:[#allocation2 + $0x65] sm:$0xff]
    %v2139 = vld [vmem:[#allocation2 + $0x6d] sm:$0xff]
    %v2140 = vld [vmem:[#allocation2 + $0x75] sm:$0xff]
    %v2141 = vld [vmem:[#allocation2 + $0x7d] sm:$0xff]
    %v2142 = vld [vmem:[#allocation2 + $0x85] sm:$0xff]
    %v2143 = vld [vmem:[#allocation2 + $0x8d] sm:$0xff]
    %v2144 = vld [vmem:[#allocation2 + $0x95] sm:$0xff]
    %v2145 = vld [vmem:[#allocation2 + $0x9d] sm:$0xff]
    %v2146 = vld [vmem:[#allocation2 + $0xa5] sm:$0xff]
    %v2147 = vld [vmem:[#allocation2 + $0xad] sm:$0xff]
    %v2148 = vld [vmem:[#allocation2 + $0xb5] sm:$0xff]
    %v2149 = vld [vmem:[#allocation2 + $0xbd] sm:$0xff]
    %v2150 = vld [vmem:[#allocation2 + $0xc5] sm:$0xff]
    %v2151 = vld [vmem:[#allocation2 + $0xcd] sm:$0xff]
    %v2152 = vld [vmem:[#allocation2 + $0xd5] sm:$0xff]
    %2153 = vset.pattern.permute.xlu0 8
    %2154 = vperm.xlu0 %2153, %v737
    %v2155 = vpop.permute.xlu0 %2154
    %2157 = vset.pattern.permute.xlu0 8
    %2158 = vperm.xlu0 %2157, %v738
    %v2159 = vpop.permute.xlu0 %2158
    %2161 = vset.pattern.permute.xlu0 8
    %2162 = vperm.xlu0 %2161, %v739
    %v2163 = vpop.permute.xlu0 %2162
    %2165 = vset.pattern.permute.xlu0 8
    %2166 = vperm.xlu0 %2165, %v740
    %v2167 = vpop.permute.xlu0 %2166
    %2169 = vset.pattern.permute.xlu0 8
    %2170 = vperm.xlu0 %2169, %v741
    %v2171 = vpop.permute.xlu0 %2170
    %2173 = vset.pattern.permute.xlu0 8
    %2174 = vperm.xlu0 %2173, %v742
    %v2175 = vpop.permute.xlu0 %2174
    %2177 = vset.pattern.permute.xlu0 8
    %2178 = vperm.xlu0 %2177, %v743
    %v2179 = vpop.permute.xlu0 %2178
    %2181 = vset.pattern.permute.xlu0 8
    %2182 = vperm.xlu0 %2181, %v744
    %v2183 = vpop.permute.xlu0 %2182
    %2185 = vset.pattern.permute.xlu0 8
    %2186 = vperm.xlu0 %2185, %v745
    %v2187 = vpop.permute.xlu0 %2186
    %2189 = vset.pattern.permute.xlu0 8
    %2190 = vperm.xlu0 %2189, %v746
    %v2191 = vpop.permute.xlu0 %2190
    %2193 = vset.pattern.permute.xlu0 8
    %2194 = vperm.xlu0 %2193, %v747
    %v2195 = vpop.permute.xlu0 %2194
    %2197 = vset.pattern.permute.xlu0 8
    %2198 = vperm.xlu0 %2197, %v748
    %v2199 = vpop.permute.xlu0 %2198
    %2201 = vset.pattern.permute.xlu0 8
    %2202 = vperm.xlu0 %2201, %v749
    %v2203 = vpop.permute.xlu0 %2202
    %2205 = vset.pattern.permute.xlu0 8
    %2206 = vperm.xlu0 %2205, %v750
    %v2207 = vpop.permute.xlu0 %2206
    %2209 = vset.pattern.permute.xlu0 8
    %2210 = vperm.xlu0 %2209, %v751
    %v2211 = vpop.permute.xlu0 %2210
    %2213 = vset.pattern.permute.xlu0 8
    %2214 = vperm.xlu0 %2213, %v752
    %v2215 = vpop.permute.xlu0 %2214
    %2217 = vset.pattern.permute.xlu0 8
    %2218 = vperm.xlu0 %2217, %v753
    %v2219 = vpop.permute.xlu0 %2218
    %2221 = vset.pattern.permute.xlu0 8
    %2222 = vperm.xlu0 %2221, %v754
    %v2223 = vpop.permute.xlu0 %2222
    %2225 = vset.pattern.permute.xlu0 8
    %2226 = vperm.xlu0 %2225, %v755
    %v2227 = vpop.permute.xlu0 %2226
    %2229 = vset.pattern.permute.xlu0 8
    %2230 = vperm.xlu0 %2229, %v756
    %v2231 = vpop.permute.xlu0 %2230
    %2233 = vset.pattern.permute.xlu0 8
    %2234 = vperm.xlu0 %2233, %v757
    %v2235 = vpop.permute.xlu0 %2234
    %2237 = vset.pattern.permute.xlu0 8
    %2238 = vperm.xlu0 %2237, %v758
    %v2239 = vpop.permute.xlu0 %2238
    %2241 = vset.pattern.permute.xlu0 8
    %2242 = vperm.xlu0 %2241, %v759
    %v2243 = vpop.permute.xlu0 %2242
    %2245 = vset.pattern.permute.xlu0 8
    %2246 = vperm.xlu0 %2245, %v760
    %v2247 = vpop.permute.xlu0 %2246
    %v2249 = vmul.f32 %v2129, %v2155
    %v2250 = vmul.f32 %v2130, %v2159
    %v2251 = vmul.f32 %v2131, %v2163
    %v2252 = vmul.f32 %v2132, %v2167
    %v2253 = vmul.f32 %v2133, %v2171
    %v2254 = vmul.f32 %v2134, %v2175
    %v2255 = vmul.f32 %v2135, %v2179
    %v2256 = vmul.f32 %v2136, %v2183
    %v2257 = vmul.f32 %v2137, %v2187
    %v2258 = vmul.f32 %v2138, %v2191
    %v2259 = vmul.f32 %v2139, %v2195
    %v2260 = vmul.f32 %v2140, %v2199
    %v2261 = vmul.f32 %v2141, %v2203
    %v2262 = vmul.f32 %v2142, %v2207
    %v2263 = vmul.f32 %v2143, %v2211
    %v2264 = vmul.f32 %v2144, %v2215
    %v2265 = vmul.f32 %v2145, %v2219
    %v2266 = vmul.f32 %v2146, %v2223
    %v2267 = vmul.f32 %v2147, %v2227
    %v2268 = vmul.f32 %v2148, %v2231
    %v2269 = vmul.f32 %v2149, %v2235
    %v2270 = vmul.f32 %v2150, %v2239
    %v2271 = vmul.f32 %v2151, %v2243
    %v2272 = vmul.f32 %v2152, %v2247
    %v2273 = vpack.c.bf16 %v2249, %v2249
    %v2274 = vpack.c.bf16 %v2250, %v2250
    %v2275 = vpack.c.bf16 %v2251, %v2251
    %v2276 = vpack.c.bf16 %v2252, %v2252
    %v2277 = vpack.c.bf16 %v2253, %v2253
    %v2278 = vpack.c.bf16 %v2254, %v2254
    %v2279 = vpack.c.bf16 %v2255, %v2255
    %v2280 = vpack.c.bf16 %v2256, %v2256
    %v2281 = vpack.c.bf16 %v2257, %v2257
    %v2282 = vpack.c.bf16 %v2258, %v2258
    %v2283 = vpack.c.bf16 %v2259, %v2259
    %v2284 = vpack.c.bf16 %v2260, %v2260
    %v2285 = vpack.c.bf16 %v2261, %v2261
    %v2286 = vpack.c.bf16 %v2262, %v2262
    %v2287 = vpack.c.bf16 %v2263, %v2263
    %v2288 = vpack.c.bf16 %v2264, %v2264
    %v2289 = vpack.c.bf16 %v2265, %v2265
    %v2290 = vpack.c.bf16 %v2266, %v2266
    %v2291 = vpack.c.bf16 %v2267, %v2267
    %v2292 = vpack.c.bf16 %v2268, %v2268
    %v2293 = vpack.c.bf16 %v2269, %v2269
    %v2294 = vpack.c.bf16 %v2270, %v2270
    %v2295 = vpack.c.bf16 %v2271, %v2271
    %v2296 = vpack.c.bf16 %v2272, %v2272
    %v2321 = vunpack.c.l.b16 %v929
    %v2322 = vunpack.c.l.b16 %v930
    %v2323 = vunpack.c.l.b16 %v931
    %v2324 = vunpack.c.l.b16 %v932
    %v2325 = vunpack.c.l.b16 %v933
    %v2326 = vunpack.c.l.b16 %v934
    %v2327 = vunpack.c.l.b16 %v935
    %v2328 = vunpack.c.l.b16 %v936
    %v2329 = vunpack.c.l.b16 %v937
    %v2330 = vunpack.c.l.b16 %v938
    %v2331 = vunpack.c.l.b16 %v939
    %v2332 = vunpack.c.l.b16 %v940
    %v2333 = vunpack.c.l.b16 %v941
    %v2334 = vunpack.c.l.b16 %v942
    %v2335 = vunpack.c.l.b16 %v943
    %v2336 = vunpack.c.l.b16 %v944
    %v2337 = vunpack.c.l.b16 %v945
    %v2338 = vunpack.c.l.b16 %v946
    %v2339 = vunpack.c.l.b16 %v947
    %v2340 = vunpack.c.l.b16 %v948
    %v2341 = vunpack.c.l.b16 %v949
    %v2342 = vunpack.c.l.b16 %v950
    %v2343 = vunpack.c.l.b16 %v951
    %v2344 = vunpack.c.l.b16 %v952
    %v2345 = vpack.c.b16 %v2322, %v2321
    %v2346 = vpack.c.b16 %v2324, %v2323
    %v2347 = vpack.c.b16 %v2326, %v2325
    %v2348 = vpack.c.b16 %v2328, %v2327
    %v2349 = vpack.c.b16 %v2330, %v2329
    %v2350 = vpack.c.b16 %v2332, %v2331
    %v2351 = vpack.c.b16 %v2334, %v2333
    %v2352 = vpack.c.b16 %v2336, %v2335
    %v2353 = vpack.c.b16 %v2338, %v2337
    %v2354 = vpack.c.b16 %v2340, %v2339
    %v2355 = vpack.c.b16 %v2342, %v2341
    %v2356 = vpack.c.b16 %v2344, %v2343
    %v2393 = vunpack.c.l.b16 %v1097
    %v2394 = vunpack.c.l.b16 %v1098
    %v2395 = vunpack.c.l.b16 %v1099
    %v2396 = vunpack.c.l.b16 %v1100
    %v2397 = vunpack.c.l.b16 %v1101
    %v2398 = vunpack.c.l.b16 %v1102
    %v2399 = vunpack.c.l.b16 %v1103
    %v2400 = vunpack.c.l.b16 %v1104
    %v2401 = vunpack.c.l.b16 %v1105
    %v2402 = vunpack.c.l.b16 %v1106
    %v2403 = vunpack.c.l.b16 %v1107
    %v2404 = vunpack.c.l.b16 %v1108
    %v2405 = vunpack.c.l.b16 %v1109
    %v2406 = vunpack.c.l.b16 %v1110
    %v2407 = vunpack.c.l.b16 %v1111
    %v2408 = vunpack.c.l.b16 %v1112
    %v2409 = vunpack.c.l.b16 %v1113
    %v2410 = vunpack.c.l.b16 %v1114
    %v2411 = vunpack.c.l.b16 %v1115
    %v2412 = vunpack.c.l.b16 %v1116
    %v2413 = vunpack.c.l.b16 %v1117
    %v2414 = vunpack.c.l.b16 %v1118
    %v2415 = vunpack.c.l.b16 %v1119
    %v2416 = vunpack.c.l.b16 %v1120
    %v2417 = vpack.c.b16 %v2394, %v2393
    %v2418 = vpack.c.b16 %v2396, %v2395
    %v2419 = vpack.c.b16 %v2398, %v2397
    %v2420 = vpack.c.b16 %v2400, %v2399
    %v2421 = vpack.c.b16 %v2402, %v2401
    %v2422 = vpack.c.b16 %v2404, %v2403
    %v2423 = vpack.c.b16 %v2406, %v2405
    %v2424 = vpack.c.b16 %v2408, %v2407
    %v2425 = vpack.c.b16 %v2410, %v2409
    %v2426 = vpack.c.b16 %v2412, %v2411
    %v2427 = vpack.c.b16 %v2414, %v2413
    %v2428 = vpack.c.b16 %v2416, %v2415
    %v2465 = vunpack.c.l.b16 %v1265
    %v2466 = vunpack.c.l.b16 %v1266
    %v2467 = vunpack.c.l.b16 %v1267
    %v2468 = vunpack.c.l.b16 %v1268
    %v2469 = vunpack.c.l.b16 %v1269
    %v2470 = vunpack.c.l.b16 %v1270
    %v2471 = vunpack.c.l.b16 %v1271
    %v2472 = vunpack.c.l.b16 %v1272
    %v2473 = vunpack.c.l.b16 %v1273
    %v2474 = vunpack.c.l.b16 %v1274
    %v2475 = vunpack.c.l.b16 %v1275
    %v2476 = vunpack.c.l.b16 %v1276
    %v2477 = vunpack.c.l.b16 %v1277
    %v2478 = vunpack.c.l.b16 %v1278
    %v2479 = vunpack.c.l.b16 %v1279
    %v2480 = vunpack.c.l.b16 %v1280
    %v2481 = vunpack.c.l.b16 %v1281
    %v2482 = vunpack.c.l.b16 %v1282
    %v2483 = vunpack.c.l.b16 %v1283
    %v2484 = vunpack.c.l.b16 %v1284
    %v2485 = vunpack.c.l.b16 %v1285
    %v2486 = vunpack.c.l.b16 %v1286
    %v2487 = vunpack.c.l.b16 %v1287
    %v2488 = vunpack.c.l.b16 %v1288
    %v2489 = vpack.c.b16 %v2466, %v2465
    %v2490 = vpack.c.b16 %v2468, %v2467
    %v2491 = vpack.c.b16 %v2470, %v2469
    %v2492 = vpack.c.b16 %v2472, %v2471
    %v2493 = vpack.c.b16 %v2474, %v2473
    %v2494 = vpack.c.b16 %v2476, %v2475
    %v2495 = vpack.c.b16 %v2478, %v2477
    %v2496 = vpack.c.b16 %v2480, %v2479
    %v2497 = vpack.c.b16 %v2482, %v2481
    %v2498 = vpack.c.b16 %v2484, %v2483
    %v2499 = vpack.c.b16 %v2486, %v2485
    %v2500 = vpack.c.b16 %v2488, %v2487
    %v2537 = vunpack.c.l.b16 %v1433
    %v2538 = vunpack.c.l.b16 %v1434
    %v2539 = vunpack.c.l.b16 %v1435
    %v2540 = vunpack.c.l.b16 %v1436
    %v2541 = vunpack.c.l.b16 %v1437
    %v2542 = vunpack.c.l.b16 %v1438
    %v2543 = vunpack.c.l.b16 %v1439
    %v2544 = vunpack.c.l.b16 %v1440
    %v2545 = vunpack.c.l.b16 %v1441
    %v2546 = vunpack.c.l.b16 %v1442
    %v2547 = vunpack.c.l.b16 %v1443
    %v2548 = vunpack.c.l.b16 %v1444
    %v2549 = vunpack.c.l.b16 %v1445
    %v2550 = vunpack.c.l.b16 %v1446
    %v2551 = vunpack.c.l.b16 %v1447
    %v2552 = vunpack.c.l.b16 %v1448
    %v2553 = vunpack.c.l.b16 %v1449
    %v2554 = vunpack.c.l.b16 %v1450
    %v2555 = vunpack.c.l.b16 %v1451
    %v2556 = vunpack.c.l.b16 %v1452
    %v2557 = vunpack.c.l.b16 %v1453
    %v2558 = vunpack.c.l.b16 %v1454
    %v2559 = vunpack.c.l.b16 %v1455
    %v2560 = vunpack.c.l.b16 %v1456
    %v2561 = vpack.c.b16 %v2538, %v2537
    %v2562 = vpack.c.b16 %v2540, %v2539
    %v2563 = vpack.c.b16 %v2542, %v2541
    %v2564 = vpack.c.b16 %v2544, %v2543
    %v2565 = vpack.c.b16 %v2546, %v2545
    %v2566 = vpack.c.b16 %v2548, %v2547
    %v2567 = vpack.c.b16 %v2550, %v2549
    %v2568 = vpack.c.b16 %v2552, %v2551
    %v2569 = vpack.c.b16 %v2554, %v2553
    %v2570 = vpack.c.b16 %v2556, %v2555
    %v2571 = vpack.c.b16 %v2558, %v2557
    %v2572 = vpack.c.b16 %v2560, %v2559
    %v2609 = vunpack.c.l.b16 %v1601
    %v2610 = vunpack.c.l.b16 %v1602
    %v2611 = vunpack.c.l.b16 %v1603
    %v2612 = vunpack.c.l.b16 %v1604
    %v2613 = vunpack.c.l.b16 %v1605
    %v2614 = vunpack.c.l.b16 %v1606
    %v2615 = vunpack.c.l.b16 %v1607
    %v2616 = vunpack.c.l.b16 %v1608
    %v2617 = vunpack.c.l.b16 %v1609
    %v2618 = vunpack.c.l.b16 %v1610
    %v2619 = vunpack.c.l.b16 %v1611
    %v2620 = vunpack.c.l.b16 %v1612
    %v2621 = vunpack.c.l.b16 %v1613
    %v2622 = vunpack.c.l.b16 %v1614
    %v2623 = vunpack.c.l.b16 %v1615
    %v2624 = vunpack.c.l.b16 %v1616
    %v2625 = vunpack.c.l.b16 %v1617
    %v2626 = vunpack.c.l.b16 %v1618
    %v2627 = vunpack.c.l.b16 %v1619
    %v2628 = vunpack.c.l.b16 %v1620
    %v2629 = vunpack.c.l.b16 %v1621
    %v2630 = vunpack.c.l.b16 %v1622
    %v2631 = vunpack.c.l.b16 %v1623
    %v2632 = vunpack.c.l.b16 %v1624
    %v2633 = vpack.c.b16 %v2610, %v2609
    %v2634 = vpack.c.b16 %v2612, %v2611
    %v2635 = vpack.c.b16 %v2614, %v2613
    %v2636 = vpack.c.b16 %v2616, %v2615
    %v2637 = vpack.c.b16 %v2618, %v2617
    %v2638 = vpack.c.b16 %v2620, %v2619
    %v2639 = vpack.c.b16 %v2622, %v2621
    %v2640 = vpack.c.b16 %v2624, %v2623
    %v2641 = vpack.c.b16 %v2626, %v2625
    %v2642 = vpack.c.b16 %v2628, %v2627
    %v2643 = vpack.c.b16 %v2630, %v2629
    %v2644 = vpack.c.b16 %v2632, %v2631
    %v2681 = vunpack.c.l.b16 %v1769
    %v2682 = vunpack.c.l.b16 %v1770
    %v2683 = vunpack.c.l.b16 %v1771
    %v2684 = vunpack.c.l.b16 %v1772
    %v2685 = vunpack.c.l.b16 %v1773
    %v2686 = vunpack.c.l.b16 %v1774
    %v2687 = vunpack.c.l.b16 %v1775
    %v2688 = vunpack.c.l.b16 %v1776
    %v2689 = vunpack.c.l.b16 %v1777
    %v2690 = vunpack.c.l.b16 %v1778
    %v2691 = vunpack.c.l.b16 %v1779
    %v2692 = vunpack.c.l.b16 %v1780
    %v2693 = vunpack.c.l.b16 %v1781
    %v2694 = vunpack.c.l.b16 %v1782
    %v2695 = vunpack.c.l.b16 %v1783
    %v2696 = vunpack.c.l.b16 %v1784
    %v2697 = vunpack.c.l.b16 %v1785
    %v2698 = vunpack.c.l.b16 %v1786
    %v2699 = vunpack.c.l.b16 %v1787
    %v2700 = vunpack.c.l.b16 %v1788
    %v2701 = vunpack.c.l.b16 %v1789
    %v2702 = vunpack.c.l.b16 %v1790
    %v2703 = vunpack.c.l.b16 %v1791
    %v2704 = vunpack.c.l.b16 %v1792
    %v2705 = vpack.c.b16 %v2682, %v2681
    %v2706 = vpack.c.b16 %v2684, %v2683
    %v2707 = vpack.c.b16 %v2686, %v2685
    %v2708 = vpack.c.b16 %v2688, %v2687
    %v2709 = vpack.c.b16 %v2690, %v2689
    %v2710 = vpack.c.b16 %v2692, %v2691
    %v2711 = vpack.c.b16 %v2694, %v2693
    %v2712 = vpack.c.b16 %v2696, %v2695
    %v2713 = vpack.c.b16 %v2698, %v2697
    %v2714 = vpack.c.b16 %v2700, %v2699
    %v2715 = vpack.c.b16 %v2702, %v2701
    %v2716 = vpack.c.b16 %v2704, %v2703
    %v2753 = vunpack.c.l.b16 %v1937
    %v2754 = vunpack.c.l.b16 %v1938
    %v2755 = vunpack.c.l.b16 %v1939
    %v2756 = vunpack.c.l.b16 %v1940
    %v2757 = vunpack.c.l.b16 %v1941
    %v2758 = vunpack.c.l.b16 %v1942
    %v2759 = vunpack.c.l.b16 %v1943
    %v2760 = vunpack.c.l.b16 %v1944
    %v2761 = vunpack.c.l.b16 %v1945
    %v2762 = vunpack.c.l.b16 %v1946
    %v2763 = vunpack.c.l.b16 %v1947
    %v2764 = vunpack.c.l.b16 %v1948
    %v2765 = vunpack.c.l.b16 %v1949
    %v2766 = vunpack.c.l.b16 %v1950
    %v2767 = vunpack.c.l.b16 %v1951
    %v2768 = vunpack.c.l.b16 %v1952
    %v2769 = vunpack.c.l.b16 %v1953
    %v2770 = vunpack.c.l.b16 %v1954
    %v2771 = vunpack.c.l.b16 %v1955
    %v2772 = vunpack.c.l.b16 %v1956
    %v2773 = vunpack.c.l.b16 %v1957
    %v2774 = vunpack.c.l.b16 %v1958
    %v2775 = vunpack.c.l.b16 %v1959
    %v2776 = vunpack.c.l.b16 %v1960
    %v2777 = vpack.c.b16 %v2754, %v2753
    %v2778 = vpack.c.b16 %v2756, %v2755
    %v2779 = vpack.c.b16 %v2758, %v2757
    %v2780 = vpack.c.b16 %v2760, %v2759
    %v2781 = vpack.c.b16 %v2762, %v2761
    %v2782 = vpack.c.b16 %v2764, %v2763
    %v2783 = vpack.c.b16 %v2766, %v2765
    %v2784 = vpack.c.b16 %v2768, %v2767
    %v2785 = vpack.c.b16 %v2770, %v2769
    %v2786 = vpack.c.b16 %v2772, %v2771
    %v2787 = vpack.c.b16 %v2774, %v2773
    %v2788 = vpack.c.b16 %v2776, %v2775
    %v2825 = vunpack.c.l.b16 %v2105
    %v2826 = vunpack.c.l.b16 %v2106
    %v2827 = vunpack.c.l.b16 %v2107
    %v2828 = vunpack.c.l.b16 %v2108
    %v2829 = vunpack.c.l.b16 %v2109
    %v2830 = vunpack.c.l.b16 %v2110
    %v2831 = vunpack.c.l.b16 %v2111
    %v2832 = vunpack.c.l.b16 %v2112
    %v2833 = vunpack.c.l.b16 %v2113
    %v2834 = vunpack.c.l.b16 %v2114
    %v2835 = vunpack.c.l.b16 %v2115
    %v2836 = vunpack.c.l.b16 %v2116
    %v2837 = vunpack.c.l.b16 %v2117
    %v2838 = vunpack.c.l.b16 %v2118
    %v2839 = vunpack.c.l.b16 %v2119
    %v2840 = vunpack.c.l.b16 %v2120
    %v2841 = vunpack.c.l.b16 %v2121
    %v2842 = vunpack.c.l.b16 %v2122
    %v2843 = vunpack.c.l.b16 %v2123
    %v2844 = vunpack.c.l.b16 %v2124
    %v2845 = vunpack.c.l.b16 %v2125
    %v2846 = vunpack.c.l.b16 %v2126
    %v2847 = vunpack.c.l.b16 %v2127
    %v2848 = vunpack.c.l.b16 %v2128
    %v2849 = vpack.c.b16 %v2826, %v2825
    %v2850 = vpack.c.b16 %v2828, %v2827
    %v2851 = vpack.c.b16 %v2830, %v2829
    %v2852 = vpack.c.b16 %v2832, %v2831
    %v2853 = vpack.c.b16 %v2834, %v2833
    %v2854 = vpack.c.b16 %v2836, %v2835
    %v2855 = vpack.c.b16 %v2838, %v2837
    %v2856 = vpack.c.b16 %v2840, %v2839
    %v2857 = vpack.c.b16 %v2842, %v2841
    %v2858 = vpack.c.b16 %v2844, %v2843
    %v2859 = vpack.c.b16 %v2846, %v2845
    %v2860 = vpack.c.b16 %v2848, %v2847
    %v2897 = vunpack.c.l.b16 %v2273
    %v2898 = vunpack.c.l.b16 %v2274
    %v2899 = vunpack.c.l.b16 %v2275
    %v2900 = vunpack.c.l.b16 %v2276
    %v2901 = vunpack.c.l.b16 %v2277
    %v2902 = vunpack.c.l.b16 %v2278
    %v2903 = vunpack.c.l.b16 %v2279
    %v2904 = vunpack.c.l.b16 %v2280
    %v2905 = vunpack.c.l.b16 %v2281
    %v2906 = vunpack.c.l.b16 %v2282
    %v2907 = vunpack.c.l.b16 %v2283
    %v2908 = vunpack.c.l.b16 %v2284
    %v2909 = vunpack.c.l.b16 %v2285
    %v2910 = vunpack.c.l.b16 %v2286
    %v2911 = vunpack.c.l.b16 %v2287
    %v2912 = vunpack.c.l.b16 %v2288
    %v2913 = vunpack.c.l.b16 %v2289
    %v2914 = vunpack.c.l.b16 %v2290
    %v2915 = vunpack.c.l.b16 %v2291
    %v2916 = vunpack.c.l.b16 %v2292
    %v2917 = vunpack.c.l.b16 %v2293
    %v2918 = vunpack.c.l.b16 %v2294
    %v2919 = vunpack.c.l.b16 %v2295
    %v2920 = vunpack.c.l.b16 %v2296
    %v2921 = vpack.c.b16 %v2898, %v2897
    %v2922 = vpack.c.b16 %v2900, %v2899
    %v2923 = vpack.c.b16 %v2902, %v2901
    %v2924 = vpack.c.b16 %v2904, %v2903
    %v2925 = vpack.c.b16 %v2906, %v2905
    %v2926 = vpack.c.b16 %v2908, %v2907
    %v2927 = vpack.c.b16 %v2910, %v2909
    %v2928 = vpack.c.b16 %v2912, %v2911
    %v2929 = vpack.c.b16 %v2914, %v2913
    %v2930 = vpack.c.b16 %v2916, %v2915
    %v2931 = vpack.c.b16 %v2918, %v2917
    %v2932 = vpack.c.b16 %v2920, %v2919
    %v2945 = vld [vmem:[#allocation9] sm:$0xf]
    %v2946 = vld [vmem:[#allocation9 + $0x4] sm:$0xf]
    %v2947 = vld [vmem:[#allocation9 + $0x8] sm:$0xf]
    %v2948 = vld [vmem:[#allocation9 + $0xc] sm:$0xf]
    %v2949 = vld [vmem:[#allocation9 + $0x10] sm:$0xf]
    %v2950 = vld [vmem:[#allocation9 + $0x14] sm:$0xf]
    %v2951 = vld [vmem:[#allocation9 + $0x18] sm:$0xf]
    %v2952 = vld [vmem:[#allocation9 + $0x1c] sm:$0xf]
    %v2953 = vld [vmem:[#allocation9 + $0x20] sm:$0xf]
    %v2954 = vld [vmem:[#allocation9 + $0x24] sm:$0xf]
    %v2955 = vld [vmem:[#allocation9 + $0x28] sm:$0xf]
    %v2956 = vld [vmem:[#allocation9 + $0x2c] sm:$0xf]
    %v2957 = vld [vmem:[#allocation9 + $0x30] sm:$0xf]
    %v2958 = vld [vmem:[#allocation9 + $0x34] sm:$0xf]
    %v2959 = vld [vmem:[#allocation9 + $0x38] sm:$0xf]
    %v2960 = vld [vmem:[#allocation9 + $0x3c] sm:$0xf]
    %v2961 = vld [vmem:[#allocation9 + $0x40] sm:$0xf]
    %v2962 = vld [vmem:[#allocation9 + $0x44] sm:$0xf]
    %v2963 = vld [vmem:[#allocation9 + $0x48] sm:$0xf]
    %v2964 = vld [vmem:[#allocation9 + $0x4c] sm:$0xf]
    %v2965 = vld [vmem:[#allocation9 + $0x50] sm:$0xf]
    %v2966 = vld [vmem:[#allocation9 + $0x54] sm:$0xf]
    %v2967 = vld [vmem:[#allocation9 + $0x58] sm:$0xf]
    %v2968 = vld [vmem:[#allocation9 + $0x5c] sm:$0xf]
    %v2969 = vld [vmem:[#allocation9 + $0x60] sm:$0xf]
    %v2970 = vld [vmem:[#allocation9 + $0x64] sm:$0xf]
    %v2971 = vld [vmem:[#allocation9 + $0x68] sm:$0xf]
    %v2972 = vld [vmem:[#allocation9 + $0x6c] sm:$0xf]
    %v2973 = vld [vmem:[#allocation9 + $0x70] sm:$0xf]
    %v2974 = vld [vmem:[#allocation9 + $0x74] sm:$0xf]
    %v2975 = vld [vmem:[#allocation9 + $0x78] sm:$0xf]
    %v2976 = vld [vmem:[#allocation9 + $0x7c] sm:$0xf]
    %v2977 = vld [vmem:[#allocation9 + $0x80] sm:$0xf]
    %v2978 = vld [vmem:[#allocation9 + $0x84] sm:$0xf]
    %v2979 = vld [vmem:[#allocation9 + $0x88] sm:$0xf]
    %v2980 = vld [vmem:[#allocation9 + $0x8c] sm:$0xf]
    %v2981 = vld [vmem:[#allocation9 + $0x90] sm:$0xf]
    %v2982 = vld [vmem:[#allocation9 + $0x94] sm:$0xf]
    %v2983 = vld [vmem:[#allocation9 + $0x98] sm:$0xf]
    %v2984 = vld [vmem:[#allocation9 + $0x9c] sm:$0xf]
    %v2985 = vld [vmem:[#allocation9 + $0xa0] sm:$0xf]
    %v2986 = vld [vmem:[#allocation9 + $0xa4] sm:$0xf]
    %v2987 = vld [vmem:[#allocation9 + $0xa8] sm:$0xf]
    %v2988 = vld [vmem:[#allocation9 + $0xac] sm:$0xf]
    %v2989 = vld [vmem:[#allocation9 + $0xb0] sm:$0xf]
    %v2990 = vld [vmem:[#allocation9 + $0xb4] sm:$0xf]
    %v2991 = vld [vmem:[#allocation9 + $0xb8] sm:$0xf]
    %v2992 = vld [vmem:[#allocation9 + $0xbc] sm:$0xf]
    %v2993 = vld [vmem:[#allocation9 + $0xc0] sm:$0xf]
    %v2994 = vld [vmem:[#allocation9 + $0xc4] sm:$0xf]
    %v2995 = vld [vmem:[#allocation9 + $0xc8] sm:$0xf]
    %v2996 = vld [vmem:[#allocation9 + $0xcc] sm:$0xf]
    %v2997 = vld [vmem:[#allocation9 + $0xd0] sm:$0xf]
    %v2998 = vld [vmem:[#allocation9 + $0xd4] sm:$0xf]
    %v2999 = vld [vmem:[#allocation9 + $0xd8] sm:$0xf]
    %v3000 = vld [vmem:[#allocation9 + $0xdc] sm:$0xf]
    %v3001 = vld [vmem:[#allocation9 + $0xe0] sm:$0xf]
    %v3002 = vld [vmem:[#allocation9 + $0xe4] sm:$0xf]
    %v3003 = vld [vmem:[#allocation9 + $0xe8] sm:$0xf]
    %v3004 = vld [vmem:[#allocation9 + $0xec] sm:$0xf]
    %v3005 = vld [vmem:[#allocation9 + $0xf0] sm:$0xf]
    %v3006 = vld [vmem:[#allocation9 + $0xf4] sm:$0xf]
    %v3007 = vld [vmem:[#allocation9 + $0xf8] sm:$0xf]
    %v3008 = vld [vmem:[#allocation9 + $0xfc] sm:$0xf]
    %v3009 = vld [vmem:[#allocation9 + $0x100] sm:$0xf]
    %v3010 = vld [vmem:[#allocation9 + $0x104] sm:$0xf]
    %v3011 = vld [vmem:[#allocation9 + $0x108] sm:$0xf]
    %v3012 = vld [vmem:[#allocation9 + $0x10c] sm:$0xf]
    %v3013 = vld [vmem:[#allocation9 + $0x110] sm:$0xf]
    %v3014 = vld [vmem:[#allocation9 + $0x114] sm:$0xf]
    %v3015 = vld [vmem:[#allocation9 + $0x118] sm:$0xf]
    %v3016 = vld [vmem:[#allocation9 + $0x11c] sm:$0xf]
    %v3017 = vld [vmem:[#allocation9 + $0x120] sm:$0xf]
    %v3018 = vld [vmem:[#allocation9 + $0x124] sm:$0xf]
    %v3019 = vld [vmem:[#allocation9 + $0x128] sm:$0xf]
    %v3020 = vld [vmem:[#allocation9 + $0x12c] sm:$0xf]
    %v3021 = vld [vmem:[#allocation9 + $0x130] sm:$0xf]
    %v3022 = vld [vmem:[#allocation9 + $0x134] sm:$0xf]
    %v3023 = vld [vmem:[#allocation9 + $0x138] sm:$0xf]
    %v3024 = vld [vmem:[#allocation9 + $0x13c] sm:$0xf]
    %v3025 = vld [vmem:[#allocation9 + $0x140] sm:$0xf]
    %v3026 = vld [vmem:[#allocation9 + $0x144] sm:$0xf]
    %v3027 = vld [vmem:[#allocation9 + $0x148] sm:$0xf]
    %v3028 = vld [vmem:[#allocation9 + $0x14c] sm:$0xf]
    %v3029 = vld [vmem:[#allocation9 + $0x150] sm:$0xf]
    %v3030 = vld [vmem:[#allocation9 + $0x154] sm:$0xf]
    %v3031 = vld [vmem:[#allocation9 + $0x158] sm:$0xf]
    %v3032 = vld [vmem:[#allocation9 + $0x15c] sm:$0xf]
    %v3033 = vld [vmem:[#allocation9 + $0x160] sm:$0xf]
    %v3034 = vld [vmem:[#allocation9 + $0x164] sm:$0xf]
    %v3035 = vld [vmem:[#allocation9 + $0x168] sm:$0xf]
    %v3036 = vld [vmem:[#allocation9 + $0x16c] sm:$0xf]
    %v3037 = vld [vmem:[#allocation9 + $0x170] sm:$0xf]
    %v3038 = vld [vmem:[#allocation9 + $0x174] sm:$0xf]
    %v3039 = vld [vmem:[#allocation9 + $0x178] sm:$0xf]
    %v3040 = vld [vmem:[#allocation9 + $0x17c] sm:$0xf]
    %v3041 = vld [vmem:[#allocation9 + $0x180] sm:$0xf]
    %v3042 = vld [vmem:[#allocation9 + $0x184] sm:$0xf]
    %v3043 = vld [vmem:[#allocation9 + $0x188] sm:$0xf]
    %v3044 = vld [vmem:[#allocation9 + $0x18c] sm:$0xf]
    %v3045 = vld [vmem:[#allocation9 + $0x190] sm:$0xf]
    %v3046 = vld [vmem:[#allocation9 + $0x194] sm:$0xf]
    %v3047 = vld [vmem:[#allocation9 + $0x198] sm:$0xf]
    %v3048 = vld [vmem:[#allocation9 + $0x19c] sm:$0xf]
    %v3049 = vld [vmem:[#allocation9 + $0x1a0] sm:$0xf]
    %v3050 = vld [vmem:[#allocation9 + $0x1a4] sm:$0xf]
    %v3051 = vld [vmem:[#allocation9 + $0x1a8] sm:$0xf]
    %v3052 = vld [vmem:[#allocation9 + $0x1ac] sm:$0xf]
    %v3053 = vld [vmem:[#allocation9 + $0x1b0] sm:$0xf]
    %v3054 = vld [vmem:[#allocation9 + $0x1b4] sm:$0xf]
    %v3055 = vld [vmem:[#allocation9 + $0x1b8] sm:$0xf]
    %v3056 = vld [vmem:[#allocation9 + $0x1bc] sm:$0xf]
    %v3057 = vld [vmem:[#allocation9 + $0x1c0] sm:$0xf]
    %v3058 = vld [vmem:[#allocation9 + $0x1c4] sm:$0xf]
    %v3059 = vld [vmem:[#allocation9 + $0x1c8] sm:$0xf]
    %v3060 = vld [vmem:[#allocation9 + $0x1cc] sm:$0xf]
    %v3061 = vld [vmem:[#allocation9 + $0x1d0] sm:$0xf]
    %v3062 = vld [vmem:[#allocation9 + $0x1d4] sm:$0xf]
    %v3063 = vld [vmem:[#allocation9 + $0x1d8] sm:$0xf]
    %v3064 = vld [vmem:[#allocation9 + $0x1dc] sm:$0xf]
    %v3065 = vld [vmem:[#allocation9 + $0x1e0] sm:$0xf]
    %v3066 = vld [vmem:[#allocation9 + $0x1e4] sm:$0xf]
    %v3067 = vld [vmem:[#allocation9 + $0x1e8] sm:$0xf]
    %v3068 = vld [vmem:[#allocation9 + $0x1ec] sm:$0xf]
    %v3069 = vld [vmem:[#allocation9 + $0x1f0] sm:$0xf]
    %v3070 = vld [vmem:[#allocation9 + $0x1f4] sm:$0xf]
    %v3071 = vld [vmem:[#allocation9 + $0x1f8] sm:$0xf]
    %v3072 = vld [vmem:[#allocation9 + $0x1fc] sm:$0xf]
    %v3073 = vld [vmem:[#allocation9 + $0x200] sm:$0xf]
    %v3074 = vld [vmem:[#allocation9 + $0x204] sm:$0xf]
    %v3075 = vld [vmem:[#allocation9 + $0x208] sm:$0xf]
    %v3076 = vld [vmem:[#allocation9 + $0x20c] sm:$0xf]
    %v3077 = vld [vmem:[#allocation9 + $0x210] sm:$0xf]
    %v3078 = vld [vmem:[#allocation9 + $0x214] sm:$0xf]
    %v3079 = vld [vmem:[#allocation9 + $0x218] sm:$0xf]
    %v3080 = vld [vmem:[#allocation9 + $0x21c] sm:$0xf]
    %v3081 = vld [vmem:[#allocation9 + $0x220] sm:$0xf]
    %v3082 = vld [vmem:[#allocation9 + $0x224] sm:$0xf]
    %v3083 = vld [vmem:[#allocation9 + $0x228] sm:$0xf]
    %v3084 = vld [vmem:[#allocation9 + $0x22c] sm:$0xf]
    %v3085 = vld [vmem:[#allocation9 + $0x230] sm:$0xf]
    %v3086 = vld [vmem:[#allocation9 + $0x234] sm:$0xf]
    %v3087 = vld [vmem:[#allocation9 + $0x238] sm:$0xf]
    %v3088 = vld [vmem:[#allocation9 + $0x23c] sm:$0xf]
    %v3089 = vld [vmem:[#allocation11] sm:$0x1]
    %v3091 = vperm.slane %v3089, 0
    %v3237 = vunpack.c.l.b16 %v2945
    %v3238 = vunpack.c.l.b16 %v2946
    %v3239 = vunpack.c.l.b16 %v2947
    %v3240 = vunpack.c.l.b16 %v2948
    %v3241 = vunpack.c.l.b16 %v2949
    %v3242 = vunpack.c.l.b16 %v2950
    %v3243 = vunpack.c.l.b16 %v2951
    %v3244 = vunpack.c.l.b16 %v2952
    %v3245 = vunpack.c.l.b16 %v2953
    %v3246 = vunpack.c.l.b16 %v2954
    %v3247 = vunpack.c.l.b16 %v2955
    %v3248 = vunpack.c.l.b16 %v2956
    %v3249 = vunpack.c.l.b16 %v2957
    %v3250 = vunpack.c.l.b16 %v2958
    %v3251 = vunpack.c.l.b16 %v2959
    %v3252 = vunpack.c.l.b16 %v2960
    %v3253 = vunpack.c.l.b16 %v2961
    %v3254 = vunpack.c.l.b16 %v2962
    %v3255 = vunpack.c.l.b16 %v2963
    %v3256 = vunpack.c.l.b16 %v2964
    %v3257 = vunpack.c.l.b16 %v2965
    %v3258 = vunpack.c.l.b16 %v2966
    %v3259 = vunpack.c.l.b16 %v2967
    %v3260 = vunpack.c.l.b16 %v2968
    %v3261 = vunpack.c.l.b16 %v2969
    %v3262 = vunpack.c.l.b16 %v2970
    %v3263 = vunpack.c.l.b16 %v2971
    %v3264 = vunpack.c.l.b16 %v2972
    %v3265 = vunpack.c.l.b16 %v2973
    %v3266 = vunpack.c.l.b16 %v2974
    %v3267 = vunpack.c.l.b16 %v2975
    %v3268 = vunpack.c.l.b16 %v2976
    %v3269 = vunpack.c.l.b16 %v2977
    %v3270 = vunpack.c.l.b16 %v2978
    %v3271 = vunpack.c.l.b16 %v2979
    %v3272 = vunpack.c.l.b16 %v2980
    %v3273 = vunpack.c.l.b16 %v2981
    %v3274 = vunpack.c.l.b16 %v2982
    %v3275 = vunpack.c.l.b16 %v2983
    %v3276 = vunpack.c.l.b16 %v2984
    %v3277 = vunpack.c.l.b16 %v2985
    %v3278 = vunpack.c.l.b16 %v2986
    %v3279 = vunpack.c.l.b16 %v2987
    %v3280 = vunpack.c.l.b16 %v2988
    %v3281 = vunpack.c.l.b16 %v2989
    %v3282 = vunpack.c.l.b16 %v2990
    %v3283 = vunpack.c.l.b16 %v2991
    %v3284 = vunpack.c.l.b16 %v2992
    %v3285 = vunpack.c.l.b16 %v2993
    %v3286 = vunpack.c.l.b16 %v2994
    %v3287 = vunpack.c.l.b16 %v2995
    %v3288 = vunpack.c.l.b16 %v2996
    %v3289 = vunpack.c.l.b16 %v2997
    %v3290 = vunpack.c.l.b16 %v2998
    %v3291 = vunpack.c.l.b16 %v2999
    %v3292 = vunpack.c.l.b16 %v3000
    %v3293 = vunpack.c.l.b16 %v3001
    %v3294 = vunpack.c.l.b16 %v3002
    %v3295 = vunpack.c.l.b16 %v3003
    %v3296 = vunpack.c.l.b16 %v3004
    %v3297 = vunpack.c.l.b16 %v3005
    %v3298 = vunpack.c.l.b16 %v3006
    %v3299 = vunpack.c.l.b16 %v3007
    %v3300 = vunpack.c.l.b16 %v3008
    %v3301 = vunpack.c.l.b16 %v3009
    %v3302 = vunpack.c.l.b16 %v3010
    %v3303 = vunpack.c.l.b16 %v3011
    %v3304 = vunpack.c.l.b16 %v3012
    %v3305 = vunpack.c.l.b16 %v3013
    %v3306 = vunpack.c.l.b16 %v3014
    %v3307 = vunpack.c.l.b16 %v3015
    %v3308 = vunpack.c.l.b16 %v3016
    %v3309 = vunpack.c.l.b16 %v3017
    %v3310 = vunpack.c.l.b16 %v3018
    %v3311 = vunpack.c.l.b16 %v3019
    %v3312 = vunpack.c.l.b16 %v3020
    %v3313 = vunpack.c.l.b16 %v3021
    %v3314 = vunpack.c.l.b16 %v3022
    %v3315 = vunpack.c.l.b16 %v3023
    %v3316 = vunpack.c.l.b16 %v3024
    %v3317 = vunpack.c.l.b16 %v3025
    %v3318 = vunpack.c.l.b16 %v3026
    %v3319 = vunpack.c.l.b16 %v3027
    %v3320 = vunpack.c.l.b16 %v3028
    %v3321 = vunpack.c.l.b16 %v3029
    %v3322 = vunpack.c.l.b16 %v3030
    %v3323 = vunpack.c.l.b16 %v3031
    %v3324 = vunpack.c.l.b16 %v3032
    %v3325 = vunpack.c.l.b16 %v3033
    %v3326 = vunpack.c.l.b16 %v3034
    %v3327 = vunpack.c.l.b16 %v3035
    %v3328 = vunpack.c.l.b16 %v3036
    %v3329 = vunpack.c.l.b16 %v3037
    %v3330 = vunpack.c.l.b16 %v3038
    %v3331 = vunpack.c.l.b16 %v3039
    %v3332 = vunpack.c.l.b16 %v3040
    %v3333 = vunpack.c.l.b16 %v3041
    %v3334 = vunpack.c.l.b16 %v3042
    %v3335 = vunpack.c.l.b16 %v3043
    %v3336 = vunpack.c.l.b16 %v3044
    %v3337 = vunpack.c.l.b16 %v3045
    %v3338 = vunpack.c.l.b16 %v3046
    %v3339 = vunpack.c.l.b16 %v3047
    %v3340 = vunpack.c.l.b16 %v3048
    %v3341 = vunpack.c.l.b16 %v3049
    %v3342 = vunpack.c.l.b16 %v3050
    %v3343 = vunpack.c.l.b16 %v3051
    %v3344 = vunpack.c.l.b16 %v3052
    %v3345 = vunpack.c.l.b16 %v3053
    %v3346 = vunpack.c.l.b16 %v3054
    %v3347 = vunpack.c.l.b16 %v3055
    %v3348 = vunpack.c.l.b16 %v3056
    %v3349 = vunpack.c.l.b16 %v3057
    %v3350 = vunpack.c.l.b16 %v3058
    %v3351 = vunpack.c.l.b16 %v3059
    %v3352 = vunpack.c.l.b16 %v3060
    %v3353 = vunpack.c.l.b16 %v3061
    %v3354 = vunpack.c.l.b16 %v3062
    %v3355 = vunpack.c.l.b16 %v3063
    %v3356 = vunpack.c.l.b16 %v3064
    %v3357 = vunpack.c.l.b16 %v3065
    %v3358 = vunpack.c.l.b16 %v3066
    %v3359 = vunpack.c.l.b16 %v3067
    %v3360 = vunpack.c.l.b16 %v3068
    %v3361 = vunpack.c.l.b16 %v3069
    %v3362 = vunpack.c.l.b16 %v3070
    %v3363 = vunpack.c.l.b16 %v3071
    %v3364 = vunpack.c.l.b16 %v3072
    %v3365 = vunpack.c.l.b16 %v3073
    %v3366 = vunpack.c.l.b16 %v3074
    %v3367 = vunpack.c.l.b16 %v3075
    %v3368 = vunpack.c.l.b16 %v3076
    %v3369 = vunpack.c.l.b16 %v3077
    %v3370 = vunpack.c.l.b16 %v3078
    %v3371 = vunpack.c.l.b16 %v3079
    %v3372 = vunpack.c.l.b16 %v3080
    %v3373 = vunpack.c.l.b16 %v3081
    %v3374 = vunpack.c.l.b16 %v3082
    %v3375 = vunpack.c.l.b16 %v3083
    %v3376 = vunpack.c.l.b16 %v3084
    %v3377 = vunpack.c.l.b16 %v3085
    %v3378 = vunpack.c.l.b16 %v3086
    %v3379 = vunpack.c.l.b16 %v3087
    %v3380 = vunpack.c.l.b16 %v3088
    %v3381 = vpack.c.b16 %v3238, %v3237
    %v3382 = vpack.c.b16 %v3240, %v3239
    %v3383 = vpack.c.b16 %v3242, %v3241
    %v3384 = vpack.c.b16 %v3244, %v3243
    %v3385 = vpack.c.b16 %v3246, %v3245
    %v3386 = vpack.c.b16 %v3248, %v3247
    %v3387 = vpack.c.b16 %v3250, %v3249
    %v3388 = vpack.c.b16 %v3252, %v3251
    %v3389 = vpack.c.b16 %v3254, %v3253
    %v3390 = vpack.c.b16 %v3256, %v3255
    %v3391 = vpack.c.b16 %v3258, %v3257
    %v3392 = vpack.c.b16 %v3260, %v3259
    %v3393 = vpack.c.b16 %v3262, %v3261
    %v3394 = vpack.c.b16 %v3264, %v3263
    %v3395 = vpack.c.b16 %v3266, %v3265
    %v3396 = vpack.c.b16 %v3268, %v3267
    %v3397 = vpack.c.b16 %v3270, %v3269
    %v3398 = vpack.c.b16 %v3272, %v3271
    %v3399 = vpack.c.b16 %v3274, %v3273
    %v3400 = vpack.c.b16 %v3276, %v3275
    %v3401 = vpack.c.b16 %v3278, %v3277
    %v3402 = vpack.c.b16 %v3280, %v3279
    %v3403 = vpack.c.b16 %v3282, %v3281
    %v3404 = vpack.c.b16 %v3284, %v3283
    %v3405 = vpack.c.b16 %v3286, %v3285
    %v3406 = vpack.c.b16 %v3288, %v3287
    %v3407 = vpack.c.b16 %v3290, %v3289
    %v3408 = vpack.c.b16 %v3292, %v3291
    %v3409 = vpack.c.b16 %v3294, %v3293
    %v3410 = vpack.c.b16 %v3296, %v3295
    %v3411 = vpack.c.b16 %v3298, %v3297
    %v3412 = vpack.c.b16 %v3300, %v3299
    %v3413 = vpack.c.b16 %v3302, %v3301
    %v3414 = vpack.c.b16 %v3304, %v3303
    %v3415 = vpack.c.b16 %v3306, %v3305
    %v3416 = vpack.c.b16 %v3308, %v3307
    %v3417 = vpack.c.b16 %v3310, %v3309
    %v3418 = vpack.c.b16 %v3312, %v3311
    %v3419 = vpack.c.b16 %v3314, %v3313
    %v3420 = vpack.c.b16 %v3316, %v3315
    %v3421 = vpack.c.b16 %v3318, %v3317
    %v3422 = vpack.c.b16 %v3320, %v3319
    %v3423 = vpack.c.b16 %v3322, %v3321
    %v3424 = vpack.c.b16 %v3324, %v3323
    %v3425 = vpack.c.b16 %v3326, %v3325
    %v3426 = vpack.c.b16 %v3328, %v3327
    %v3427 = vpack.c.b16 %v3330, %v3329
    %v3428 = vpack.c.b16 %v3332, %v3331
    %v3429 = vpack.c.b16 %v3334, %v3333
    %v3430 = vpack.c.b16 %v3336, %v3335
    %v3431 = vpack.c.b16 %v3338, %v3337
    %v3432 = vpack.c.b16 %v3340, %v3339
    %v3433 = vpack.c.b16 %v3342, %v3341
    %v3434 = vpack.c.b16 %v3344, %v3343
    %v3435 = vpack.c.b16 %v3346, %v3345
    %v3436 = vpack.c.b16 %v3348, %v3347
    %v3437 = vpack.c.b16 %v3350, %v3349
    %v3438 = vpack.c.b16 %v3352, %v3351
    %v3439 = vpack.c.b16 %v3354, %v3353
    %v3440 = vpack.c.b16 %v3356, %v3355
    %v3441 = vpack.c.b16 %v3358, %v3357
    %v3442 = vpack.c.b16 %v3360, %v3359
    %v3443 = vpack.c.b16 %v3362, %v3361
    %v3444 = vpack.c.b16 %v3364, %v3363
    %v3445 = vpack.c.b16 %v3366, %v3365
    %v3446 = vpack.c.b16 %v3368, %v3367
    %v3447 = vpack.c.b16 %v3370, %v3369
    %v3448 = vpack.c.b16 %v3372, %v3371
    %v3449 = vpack.c.b16 %v3374, %v3373
    %v3450 = vpack.c.b16 %v3376, %v3375
    %v3451 = vpack.c.b16 %v3378, %v3377
    %v3452 = vpack.c.b16 %v3380, %v3379
    %3525 = vmatpush.bf16.msra.mxu0 %v3388
    %3526 = vmatpush.bf16.msra.mxu0 %v3387
    %3527 = vmatpush.bf16.msra.mxu0 %v3386
    %3528 = vmatpush.bf16.msra.mxu0 %v3385
    %3529 = vmatpush.bf16.msra.mxu0 %v3384
    %3530 = vmatpush.bf16.msra.mxu0 %v3383
    %3531 = vmatpush.bf16.msra.mxu0 %v3382
    %3532 = vmatpush.bf16.msra.mxu0 %v3381
    %3533 = vmatmul.bf16.gmra.mxu0 %v2345
    %v3534 = vpop.f32.mrf.mxu0
    %v3535 = vadd.f32 %v3091, %v3534
    %v3536 = vpop.f32.mrf.mxu0
    %v3537 = vadd.f32 %v3091, %v3536
    %3538 = vmatmul.bf16.gmra.mxu0 %v2346
    %v3539 = vpop.f32.mrf.mxu0
    %v3540 = vadd.f32 %v3091, %v3539
    %v3541 = vpop.f32.mrf.mxu0
    %v3542 = vadd.f32 %v3091, %v3541
    %3543 = vmatmul.bf16.gmra.mxu0 %v2347
    %v3544 = vpop.f32.mrf.mxu0
    %v3545 = vadd.f32 %v3091, %v3544
    %v3546 = vpop.f32.mrf.mxu0
    %v3547 = vadd.f32 %v3091, %v3546
    %3548 = vmatmul.bf16.gmra.mxu0 %v2348
    %v3549 = vpop.f32.mrf.mxu0
    %v3550 = vadd.f32 %v3091, %v3549
    %v3551 = vpop.f32.mrf.mxu0
    %v3552 = vadd.f32 %v3091, %v3551
    %3553 = vmatmul.bf16.gmra.mxu0 %v2349
    %v3554 = vpop.f32.mrf.mxu0
    %v3555 = vadd.f32 %v3091, %v3554
    %v3556 = vpop.f32.mrf.mxu0
    %v3557 = vadd.f32 %v3091, %v3556
    %3558 = vmatmul.bf16.gmra.mxu0 %v2350
    %v3559 = vpop.f32.mrf.mxu0
    %v3560 = vadd.f32 %v3091, %v3559
    %v3561 = vpop.f32.mrf.mxu0
    %v3562 = vadd.f32 %v3091, %v3561
    %3563 = vmatmul.bf16.gmra.mxu0 %v2351
    %v3564 = vpop.f32.mrf.mxu0
    %v3565 = vadd.f32 %v3091, %v3564
    %v3566 = vpop.f32.mrf.mxu0
    %v3567 = vadd.f32 %v3091, %v3566
    %3568 = vmatmul.bf16.gmra.mxu0 %v2352
    %v3569 = vpop.f32.mrf.mxu0
    %v3570 = vadd.f32 %v3091, %v3569
    %v3571 = vpop.f32.mrf.mxu0
    %v3572 = vadd.f32 %v3091, %v3571
    %3573 = vmatmul.bf16.gmra.mxu0 %v2353
    %v3574 = vpop.f32.mrf.mxu0
    %v3575 = vadd.f32 %v3091, %v3574
    %v3576 = vpop.f32.mrf.mxu0
    %v3577 = vadd.f32 %v3091, %v3576
    %3578 = vmatmul.bf16.gmra.mxu0 %v2354
    %v3579 = vpop.f32.mrf.mxu0
    %v3580 = vadd.f32 %v3091, %v3579
    %v3581 = vpop.f32.mrf.mxu0
    %v3582 = vadd.f32 %v3091, %v3581
    %3583 = vmatmul.bf16.gmra.mxu0 %v2355
    %v3584 = vpop.f32.mrf.mxu0
    %v3585 = vadd.f32 %v3091, %v3584
    %v3586 = vpop.f32.mrf.mxu0
    %v3587 = vadd.f32 %v3091, %v3586
    %3588 = vmatmul.bf16.gmra.mxu0 %v2356
    %v3589 = vpop.f32.mrf.mxu0
    %v3590 = vadd.f32 %v3091, %v3589
    %v3591 = vpop.f32.mrf.mxu0
    %v3592 = vadd.f32 %v3091, %v3591
    %3593 = vdwg.mxu0
    %3594 = vmatpush.bf16.msra.mxu0 %v3396
    %3595 = vmatpush.bf16.msra.mxu0 %v3395
    %3596 = vmatpush.bf16.msra.mxu0 %v3394
    %3597 = vmatpush.bf16.msra.mxu0 %v3393
    %3598 = vmatpush.bf16.msra.mxu0 %v3392
    %3599 = vmatpush.bf16.msra.mxu0 %v3391
    %3600 = vmatpush.bf16.msra.mxu0 %v3390
    %3601 = vmatpush.bf16.msra.mxu0 %v3389
    %3602 = vmatmul.bf16.gmra.mxu0 %v2417
    %v3603 = vpop.f32.mrf.mxu0
    %v3604 = vadd.f32 %v3535, %v3603
    %v3605 = vpop.f32.mrf.mxu0
    %v3606 = vadd.f32 %v3537, %v3605
    %3607 = vmatmul.bf16.gmra.mxu0 %v2418
    %v3608 = vpop.f32.mrf.mxu0
    %v3609 = vadd.f32 %v3540, %v3608
    %v3610 = vpop.f32.mrf.mxu0
    %v3611 = vadd.f32 %v3542, %v3610
    %3612 = vmatmul.bf16.gmra.mxu0 %v2419
    %v3613 = vpop.f32.mrf.mxu0
    %v3614 = vadd.f32 %v3545, %v3613
    %v3615 = vpop.f32.mrf.mxu0
    %v3616 = vadd.f32 %v3547, %v3615
    %3617 = vmatmul.bf16.gmra.mxu0 %v2420
    %v3618 = vpop.f32.mrf.mxu0
    %v3619 = vadd.f32 %v3550, %v3618
    %v3620 = vpop.f32.mrf.mxu0
    %v3621 = vadd.f32 %v3552, %v3620
    %3622 = vmatmul.bf16.gmra.mxu0 %v2421
    %v3623 = vpop.f32.mrf.mxu0
    %v3624 = vadd.f32 %v3555, %v3623
    %v3625 = vpop.f32.mrf.mxu0
    %v3626 = vadd.f32 %v3557, %v3625
    %3627 = vmatmul.bf16.gmra.mxu0 %v2422
    %v3628 = vpop.f32.mrf.mxu0
    %v3629 = vadd.f32 %v3560, %v3628
    %v3630 = vpop.f32.mrf.mxu0
    %v3631 = vadd.f32 %v3562, %v3630
    %3632 = vmatmul.bf16.gmra.mxu0 %v2423
    %v3633 = vpop.f32.mrf.mxu0
    %v3634 = vadd.f32 %v3565, %v3633
    %v3635 = vpop.f32.mrf.mxu0
    %v3636 = vadd.f32 %v3567, %v3635
    %3637 = vmatmul.bf16.gmra.mxu0 %v2424
    %v3638 = vpop.f32.mrf.mxu0
    %v3639 = vadd.f32 %v3570, %v3638
    %v3640 = vpop.f32.mrf.mxu0
    %v3641 = vadd.f32 %v3572, %v3640
    %3642 = vmatmul.bf16.gmra.mxu0 %v2425
    %v3643 = vpop.f32.mrf.mxu0
    %v3644 = vadd.f32 %v3575, %v3643
    %v3645 = vpop.f32.mrf.mxu0
    %v3646 = vadd.f32 %v3577, %v3645
    %3647 = vmatmul.bf16.gmra.mxu0 %v2426
    %v3648 = vpop.f32.mrf.mxu0
    %v3649 = vadd.f32 %v3580, %v3648
    %v3650 = vpop.f32.mrf.mxu0
    %v3651 = vadd.f32 %v3582, %v3650
    %3652 = vmatmul.bf16.gmra.mxu0 %v2427
    %v3653 = vpop.f32.mrf.mxu0
    %v3654 = vadd.f32 %v3585, %v3653
    %v3655 = vpop.f32.mrf.mxu0
    %v3656 = vadd.f32 %v3587, %v3655
    %3657 = vmatmul.bf16.gmra.mxu0 %v2428
    %v3658 = vpop.f32.mrf.mxu0
    %v3659 = vadd.f32 %v3590, %v3658
    %v3660 = vpop.f32.mrf.mxu0
    %v3661 = vadd.f32 %v3592, %v3660
    %3662 = vdwg.mxu0
    %3663 = vmatpush.bf16.msra.mxu0 %v3404
    %3664 = vmatpush.bf16.msra.mxu0 %v3403
    %3665 = vmatpush.bf16.msra.mxu0 %v3402
    %3666 = vmatpush.bf16.msra.mxu0 %v3401
    %3667 = vmatpush.bf16.msra.mxu0 %v3400
    %3668 = vmatpush.bf16.msra.mxu0 %v3399
    %3669 = vmatpush.bf16.msra.mxu0 %v3398
    %3670 = vmatpush.bf16.msra.mxu0 %v3397
    %3671 = vmatmul.bf16.gmra.mxu0 %v2489
    %v3672 = vpop.f32.mrf.mxu0
    %v3673 = vadd.f32 %v3604, %v3672
    %v3674 = vpop.f32.mrf.mxu0
    %v3675 = vadd.f32 %v3606, %v3674
    %3676 = vmatmul.bf16.gmra.mxu0 %v2490
    %v3677 = vpop.f32.mrf.mxu0
    %v3678 = vadd.f32 %v3609, %v3677
    %v3679 = vpop.f32.mrf.mxu0
    %v3680 = vadd.f32 %v3611, %v3679
    %3681 = vmatmul.bf16.gmra.mxu0 %v2491
    %v3682 = vpop.f32.mrf.mxu0
    %v3683 = vadd.f32 %v3614, %v3682
    %v3684 = vpop.f32.mrf.mxu0
    %v3685 = vadd.f32 %v3616, %v3684
    %3686 = vmatmul.bf16.gmra.mxu0 %v2492
    %v3687 = vpop.f32.mrf.mxu0
    %v3688 = vadd.f32 %v3619, %v3687
    %v3689 = vpop.f32.mrf.mxu0
    %v3690 = vadd.f32 %v3621, %v3689
    %3691 = vmatmul.bf16.gmra.mxu0 %v2493
    %v3692 = vpop.f32.mrf.mxu0
    %v3693 = vadd.f32 %v3624, %v3692
    %v3694 = vpop.f32.mrf.mxu0
    %v3695 = vadd.f32 %v3626, %v3694
    %3696 = vmatmul.bf16.gmra.mxu0 %v2494
    %v3697 = vpop.f32.mrf.mxu0
    %v3698 = vadd.f32 %v3629, %v3697
    %v3699 = vpop.f32.mrf.mxu0
    %v3700 = vadd.f32 %v3631, %v3699
    %3701 = vmatmul.bf16.gmra.mxu0 %v2495
    %v3702 = vpop.f32.mrf.mxu0
    %v3703 = vadd.f32 %v3634, %v3702
    %v3704 = vpop.f32.mrf.mxu0
    %v3705 = vadd.f32 %v3636, %v3704
    %3706 = vmatmul.bf16.gmra.mxu0 %v2496
    %v3707 = vpop.f32.mrf.mxu0
    %v3708 = vadd.f32 %v3639, %v3707
    %v3709 = vpop.f32.mrf.mxu0
    %v3710 = vadd.f32 %v3641, %v3709
    %3711 = vmatmul.bf16.gmra.mxu0 %v2497
    %v3712 = vpop.f32.mrf.mxu0
    %v3713 = vadd.f32 %v3644, %v3712
    %v3714 = vpop.f32.mrf.mxu0
    %v3715 = vadd.f32 %v3646, %v3714
    %3716 = vmatmul.bf16.gmra.mxu0 %v2498
    %v3717 = vpop.f32.mrf.mxu0
    %v3718 = vadd.f32 %v3649, %v3717
    %v3719 = vpop.f32.mrf.mxu0
    %v3720 = vadd.f32 %v3651, %v3719
    %3721 = vmatmul.bf16.gmra.mxu0 %v2499
    %v3722 = vpop.f32.mrf.mxu0
    %v3723 = vadd.f32 %v3654, %v3722
    %v3724 = vpop.f32.mrf.mxu0
    %v3725 = vadd.f32 %v3656, %v3724
    %3726 = vmatmul.bf16.gmra.mxu0 %v2500
    %v3727 = vpop.f32.mrf.mxu0
    %v3728 = vadd.f32 %v3659, %v3727
    %v3729 = vpop.f32.mrf.mxu0
    %v3730 = vadd.f32 %v3661, %v3729
    %3731 = vdwg.mxu0
    %3732 = vmatpush.bf16.msra.mxu0 %v3412
    %3733 = vmatpush.bf16.msra.mxu0 %v3411
    %3734 = vmatpush.bf16.msra.mxu0 %v3410
    %3735 = vmatpush.bf16.msra.mxu0 %v3409
    %3736 = vmatpush.bf16.msra.mxu0 %v3408
    %3737 = vmatpush.bf16.msra.mxu0 %v3407
    %3738 = vmatpush.bf16.msra.mxu0 %v3406
    %3739 = vmatpush.bf16.msra.mxu0 %v3405
    %3740 = vmatmul.bf16.gmra.mxu0 %v2561
    %v3741 = vpop.f32.mrf.mxu0
    %v3742 = vadd.f32 %v3673, %v3741
    %v3743 = vpop.f32.mrf.mxu0
    %v3744 = vadd.f32 %v3675, %v3743
    %3745 = vmatmul.bf16.gmra.mxu0 %v2562
    %v3746 = vpop.f32.mrf.mxu0
    %v3747 = vadd.f32 %v3678, %v3746
    %v3748 = vpop.f32.mrf.mxu0
    %v3749 = vadd.f32 %v3680, %v3748
    %3750 = vmatmul.bf16.gmra.mxu0 %v2563
    %v3751 = vpop.f32.mrf.mxu0
    %v3752 = vadd.f32 %v3683, %v3751
    %v3753 = vpop.f32.mrf.mxu0
    %v3754 = vadd.f32 %v3685, %v3753
    %3755 = vmatmul.bf16.gmra.mxu0 %v2564
    %v3756 = vpop.f32.mrf.mxu0
    %v3757 = vadd.f32 %v3688, %v3756
    %v3758 = vpop.f32.mrf.mxu0
    %v3759 = vadd.f32 %v3690, %v3758
    %3760 = vmatmul.bf16.gmra.mxu0 %v2565
    %v3761 = vpop.f32.mrf.mxu0
    %v3762 = vadd.f32 %v3693, %v3761
    %v3763 = vpop.f32.mrf.mxu0
    %v3764 = vadd.f32 %v3695, %v3763
    %3765 = vmatmul.bf16.gmra.mxu0 %v2566
    %v3766 = vpop.f32.mrf.mxu0
    %v3767 = vadd.f32 %v3698, %v3766
    %v3768 = vpop.f32.mrf.mxu0
    %v3769 = vadd.f32 %v3700, %v3768
    %3770 = vmatmul.bf16.gmra.mxu0 %v2567
    %v3771 = vpop.f32.mrf.mxu0
    %v3772 = vadd.f32 %v3703, %v3771
    %v3773 = vpop.f32.mrf.mxu0
    %v3774 = vadd.f32 %v3705, %v3773
    %3775 = vmatmul.bf16.gmra.mxu0 %v2568
    %v3776 = vpop.f32.mrf.mxu0
    %v3777 = vadd.f32 %v3708, %v3776
    %v3778 = vpop.f32.mrf.mxu0
    %v3779 = vadd.f32 %v3710, %v3778
    %3780 = vmatmul.bf16.gmra.mxu0 %v2569
    %v3781 = vpop.f32.mrf.mxu0
    %v3782 = vadd.f32 %v3713, %v3781
    %v3783 = vpop.f32.mrf.mxu0
    %v3784 = vadd.f32 %v3715, %v3783
    %3785 = vmatmul.bf16.gmra.mxu0 %v2570
    %v3786 = vpop.f32.mrf.mxu0
    %v3787 = vadd.f32 %v3718, %v3786
    %v3788 = vpop.f32.mrf.mxu0
    %v3789 = vadd.f32 %v3720, %v3788
    %3790 = vmatmul.bf16.gmra.mxu0 %v2571
    %v3791 = vpop.f32.mrf.mxu0
    %v3792 = vadd.f32 %v3723, %v3791
    %v3793 = vpop.f32.mrf.mxu0
    %v3794 = vadd.f32 %v3725, %v3793
    %3795 = vmatmul.bf16.gmra.mxu0 %v2572
    %v3796 = vpop.f32.mrf.mxu0
    %v3797 = vadd.f32 %v3728, %v3796
    %v3798 = vpop.f32.mrf.mxu0
    %v3799 = vadd.f32 %v3730, %v3798
    %3800 = vdwg.mxu0
    %3801 = vmatpush.bf16.msra.mxu0 %v3420
    %3802 = vmatpush.bf16.msra.mxu0 %v3419
    %3803 = vmatpush.bf16.msra.mxu0 %v3418
    %3804 = vmatpush.bf16.msra.mxu0 %v3417
    %3805 = vmatpush.bf16.msra.mxu0 %v3416
    %3806 = vmatpush.bf16.msra.mxu0 %v3415
    %3807 = vmatpush.bf16.msra.mxu0 %v3414
    %3808 = vmatpush.bf16.msra.mxu0 %v3413
    %3809 = vmatmul.bf16.gmra.mxu0 %v2633
    %v3810 = vpop.f32.mrf.mxu0
    %v3811 = vadd.f32 %v3742, %v3810
    %v3812 = vpop.f32.mrf.mxu0
    %v3813 = vadd.f32 %v3744, %v3812
    %3814 = vmatmul.bf16.gmra.mxu0 %v2634
    %v3815 = vpop.f32.mrf.mxu0
    %v3816 = vadd.f32 %v3747, %v3815
    %v3817 = vpop.f32.mrf.mxu0
    %v3818 = vadd.f32 %v3749, %v3817
    %3819 = vmatmul.bf16.gmra.mxu0 %v2635
    %v3820 = vpop.f32.mrf.mxu0
    %v3821 = vadd.f32 %v3752, %v3820
    %v3822 = vpop.f32.mrf.mxu0
    %v3823 = vadd.f32 %v3754, %v3822
    %3824 = vmatmul.bf16.gmra.mxu0 %v2636
    %v3825 = vpop.f32.mrf.mxu0
    %v3826 = vadd.f32 %v3757, %v3825
    %v3827 = vpop.f32.mrf.mxu0
    %v3828 = vadd.f32 %v3759, %v3827
    %3829 = vmatmul.bf16.gmra.mxu0 %v2637
    %v3830 = vpop.f32.mrf.mxu0
    %v3831 = vadd.f32 %v3762, %v3830
    %v3832 = vpop.f32.mrf.mxu0
    %v3833 = vadd.f32 %v3764, %v3832
    %3834 = vmatmul.bf16.gmra.mxu0 %v2638
    %v3835 = vpop.f32.mrf.mxu0
    %v3836 = vadd.f32 %v3767, %v3835
    %v3837 = vpop.f32.mrf.mxu0
    %v3838 = vadd.f32 %v3769, %v3837
    %3839 = vmatmul.bf16.gmra.mxu0 %v2639
    %v3840 = vpop.f32.mrf.mxu0
    %v3841 = vadd.f32 %v3772, %v3840
    %v3842 = vpop.f32.mrf.mxu0
    %v3843 = vadd.f32 %v3774, %v3842
    %3844 = vmatmul.bf16.gmra.mxu0 %v2640
    %v3845 = vpop.f32.mrf.mxu0
    %v3846 = vadd.f32 %v3777, %v3845
    %v3847 = vpop.f32.mrf.mxu0
    %v3848 = vadd.f32 %v3779, %v3847
    %3849 = vmatmul.bf16.gmra.mxu0 %v2641
    %v3850 = vpop.f32.mrf.mxu0
    %v3851 = vadd.f32 %v3782, %v3850
    %v3852 = vpop.f32.mrf.mxu0
    %v3853 = vadd.f32 %v3784, %v3852
    %3854 = vmatmul.bf16.gmra.mxu0 %v2642
    %v3855 = vpop.f32.mrf.mxu0
    %v3856 = vadd.f32 %v3787, %v3855
    %v3857 = vpop.f32.mrf.mxu0
    %v3858 = vadd.f32 %v3789, %v3857
    %3859 = vmatmul.bf16.gmra.mxu0 %v2643
    %v3860 = vpop.f32.mrf.mxu0
    %v3861 = vadd.f32 %v3792, %v3860
    %v3862 = vpop.f32.mrf.mxu0
    %v3863 = vadd.f32 %v3794, %v3862
    %3864 = vmatmul.bf16.gmra.mxu0 %v2644
    %v3865 = vpop.f32.mrf.mxu0
    %v3866 = vadd.f32 %v3797, %v3865
    %v3867 = vpop.f32.mrf.mxu0
    %v3868 = vadd.f32 %v3799, %v3867
    %3869 = vdwg.mxu0
    %3870 = vmatpush.bf16.msra.mxu0 %v3428
    %3871 = vmatpush.bf16.msra.mxu0 %v3427
    %3872 = vmatpush.bf16.msra.mxu0 %v3426
    %3873 = vmatpush.bf16.msra.mxu0 %v3425
    %3874 = vmatpush.bf16.msra.mxu0 %v3424
    %3875 = vmatpush.bf16.msra.mxu0 %v3423
    %3876 = vmatpush.bf16.msra.mxu0 %v3422
    %3877 = vmatpush.bf16.msra.mxu0 %v3421
    %3878 = vmatmul.bf16.gmra.mxu0 %v2705
    %v3879 = vpop.f32.mrf.mxu0
    %v3880 = vadd.f32 %v3811, %v3879
    %v3881 = vpop.f32.mrf.mxu0
    %v3882 = vadd.f32 %v3813, %v3881
    %3883 = vmatmul.bf16.gmra.mxu0 %v2706
    %v3884 = vpop.f32.mrf.mxu0
    %v3885 = vadd.f32 %v3816, %v3884
    %v3886 = vpop.f32.mrf.mxu0
    %v3887 = vadd.f32 %v3818, %v3886
    %3888 = vmatmul.bf16.gmra.mxu0 %v2707
    %v3889 = vpop.f32.mrf.mxu0
    %v3890 = vadd.f32 %v3821, %v3889
    %v3891 = vpop.f32.mrf.mxu0
    %v3892 = vadd.f32 %v3823, %v3891
    %3893 = vmatmul.bf16.gmra.mxu0 %v2708
    %v3894 = vpop.f32.mrf.mxu0
    %v3895 = vadd.f32 %v3826, %v3894
    %v3896 = vpop.f32.mrf.mxu0
    %v3897 = vadd.f32 %v3828, %v3896
    %3898 = vmatmul.bf16.gmra.mxu0 %v2709
    %v3899 = vpop.f32.mrf.mxu0
    %v3900 = vadd.f32 %v3831, %v3899
    %v3901 = vpop.f32.mrf.mxu0
    %v3902 = vadd.f32 %v3833, %v3901
    %3903 = vmatmul.bf16.gmra.mxu0 %v2710
    %v3904 = vpop.f32.mrf.mxu0
    %v3905 = vadd.f32 %v3836, %v3904
    %v3906 = vpop.f32.mrf.mxu0
    %v3907 = vadd.f32 %v3838, %v3906
    %3908 = vmatmul.bf16.gmra.mxu0 %v2711
    %v3909 = vpop.f32.mrf.mxu0
    %v3910 = vadd.f32 %v3841, %v3909
    %v3911 = vpop.f32.mrf.mxu0
    %v3912 = vadd.f32 %v3843, %v3911
    %3913 = vmatmul.bf16.gmra.mxu0 %v2712
    %v3914 = vpop.f32.mrf.mxu0
    %v3915 = vadd.f32 %v3846, %v3914
    %v3916 = vpop.f32.mrf.mxu0
    %v3917 = vadd.f32 %v3848, %v3916
    %3918 = vmatmul.bf16.gmra.mxu0 %v2713
    %v3919 = vpop.f32.mrf.mxu0
    %v3920 = vadd.f32 %v3851, %v3919
    %v3921 = vpop.f32.mrf.mxu0
    %v3922 = vadd.f32 %v3853, %v3921
    %3923 = vmatmul.bf16.gmra.mxu0 %v2714
    %v3924 = vpop.f32.mrf.mxu0
    %v3925 = vadd.f32 %v3856, %v3924
    %v3926 = vpop.f32.mrf.mxu0
    %v3927 = vadd.f32 %v3858, %v3926
    %3928 = vmatmul.bf16.gmra.mxu0 %v2715
    %v3929 = vpop.f32.mrf.mxu0
    %v3930 = vadd.f32 %v3861, %v3929
    %v3931 = vpop.f32.mrf.mxu0
    %v3932 = vadd.f32 %v3863, %v3931
    %3933 = vmatmul.bf16.gmra.mxu0 %v2716
    %v3934 = vpop.f32.mrf.mxu0
    %v3935 = vadd.f32 %v3866, %v3934
    %v3936 = vpop.f32.mrf.mxu0
    %v3937 = vadd.f32 %v3868, %v3936
    %3938 = vdwg.mxu0
    %3939 = vmatpush.bf16.msra.mxu0 %v3436
    %3940 = vmatpush.bf16.msra.mxu0 %v3435
    %3941 = vmatpush.bf16.msra.mxu0 %v3434
    %3942 = vmatpush.bf16.msra.mxu0 %v3433
    %3943 = vmatpush.bf16.msra.mxu0 %v3432
    %3944 = vmatpush.bf16.msra.mxu0 %v3431
    %3945 = vmatpush.bf16.msra.mxu0 %v3430
    %3946 = vmatpush.bf16.msra.mxu0 %v3429
    %3947 = vmatmul.bf16.gmra.mxu0 %v2777
    %v3948 = vpop.f32.mrf.mxu0
    %v3949 = vadd.f32 %v3880, %v3948
    %v3950 = vpop.f32.mrf.mxu0
    %v3951 = vadd.f32 %v3882, %v3950
    %3952 = vmatmul.bf16.gmra.mxu0 %v2778
    %v3953 = vpop.f32.mrf.mxu0
    %v3954 = vadd.f32 %v3885, %v3953
    %v3955 = vpop.f32.mrf.mxu0
    %v3956 = vadd.f32 %v3887, %v3955
    %3957 = vmatmul.bf16.gmra.mxu0 %v2779
    %v3958 = vpop.f32.mrf.mxu0
    %v3959 = vadd.f32 %v3890, %v3958
    %v3960 = vpop.f32.mrf.mxu0
    %v3961 = vadd.f32 %v3892, %v3960
    %3962 = vmatmul.bf16.gmra.mxu0 %v2780
    %v3963 = vpop.f32.mrf.mxu0
    %v3964 = vadd.f32 %v3895, %v3963
    %v3965 = vpop.f32.mrf.mxu0
    %v3966 = vadd.f32 %v3897, %v3965
    %3967 = vmatmul.bf16.gmra.mxu0 %v2781
    %v3968 = vpop.f32.mrf.mxu0
    %v3969 = vadd.f32 %v3900, %v3968
    %v3970 = vpop.f32.mrf.mxu0
    %v3971 = vadd.f32 %v3902, %v3970
    %3972 = vmatmul.bf16.gmra.mxu0 %v2782
    %v3973 = vpop.f32.mrf.mxu0
    %v3974 = vadd.f32 %v3905, %v3973
    %v3975 = vpop.f32.mrf.mxu0
    %v3976 = vadd.f32 %v3907, %v3975
    %3977 = vmatmul.bf16.gmra.mxu0 %v2783
    %v3978 = vpop.f32.mrf.mxu0
    %v3979 = vadd.f32 %v3910, %v3978
    %v3980 = vpop.f32.mrf.mxu0
    %v3981 = vadd.f32 %v3912, %v3980
    %3982 = vmatmul.bf16.gmra.mxu0 %v2784
    %v3983 = vpop.f32.mrf.mxu0
    %v3984 = vadd.f32 %v3915, %v3983
    %v3985 = vpop.f32.mrf.mxu0
    %v3986 = vadd.f32 %v3917, %v3985
    %3987 = vmatmul.bf16.gmra.mxu0 %v2785
    %v3988 = vpop.f32.mrf.mxu0
    %v3989 = vadd.f32 %v3920, %v3988
    %v3990 = vpop.f32.mrf.mxu0
    %v3991 = vadd.f32 %v3922, %v3990
    %3992 = vmatmul.bf16.gmra.mxu0 %v2786
    %v3993 = vpop.f32.mrf.mxu0
    %v3994 = vadd.f32 %v3925, %v3993
    %v3995 = vpop.f32.mrf.mxu0
    %v3996 = vadd.f32 %v3927, %v3995
    %3997 = vmatmul.bf16.gmra.mxu0 %v2787
    %v3998 = vpop.f32.mrf.mxu0
    %v3999 = vadd.f32 %v3930, %v3998
    %v4000 = vpop.f32.mrf.mxu0
    %v4001 = vadd.f32 %v3932, %v4000
    %4002 = vmatmul.bf16.gmra.mxu0 %v2788
    %v4003 = vpop.f32.mrf.mxu0
    %v4004 = vadd.f32 %v3935, %v4003
    %v4005 = vpop.f32.mrf.mxu0
    %v4006 = vadd.f32 %v3937, %v4005
    %4007 = vdwg.mxu0
    %4008 = vmatpush.bf16.msra.mxu0 %v3444
    %4009 = vmatpush.bf16.msra.mxu0 %v3443
    %4010 = vmatpush.bf16.msra.mxu0 %v3442
    %4011 = vmatpush.bf16.msra.mxu0 %v3441
    %4012 = vmatpush.bf16.msra.mxu0 %v3440
    %4013 = vmatpush.bf16.msra.mxu0 %v3439
    %4014 = vmatpush.bf16.msra.mxu0 %v3438
    %4015 = vmatpush.bf16.msra.mxu0 %v3437
    %4016 = vmatmul.bf16.gmra.mxu0 %v2849
    %v4017 = vpop.f32.mrf.mxu0
    %v4018 = vadd.f32 %v3949, %v4017
    %v4019 = vpop.f32.mrf.mxu0
    %v4020 = vadd.f32 %v3951, %v4019
    %4021 = vmatmul.bf16.gmra.mxu0 %v2850
    %v4022 = vpop.f32.mrf.mxu0
    %v4023 = vadd.f32 %v3954, %v4022
    %v4024 = vpop.f32.mrf.mxu0
    %v4025 = vadd.f32 %v3956, %v4024
    %4026 = vmatmul.bf16.gmra.mxu0 %v2851
    %v4027 = vpop.f32.mrf.mxu0
    %v4028 = vadd.f32 %v3959, %v4027
    %v4029 = vpop.f32.mrf.mxu0
    %v4030 = vadd.f32 %v3961, %v4029
    %4031 = vmatmul.bf16.gmra.mxu0 %v2852
    %v4032 = vpop.f32.mrf.mxu0
    %v4033 = vadd.f32 %v3964, %v4032
    %v4034 = vpop.f32.mrf.mxu0
    %v4035 = vadd.f32 %v3966, %v4034
    %4036 = vmatmul.bf16.gmra.mxu0 %v2853
    %v4037 = vpop.f32.mrf.mxu0
    %v4038 = vadd.f32 %v3969, %v4037
    %v4039 = vpop.f32.mrf.mxu0
    %v4040 = vadd.f32 %v3971, %v4039
    %4041 = vmatmul.bf16.gmra.mxu0 %v2854
    %v4042 = vpop.f32.mrf.mxu0
    %v4043 = vadd.f32 %v3974, %v4042
    %v4044 = vpop.f32.mrf.mxu0
    %v4045 = vadd.f32 %v3976, %v4044
    %4046 = vmatmul.bf16.gmra.mxu0 %v2855
    %v4047 = vpop.f32.mrf.mxu0
    %v4048 = vadd.f32 %v3979, %v4047
    %v4049 = vpop.f32.mrf.mxu0
    %v4050 = vadd.f32 %v3981, %v4049
    %4051 = vmatmul.bf16.gmra.mxu0 %v2856
    %v4052 = vpop.f32.mrf.mxu0
    %v4053 = vadd.f32 %v3984, %v4052
    %v4054 = vpop.f32.mrf.mxu0
    %v4055 = vadd.f32 %v3986, %v4054
    %4056 = vmatmul.bf16.gmra.mxu0 %v2857
    %v4057 = vpop.f32.mrf.mxu0
    %v4058 = vadd.f32 %v3989, %v4057
    %v4059 = vpop.f32.mrf.mxu0
    %v4060 = vadd.f32 %v3991, %v4059
    %4061 = vmatmul.bf16.gmra.mxu0 %v2858
    %v4062 = vpop.f32.mrf.mxu0
    %v4063 = vadd.f32 %v3994, %v4062
    %v4064 = vpop.f32.mrf.mxu0
    %v4065 = vadd.f32 %v3996, %v4064
    %4066 = vmatmul.bf16.gmra.mxu0 %v2859
    %v4067 = vpop.f32.mrf.mxu0
    %v4068 = vadd.f32 %v3999, %v4067
    %v4069 = vpop.f32.mrf.mxu0
    %v4070 = vadd.f32 %v4001, %v4069
    %4071 = vmatmul.bf16.gmra.mxu0 %v2860
    %v4072 = vpop.f32.mrf.mxu0
    %v4073 = vadd.f32 %v4004, %v4072
    %v4074 = vpop.f32.mrf.mxu0
    %v4075 = vadd.f32 %v4006, %v4074
    %4076 = vdwg.mxu0
    %4077 = vmatpush.bf16.msra.mxu0 %v3452
    %4078 = vmatpush.bf16.msra.mxu0 %v3451
    %4079 = vmatpush.bf16.msra.mxu0 %v3450
    %4080 = vmatpush.bf16.msra.mxu0 %v3449
    %4081 = vmatpush.bf16.msra.mxu0 %v3448
    %4082 = vmatpush.bf16.msra.mxu0 %v3447
    %4083 = vmatpush.bf16.msra.mxu0 %v3446
    %4084 = vmatpush.bf16.msra.mxu0 %v3445
    %4085 = vmatmul.bf16.gmra.mxu0 %v2921
    %v4086 = vpop.f32.mrf.mxu0
    %v4087 = vadd.f32 %v4018, %v4086
    %v4088 = vpop.f32.mrf.mxu0
    %v4089 = vadd.f32 %v4020, %v4088
    %4090 = vmatmul.bf16.gmra.mxu0 %v2922
    %v4091 = vpop.f32.mrf.mxu0
    %v4092 = vadd.f32 %v4023, %v4091
    %v4093 = vpop.f32.mrf.mxu0
    %v4094 = vadd.f32 %v4025, %v4093
    %4095 = vmatmul.bf16.gmra.mxu0 %v2923
    %v4096 = vpop.f32.mrf.mxu0
    %v4097 = vadd.f32 %v4028, %v4096
    %v4098 = vpop.f32.mrf.mxu0
    %v4099 = vadd.f32 %v4030, %v4098
    %4100 = vmatmul.bf16.gmra.mxu0 %v2924
    %v4101 = vpop.f32.mrf.mxu0
    %v4102 = vadd.f32 %v4033, %v4101
    %v4103 = vpop.f32.mrf.mxu0
    %v4104 = vadd.f32 %v4035, %v4103
    %4105 = vmatmul.bf16.gmra.mxu0 %v2925
    %v4106 = vpop.f32.mrf.mxu0
    %v4107 = vadd.f32 %v4038, %v4106
    %v4108 = vpop.f32.mrf.mxu0
    %v4109 = vadd.f32 %v4040, %v4108
    %4110 = vmatmul.bf16.gmra.mxu0 %v2926
    %v4111 = vpop.f32.mrf.mxu0
    %v4112 = vadd.f32 %v4043, %v4111
    %v4113 = vpop.f32.mrf.mxu0
    %v4114 = vadd.f32 %v4045, %v4113
    %4115 = vmatmul.bf16.gmra.mxu0 %v2927
    %v4116 = vpop.f32.mrf.mxu0
    %v4117 = vadd.f32 %v4048, %v4116
    %v4118 = vpop.f32.mrf.mxu0
    %v4119 = vadd.f32 %v4050, %v4118
    %4120 = vmatmul.bf16.gmra.mxu0 %v2928
    %v4121 = vpop.f32.mrf.mxu0
    %v4122 = vadd.f32 %v4053, %v4121
    %v4123 = vpop.f32.mrf.mxu0
    %v4124 = vadd.f32 %v4055, %v4123
    %4125 = vmatmul.bf16.gmra.mxu0 %v2929
    %v4126 = vpop.f32.mrf.mxu0
    %v4127 = vadd.f32 %v4058, %v4126
    %v4128 = vpop.f32.mrf.mxu0
    %v4129 = vadd.f32 %v4060, %v4128
    %4130 = vmatmul.bf16.gmra.mxu0 %v2930
    %v4131 = vpop.f32.mrf.mxu0
    %v4132 = vadd.f32 %v4063, %v4131
    %v4133 = vpop.f32.mrf.mxu0
    %v4134 = vadd.f32 %v4065, %v4133
    %4135 = vmatmul.bf16.gmra.mxu0 %v2931
    %v4136 = vpop.f32.mrf.mxu0
    %v4137 = vadd.f32 %v4068, %v4136
    %v4138 = vpop.f32.mrf.mxu0
    %v4139 = vadd.f32 %v4070, %v4138
    %4140 = vmatmul.bf16.gmra.mxu0 %v2932
    %v4141 = vpop.f32.mrf.mxu0
    %v4142 = vadd.f32 %v4073, %v4141
    %v4143 = vpop.f32.mrf.mxu0
    %v4144 = vadd.f32 %v4075, %v4143
    %4145 = vdwg.mxu0
    %v4146 = vmax.f32 %v4087, 0.0
    %v4147 = vmax.f32 %v4089, 0.0
    %v4148 = vmax.f32 %v4092, 0.0
    %v4149 = vmax.f32 %v4094, 0.0
    %v4150 = vmax.f32 %v4097, 0.0
    %v4151 = vmax.f32 %v4099, 0.0
    %v4152 = vmax.f32 %v4102, 0.0
    %v4153 = vmax.f32 %v4104, 0.0
    %v4154 = vmax.f32 %v4107, 0.0
    %v4155 = vmax.f32 %v4109, 0.0
    %v4156 = vmax.f32 %v4112, 0.0
    %v4157 = vmax.f32 %v4114, 0.0
    %v4158 = vmax.f32 %v4117, 0.0
    %v4159 = vmax.f32 %v4119, 0.0
    %v4160 = vmax.f32 %v4122, 0.0
    %v4161 = vmax.f32 %v4124, 0.0
    %v4162 = vmax.f32 %v4127, 0.0
    %v4163 = vmax.f32 %v4129, 0.0
    %v4164 = vmax.f32 %v4132, 0.0
    %v4165 = vmax.f32 %v4134, 0.0
    %v4166 = vmax.f32 %v4137, 0.0
    %v4167 = vmax.f32 %v4139, 0.0
    %v4168 = vmax.f32 %v4142, 0.0
    %v4169 = vmax.f32 %v4144, 0.0
    %v4170 = vld [vmem:[#allocation12] sm:$0xff]
    %v4171 = vld [vmem:[#allocation12 + $0x8] sm:$0xff]
    %v4172 = vld [vmem:[#allocation12 + $0x10] sm:$0xff]
    %v4173 = vld [vmem:[#allocation12 + $0x18] sm:$0xff]
    %v4174 = vld [vmem:[#allocation12 + $0x20] sm:$0xff]
    %v4175 = vld [vmem:[#allocation12 + $0x28] sm:$0xff]
    %v4176 = vpack.c.bf16 %v4147, %v4146
    %v4177 = vpack.c.bf16 %v4149, %v4148
    %v4178 = vpack.c.bf16 %v4151, %v4150
    %v4179 = vpack.c.bf16 %v4153, %v4152
    %v4180 = vpack.c.bf16 %v4155, %v4154
    %v4181 = vpack.c.bf16 %v4157, %v4156
    %v4182 = vpack.c.bf16 %v4159, %v4158
    %v4183 = vpack.c.bf16 %v4161, %v4160
    %v4184 = vpack.c.bf16 %v4163, %v4162
    %v4185 = vpack.c.bf16 %v4165, %v4164
    %v4186 = vpack.c.bf16 %v4167, %v4166
    %v4187 = vpack.c.bf16 %v4169, %v4168
    %v4194 = vunpack.c.l.b16 %v4170
    %v4195 = vunpack.c.h.b16 %v4170
    %v4196 = vunpack.c.l.b16 %v4171
    %v4197 = vunpack.c.h.b16 %v4171
    %v4198 = vunpack.c.l.b16 %v4172
    %v4199 = vunpack.c.h.b16 %v4172
    %v4200 = vunpack.c.l.b16 %v4173
    %v4201 = vunpack.c.h.b16 %v4173
    %v4202 = vunpack.c.l.b16 %v4174
    %v4203 = vunpack.c.h.b16 %v4174
    %v4204 = vunpack.c.l.b16 %v4175
    %v4205 = vunpack.c.h.b16 %v4175
    %v4206 = vpack.c.b16 %v4196, %v4194
    %v4207 = vpack.c.b16 %v4197, %v4195
    %v4208 = vpack.c.b16 %v4200, %v4198
    %v4209 = vpack.c.b16 %v4201, %v4199
    %v4210 = vpack.c.b16 %v4204, %v4202
    %v4211 = vpack.c.b16 %v4205, %v4203
    %vm4215 = vcmask 523264
    %v4217 = vsel %vm4215, %v4207, 0
    %v4220 = vsel %vm4215, %v4209, 0
    %v4223 = vsel %vm4215, %v4211, 0
    %4225 = vmatpush.bf16.msra.mxu0 %v4183
    %4226 = vmatpush.bf16.msra.mxu0 %v4182
    %4227 = vmatpush.bf16.msra.mxu0 %v4181
    %4228 = vmatpush.bf16.msra.mxu0 %v4180
    %4229 = vmatpush.bf16.msra.mxu0 %v4179
    %4230 = vmatpush.bf16.msra.mxu0 %v4178
    %4231 = vmatpush.bf16.msra.mxu0 %v4177
    %4232 = vmatpush.bf16.msra.mxu0 %v4176
    %4233 = vmatmul.bf16.gmra.mxu0 %v4206
    %v4234 = vpop.f32.mrf.mxu0
    %v4235 = vadd.f32 0.0, %v4234
    %v4236 = vpop.f32.mrf.mxu0
    %v4237 = vadd.f32 0.0, %v4236
    %4238 = vmatmul.bf16.gmra.mxu0 %v4208
    %v4239 = vpop.f32.mrf.mxu0
    %v4240 = vadd.f32 0.0, %v4239
    %v4241 = vpop.f32.mrf.mxu0
    %v4242 = vadd.f32 0.0, %v4241
    %4243 = vmatmul.bf16.gmra.mxu0 %v4210
    %v4244 = vpop.f32.mrf.mxu0
    %v4245 = vadd.f32 0.0, %v4244
    %v4246 = vpop.f32.mrf.mxu0
    %v4247 = vadd.f32 0.0, %v4246
    %4248 = vdwg.mxu0
    %4249 = vmatpush.bf16.msra.mxu0 0
    %4250 = vmatpush.bf16.msra.mxu0 0
    %4251 = vmatpush.bf16.msra.mxu0 0
    %4252 = vmatpush.bf16.msra.mxu0 0
    %4253 = vmatpush.bf16.msra.mxu0 %v4187
    %4254 = vmatpush.bf16.msra.mxu0 %v4186
    %4255 = vmatpush.bf16.msra.mxu0 %v4185
    %4256 = vmatpush.bf16.msra.mxu0 %v4184
    %4257 = vmatmul.bf16.gmra.mxu0 %v4217
    %v4258 = vpop.f32.mrf.mxu0
    %v4259 = vadd.f32 %v4235, %v4258
    %v4260 = vpop.f32.mrf.mxu0
    %v4261 = vadd.f32 %v4237, %v4260
    %4262 = vmatmul.bf16.gmra.mxu0 %v4220
    %v4263 = vpop.f32.mrf.mxu0
    %v4264 = vadd.f32 %v4240, %v4263
    %v4265 = vpop.f32.mrf.mxu0
    %v4266 = vadd.f32 %v4242, %v4265
    %4267 = vmatmul.bf16.gmra.mxu0 %v4223
    %v4268 = vpop.f32.mrf.mxu0
    %v4269 = vadd.f32 %v4245, %v4268
    %v4270 = vpop.f32.mrf.mxu0
    %v4271 = vadd.f32 %v4247, %v4270
    %4272 = vdwg.mxu0
    %4273 = vst [vmem:[#allocation3] sm:$0xff] 0.0
    %4274 = vst [vmem:[#allocation3 + $0x8] sm:$0xff] 0.0
    %4275 = vst [vmem:[#allocation3 + $0x10] sm:$0xff] 0.0
    %4276 = vst [vmem:[#allocation3 + $0x18] sm:$0xff] 0.0
    %4277 = vst [vmem:[#allocation3 + $0x20] sm:$0xff] 0.0
    %4278 = vst [vmem:[#allocation3 + $0x28] sm:$0xff] 0.0
    %4279 = vst [vmem:[#allocation3 + $0x30] sm:$0xff] 0.0
    %4280 = vst [vmem:[#allocation3 + $0x38] sm:$0xff] 0.0
    %4281 = vst [vmem:[#allocation3 + $0x8] sm:$0xff] %v4259
    %4282 = vst [vmem:[#allocation3 + $0x10] sm:$0xff] %v4261
    %4283 = vst [vmem:[#allocation3 + $0x18] sm:$0xff] %v4264
    %4284 = vst [vmem:[#allocation3 + $0x20] sm:$0xff] %v4266
    %4285 = vst [vmem:[#allocation3 + $0x28] sm:$0xff] %v4269
    %4286 = vst [vmem:[#allocation3 + $0x30] sm:$0xff] %v4271
    %v4287 = vld [vmem:[%s8] sm:$0xff]
    %v4288 = vld [vmem:[%s8 + $0x8] sm:$0xff]
    %v4289 = vld [vmem:[%s8 + $0x10] sm:$0xff]
    %v4290 = vld [vmem:[%s8 + $0x18] sm:$0xff]
    %v4291 = vld [vmem:[%s8 + $0x20] sm:$0xff]
    %v4292 = vld [vmem:[%s8 + $0x28] sm:$0xff]
    %v4293 = vld [vmem:[#allocation3 + $0x1] sm:$0xff]
    %v4294 = vld [vmem:[#allocation3 + $0x9] sm:$0xff]
    %v4295 = vld [vmem:[#allocation3 + $0x11] sm:$0xff]
    %v4296 = vld [vmem:[#allocation3 + $0x19] sm:$0xff]
    %v4297 = vld [vmem:[#allocation3 + $0x21] sm:$0xff]
    %v4298 = vld [vmem:[#allocation3 + $0x29] sm:$0xff]
    %4300 = vset.pattern.permute.xlu0 0
    %4301 = vperm.xlu0 %4300, %v4287
    %v4302 = vpop.permute.xlu0 %4301
    %4305 = vset.pattern.permute.xlu0 0
    %4306 = vperm.xlu0 %4305, %v4288
    %v4307 = vpop.permute.xlu0 %4306
    %4310 = vset.pattern.permute.xlu0 0
    %4311 = vperm.xlu0 %4310, %v4289
    %v4312 = vpop.permute.xlu0 %4311
    %4315 = vset.pattern.permute.xlu0 0
    %4316 = vperm.xlu0 %4315, %v4290
    %v4317 = vpop.permute.xlu0 %4316
    %4320 = vset.pattern.permute.xlu0 0
    %4321 = vperm.xlu0 %4320, %v4291
    %v4322 = vpop.permute.xlu0 %4321
    %4325 = vset.pattern.permute.xlu0 0
    %4326 = vperm.xlu0 %4325, %v4292
    %v4327 = vpop.permute.xlu0 %4326
    %v4329 = vmul.f32 %v4293, %v4302
    %v4330 = vmul.f32 %v4294, %v4307
    %v4331 = vmul.f32 %v4295, %v4312
    %v4332 = vmul.f32 %v4296, %v4317
    %v4333 = vmul.f32 %v4297, %v4322
    %v4334 = vmul.f32 %v4298, %v4327
    %v4335 = vpack.c.bf16 %v4329, %v4329
    %v4336 = vpack.c.bf16 %v4330, %v4330
    %v4337 = vpack.c.bf16 %v4331, %v4331
    %v4338 = vpack.c.bf16 %v4332, %v4332
    %v4339 = vpack.c.bf16 %v4333, %v4333
    %v4340 = vpack.c.bf16 %v4334, %v4334
    %v4341 = vld [vmem:[#allocation3 + $0x2] sm:$0xff]
    %v4342 = vld [vmem:[#allocation3 + $0xa] sm:$0xff]
    %v4343 = vld [vmem:[#allocation3 + $0x12] sm:$0xff]
    %v4344 = vld [vmem:[#allocation3 + $0x1a] sm:$0xff]
    %v4345 = vld [vmem:[#allocation3 + $0x22] sm:$0xff]
    %v4346 = vld [vmem:[#allocation3 + $0x2a] sm:$0xff]
    %4347 = vset.pattern.permute.xlu0 1
    %4348 = vperm.xlu0 %4347, %v4287
    %v4349 = vpop.permute.xlu0 %4348
    %4351 = vset.pattern.permute.xlu0 1
    %4352 = vperm.xlu0 %4351, %v4288
    %v4353 = vpop.permute.xlu0 %4352
    %4355 = vset.pattern.permute.xlu0 1
    %4356 = vperm.xlu0 %4355, %v4289
    %v4357 = vpop.permute.xlu0 %4356
    %4359 = vset.pattern.permute.xlu0 1
    %4360 = vperm.xlu0 %4359, %v4290
    %v4361 = vpop.permute.xlu0 %4360
    %4363 = vset.pattern.permute.xlu0 1
    %4364 = vperm.xlu0 %4363, %v4291
    %v4365 = vpop.permute.xlu0 %4364
    %4367 = vset.pattern.permute.xlu0 1
    %4368 = vperm.xlu0 %4367, %v4292
    %v4369 = vpop.permute.xlu0 %4368
    %v4371 = vmul.f32 %v4341, %v4349
    %v4372 = vmul.f32 %v4342, %v4353
    %v4373 = vmul.f32 %v4343, %v4357
    %v4374 = vmul.f32 %v4344, %v4361
    %v4375 = vmul.f32 %v4345, %v4365
    %v4376 = vmul.f32 %v4346, %v4369
    %v4377 = vpack.c.bf16 %v4371, %v4371
    %v4378 = vpack.c.bf16 %v4372, %v4372
    %v4379 = vpack.c.bf16 %v4373, %v4373
    %v4380 = vpack.c.bf16 %v4374, %v4374
    %v4381 = vpack.c.bf16 %v4375, %v4375
    %v4382 = vpack.c.bf16 %v4376, %v4376
    %v4383 = vld [vmem:[#allocation3 + $0x3] sm:$0xff]
    %v4384 = vld [vmem:[#allocation3 + $0xb] sm:$0xff]
    %v4385 = vld [vmem:[#allocation3 + $0x13] sm:$0xff]
    %v4386 = vld [vmem:[#allocation3 + $0x1b] sm:$0xff]
    %v4387 = vld [vmem:[#allocation3 + $0x23] sm:$0xff]
    %v4388 = vld [vmem:[#allocation3 + $0x2b] sm:$0xff]
    %4389 = vset.pattern.permute.xlu0 2
    %4390 = vperm.xlu0 %4389, %v4287
    %v4391 = vpop.permute.xlu0 %4390
    %4393 = vset.pattern.permute.xlu0 2
    %4394 = vperm.xlu0 %4393, %v4288
    %v4395 = vpop.permute.xlu0 %4394
    %4397 = vset.pattern.permute.xlu0 2
    %4398 = vperm.xlu0 %4397, %v4289
    %v4399 = vpop.permute.xlu0 %4398
    %4401 = vset.pattern.permute.xlu0 2
    %4402 = vperm.xlu0 %4401, %v4290
    %v4403 = vpop.permute.xlu0 %4402
    %4405 = vset.pattern.permute.xlu0 2
    %4406 = vperm.xlu0 %4405, %v4291
    %v4407 = vpop.permute.xlu0 %4406
    %4409 = vset.pattern.permute.xlu0 2
    %4410 = vperm.xlu0 %4409, %v4292
    %v4411 = vpop.permute.xlu0 %4410
    %v4413 = vmul.f32 %v4383, %v4391
    %v4414 = vmul.f32 %v4384, %v4395
    %v4415 = vmul.f32 %v4385, %v4399
    %v4416 = vmul.f32 %v4386, %v4403
    %v4417 = vmul.f32 %v4387, %v4407
    %v4418 = vmul.f32 %v4388, %v4411
    %v4419 = vpack.c.bf16 %v4413, %v4413
    %v4420 = vpack.c.bf16 %v4414, %v4414
    %v4421 = vpack.c.bf16 %v4415, %v4415
    %v4422 = vpack.c.bf16 %v4416, %v4416
    %v4423 = vpack.c.bf16 %v4417, %v4417
    %v4424 = vpack.c.bf16 %v4418, %v4418
    %v4425 = vld [vmem:[#allocation3 + $0x7] sm:$0xff]
    %v4426 = vld [vmem:[#allocation3 + $0xf] sm:$0xff]
    %v4427 = vld [vmem:[#allocation3 + $0x17] sm:$0xff]
    %v4428 = vld [vmem:[#allocation3 + $0x1f] sm:$0xff]
    %v4429 = vld [vmem:[#allocation3 + $0x27] sm:$0xff]
    %v4430 = vld [vmem:[#allocation3 + $0x2f] sm:$0xff]
    %4431 = vset.pattern.permute.xlu0 3
    %4432 = vperm.xlu0 %4431, %v4287
    %v4433 = vpop.permute.xlu0 %4432
    %4435 = vset.pattern.permute.xlu0 3
    %4436 = vperm.xlu0 %4435, %v4288
    %v4437 = vpop.permute.xlu0 %4436
    %4439 = vset.pattern.permute.xlu0 3
    %4440 = vperm.xlu0 %4439, %v4289
    %v4441 = vpop.permute.xlu0 %4440
    %4443 = vset.pattern.permute.xlu0 3
    %4444 = vperm.xlu0 %4443, %v4290
    %v4445 = vpop.permute.xlu0 %4444
    %4447 = vset.pattern.permute.xlu0 3
    %4448 = vperm.xlu0 %4447, %v4291
    %v4449 = vpop.permute.xlu0 %4448
    %4451 = vset.pattern.permute.xlu0 3
    %4452 = vperm.xlu0 %4451, %v4292
    %v4453 = vpop.permute.xlu0 %4452
    %v4455 = vmul.f32 %v4425, %v4433
    %v4456 = vmul.f32 %v4426, %v4437
    %v4457 = vmul.f32 %v4427, %v4441
    %v4458 = vmul.f32 %v4428, %v4445
    %v4459 = vmul.f32 %v4429, %v4449
    %v4460 = vmul.f32 %v4430, %v4453
    %v4461 = vpack.c.bf16 %v4455, %v4455
    %v4462 = vpack.c.bf16 %v4456, %v4456
    %v4463 = vpack.c.bf16 %v4457, %v4457
    %v4464 = vpack.c.bf16 %v4458, %v4458
    %v4465 = vpack.c.bf16 %v4459, %v4459
    %v4466 = vpack.c.bf16 %v4460, %v4460
    %v4467 = vld [vmem:[#allocation3 + $0x8] sm:$0xff]
    %v4468 = vld [vmem:[#allocation3 + $0x10] sm:$0xff]
    %v4469 = vld [vmem:[#allocation3 + $0x18] sm:$0xff]
    %v4470 = vld [vmem:[#allocation3 + $0x20] sm:$0xff]
    %v4471 = vld [vmem:[#allocation3 + $0x28] sm:$0xff]
    %v4472 = vld [vmem:[#allocation3 + $0x30] sm:$0xff]
    %4473 = vset.pattern.permute.xlu0 4
    %4474 = vperm.xlu0 %4473, %v4287
    %v4475 = vpop.permute.xlu0 %4474
    %4477 = vset.pattern.permute.xlu0 4
    %4478 = vperm.xlu0 %4477, %v4288
    %v4479 = vpop.permute.xlu0 %4478
    %4481 = vset.pattern.permute.xlu0 4
    %4482 = vperm.xlu0 %4481, %v4289
    %v4483 = vpop.permute.xlu0 %4482
    %4485 = vset.pattern.permute.xlu0 4
    %4486 = vperm.xlu0 %4485, %v4290
    %v4487 = vpop.permute.xlu0 %4486
    %4489 = vset.pattern.permute.xlu0 4
    %4490 = vperm.xlu0 %4489, %v4291
    %v4491 = vpop.permute.xlu0 %4490
    %4493 = vset.pattern.permute.xlu0 4
    %4494 = vperm.xlu0 %4493, %v4292
    %v4495 = vpop.permute.xlu0 %4494
    %v4497 = vmul.f32 %v4467, %v4475
    %v4498 = vmul.f32 %v4468, %v4479
    %v4499 = vmul.f32 %v4469, %v4483
    %v4500 = vmul.f32 %v4470, %v4487
    %v4501 = vmul.f32 %v4471, %v4491
    %v4502 = vmul.f32 %v4472, %v4495
    %v4503 = vpack.c.bf16 %v4497, %v4497
    %v4504 = vpack.c.bf16 %v4498, %v4498
    %v4505 = vpack.c.bf16 %v4499, %v4499
    %v4506 = vpack.c.bf16 %v4500, %v4500
    %v4507 = vpack.c.bf16 %v4501, %v4501
    %v4508 = vpack.c.bf16 %v4502, %v4502
    %v4509 = vld [vmem:[#allocation3 + $0x9] sm:$0xff]
    %v4510 = vld [vmem:[#allocation3 + $0x11] sm:$0xff]
    %v4511 = vld [vmem:[#allocation3 + $0x19] sm:$0xff]
    %v4512 = vld [vmem:[#allocation3 + $0x21] sm:$0xff]
    %v4513 = vld [vmem:[#allocation3 + $0x29] sm:$0xff]
    %v4514 = vld [vmem:[#allocation3 + $0x31] sm:$0xff]
    %4515 = vset.pattern.permute.xlu0 5
    %4516 = vperm.xlu0 %4515, %v4287
    %v4517 = vpop.permute.xlu0 %4516
    %4519 = vset.pattern.permute.xlu0 5
    %4520 = vperm.xlu0 %4519, %v4288
    %v4521 = vpop.permute.xlu0 %4520
    %4523 = vset.pattern.permute.xlu0 5
    %4524 = vperm.xlu0 %4523, %v4289
    %v4525 = vpop.permute.xlu0 %4524
    %4527 = vset.pattern.permute.xlu0 5
    %4528 = vperm.xlu0 %4527, %v4290
    %v4529 = vpop.permute.xlu0 %4528
    %4531 = vset.pattern.permute.xlu0 5
    %4532 = vperm.xlu0 %4531, %v4291
    %v4533 = vpop.permute.xlu0 %4532
    %4535 = vset.pattern.permute.xlu0 5
    %4536 = vperm.xlu0 %4535, %v4292
    %v4537 = vpop.permute.xlu0 %4536
    %v4539 = vmul.f32 %v4509, %v4517
    %v4540 = vmul.f32 %v4510, %v4521
    %v4541 = vmul.f32 %v4511, %v4525
    %v4542 = vmul.f32 %v4512, %v4529
    %v4543 = vmul.f32 %v4513, %v4533
    %v4544 = vmul.f32 %v4514, %v4537
    %v4545 = vpack.c.bf16 %v4539, %v4539
    %v4546 = vpack.c.bf16 %v4540, %v4540
    %v4547 = vpack.c.bf16 %v4541, %v4541
    %v4548 = vpack.c.bf16 %v4542, %v4542
    %v4549 = vpack.c.bf16 %v4543, %v4543
    %v4550 = vpack.c.bf16 %v4544, %v4544
    %v4551 = vld [vmem:[#allocation3 + $0xd] sm:$0xff]
    %v4552 = vld [vmem:[#allocation3 + $0x15] sm:$0xff]
    %v4553 = vld [vmem:[#allocation3 + $0x1d] sm:$0xff]
    %v4554 = vld [vmem:[#allocation3 + $0x25] sm:$0xff]
    %v4555 = vld [vmem:[#allocation3 + $0x2d] sm:$0xff]
    %v4556 = vld [vmem:[#allocation3 + $0x35] sm:$0xff]
    %4557 = vset.pattern.permute.xlu0 6
    %4558 = vperm.xlu0 %4557, %v4287
    %v4559 = vpop.permute.xlu0 %4558
    %4561 = vset.pattern.permute.xlu0 6
    %4562 = vperm.xlu0 %4561, %v4288
    %v4563 = vpop.permute.xlu0 %4562
    %4565 = vset.pattern.permute.xlu0 6
    %4566 = vperm.xlu0 %4565, %v4289
    %v4567 = vpop.permute.xlu0 %4566
    %4569 = vset.pattern.permute.xlu0 6
    %4570 = vperm.xlu0 %4569, %v4290
    %v4571 = vpop.permute.xlu0 %4570
    %4573 = vset.pattern.permute.xlu0 6
    %4574 = vperm.xlu0 %4573, %v4291
    %v4575 = vpop.permute.xlu0 %4574
    %4577 = vset.pattern.permute.xlu0 6
    %4578 = vperm.xlu0 %4577, %v4292
    %v4579 = vpop.permute.xlu0 %4578
    %v4581 = vmul.f32 %v4551, %v4559
    %v4582 = vmul.f32 %v4552, %v4563
    %v4583 = vmul.f32 %v4553, %v4567
    %v4584 = vmul.f32 %v4554, %v4571
    %v4585 = vmul.f32 %v4555, %v4575
    %v4586 = vmul.f32 %v4556, %v4579
    %v4587 = vpack.c.bf16 %v4581, %v4581
    %v4588 = vpack.c.bf16 %v4582, %v4582
    %v4589 = vpack.c.bf16 %v4583, %v4583
    %v4590 = vpack.c.bf16 %v4584, %v4584
    %v4591 = vpack.c.bf16 %v4585, %v4585
    %v4592 = vpack.c.bf16 %v4586, %v4586
    %v4593 = vld [vmem:[#allocation3 + $0xe] sm:$0xff]
    %v4594 = vld [vmem:[#allocation3 + $0x16] sm:$0xff]
    %v4595 = vld [vmem:[#allocation3 + $0x1e] sm:$0xff]
    %v4596 = vld [vmem:[#allocation3 + $0x26] sm:$0xff]
    %v4597 = vld [vmem:[#allocation3 + $0x2e] sm:$0xff]
    %v4598 = vld [vmem:[#allocation3 + $0x36] sm:$0xff]
    %4599 = vset.pattern.permute.xlu0 7
    %4600 = vperm.xlu0 %4599, %v4287
    %v4601 = vpop.permute.xlu0 %4600
    %4603 = vset.pattern.permute.xlu0 7
    %4604 = vperm.xlu0 %4603, %v4288
    %v4605 = vpop.permute.xlu0 %4604
    %4607 = vset.pattern.permute.xlu0 7
    %4608 = vperm.xlu0 %4607, %v4289
    %v4609 = vpop.permute.xlu0 %4608
    %4611 = vset.pattern.permute.xlu0 7
    %4612 = vperm.xlu0 %4611, %v4290
    %v4613 = vpop.permute.xlu0 %4612
    %4615 = vset.pattern.permute.xlu0 7
    %4616 = vperm.xlu0 %4615, %v4291
    %v4617 = vpop.permute.xlu0 %4616
    %4619 = vset.pattern.permute.xlu0 7
    %4620 = vperm.xlu0 %4619, %v4292
    %v4621 = vpop.permute.xlu0 %4620
    %v4623 = vmul.f32 %v4593, %v4601
    %v4624 = vmul.f32 %v4594, %v4605
    %v4625 = vmul.f32 %v4595, %v4609
    %v4626 = vmul.f32 %v4596, %v4613
    %v4627 = vmul.f32 %v4597, %v4617
    %v4628 = vmul.f32 %v4598, %v4621
    %v4629 = vpack.c.bf16 %v4623, %v4623
    %v4630 = vpack.c.bf16 %v4624, %v4624
    %v4631 = vpack.c.bf16 %v4625, %v4625
    %v4632 = vpack.c.bf16 %v4626, %v4626
    %v4633 = vpack.c.bf16 %v4627, %v4627
    %v4634 = vpack.c.bf16 %v4628, %v4628
    %v4635 = vld [vmem:[#allocation3 + $0xf] sm:$0xff]
    %v4636 = vld [vmem:[#allocation3 + $0x17] sm:$0xff]
    %v4637 = vld [vmem:[#allocation3 + $0x1f] sm:$0xff]
    %v4638 = vld [vmem:[#allocation3 + $0x27] sm:$0xff]
    %v4639 = vld [vmem:[#allocation3 + $0x2f] sm:$0xff]
    %v4640 = vld [vmem:[#allocation3 + $0x37] sm:$0xff]
    %4641 = vset.pattern.permute.xlu0 8
    %4642 = vperm.xlu0 %4641, %v4287
    %v4643 = vpop.permute.xlu0 %4642
    %4645 = vset.pattern.permute.xlu0 8
    %4646 = vperm.xlu0 %4645, %v4288
    %v4647 = vpop.permute.xlu0 %4646
    %4649 = vset.pattern.permute.xlu0 8
    %4650 = vperm.xlu0 %4649, %v4289
    %v4651 = vpop.permute.xlu0 %4650
    %4653 = vset.pattern.permute.xlu0 8
    %4654 = vperm.xlu0 %4653, %v4290
    %v4655 = vpop.permute.xlu0 %4654
    %4657 = vset.pattern.permute.xlu0 8
    %4658 = vperm.xlu0 %4657, %v4291
    %v4659 = vpop.permute.xlu0 %4658
    %4661 = vset.pattern.permute.xlu0 8
    %4662 = vperm.xlu0 %4661, %v4292
    %v4663 = vpop.permute.xlu0 %4662
    %v4665 = vmul.f32 %v4635, %v4643
    %v4666 = vmul.f32 %v4636, %v4647
    %v4667 = vmul.f32 %v4637, %v4651
    %v4668 = vmul.f32 %v4638, %v4655
    %v4669 = vmul.f32 %v4639, %v4659
    %v4670 = vmul.f32 %v4640, %v4663
    %v4671 = vpack.c.bf16 %v4665, %v4665
    %v4672 = vpack.c.bf16 %v4666, %v4666
    %v4673 = vpack.c.bf16 %v4667, %v4667
    %v4674 = vpack.c.bf16 %v4668, %v4668
    %v4675 = vpack.c.bf16 %v4669, %v4669
    %v4676 = vpack.c.bf16 %v4670, %v4670
    %v4683 = vunpack.c.l.b16 %v4335
    %v4684 = vunpack.c.l.b16 %v4336
    %v4685 = vunpack.c.l.b16 %v4337
    %v4686 = vunpack.c.l.b16 %v4338
    %v4687 = vunpack.c.l.b16 %v4339
    %v4688 = vunpack.c.l.b16 %v4340
    %v4689 = vpack.c.b16 %v4684, %v4683
    %v4690 = vpack.c.b16 %v4686, %v4685
    %v4691 = vpack.c.b16 %v4688, %v4687
    %v4701 = vunpack.c.l.b16 %v4377
    %v4702 = vunpack.c.l.b16 %v4378
    %v4703 = vunpack.c.l.b16 %v4379
    %v4704 = vunpack.c.l.b16 %v4380
    %v4705 = vunpack.c.l.b16 %v4381
    %v4706 = vunpack.c.l.b16 %v4382
    %v4707 = vpack.c.b16 %v4702, %v4701
    %v4708 = vpack.c.b16 %v4704, %v4703
    %v4709 = vpack.c.b16 %v4706, %v4705
    %v4719 = vunpack.c.l.b16 %v4419
    %v4720 = vunpack.c.l.b16 %v4420
    %v4721 = vunpack.c.l.b16 %v4421
    %v4722 = vunpack.c.l.b16 %v4422
    %v4723 = vunpack.c.l.b16 %v4423
    %v4724 = vunpack.c.l.b16 %v4424
    %v4725 = vpack.c.b16 %v4720, %v4719
    %v4726 = vpack.c.b16 %v4722, %v4721
    %v4727 = vpack.c.b16 %v4724, %v4723
    %v4737 = vunpack.c.l.b16 %v4461
    %v4738 = vunpack.c.l.b16 %v4462
    %v4739 = vunpack.c.l.b16 %v4463
    %v4740 = vunpack.c.l.b16 %v4464
    %v4741 = vunpack.c.l.b16 %v4465
    %v4742 = vunpack.c.l.b16 %v4466
    %v4743 = vpack.c.b16 %v4738, %v4737
    %v4744 = vpack.c.b16 %v4740, %v4739
    %v4745 = vpack.c.b16 %v4742, %v4741
    %v4755 = vunpack.c.l.b16 %v4503
    %v4756 = vunpack.c.l.b16 %v4504
    %v4757 = vunpack.c.l.b16 %v4505
    %v4758 = vunpack.c.l.b16 %v4506
    %v4759 = vunpack.c.l.b16 %v4507
    %v4760 = vunpack.c.l.b16 %v4508
    %v4761 = vpack.c.b16 %v4756, %v4755
    %v4762 = vpack.c.b16 %v4758, %v4757
    %v4763 = vpack.c.b16 %v4760, %v4759
    %v4773 = vunpack.c.l.b16 %v4545
    %v4774 = vunpack.c.l.b16 %v4546
    %v4775 = vunpack.c.l.b16 %v4547
    %v4776 = vunpack.c.l.b16 %v4548
    %v4777 = vunpack.c.l.b16 %v4549
    %v4778 = vunpack.c.l.b16 %v4550
    %v4779 = vpack.c.b16 %v4774, %v4773
    %v4780 = vpack.c.b16 %v4776, %v4775
    %v4781 = vpack.c.b16 %v4778, %v4777
    %v4791 = vunpack.c.l.b16 %v4587
    %v4792 = vunpack.c.l.b16 %v4588
    %v4793 = vunpack.c.l.b16 %v4589
    %v4794 = vunpack.c.l.b16 %v4590
    %v4795 = vunpack.c.l.b16 %v4591
    %v4796 = vunpack.c.l.b16 %v4592
    %v4797 = vpack.c.b16 %v4792, %v4791
    %v4798 = vpack.c.b16 %v4794, %v4793
    %v4799 = vpack.c.b16 %v4796, %v4795
    %v4809 = vunpack.c.l.b16 %v4629
    %v4810 = vunpack.c.l.b16 %v4630
    %v4811 = vunpack.c.l.b16 %v4631
    %v4812 = vunpack.c.l.b16 %v4632
    %v4813 = vunpack.c.l.b16 %v4633
    %v4814 = vunpack.c.l.b16 %v4634
    %v4815 = vpack.c.b16 %v4810, %v4809
    %v4816 = vpack.c.b16 %v4812, %v4811
    %v4817 = vpack.c.b16 %v4814, %v4813
    %v4827 = vunpack.c.l.b16 %v4671
    %v4828 = vunpack.c.l.b16 %v4672
    %v4829 = vunpack.c.l.b16 %v4673
    %v4830 = vunpack.c.l.b16 %v4674
    %v4831 = vunpack.c.l.b16 %v4675
    %v4832 = vunpack.c.l.b16 %v4676
    %v4833 = vpack.c.b16 %v4828, %v4827
    %v4834 = vpack.c.b16 %v4830, %v4829
    %v4835 = vpack.c.b16 %v4832, %v4831
    %v4839 = vld [vmem:[#allocation14] sm:$0xf]
    %v4840 = vld [vmem:[#allocation14 + $0x4] sm:$0xf]
    %v4841 = vld [vmem:[#allocation14 + $0x8] sm:$0xf]
    %v4842 = vld [vmem:[#allocation14 + $0xc] sm:$0xf]
    %v4843 = vld [vmem:[#allocation14 + $0x10] sm:$0xf]
    %v4844 = vld [vmem:[#allocation14 + $0x14] sm:$0xf]
    %v4845 = vld [vmem:[#allocation14 + $0x18] sm:$0xf]
    %v4846 = vld [vmem:[#allocation14 + $0x1c] sm:$0xf]
    %v4847 = vld [vmem:[#allocation14 + $0x20] sm:$0xf]
    %v4848 = vld [vmem:[#allocation14 + $0x24] sm:$0xf]
    %v4849 = vld [vmem:[#allocation14 + $0x28] sm:$0xf]
    %v4850 = vld [vmem:[#allocation14 + $0x2c] sm:$0xf]
    %v4851 = vld [vmem:[#allocation14 + $0x30] sm:$0xf]
    %v4852 = vld [vmem:[#allocation14 + $0x34] sm:$0xf]
    %v4853 = vld [vmem:[#allocation14 + $0x38] sm:$0xf]
    %v4854 = vld [vmem:[#allocation14 + $0x3c] sm:$0xf]
    %v4855 = vld [vmem:[#allocation14 + $0x40] sm:$0xf]
    %v4856 = vld [vmem:[#allocation14 + $0x44] sm:$0xf]
    %v4857 = vld [vmem:[#allocation14 + $0x48] sm:$0xf]
    %v4858 = vld [vmem:[#allocation14 + $0x4c] sm:$0xf]
    %v4859 = vld [vmem:[#allocation14 + $0x50] sm:$0xf]
    %v4860 = vld [vmem:[#allocation14 + $0x54] sm:$0xf]
    %v4861 = vld [vmem:[#allocation14 + $0x58] sm:$0xf]
    %v4862 = vld [vmem:[#allocation14 + $0x5c] sm:$0xf]
    %v4863 = vld [vmem:[#allocation14 + $0x60] sm:$0xf]
    %v4864 = vld [vmem:[#allocation14 + $0x64] sm:$0xf]
    %v4865 = vld [vmem:[#allocation14 + $0x68] sm:$0xf]
    %v4866 = vld [vmem:[#allocation14 + $0x6c] sm:$0xf]
    %v4867 = vld [vmem:[#allocation14 + $0x70] sm:$0xf]
    %v4868 = vld [vmem:[#allocation14 + $0x74] sm:$0xf]
    %v4869 = vld [vmem:[#allocation14 + $0x78] sm:$0xf]
    %v4870 = vld [vmem:[#allocation14 + $0x7c] sm:$0xf]
    %v4871 = vld [vmem:[#allocation14 + $0x80] sm:$0xf]
    %v4872 = vld [vmem:[#allocation14 + $0x84] sm:$0xf]
    %v4873 = vld [vmem:[#allocation14 + $0x88] sm:$0xf]
    %v4874 = vld [vmem:[#allocation14 + $0x8c] sm:$0xf]
    %v4875 = vld [vmem:[#allocation14 + $0x90] sm:$0xf]
    %v4876 = vld [vmem:[#allocation14 + $0x94] sm:$0xf]
    %v4877 = vld [vmem:[#allocation14 + $0x98] sm:$0xf]
    %v4878 = vld [vmem:[#allocation14 + $0x9c] sm:$0xf]
    %v4879 = vld [vmem:[#allocation14 + $0xa0] sm:$0xf]
    %v4880 = vld [vmem:[#allocation14 + $0xa4] sm:$0xf]
    %v4881 = vld [vmem:[#allocation14 + $0xa8] sm:$0xf]
    %v4882 = vld [vmem:[#allocation14 + $0xac] sm:$0xf]
    %v4883 = vld [vmem:[#allocation14 + $0xb0] sm:$0xf]
    %v4884 = vld [vmem:[#allocation14 + $0xb4] sm:$0xf]
    %v4885 = vld [vmem:[#allocation14 + $0xb8] sm:$0xf]
    %v4886 = vld [vmem:[#allocation14 + $0xbc] sm:$0xf]
    %v4887 = vld [vmem:[#allocation14 + $0xc0] sm:$0xf]
    %v4888 = vld [vmem:[#allocation14 + $0xc4] sm:$0xf]
    %v4889 = vld [vmem:[#allocation14 + $0xc8] sm:$0xf]
    %v4890 = vld [vmem:[#allocation14 + $0xcc] sm:$0xf]
    %v4891 = vld [vmem:[#allocation14 + $0xd0] sm:$0xf]
    %v4892 = vld [vmem:[#allocation14 + $0xd4] sm:$0xf]
    %v4893 = vld [vmem:[#allocation14 + $0xd8] sm:$0xf]
    %v4894 = vld [vmem:[#allocation14 + $0xdc] sm:$0xf]
    %v4895 = vld [vmem:[#allocation14 + $0xe0] sm:$0xf]
    %v4896 = vld [vmem:[#allocation14 + $0xe4] sm:$0xf]
    %v4897 = vld [vmem:[#allocation14 + $0xe8] sm:$0xf]
    %v4898 = vld [vmem:[#allocation14 + $0xec] sm:$0xf]
    %v4899 = vld [vmem:[#allocation14 + $0xf0] sm:$0xf]
    %v4900 = vld [vmem:[#allocation14 + $0xf4] sm:$0xf]
    %v4901 = vld [vmem:[#allocation14 + $0xf8] sm:$0xf]
    %v4902 = vld [vmem:[#allocation14 + $0xfc] sm:$0xf]
    %v4903 = vld [vmem:[#allocation14 + $0x100] sm:$0xf]
    %v4904 = vld [vmem:[#allocation14 + $0x104] sm:$0xf]
    %v4905 = vld [vmem:[#allocation14 + $0x108] sm:$0xf]
    %v4906 = vld [vmem:[#allocation14 + $0x10c] sm:$0xf]
    %v4907 = vld [vmem:[#allocation14 + $0x110] sm:$0xf]
    %v4908 = vld [vmem:[#allocation14 + $0x114] sm:$0xf]
    %v4909 = vld [vmem:[#allocation14 + $0x118] sm:$0xf]
    %v4910 = vld [vmem:[#allocation14 + $0x11c] sm:$0xf]
    %v4911 = vld [vmem:[#allocation14 + $0x120] sm:$0xf]
    %v4912 = vld [vmem:[#allocation14 + $0x124] sm:$0xf]
    %v4913 = vld [vmem:[#allocation14 + $0x128] sm:$0xf]
    %v4914 = vld [vmem:[#allocation14 + $0x12c] sm:$0xf]
    %v4915 = vld [vmem:[#allocation14 + $0x130] sm:$0xf]
    %v4916 = vld [vmem:[#allocation14 + $0x134] sm:$0xf]
    %v4917 = vld [vmem:[#allocation14 + $0x138] sm:$0xf]
    %v4918 = vld [vmem:[#allocation14 + $0x13c] sm:$0xf]
    %v4919 = vld [vmem:[#allocation14 + $0x140] sm:$0xf]
    %v4920 = vld [vmem:[#allocation14 + $0x144] sm:$0xf]
    %v4921 = vld [vmem:[#allocation14 + $0x148] sm:$0xf]
    %v4922 = vld [vmem:[#allocation14 + $0x14c] sm:$0xf]
    %v4923 = vld [vmem:[#allocation14 + $0x150] sm:$0xf]
    %v4924 = vld [vmem:[#allocation14 + $0x154] sm:$0xf]
    %v4925 = vld [vmem:[#allocation14 + $0x158] sm:$0xf]
    %v4926 = vld [vmem:[#allocation14 + $0x15c] sm:$0xf]
    %v4927 = vld [vmem:[#allocation14 + $0x160] sm:$0xf]
    %v4928 = vld [vmem:[#allocation14 + $0x164] sm:$0xf]
    %v4929 = vld [vmem:[#allocation14 + $0x168] sm:$0xf]
    %v4930 = vld [vmem:[#allocation14 + $0x16c] sm:$0xf]
    %v4931 = vld [vmem:[#allocation14 + $0x170] sm:$0xf]
    %v4932 = vld [vmem:[#allocation14 + $0x174] sm:$0xf]
    %v4933 = vld [vmem:[#allocation14 + $0x178] sm:$0xf]
    %v4934 = vld [vmem:[#allocation14 + $0x17c] sm:$0xf]
    %v4935 = vld [vmem:[#allocation14 + $0x180] sm:$0xf]
    %v4936 = vld [vmem:[#allocation14 + $0x184] sm:$0xf]
    %v4937 = vld [vmem:[#allocation14 + $0x188] sm:$0xf]
    %v4938 = vld [vmem:[#allocation14 + $0x18c] sm:$0xf]
    %v4939 = vld [vmem:[#allocation14 + $0x190] sm:$0xf]
    %v4940 = vld [vmem:[#allocation14 + $0x194] sm:$0xf]
    %v4941 = vld [vmem:[#allocation14 + $0x198] sm:$0xf]
    %v4942 = vld [vmem:[#allocation14 + $0x19c] sm:$0xf]
    %v4943 = vld [vmem:[#allocation14 + $0x1a0] sm:$0xf]
    %v4944 = vld [vmem:[#allocation14 + $0x1a4] sm:$0xf]
    %v4945 = vld [vmem:[#allocation14 + $0x1a8] sm:$0xf]
    %v4946 = vld [vmem:[#allocation14 + $0x1ac] sm:$0xf]
    %v4947 = vld [vmem:[#allocation14 + $0x1b0] sm:$0xf]
    %v4948 = vld [vmem:[#allocation14 + $0x1b4] sm:$0xf]
    %v4949 = vld [vmem:[#allocation14 + $0x1b8] sm:$0xf]
    %v4950 = vld [vmem:[#allocation14 + $0x1bc] sm:$0xf]
    %v4951 = vld [vmem:[#allocation14 + $0x1c0] sm:$0xf]
    %v4952 = vld [vmem:[#allocation14 + $0x1c4] sm:$0xf]
    %v4953 = vld [vmem:[#allocation14 + $0x1c8] sm:$0xf]
    %v4954 = vld [vmem:[#allocation14 + $0x1cc] sm:$0xf]
    %v4955 = vld [vmem:[#allocation14 + $0x1d0] sm:$0xf]
    %v4956 = vld [vmem:[#allocation14 + $0x1d4] sm:$0xf]
    %v4957 = vld [vmem:[#allocation14 + $0x1d8] sm:$0xf]
    %v4958 = vld [vmem:[#allocation14 + $0x1dc] sm:$0xf]
    %v4959 = vld [vmem:[#allocation14 + $0x1e0] sm:$0xf]
    %v4960 = vld [vmem:[#allocation14 + $0x1e4] sm:$0xf]
    %v4961 = vld [vmem:[#allocation14 + $0x1e8] sm:$0xf]
    %v4962 = vld [vmem:[#allocation14 + $0x1ec] sm:$0xf]
    %v4963 = vld [vmem:[#allocation14 + $0x1f0] sm:$0xf]
    %v4964 = vld [vmem:[#allocation14 + $0x1f4] sm:$0xf]
    %v4965 = vld [vmem:[#allocation14 + $0x1f8] sm:$0xf]
    %v4966 = vld [vmem:[#allocation14 + $0x1fc] sm:$0xf]
    %v4967 = vld [vmem:[#allocation14 + $0x200] sm:$0xf]
    %v4968 = vld [vmem:[#allocation14 + $0x204] sm:$0xf]
    %v4969 = vld [vmem:[#allocation14 + $0x208] sm:$0xf]
    %v4970 = vld [vmem:[#allocation14 + $0x20c] sm:$0xf]
    %v4971 = vld [vmem:[#allocation14 + $0x210] sm:$0xf]
    %v4972 = vld [vmem:[#allocation14 + $0x214] sm:$0xf]
    %v4973 = vld [vmem:[#allocation14 + $0x218] sm:$0xf]
    %v4974 = vld [vmem:[#allocation14 + $0x21c] sm:$0xf]
    %v4975 = vld [vmem:[#allocation14 + $0x220] sm:$0xf]
    %v4976 = vld [vmem:[#allocation14 + $0x224] sm:$0xf]
    %v4977 = vld [vmem:[#allocation14 + $0x228] sm:$0xf]
    %v4978 = vld [vmem:[#allocation14 + $0x22c] sm:$0xf]
    %v4979 = vld [vmem:[#allocation14 + $0x230] sm:$0xf]
    %v4980 = vld [vmem:[#allocation14 + $0x234] sm:$0xf]
    %v4981 = vld [vmem:[#allocation14 + $0x238] sm:$0xf]
    %v4982 = vld [vmem:[#allocation14 + $0x23c] sm:$0xf]
    %v4983 = vld [vmem:[#allocation15] sm:$0x1]
    %v4985 = vperm.slane %v4983, 0
    %v5131 = vunpack.c.l.b16 %v4839
    %v5132 = vunpack.c.l.b16 %v4840
    %v5133 = vunpack.c.l.b16 %v4841
    %v5134 = vunpack.c.l.b16 %v4842
    %v5135 = vunpack.c.l.b16 %v4843
    %v5136 = vunpack.c.l.b16 %v4844
    %v5137 = vunpack.c.l.b16 %v4845
    %v5138 = vunpack.c.l.b16 %v4846
    %v5139 = vunpack.c.l.b16 %v4847
    %v5140 = vunpack.c.l.b16 %v4848
    %v5141 = vunpack.c.l.b16 %v4849
    %v5142 = vunpack.c.l.b16 %v4850
    %v5143 = vunpack.c.l.b16 %v4851
    %v5144 = vunpack.c.l.b16 %v4852
    %v5145 = vunpack.c.l.b16 %v4853
    %v5146 = vunpack.c.l.b16 %v4854
    %v5147 = vunpack.c.l.b16 %v4855
    %v5148 = vunpack.c.l.b16 %v4856
    %v5149 = vunpack.c.l.b16 %v4857
    %v5150 = vunpack.c.l.b16 %v4858
    %v5151 = vunpack.c.l.b16 %v4859
    %v5152 = vunpack.c.l.b16 %v4860
    %v5153 = vunpack.c.l.b16 %v4861
    %v5154 = vunpack.c.l.b16 %v4862
    %v5155 = vunpack.c.l.b16 %v4863
    %v5156 = vunpack.c.l.b16 %v4864
    %v5157 = vunpack.c.l.b16 %v4865
    %v5158 = vunpack.c.l.b16 %v4866
    %v5159 = vunpack.c.l.b16 %v4867
    %v5160 = vunpack.c.l.b16 %v4868
    %v5161 = vunpack.c.l.b16 %v4869
    %v5162 = vunpack.c.l.b16 %v4870
    %v5163 = vunpack.c.l.b16 %v4871
    %v5164 = vunpack.c.l.b16 %v4872
    %v5165 = vunpack.c.l.b16 %v4873
    %v5166 = vunpack.c.l.b16 %v4874
    %v5167 = vunpack.c.l.b16 %v4875
    %v5168 = vunpack.c.l.b16 %v4876
    %v5169 = vunpack.c.l.b16 %v4877
    %v5170 = vunpack.c.l.b16 %v4878
    %v5171 = vunpack.c.l.b16 %v4879
    %v5172 = vunpack.c.l.b16 %v4880
    %v5173 = vunpack.c.l.b16 %v4881
    %v5174 = vunpack.c.l.b16 %v4882
    %v5175 = vunpack.c.l.b16 %v4883
    %v5176 = vunpack.c.l.b16 %v4884
    %v5177 = vunpack.c.l.b16 %v4885
    %v5178 = vunpack.c.l.b16 %v4886
    %v5179 = vunpack.c.l.b16 %v4887
    %v5180 = vunpack.c.l.b16 %v4888
    %v5181 = vunpack.c.l.b16 %v4889
    %v5182 = vunpack.c.l.b16 %v4890
    %v5183 = vunpack.c.l.b16 %v4891
    %v5184 = vunpack.c.l.b16 %v4892
    %v5185 = vunpack.c.l.b16 %v4893
    %v5186 = vunpack.c.l.b16 %v4894
    %v5187 = vunpack.c.l.b16 %v4895
    %v5188 = vunpack.c.l.b16 %v4896
    %v5189 = vunpack.c.l.b16 %v4897
    %v5190 = vunpack.c.l.b16 %v4898
    %v5191 = vunpack.c.l.b16 %v4899
    %v5192 = vunpack.c.l.b16 %v4900
    %v5193 = vunpack.c.l.b16 %v4901
    %v5194 = vunpack.c.l.b16 %v4902
    %v5195 = vunpack.c.l.b16 %v4903
    %v5196 = vunpack.c.l.b16 %v4904
    %v5197 = vunpack.c.l.b16 %v4905
    %v5198 = vunpack.c.l.b16 %v4906
    %v5199 = vunpack.c.l.b16 %v4907
    %v5200 = vunpack.c.l.b16 %v4908
    %v5201 = vunpack.c.l.b16 %v4909
    %v5202 = vunpack.c.l.b16 %v4910
    %v5203 = vunpack.c.l.b16 %v4911
    %v5204 = vunpack.c.l.b16 %v4912
    %v5205 = vunpack.c.l.b16 %v4913
    %v5206 = vunpack.c.l.b16 %v4914
    %v5207 = vunpack.c.l.b16 %v4915
    %v5208 = vunpack.c.l.b16 %v4916
    %v5209 = vunpack.c.l.b16 %v4917
    %v5210 = vunpack.c.l.b16 %v4918
    %v5211 = vunpack.c.l.b16 %v4919
    %v5212 = vunpack.c.l.b16 %v4920
    %v5213 = vunpack.c.l.b16 %v4921
    %v5214 = vunpack.c.l.b16 %v4922
    %v5215 = vunpack.c.l.b16 %v4923
    %v5216 = vunpack.c.l.b16 %v4924
    %v5217 = vunpack.c.l.b16 %v4925
    %v5218 = vunpack.c.l.b16 %v4926
    %v5219 = vunpack.c.l.b16 %v4927
    %v5220 = vunpack.c.l.b16 %v4928
    %v5221 = vunpack.c.l.b16 %v4929
    %v5222 = vunpack.c.l.b16 %v4930
    %v5223 = vunpack.c.l.b16 %v4931
    %v5224 = vunpack.c.l.b16 %v4932
    %v5225 = vunpack.c.l.b16 %v4933
    %v5226 = vunpack.c.l.b16 %v4934
    %v5227 = vunpack.c.l.b16 %v4935
    %v5228 = vunpack.c.l.b16 %v4936
    %v5229 = vunpack.c.l.b16 %v4937
    %v5230 = vunpack.c.l.b16 %v4938
    %v5231 = vunpack.c.l.b16 %v4939
    %v5232 = vunpack.c.l.b16 %v4940
    %v5233 = vunpack.c.l.b16 %v4941
    %v5234 = vunpack.c.l.b16 %v4942
    %v5235 = vunpack.c.l.b16 %v4943
    %v5236 = vunpack.c.l.b16 %v4944
    %v5237 = vunpack.c.l.b16 %v4945
    %v5238 = vunpack.c.l.b16 %v4946
    %v5239 = vunpack.c.l.b16 %v4947
    %v5240 = vunpack.c.l.b16 %v4948
    %v5241 = vunpack.c.l.b16 %v4949
    %v5242 = vunpack.c.l.b16 %v4950
    %v5243 = vunpack.c.l.b16 %v4951
    %v5244 = vunpack.c.l.b16 %v4952
    %v5245 = vunpack.c.l.b16 %v4953
    %v5246 = vunpack.c.l.b16 %v4954
    %v5247 = vunpack.c.l.b16 %v4955
    %v5248 = vunpack.c.l.b16 %v4956
    %v5249 = vunpack.c.l.b16 %v4957
    %v5250 = vunpack.c.l.b16 %v4958
    %v5251 = vunpack.c.l.b16 %v4959
    %v5252 = vunpack.c.l.b16 %v4960
    %v5253 = vunpack.c.l.b16 %v4961
    %v5254 = vunpack.c.l.b16 %v4962
    %v5255 = vunpack.c.l.b16 %v4963
    %v5256 = vunpack.c.l.b16 %v4964
    %v5257 = vunpack.c.l.b16 %v4965
    %v5258 = vunpack.c.l.b16 %v4966
    %v5259 = vunpack.c.l.b16 %v4967
    %v5260 = vunpack.c.l.b16 %v4968
    %v5261 = vunpack.c.l.b16 %v4969
    %v5262 = vunpack.c.l.b16 %v4970
    %v5263 = vunpack.c.l.b16 %v4971
    %v5264 = vunpack.c.l.b16 %v4972
    %v5265 = vunpack.c.l.b16 %v4973
    %v5266 = vunpack.c.l.b16 %v4974
    %v5267 = vunpack.c.l.b16 %v4975
    %v5268 = vunpack.c.l.b16 %v4976
    %v5269 = vunpack.c.l.b16 %v4977
    %v5270 = vunpack.c.l.b16 %v4978
    %v5271 = vunpack.c.l.b16 %v4979
    %v5272 = vunpack.c.l.b16 %v4980
    %v5273 = vunpack.c.l.b16 %v4981
    %v5274 = vunpack.c.l.b16 %v4982
    %v5275 = vpack.c.b16 %v5132, %v5131
    %v5276 = vpack.c.b16 %v5134, %v5133
    %v5277 = vpack.c.b16 %v5136, %v5135
    %v5278 = vpack.c.b16 %v5138, %v5137
    %v5279 = vpack.c.b16 %v5140, %v5139
    %v5280 = vpack.c.b16 %v5142, %v5141
    %v5281 = vpack.c.b16 %v5144, %v5143
    %v5282 = vpack.c.b16 %v5146, %v5145
    %v5283 = vpack.c.b16 %v5148, %v5147
    %v5284 = vpack.c.b16 %v5150, %v5149
    %v5285 = vpack.c.b16 %v5152, %v5151
    %v5286 = vpack.c.b16 %v5154, %v5153
    %v5287 = vpack.c.b16 %v5156, %v5155
    %v5288 = vpack.c.b16 %v5158, %v5157
    %v5289 = vpack.c.b16 %v5160, %v5159
    %v5290 = vpack.c.b16 %v5162, %v5161
    %v5291 = vpack.c.b16 %v5164, %v5163
    %v5292 = vpack.c.b16 %v5166, %v5165
    %v5293 = vpack.c.b16 %v5168, %v5167
    %v5294 = vpack.c.b16 %v5170, %v5169
    %v5295 = vpack.c.b16 %v5172, %v5171
    %v5296 = vpack.c.b16 %v5174, %v5173
    %v5297 = vpack.c.b16 %v5176, %v5175
    %v5298 = vpack.c.b16 %v5178, %v5177
    %v5299 = vpack.c.b16 %v5180, %v5179
    %v5300 = vpack.c.b16 %v5182, %v5181
    %v5301 = vpack.c.b16 %v5184, %v5183
    %v5302 = vpack.c.b16 %v5186, %v5185
    %v5303 = vpack.c.b16 %v5188, %v5187
    %v5304 = vpack.c.b16 %v5190, %v5189
    %v5305 = vpack.c.b16 %v5192, %v5191
    %v5306 = vpack.c.b16 %v5194, %v5193
    %v5307 = vpack.c.b16 %v5196, %v5195
    %v5308 = vpack.c.b16 %v5198, %v5197
    %v5309 = vpack.c.b16 %v5200, %v5199
    %v5310 = vpack.c.b16 %v5202, %v5201
    %v5311 = vpack.c.b16 %v5204, %v5203
    %v5312 = vpack.c.b16 %v5206, %v5205
    %v5313 = vpack.c.b16 %v5208, %v5207
    %v5314 = vpack.c.b16 %v5210, %v5209
    %v5315 = vpack.c.b16 %v5212, %v5211
    %v5316 = vpack.c.b16 %v5214, %v5213
    %v5317 = vpack.c.b16 %v5216, %v5215
    %v5318 = vpack.c.b16 %v5218, %v5217
    %v5319 = vpack.c.b16 %v5220, %v5219
    %v5320 = vpack.c.b16 %v5222, %v5221
    %v5321 = vpack.c.b16 %v5224, %v5223
    %v5322 = vpack.c.b16 %v5226, %v5225
    %v5323 = vpack.c.b16 %v5228, %v5227
    %v5324 = vpack.c.b16 %v5230, %v5229
    %v5325 = vpack.c.b16 %v5232, %v5231
    %v5326 = vpack.c.b16 %v5234, %v5233
    %v5327 = vpack.c.b16 %v5236, %v5235
    %v5328 = vpack.c.b16 %v5238, %v5237
    %v5329 = vpack.c.b16 %v5240, %v5239
    %v5330 = vpack.c.b16 %v5242, %v5241
    %v5331 = vpack.c.b16 %v5244, %v5243
    %v5332 = vpack.c.b16 %v5246, %v5245
    %v5333 = vpack.c.b16 %v5248, %v5247
    %v5334 = vpack.c.b16 %v5250, %v5249
    %v5335 = vpack.c.b16 %v5252, %v5251
    %v5336 = vpack.c.b16 %v5254, %v5253
    %v5337 = vpack.c.b16 %v5256, %v5255
    %v5338 = vpack.c.b16 %v5258, %v5257
    %v5339 = vpack.c.b16 %v5260, %v5259
    %v5340 = vpack.c.b16 %v5262, %v5261
    %v5341 = vpack.c.b16 %v5264, %v5263
    %v5342 = vpack.c.b16 %v5266, %v5265
    %v5343 = vpack.c.b16 %v5268, %v5267
    %v5344 = vpack.c.b16 %v5270, %v5269
    %v5345 = vpack.c.b16 %v5272, %v5271
    %v5346 = vpack.c.b16 %v5274, %v5273
    %5419 = vmatpush.bf16.msra.mxu0 %v5282
    %5420 = vmatpush.bf16.msra.mxu0 %v5281
    %5421 = vmatpush.bf16.msra.mxu0 %v5280
    %5422 = vmatpush.bf16.msra.mxu0 %v5279
    %5423 = vmatpush.bf16.msra.mxu0 %v5278
    %5424 = vmatpush.bf16.msra.mxu0 %v5277
    %5425 = vmatpush.bf16.msra.mxu0 %v5276
    %5426 = vmatpush.bf16.msra.mxu0 %v5275
    %5427 = vmatmul.bf16.gmra.mxu0 %v4689
    %v5428 = vpop.f32.mrf.mxu0
    %v5429 = vadd.f32 %v4985, %v5428
    %v5430 = vpop.f32.mrf.mxu0
    %v5431 = vadd.f32 %v4985, %v5430
    %5432 = vmatmul.bf16.gmra.mxu0 %v4690
    %v5433 = vpop.f32.mrf.mxu0
    %v5434 = vadd.f32 %v4985, %v5433
    %v5435 = vpop.f32.mrf.mxu0
    %v5436 = vadd.f32 %v4985, %v5435
    %5437 = vmatmul.bf16.gmra.mxu0 %v4691
    %v5438 = vpop.f32.mrf.mxu0
    %v5439 = vadd.f32 %v4985, %v5438
    %v5440 = vpop.f32.mrf.mxu0
    %v5441 = vadd.f32 %v4985, %v5440
    %5442 = vdwg.mxu0
    %5443 = vmatpush.bf16.msra.mxu0 %v5290
    %5444 = vmatpush.bf16.msra.mxu0 %v5289
    %5445 = vmatpush.bf16.msra.mxu0 %v5288
    %5446 = vmatpush.bf16.msra.mxu0 %v5287
    %5447 = vmatpush.bf16.msra.mxu0 %v5286
    %5448 = vmatpush.bf16.msra.mxu0 %v5285
    %5449 = vmatpush.bf16.msra.mxu0 %v5284
    %5450 = vmatpush.bf16.msra.mxu0 %v5283
    %5451 = vmatmul.bf16.gmra.mxu0 %v4707
    %v5452 = vpop.f32.mrf.mxu0
    %v5453 = vadd.f32 %v5429, %v5452
    %v5454 = vpop.f32.mrf.mxu0
    %v5455 = vadd.f32 %v5431, %v5454
    %5456 = vmatmul.bf16.gmra.mxu0 %v4708
    %v5457 = vpop.f32.mrf.mxu0
    %v5458 = vadd.f32 %v5434, %v5457
    %v5459 = vpop.f32.mrf.mxu0
    %v5460 = vadd.f32 %v5436, %v5459
    %5461 = vmatmul.bf16.gmra.mxu0 %v4709
    %v5462 = vpop.f32.mrf.mxu0
    %v5463 = vadd.f32 %v5439, %v5462
    %v5464 = vpop.f32.mrf.mxu0
    %v5465 = vadd.f32 %v5441, %v5464
    %5466 = vdwg.mxu0
    %5467 = vmatpush.bf16.msra.mxu0 %v5298
    %5468 = vmatpush.bf16.msra.mxu0 %v5297
    %5469 = vmatpush.bf16.msra.mxu0 %v5296
    %5470 = vmatpush.bf16.msra.mxu0 %v5295
    %5471 = vmatpush.bf16.msra.mxu0 %v5294
    %5472 = vmatpush.bf16.msra.mxu0 %v5293
    %5473 = vmatpush.bf16.msra.mxu0 %v5292
    %5474 = vmatpush.bf16.msra.mxu0 %v5291
    %5475 = vmatmul.bf16.gmra.mxu0 %v4725
    %v5476 = vpop.f32.mrf.mxu0
    %v5477 = vadd.f32 %v5453, %v5476
    %v5478 = vpop.f32.mrf.mxu0
    %v5479 = vadd.f32 %v5455, %v5478
    %5480 = vmatmul.bf16.gmra.mxu0 %v4726
    %v5481 = vpop.f32.mrf.mxu0
    %v5482 = vadd.f32 %v5458, %v5481
    %v5483 = vpop.f32.mrf.mxu0
    %v5484 = vadd.f32 %v5460, %v5483
    %5485 = vmatmul.bf16.gmra.mxu0 %v4727
    %v5486 = vpop.f32.mrf.mxu0
    %v5487 = vadd.f32 %v5463, %v5486
    %v5488 = vpop.f32.mrf.mxu0
    %v5489 = vadd.f32 %v5465, %v5488
    %5490 = vdwg.mxu0
    %5491 = vmatpush.bf16.msra.mxu0 %v5306
    %5492 = vmatpush.bf16.msra.mxu0 %v5305
    %5493 = vmatpush.bf16.msra.mxu0 %v5304
    %5494 = vmatpush.bf16.msra.mxu0 %v5303
    %5495 = vmatpush.bf16.msra.mxu0 %v5302
    %5496 = vmatpush.bf16.msra.mxu0 %v5301
    %5497 = vmatpush.bf16.msra.mxu0 %v5300
    %5498 = vmatpush.bf16.msra.mxu0 %v5299
    %5499 = vmatmul.bf16.gmra.mxu0 %v4743
    %v5500 = vpop.f32.mrf.mxu0
    %v5501 = vadd.f32 %v5477, %v5500
    %v5502 = vpop.f32.mrf.mxu0
    %v5503 = vadd.f32 %v5479, %v5502
    %5504 = vmatmul.bf16.gmra.mxu0 %v4744
    %v5505 = vpop.f32.mrf.mxu0
    %v5506 = vadd.f32 %v5482, %v5505
    %v5507 = vpop.f32.mrf.mxu0
    %v5508 = vadd.f32 %v5484, %v5507
    %5509 = vmatmul.bf16.gmra.mxu0 %v4745
    %v5510 = vpop.f32.mrf.mxu0
    %v5511 = vadd.f32 %v5487, %v5510
    %v5512 = vpop.f32.mrf.mxu0
    %v5513 = vadd.f32 %v5489, %v5512
    %5514 = vdwg.mxu0
    %5515 = vmatpush.bf16.msra.mxu0 %v5314
    %5516 = vmatpush.bf16.msra.mxu0 %v5313
    %5517 = vmatpush.bf16.msra.mxu0 %v5312
    %5518 = vmatpush.bf16.msra.mxu0 %v5311
    %5519 = vmatpush.bf16.msra.mxu0 %v5310
    %5520 = vmatpush.bf16.msra.mxu0 %v5309
    %5521 = vmatpush.bf16.msra.mxu0 %v5308
    %5522 = vmatpush.bf16.msra.mxu0 %v5307
    %5523 = vmatmul.bf16.gmra.mxu0 %v4761
    %v5524 = vpop.f32.mrf.mxu0
    %v5525 = vadd.f32 %v5501, %v5524
    %v5526 = vpop.f32.mrf.mxu0
    %v5527 = vadd.f32 %v5503, %v5526
    %5528 = vmatmul.bf16.gmra.mxu0 %v4762
    %v5529 = vpop.f32.mrf.mxu0
    %v5530 = vadd.f32 %v5506, %v5529
    %v5531 = vpop.f32.mrf.mxu0
    %v5532 = vadd.f32 %v5508, %v5531
    %5533 = vmatmul.bf16.gmra.mxu0 %v4763
    %v5534 = vpop.f32.mrf.mxu0
    %v5535 = vadd.f32 %v5511, %v5534
    %v5536 = vpop.f32.mrf.mxu0
    %v5537 = vadd.f32 %v5513, %v5536
    %5538 = vdwg.mxu0
    %5539 = vmatpush.bf16.msra.mxu0 %v5322
    %5540 = vmatpush.bf16.msra.mxu0 %v5321
    %5541 = vmatpush.bf16.msra.mxu0 %v5320
    %5542 = vmatpush.bf16.msra.mxu0 %v5319
    %5543 = vmatpush.bf16.msra.mxu0 %v5318
    %5544 = vmatpush.bf16.msra.mxu0 %v5317
    %5545 = vmatpush.bf16.msra.mxu0 %v5316
    %5546 = vmatpush.bf16.msra.mxu0 %v5315
    %5547 = vmatmul.bf16.gmra.mxu0 %v4779
    %v5548 = vpop.f32.mrf.mxu0
    %v5549 = vadd.f32 %v5525, %v5548
    %v5550 = vpop.f32.mrf.mxu0
    %v5551 = vadd.f32 %v5527, %v5550
    %5552 = vmatmul.bf16.gmra.mxu0 %v4780
    %v5553 = vpop.f32.mrf.mxu0
    %v5554 = vadd.f32 %v5530, %v5553
    %v5555 = vpop.f32.mrf.mxu0
    %v5556 = vadd.f32 %v5532, %v5555
    %5557 = vmatmul.bf16.gmra.mxu0 %v4781
    %v5558 = vpop.f32.mrf.mxu0
    %v5559 = vadd.f32 %v5535, %v5558
    %v5560 = vpop.f32.mrf.mxu0
    %v5561 = vadd.f32 %v5537, %v5560
    %5562 = vdwg.mxu0
    %5563 = vmatpush.bf16.msra.mxu0 %v5330
    %5564 = vmatpush.bf16.msra.mxu0 %v5329
    %5565 = vmatpush.bf16.msra.mxu0 %v5328
    %5566 = vmatpush.bf16.msra.mxu0 %v5327
    %5567 = vmatpush.bf16.msra.mxu0 %v5326
    %5568 = vmatpush.bf16.msra.mxu0 %v5325
    %5569 = vmatpush.bf16.msra.mxu0 %v5324
    %5570 = vmatpush.bf16.msra.mxu0 %v5323
    %5571 = vmatmul.bf16.gmra.mxu0 %v4797
    %v5572 = vpop.f32.mrf.mxu0
    %v5573 = vadd.f32 %v5549, %v5572
    %v5574 = vpop.f32.mrf.mxu0
    %v5575 = vadd.f32 %v5551, %v5574
    %5576 = vmatmul.bf16.gmra.mxu0 %v4798
    %v5577 = vpop.f32.mrf.mxu0
    %v5578 = vadd.f32 %v5554, %v5577
    %v5579 = vpop.f32.mrf.mxu0
    %v5580 = vadd.f32 %v5556, %v5579
    %5581 = vmatmul.bf16.gmra.mxu0 %v4799
    %v5582 = vpop.f32.mrf.mxu0
    %v5583 = vadd.f32 %v5559, %v5582
    %v5584 = vpop.f32.mrf.mxu0
    %v5585 = vadd.f32 %v5561, %v5584
    %5586 = vdwg.mxu0
    %5587 = vmatpush.bf16.msra.mxu0 %v5338
    %5588 = vmatpush.bf16.msra.mxu0 %v5337
    %5589 = vmatpush.bf16.msra.mxu0 %v5336
    %5590 = vmatpush.bf16.msra.mxu0 %v5335
    %5591 = vmatpush.bf16.msra.mxu0 %v5334
    %5592 = vmatpush.bf16.msra.mxu0 %v5333
    %5593 = vmatpush.bf16.msra.mxu0 %v5332
    %5594 = vmatpush.bf16.msra.mxu0 %v5331
    %5595 = vmatmul.bf16.gmra.mxu0 %v4815
    %v5596 = vpop.f32.mrf.mxu0
    %v5597 = vadd.f32 %v5573, %v5596
    %v5598 = vpop.f32.mrf.mxu0
    %v5599 = vadd.f32 %v5575, %v5598
    %5600 = vmatmul.bf16.gmra.mxu0 %v4816
    %v5601 = vpop.f32.mrf.mxu0
    %v5602 = vadd.f32 %v5578, %v5601
    %v5603 = vpop.f32.mrf.mxu0
    %v5604 = vadd.f32 %v5580, %v5603
    %5605 = vmatmul.bf16.gmra.mxu0 %v4817
    %v5606 = vpop.f32.mrf.mxu0
    %v5607 = vadd.f32 %v5583, %v5606
    %v5608 = vpop.f32.mrf.mxu0
    %v5609 = vadd.f32 %v5585, %v5608
    %5610 = vdwg.mxu0
    %5611 = vmatpush.bf16.msra.mxu0 %v5346
    %5612 = vmatpush.bf16.msra.mxu0 %v5345
    %5613 = vmatpush.bf16.msra.mxu0 %v5344
    %5614 = vmatpush.bf16.msra.mxu0 %v5343
    %5615 = vmatpush.bf16.msra.mxu0 %v5342
    %5616 = vmatpush.bf16.msra.mxu0 %v5341
    %5617 = vmatpush.bf16.msra.mxu0 %v5340
    %5618 = vmatpush.bf16.msra.mxu0 %v5339
    %5619 = vmatmul.bf16.gmra.mxu0 %v4833
    %v5620 = vpop.f32.mrf.mxu0
    %v5621 = vadd.f32 %v5597, %v5620
    %v5622 = vpop.f32.mrf.mxu0
    %v5623 = vadd.f32 %v5599, %v5622
    %5624 = vmatmul.bf16.gmra.mxu0 %v4834
    %v5625 = vpop.f32.mrf.mxu0
    %v5626 = vadd.f32 %v5602, %v5625
    %v5627 = vpop.f32.mrf.mxu0
    %v5628 = vadd.f32 %v5604, %v5627
    %5629 = vmatmul.bf16.gmra.mxu0 %v4835
    %v5630 = vpop.f32.mrf.mxu0
    %v5631 = vadd.f32 %v5607, %v5630
    %v5632 = vpop.f32.mrf.mxu0
    %v5633 = vadd.f32 %v5609, %v5632
    %5634 = vdwg.mxu0
    %v5635 = vmax.f32 %v5621, 0.0
    %v5636 = vmax.f32 %v5623, 0.0
    %v5637 = vmax.f32 %v5626, 0.0
    %v5638 = vmax.f32 %v5628, 0.0
    %v5639 = vmax.f32 %v5631, 0.0
    %v5640 = vmax.f32 %v5633, 0.0
    %v5641 = vpack.c.bf16 %v5636, %v5635
    %v5642 = vpack.c.bf16 %v5638, %v5637
    %v5643 = vpack.c.bf16 %v5640, %v5639
    %v5644 = vld [vmem:[#allocation17] sm:$0xf]
    %vm5645 = vcmask 392192
    %v5647 = vsel %vm5645, %v5644, 0
    %5649 = vmatpush.bf16.msra.mxu0 0
    %5650 = vmatpush.bf16.msra.mxu0 0
    %5651 = vmatpush.bf16.msra.mxu0 0
    %5652 = vmatpush.bf16.msra.mxu0 0
    %5653 = vmatpush.bf16.msra.mxu0 0
    %5654 = vmatpush.bf16.msra.mxu0 %v5643
    %5655 = vmatpush.bf16.msra.mxu0 %v5642
    %5656 = vmatpush.bf16.msra.mxu0 %v5641
    %5657 = vmatmul.bf16.gmra.mxu0 %v5647
    %v5658 = vpop.f32.mrf.mxu0
    %v5659 = vadd.f32 0.0, %v5658
    %v5660 = vpop.f32.mrf.mxu0
    %5661 = vdwg.mxu0
    %v5662 = vpack.c.bf16 %v5659, %v5659
    %s5663 = scalar_lea.vmem [#allocation17], 4
    %v5664 = vld [vmem:[%s5663] sm:$0xf]
    %v5666 = vsel %vm5645, %v5664, 0
    %5668 = vmatpush.bf16.msra.mxu0 0
    %5669 = vmatpush.bf16.msra.mxu0 0
    %5670 = vmatpush.bf16.msra.mxu0 0
    %5671 = vmatpush.bf16.msra.mxu0 0
    %5672 = vmatpush.bf16.msra.mxu0 0
    %5673 = vmatpush.bf16.msra.mxu0 %v5643
    %5674 = vmatpush.bf16.msra.mxu0 %v5642
    %5675 = vmatpush.bf16.msra.mxu0 %v5641
    %5676 = vmatmul.bf16.gmra.mxu0 %v5666
    %v5677 = vpop.f32.mrf.mxu0
    %v5678 = vadd.f32 0.0, %v5677
    %v5679 = vpop.f32.mrf.mxu0
    %5680 = vdwg.mxu0
    %v5681 = vpack.c.bf16 %v5678, %v5678
    %s5682 = scalar_lea.vmem [#allocation17], 8
    %v5683 = vld [vmem:[%s5682] sm:$0xf]
    %v5685 = vsel %vm5645, %v5683, 0
    %5687 = vmatpush.bf16.msra.mxu0 0
    %5688 = vmatpush.bf16.msra.mxu0 0
    %5689 = vmatpush.bf16.msra.mxu0 0
    %5690 = vmatpush.bf16.msra.mxu0 0
    %5691 = vmatpush.bf16.msra.mxu0 0
    %5692 = vmatpush.bf16.msra.mxu0 %v5643
    %5693 = vmatpush.bf16.msra.mxu0 %v5642
    %5694 = vmatpush.bf16.msra.mxu0 %v5641
    %5695 = vmatmul.bf16.gmra.mxu0 %v5685
    %v5696 = vpop.f32.mrf.mxu0
    %v5697 = vadd.f32 0.0, %v5696
    %v5698 = vpop.f32.mrf.mxu0
    %5699 = vdwg.mxu0
    %v5700 = vpack.c.bf16 %v5697, %v5697
    %s5701 = scalar_lea.vmem [#allocation17], 12
    %v5702 = vld [vmem:[%s5701] sm:$0xf]
    %v5704 = vsel %vm5645, %v5702, 0
    %5706 = vmatpush.bf16.msra.mxu0 0
    %5707 = vmatpush.bf16.msra.mxu0 0
    %5708 = vmatpush.bf16.msra.mxu0 0
    %5709 = vmatpush.bf16.msra.mxu0 0
    %5710 = vmatpush.bf16.msra.mxu0 0
    %5711 = vmatpush.bf16.msra.mxu0 %v5643
    %5712 = vmatpush.bf16.msra.mxu0 %v5642
    %5713 = vmatpush.bf16.msra.mxu0 %v5641
    %5714 = vmatmul.bf16.gmra.mxu0 %v5704
    %v5715 = vpop.f32.mrf.mxu0
    %v5716 = vadd.f32 0.0, %v5715
    %v5717 = vpop.f32.mrf.mxu0
    %5718 = vdwg.mxu0
    %v5719 = vpack.c.bf16 %v5716, %v5716
    %s5720 = scalar_lea.vmem [#allocation17], 16
    %v5721 = vld [vmem:[%s5720] sm:$0xf]
    %v5723 = vsel %vm5645, %v5721, 0
    %5725 = vmatpush.bf16.msra.mxu0 0
    %5726 = vmatpush.bf16.msra.mxu0 0
    %5727 = vmatpush.bf16.msra.mxu0 0
    %5728 = vmatpush.bf16.msra.mxu0 0
    %5729 = vmatpush.bf16.msra.mxu0 0
    %5730 = vmatpush.bf16.msra.mxu0 %v5643
    %5731 = vmatpush.bf16.msra.mxu0 %v5642
    %5732 = vmatpush.bf16.msra.mxu0 %v5641
    %5733 = vmatmul.bf16.gmra.mxu0 %v5723
    %v5734 = vpop.f32.mrf.mxu0
    %v5735 = vadd.f32 0.0, %v5734
    %v5736 = vpop.f32.mrf.mxu0
    %5737 = vdwg.mxu0
    %v5738 = vpack.c.bf16 %v5735, %v5735
    %s5739 = scalar_lea.vmem [#allocation17], 20
    %v5740 = vld [vmem:[%s5739] sm:$0xf]
    %v5742 = vsel %vm5645, %v5740, 0
    %5744 = vmatpush.bf16.msra.mxu0 0
    %5745 = vmatpush.bf16.msra.mxu0 0
    %5746 = vmatpush.bf16.msra.mxu0 0
    %5747 = vmatpush.bf16.msra.mxu0 0
    %5748 = vmatpush.bf16.msra.mxu0 0
    %5749 = vmatpush.bf16.msra.mxu0 %v5643
    %5750 = vmatpush.bf16.msra.mxu0 %v5642
    %5751 = vmatpush.bf16.msra.mxu0 %v5641
    %5752 = vmatmul.bf16.gmra.mxu0 %v5742
    %v5753 = vpop.f32.mrf.mxu0
    %v5754 = vadd.f32 0.0, %v5753
    %v5755 = vpop.f32.mrf.mxu0
    %5756 = vdwg.mxu0
    %v5757 = vpack.c.bf16 %v5754, %v5754
    %v5758 = vld [vmem:[#allocation18] sm:$0xff]
    %v5759 = vld [vmem:[#allocation18 + $0x8] sm:$0xff]
    %v5760 = vld [vmem:[#allocation18 + $0x10] sm:$0xff]
    %v5761 = vld [vmem:[#allocation18 + $0x18] sm:$0xff]
    %v5762 = vld [vmem:[#allocation18 + $0x20] sm:$0xff]
    %v5763 = vld [vmem:[#allocation18 + $0x28] sm:$0xff]
    %v5764 = vld [vmem:[#allocation18 + $0x30] sm:$0xff]
    %v5765 = vld [vmem:[#allocation18 + $0x38] sm:$0xff]
    %v5766 = vld [vmem:[#allocation18 + $0x40] sm:$0xff]
    %v5767 = vld [vmem:[#allocation18 + $0x48] sm:$0xff]
    %v5768 = vld [vmem:[#allocation18 + $0x50] sm:$0xff]
    %v5769 = vld [vmem:[#allocation18 + $0x58] sm:$0xff]
    %v5770 = vld [vmem:[#allocation18 + $0x60] sm:$0xff]
    %v5771 = vld [vmem:[#allocation18 + $0x68] sm:$0xff]
    %v5772 = vld [vmem:[#allocation18 + $0x70] sm:$0xff]
    %v5773 = vld [vmem:[#allocation18 + $0x78] sm:$0xff]
    %v5774 = vld [vmem:[#allocation18 + $0x80] sm:$0xff]
    %v5775 = vld [vmem:[#allocation18 + $0x88] sm:$0xff]
    %v5776 = vld [vmem:[#allocation18 + $0x90] sm:$0xff]
    %v5777 = vld [vmem:[#allocation18 + $0x98] sm:$0xff]
    %v5778 = vld [vmem:[#allocation18 + $0xa0] sm:$0xff]
    %v5779 = vld [vmem:[#allocation18 + $0xa8] sm:$0xff]
    %v5780 = vld [vmem:[#allocation18 + $0xb0] sm:$0xff]
    %v5781 = vld [vmem:[#allocation18 + $0xb8] sm:$0xff]
    %v5782 = vld [vmem:[#allocation18 + $0xc0] sm:$0xff]
    %v5783 = vld [vmem:[#allocation18 + $0xc8] sm:$0xff]
    %v5784 = vld [vmem:[#allocation18 + $0xd0] sm:$0xff]
    %v5785 = vld [vmem:[#allocation18 + $0xd8] sm:$0xff]
    %v5786 = vld [vmem:[#allocation18 + $0xe0] sm:$0xff]
    %v5787 = vld [vmem:[#allocation18 + $0xe8] sm:$0xff]
    %v5788 = vld [vmem:[#allocation18 + $0xf0] sm:$0xff]
    %v5789 = vld [vmem:[#allocation18 + $0xf8] sm:$0xff]
    %v5790 = vld [vmem:[#allocation18 + $0x100] sm:$0xff]
    %v5791 = vld [vmem:[#allocation18 + $0x108] sm:$0xff]
    %v5792 = vld [vmem:[#allocation18 + $0x110] sm:$0xff]
    %v5793 = vld [vmem:[#allocation18 + $0x118] sm:$0xff]
    %v5794 = vld [vmem:[#allocation18 + $0x120] sm:$0xff]
    %v5795 = vld [vmem:[#allocation18 + $0x128] sm:$0xff]
    %v5796 = vld [vmem:[#allocation18 + $0x130] sm:$0xff]
    %v5797 = vld [vmem:[#allocation18 + $0x138] sm:$0xff]
    %v5798 = vld [vmem:[#allocation18 + $0x140] sm:$0xff]
    %v5799 = vld [vmem:[#allocation18 + $0x148] sm:$0xff]
    %v5800 = vld [vmem:[#allocation18 + $0x150] sm:$0xff]
    %v5801 = vld [vmem:[#allocation18 + $0x158] sm:$0xff]
    %v5802 = vld [vmem:[#allocation18 + $0x160] sm:$0xff]
    %v5803 = vld [vmem:[#allocation18 + $0x168] sm:$0xff]
    %v5804 = vld [vmem:[#allocation18 + $0x170] sm:$0xff]
    %v5805 = vld [vmem:[#allocation18 + $0x178] sm:$0xff]
    %v5806 = vld [vmem:[#allocation18 + $0x180] sm:$0xff]
    %v5807 = vld [vmem:[#allocation18 + $0x188] sm:$0xff]
    %v5808 = vld [vmem:[#allocation18 + $0x190] sm:$0xff]
    %v5809 = vld [vmem:[#allocation18 + $0x198] sm:$0xff]
    %v5810 = vld [vmem:[#allocation18 + $0x1a0] sm:$0xff]
    %v5811 = vld [vmem:[#allocation18 + $0x1a8] sm:$0xff]
    %v5812 = vld [vmem:[#allocation18 + $0x1b0] sm:$0xff]
    %v5813 = vld [vmem:[#allocation18 + $0x1b8] sm:$0xff]
    %v5814 = vld [vmem:[#allocation18 + $0x1c0] sm:$0xff]
    %v5815 = vld [vmem:[#allocation18 + $0x1c8] sm:$0xff]
    %v5816 = vld [vmem:[#allocation18 + $0x1d0] sm:$0xff]
    %v5817 = vld [vmem:[#allocation18 + $0x1d8] sm:$0xff]
    %v5818 = vld [vmem:[#allocation18 + $0x1e0] sm:$0xff]
    %v5819 = vld [vmem:[#allocation18 + $0x1e8] sm:$0xff]
    %v5820 = vld [vmem:[#allocation18 + $0x1f0] sm:$0xff]
    %v5821 = vld [vmem:[#allocation18 + $0x1f8] sm:$0xff]
    %v5822 = vld [vmem:[#allocation18 + $0x200] sm:$0xff]
    %v5823 = vld [vmem:[#allocation18 + $0x208] sm:$0xff]
    %v5824 = vld [vmem:[#allocation18 + $0x210] sm:$0xff]
    %v5825 = vld [vmem:[#allocation18 + $0x218] sm:$0xff]
    %v5826 = vld [vmem:[#allocation18 + $0x220] sm:$0xff]
    %v5827 = vld [vmem:[#allocation18 + $0x228] sm:$0xff]
    %v5828 = vld [vmem:[#allocation18 + $0x230] sm:$0xff]
    %v5829 = vld [vmem:[#allocation18 + $0x238] sm:$0xff]
    %v5830 = vld [vmem:[#allocation18 + $0x240] sm:$0xff]
    %v5831 = vld [vmem:[#allocation18 + $0x248] sm:$0xff]
    %v5832 = vld [vmem:[#allocation18 + $0x250] sm:$0xff]
    %v5833 = vld [vmem:[#allocation18 + $0x258] sm:$0xff]
    %v5834 = vld [vmem:[#allocation18 + $0x260] sm:$0xff]
    %v5835 = vld [vmem:[#allocation18 + $0x268] sm:$0xff]
    %v5836 = vld [vmem:[#allocation18 + $0x270] sm:$0xff]
    %v5837 = vld [vmem:[#allocation18 + $0x278] sm:$0xff]
    %v5838 = vld [vmem:[#allocation18 + $0x280] sm:$0xff]
    %v5839 = vld [vmem:[#allocation18 + $0x288] sm:$0xff]
    %v5840 = vld [vmem:[#allocation18 + $0x290] sm:$0xff]
    %v5841 = vld [vmem:[#allocation18 + $0x298] sm:$0xff]
    %v5842 = vld [vmem:[#allocation18 + $0x2a0] sm:$0xff]
    %v5843 = vld [vmem:[#allocation18 + $0x2a8] sm:$0xff]
    %v5844 = vld [vmem:[#allocation18 + $0x2b0] sm:$0xff]
    %v5845 = vld [vmem:[#allocation18 + $0x2b8] sm:$0xff]
    %v5846 = vld [vmem:[#allocation18 + $0x2c0] sm:$0xff]
    %v5847 = vld [vmem:[#allocation18 + $0x2c8] sm:$0xff]
    %v5848 = vld [vmem:[#allocation18 + $0x2d0] sm:$0xff]
    %v5849 = vld [vmem:[#allocation18 + $0x2d8] sm:$0xff]
    %v5850 = vld [vmem:[#allocation18 + $0x2e0] sm:$0xff]
    %v5851 = vld [vmem:[#allocation18 + $0x2e8] sm:$0xff]
    %v5852 = vld [vmem:[#allocation18 + $0x2f0] sm:$0xff]
    %v5853 = vld [vmem:[#allocation18 + $0x2f8] sm:$0xff]
    %v5854 = vld [vmem:[#allocation18 + $0x300] sm:$0xff]
    %v5855 = vld [vmem:[#allocation18 + $0x308] sm:$0xff]
    %v5856 = vld [vmem:[#allocation18 + $0x310] sm:$0xff]
    %v5857 = vld [vmem:[#allocation18 + $0x318] sm:$0xff]
    %v5858 = vld [vmem:[#allocation18 + $0x320] sm:$0xff]
    %v5859 = vld [vmem:[#allocation18 + $0x328] sm:$0xff]
    %v5860 = vld [vmem:[#allocation18 + $0x330] sm:$0xff]
    %v5861 = vld [vmem:[#allocation18 + $0x338] sm:$0xff]
    %v5862 = vld [vmem:[#allocation18 + $0x340] sm:$0xff]
    %v5863 = vld [vmem:[#allocation18 + $0x348] sm:$0xff]
    %v5864 = vld [vmem:[#allocation18 + $0x350] sm:$0xff]
    %v5865 = vld [vmem:[#allocation18 + $0x358] sm:$0xff]
    %v5866 = vld [vmem:[#allocation18 + $0x360] sm:$0xff]
    %v5867 = vld [vmem:[#allocation18 + $0x368] sm:$0xff]
    %v5868 = vld [vmem:[#allocation18 + $0x370] sm:$0xff]
    %v5869 = vld [vmem:[#allocation18 + $0x378] sm:$0xff]
    %v5870 = vld [vmem:[#allocation18 + $0x380] sm:$0xff]
    %v5871 = vld [vmem:[#allocation18 + $0x388] sm:$0xff]
    %v5872 = vld [vmem:[#allocation18 + $0x390] sm:$0xff]
    %v5873 = vld [vmem:[#allocation18 + $0x398] sm:$0xff]
    %v5874 = vld [vmem:[#allocation18 + $0x3a0] sm:$0xff]
    %v5875 = vld [vmem:[#allocation18 + $0x3a8] sm:$0xff]
    %v5876 = vld [vmem:[#allocation18 + $0x3b0] sm:$0xff]
    %v5877 = vld [vmem:[#allocation18 + $0x3b8] sm:$0xff]
    %v5878 = vld [vmem:[#allocation18 + $0x3c0] sm:$0xff]
    %v5879 = vld [vmem:[#allocation18 + $0x3c8] sm:$0xff]
    %v5880 = vld [vmem:[#allocation18 + $0x3d0] sm:$0xff]
    %v5881 = vld [vmem:[#allocation18 + $0x3d8] sm:$0xff]
    %v5882 = vld [vmem:[#allocation18 + $0x3e0] sm:$0xff]
    %v5883 = vld [vmem:[#allocation18 + $0x3e8] sm:$0xff]
    %v5884 = vld [vmem:[#allocation18 + $0x3f0] sm:$0xff]
    %v5885 = vld [vmem:[#allocation18 + $0x3f8] sm:$0xff]
    %v5886 = vld [vmem:[#allocation18 + $0x400] sm:$0xff]
    %v5887 = vld [vmem:[#allocation18 + $0x408] sm:$0xff]
    %v5888 = vld [vmem:[#allocation18 + $0x410] sm:$0xff]
    %v5889 = vld [vmem:[#allocation18 + $0x418] sm:$0xff]
    %v5890 = vld [vmem:[#allocation18 + $0x420] sm:$0xff]
    %v5891 = vld [vmem:[#allocation18 + $0x428] sm:$0xff]
    %v5892 = vld [vmem:[#allocation18 + $0x430] sm:$0xff]
    %v5893 = vld [vmem:[#allocation18 + $0x438] sm:$0xff]
    %v5894 = vld [vmem:[#allocation18 + $0x440] sm:$0xff]
    %v5895 = vld [vmem:[#allocation18 + $0x448] sm:$0xff]
    %v5896 = vld [vmem:[#allocation18 + $0x450] sm:$0xff]
    %v5897 = vld [vmem:[#allocation18 + $0x458] sm:$0xff]
    %v5898 = vld [vmem:[#allocation18 + $0x460] sm:$0xff]
    %v5899 = vld [vmem:[#allocation18 + $0x468] sm:$0xff]
    %v5900 = vld [vmem:[#allocation18 + $0x470] sm:$0xff]
    %v5901 = vld [vmem:[#allocation18 + $0x478] sm:$0xff]
    %v5902 = vld [vmem:[#allocation18 + $0x480] sm:$0xff]
    %v5903 = vld [vmem:[#allocation18 + $0x488] sm:$0xff]
    %v5904 = vld [vmem:[#allocation18 + $0x490] sm:$0xff]
    %v5905 = vld [vmem:[#allocation18 + $0x498] sm:$0xff]
    %v5906 = vld [vmem:[#allocation18 + $0x4a0] sm:$0xff]
    %v5907 = vld [vmem:[#allocation18 + $0x4a8] sm:$0xff]
    %v5908 = vld [vmem:[#allocation18 + $0x4b0] sm:$0xff]
    %v5909 = vld [vmem:[#allocation18 + $0x4b8] sm:$0xff]
    %v5910 = vld [vmem:[#allocation18 + $0x4c0] sm:$0xff]
    %v5911 = vld [vmem:[#allocation18 + $0x4c8] sm:$0xff]
    %v5912 = vld [vmem:[#allocation18 + $0x4d0] sm:$0xff]
    %v5913 = vld [vmem:[#allocation18 + $0x4d8] sm:$0xff]
    %v5914 = vld [vmem:[#allocation18 + $0x4e0] sm:$0xff]
    %v5915 = vld [vmem:[#allocation18 + $0x4e8] sm:$0xff]
    %v5916 = vld [vmem:[#allocation18 + $0x4f0] sm:$0xff]
    %v5917 = vld [vmem:[#allocation18 + $0x4f8] sm:$0xff]
    %v5918 = vld [vmem:[#allocation18 + $0x500] sm:$0xff]
    %v5919 = vld [vmem:[#allocation18 + $0x508] sm:$0xff]
    %v5920 = vld [vmem:[#allocation18 + $0x510] sm:$0xff]
    %v5921 = vld [vmem:[#allocation18 + $0x518] sm:$0xff]
    %v5922 = vld [vmem:[#allocation18 + $0x520] sm:$0xff]
    %v5923 = vld [vmem:[#allocation18 + $0x528] sm:$0xff]
    %v5924 = vld [vmem:[#allocation18 + $0x530] sm:$0xff]
    %v5925 = vld [vmem:[#allocation18 + $0x538] sm:$0xff]
    %v5926 = vld [vmem:[#allocation18 + $0x540] sm:$0xff]
    %v5927 = vld [vmem:[#allocation18 + $0x548] sm:$0xff]
    %v5928 = vld [vmem:[#allocation18 + $0x550] sm:$0xff]
    %v5929 = vld [vmem:[#allocation18 + $0x558] sm:$0xff]
    %v5930 = vld [vmem:[#allocation18 + $0x560] sm:$0xff]
    %v5931 = vld [vmem:[#allocation18 + $0x568] sm:$0xff]
    %v5932 = vld [vmem:[#allocation18 + $0x570] sm:$0xff]
    %v5933 = vld [vmem:[#allocation18 + $0x578] sm:$0xff]
    %v5934 = vld [vmem:[#allocation18 + $0x580] sm:$0xff]
    %v5935 = vld [vmem:[#allocation18 + $0x588] sm:$0xff]
    %v5936 = vld [vmem:[#allocation18 + $0x590] sm:$0xff]
    %v5937 = vld [vmem:[#allocation18 + $0x598] sm:$0xff]
    %v5938 = vld [vmem:[#allocation18 + $0x5a0] sm:$0xff]
    %v5939 = vld [vmem:[#allocation18 + $0x5a8] sm:$0xff]
    %v5940 = vld [vmem:[#allocation18 + $0x5b0] sm:$0xff]
    %v5941 = vld [vmem:[#allocation18 + $0x5b8] sm:$0xff]
    %v5942 = vld [vmem:[#allocation18 + $0x5c0] sm:$0xff]
    %v5943 = vld [vmem:[#allocation18 + $0x5c8] sm:$0xff]
    %v5944 = vld [vmem:[#allocation18 + $0x5d0] sm:$0xff]
    %v5945 = vld [vmem:[#allocation18 + $0x5d8] sm:$0xff]
    %v5946 = vld [vmem:[#allocation18 + $0x5e0] sm:$0xff]
    %v5947 = vld [vmem:[#allocation18 + $0x5e8] sm:$0xff]
    %v5948 = vld [vmem:[#allocation18 + $0x5f0] sm:$0xff]
    %v5949 = vld [vmem:[#allocation18 + $0x5f8] sm:$0xff]
    %v5950 = vld [vmem:[#allocation18 + $0x600] sm:$0xff]
    %v5951 = vld [vmem:[#allocation18 + $0x608] sm:$0xff]
    %v5952 = vld [vmem:[#allocation18 + $0x610] sm:$0xff]
    %v5953 = vld [vmem:[#allocation18 + $0x618] sm:$0xff]
    %v5954 = vld [vmem:[#allocation18 + $0x620] sm:$0xff]
    %v5955 = vld [vmem:[#allocation18 + $0x628] sm:$0xff]
    %v5956 = vld [vmem:[#allocation18 + $0x630] sm:$0xff]
    %v5957 = vld [vmem:[#allocation18 + $0x638] sm:$0xff]
    %v5958 = vld [vmem:[#allocation18 + $0x640] sm:$0xff]
    %v5959 = vld [vmem:[#allocation18 + $0x648] sm:$0xff]
    %v5960 = vld [vmem:[#allocation18 + $0x650] sm:$0xff]
    %v5961 = vld [vmem:[#allocation18 + $0x658] sm:$0xff]
    %v5962 = vld [vmem:[#allocation18 + $0x660] sm:$0xff]
    %v5963 = vld [vmem:[#allocation18 + $0x668] sm:$0xff]
    %v5964 = vld [vmem:[#allocation18 + $0x670] sm:$0xff]
    %v5965 = vld [vmem:[#allocation18 + $0x678] sm:$0xff]
    %v5966 = vld [vmem:[#allocation18 + $0x680] sm:$0xff]
    %v5967 = vld [vmem:[#allocation18 + $0x688] sm:$0xff]
    %v5968 = vld [vmem:[#allocation18 + $0x690] sm:$0xff]
    %v5969 = vld [vmem:[#allocation18 + $0x698] sm:$0xff]
    %v5970 = vld [vmem:[#allocation18 + $0x6a0] sm:$0xff]
    %v5971 = vld [vmem:[#allocation18 + $0x6a8] sm:$0xff]
    %v5972 = vld [vmem:[#allocation18 + $0x6b0] sm:$0xff]
    %v5973 = vld [vmem:[#allocation18 + $0x6b8] sm:$0xff]
    %v5974 = vld [vmem:[#allocation18 + $0x6c0] sm:$0xff]
    %v5975 = vld [vmem:[#allocation18 + $0x6c8] sm:$0xff]
    %v5976 = vld [vmem:[#allocation18 + $0x6d0] sm:$0xff]
    %v5977 = vld [vmem:[#allocation18 + $0x6d8] sm:$0xff]
    %v5978 = vld [vmem:[#allocation18 + $0x6e0] sm:$0xff]
    %v5979 = vld [vmem:[#allocation18 + $0x6e8] sm:$0xff]
    %v5980 = vld [vmem:[#allocation18 + $0x6f0] sm:$0xff]
    %v5981 = vld [vmem:[#allocation18 + $0x6f8] sm:$0xff]
    %v5982 = vld [vmem:[#allocation18 + $0x700] sm:$0xff]
    %v5983 = vld [vmem:[#allocation18 + $0x708] sm:$0xff]
    %v5984 = vld [vmem:[#allocation18 + $0x710] sm:$0xff]
    %v5985 = vld [vmem:[#allocation18 + $0x718] sm:$0xff]
    %v5986 = vld [vmem:[#allocation18 + $0x720] sm:$0xff]
    %v5987 = vld [vmem:[#allocation18 + $0x728] sm:$0xff]
    %v5988 = vld [vmem:[#allocation18 + $0x730] sm:$0xff]
    %v5989 = vld [vmem:[#allocation18 + $0x738] sm:$0xff]
    %v5990 = vld [vmem:[#allocation18 + $0x740] sm:$0xff]
    %v5991 = vld [vmem:[#allocation18 + $0x748] sm:$0xff]
    %v5992 = vld [vmem:[#allocation18 + $0x750] sm:$0xff]
    %v5993 = vld [vmem:[#allocation18 + $0x758] sm:$0xff]
    %v5994 = vld [vmem:[#allocation18 + $0x760] sm:$0xff]
    %v5995 = vld [vmem:[#allocation18 + $0x768] sm:$0xff]
    %v5996 = vld [vmem:[#allocation18 + $0x770] sm:$0xff]
    %v5997 = vld [vmem:[#allocation18 + $0x778] sm:$0xff]
    %v5998 = vld [vmem:[#allocation18 + $0x780] sm:$0xff]
    %v5999 = vld [vmem:[#allocation18 + $0x788] sm:$0xff]
    %v6000 = vld [vmem:[#allocation18 + $0x790] sm:$0xff]
    %v6001 = vld [vmem:[#allocation18 + $0x798] sm:$0xff]
    %v6002 = vld [vmem:[#allocation18 + $0x7a0] sm:$0xff]
    %v6003 = vld [vmem:[#allocation18 + $0x7a8] sm:$0xff]
    %v6004 = vld [vmem:[#allocation18 + $0x7b0] sm:$0xff]
    %v6005 = vld [vmem:[#allocation18 + $0x7b8] sm:$0xff]
    %v6006 = vld [vmem:[#allocation18 + $0x7c0] sm:$0xff]
    %v6007 = vld [vmem:[#allocation18 + $0x7c8] sm:$0xff]
    %v6008 = vld [vmem:[#allocation18 + $0x7d0] sm:$0xff]
    %v6009 = vld [vmem:[#allocation18 + $0x7d8] sm:$0xff]
    %v6010 = vld [vmem:[#allocation18 + $0x7e0] sm:$0xff]
    %v6011 = vld [vmem:[#allocation18 + $0x7e8] sm:$0xff]
    %v6012 = vld [vmem:[#allocation18 + $0x7f0] sm:$0xff]
    %v6013 = vld [vmem:[#allocation18 + $0x7f8] sm:$0xff]
    %v6014 = vld [vmem:[#allocation18 + $0x800] sm:$0xff]
    %v6015 = vld [vmem:[#allocation18 + $0x808] sm:$0xff]
    %v6016 = vld [vmem:[#allocation18 + $0x810] sm:$0xff]
    %v6017 = vld [vmem:[#allocation18 + $0x818] sm:$0xff]
    %v6018 = vld [vmem:[#allocation18 + $0x820] sm:$0xff]
    %v6019 = vld [vmem:[#allocation18 + $0x828] sm:$0xff]
    %v6020 = vld [vmem:[#allocation18 + $0x830] sm:$0xff]
    %v6021 = vld [vmem:[#allocation18 + $0x838] sm:$0xff]
    %v6022 = vld [vmem:[#allocation18 + $0x840] sm:$0xff]
    %v6023 = vld [vmem:[#allocation18 + $0x848] sm:$0xff]
    %v6024 = vld [vmem:[#allocation18 + $0x850] sm:$0xff]
    %v6025 = vld [vmem:[#allocation18 + $0x858] sm:$0xff]
    %v6026 = vld [vmem:[#allocation18 + $0x860] sm:$0xff]
    %v6027 = vld [vmem:[#allocation18 + $0x868] sm:$0xff]
    %v6028 = vld [vmem:[#allocation18 + $0x870] sm:$0xff]
    %v6029 = vld [vmem:[#allocation18 + $0x878] sm:$0xff]
    %v6030 = vld [vmem:[#allocation18 + $0x880] sm:$0xff]
    %v6031 = vld [vmem:[#allocation18 + $0x888] sm:$0xff]
    %v6032 = vld [vmem:[#allocation18 + $0x890] sm:$0xff]
    %v6033 = vld [vmem:[#allocation18 + $0x898] sm:$0xff]
    %v6034 = vld [vmem:[#allocation18 + $0x8a0] sm:$0xff]
    %v6035 = vld [vmem:[#allocation18 + $0x8a8] sm:$0xff]
    %v6036 = vld [vmem:[#allocation18 + $0x8b0] sm:$0xff]
    %v6037 = vld [vmem:[#allocation18 + $0x8b8] sm:$0xff]
    %v6038 = vld [vmem:[#allocation18 + $0x8c0] sm:$0xff]
    %v6039 = vld [vmem:[#allocation18 + $0x8c8] sm:$0xff]
    %v6040 = vld [vmem:[#allocation18 + $0x8d0] sm:$0xff]
    %v6041 = vld [vmem:[#allocation18 + $0x8d8] sm:$0xff]
    %v6042 = vld [vmem:[#allocation18 + $0x8e0] sm:$0xff]
    %v6043 = vld [vmem:[#allocation18 + $0x8e8] sm:$0xff]
    %v6044 = vld [vmem:[#allocation18 + $0x8f0] sm:$0xff]
    %v6045 = vld [vmem:[#allocation18 + $0x8f8] sm:$0xff]
    %v6046 = vld [vmem:[#allocation18 + $0x900] sm:$0xff]
    %v6047 = vld [vmem:[#allocation18 + $0x908] sm:$0xff]
    %v6048 = vld [vmem:[#allocation18 + $0x910] sm:$0xff]
    %v6049 = vld [vmem:[#allocation18 + $0x918] sm:$0xff]
    %v6050 = vld [vmem:[#allocation18 + $0x920] sm:$0xff]
    %v6051 = vld [vmem:[#allocation18 + $0x928] sm:$0xff]
    %v6052 = vld [vmem:[#allocation18 + $0x930] sm:$0xff]
    %v6053 = vld [vmem:[#allocation18 + $0x938] sm:$0xff]
    %v6054 = vld [vmem:[#allocation18 + $0x940] sm:$0xff]
    %v6055 = vld [vmem:[#allocation18 + $0x948] sm:$0xff]
    %v6056 = vld [vmem:[#allocation18 + $0x950] sm:$0xff]
    %v6057 = vld [vmem:[#allocation18 + $0x958] sm:$0xff]
    %v6058 = vld [vmem:[#allocation18 + $0x960] sm:$0xff]
    %v6059 = vld [vmem:[#allocation18 + $0x968] sm:$0xff]
    %v6060 = vld [vmem:[#allocation18 + $0x970] sm:$0xff]
    %v6061 = vld [vmem:[#allocation18 + $0x978] sm:$0xff]
    %v6062 = vld [vmem:[#allocation18 + $0x980] sm:$0xff]
    %v6063 = vld [vmem:[#allocation18 + $0x988] sm:$0xff]
    %v6064 = vld [vmem:[#allocation18 + $0x990] sm:$0xff]
    %v6065 = vld [vmem:[#allocation18 + $0x998] sm:$0xff]
    %v6066 = vld [vmem:[#allocation18 + $0x9a0] sm:$0xff]
    %v6067 = vld [vmem:[#allocation18 + $0x9a8] sm:$0xff]
    %v6068 = vld [vmem:[#allocation18 + $0x9b0] sm:$0xff]
    %v6069 = vld [vmem:[#allocation18 + $0x9b8] sm:$0xff]
    %v6070 = vld [vmem:[#allocation18 + $0x9c0] sm:$0xff]
    %v6071 = vld [vmem:[#allocation18 + $0x9c8] sm:$0xff]
    %v6072 = vld [vmem:[#allocation18 + $0x9d0] sm:$0xff]
    %v6073 = vld [vmem:[#allocation18 + $0x9d8] sm:$0xff]
    %v6074 = vld [vmem:[#allocation18 + $0x9e0] sm:$0xff]
    %v6075 = vld [vmem:[#allocation18 + $0x9e8] sm:$0xff]
    %v6076 = vld [vmem:[#allocation18 + $0x9f0] sm:$0xff]
    %v6077 = vld [vmem:[#allocation18 + $0x9f8] sm:$0xff]
    %v6078 = vld [vmem:[#allocation18 + $0xa00] sm:$0xff]
    %v6079 = vld [vmem:[#allocation18 + $0xa08] sm:$0xff]
    %v6080 = vld [vmem:[#allocation18 + $0xa10] sm:$0xff]
    %v6081 = vld [vmem:[#allocation18 + $0xa18] sm:$0xff]
    %v6082 = vld [vmem:[#allocation18 + $0xa20] sm:$0xff]
    %v6083 = vld [vmem:[#allocation18 + $0xa28] sm:$0xff]
    %v6084 = vld [vmem:[#allocation18 + $0xa30] sm:$0xff]
    %v6085 = vld [vmem:[#allocation18 + $0xa38] sm:$0xff]
    %v6086 = vld [vmem:[#allocation18 + $0xa40] sm:$0xff]
    %v6087 = vld [vmem:[#allocation18 + $0xa48] sm:$0xff]
    %v6088 = vld [vmem:[#allocation18 + $0xa50] sm:$0xff]
    %v6089 = vld [vmem:[#allocation18 + $0xa58] sm:$0xff]
    %v6090 = vld [vmem:[#allocation18 + $0xa60] sm:$0xff]
    %v6091 = vld [vmem:[#allocation18 + $0xa68] sm:$0xff]
    %v6092 = vld [vmem:[#allocation18 + $0xa70] sm:$0xff]
    %v6093 = vld [vmem:[#allocation18 + $0xa78] sm:$0xff]
    %v6094 = vld [vmem:[#allocation18 + $0xa80] sm:$0xff]
    %v6095 = vld [vmem:[#allocation18 + $0xa88] sm:$0xff]
    %v6096 = vld [vmem:[#allocation18 + $0xa90] sm:$0xff]
    %v6097 = vld [vmem:[#allocation18 + $0xa98] sm:$0xff]
    %v6098 = vld [vmem:[#allocation18 + $0xaa0] sm:$0xff]
    %v6099 = vld [vmem:[#allocation18 + $0xaa8] sm:$0xff]
    %v6100 = vld [vmem:[#allocation18 + $0xab0] sm:$0xff]
    %v6101 = vld [vmem:[#allocation18 + $0xab8] sm:$0xff]
    %v6102 = vld [vmem:[#allocation18 + $0xac0] sm:$0xff]
    %v6103 = vld [vmem:[#allocation18 + $0xac8] sm:$0xff]
    %v6104 = vld [vmem:[#allocation18 + $0xad0] sm:$0xff]
    %v6105 = vld [vmem:[#allocation18 + $0xad8] sm:$0xff]
    %v6106 = vld [vmem:[#allocation18 + $0xae0] sm:$0xff]
    %v6107 = vld [vmem:[#allocation18 + $0xae8] sm:$0xff]
    %v6108 = vld [vmem:[#allocation18 + $0xaf0] sm:$0xff]
    %v6109 = vld [vmem:[#allocation18 + $0xaf8] sm:$0xff]
    %v6110 = vld [vmem:[#allocation18 + $0xb00] sm:$0xff]
    %v6111 = vld [vmem:[#allocation18 + $0xb08] sm:$0xff]
    %v6112 = vld [vmem:[#allocation18 + $0xb10] sm:$0xff]
    %v6113 = vld [vmem:[#allocation18 + $0xb18] sm:$0xff]
    %v6114 = vld [vmem:[#allocation18 + $0xb20] sm:$0xff]
    %v6115 = vld [vmem:[#allocation18 + $0xb28] sm:$0xff]
    %v6116 = vld [vmem:[#allocation18 + $0xb30] sm:$0xff]
    %v6117 = vld [vmem:[#allocation18 + $0xb38] sm:$0xff]
    %v6118 = vld [vmem:[#allocation18 + $0xb40] sm:$0xff]
    %v6119 = vld [vmem:[#allocation18 + $0xb48] sm:$0xff]
    %v6120 = vld [vmem:[#allocation18 + $0xb50] sm:$0xff]
    %v6121 = vld [vmem:[#allocation18 + $0xb58] sm:$0xff]
    %v6122 = vld [vmem:[#allocation18 + $0xb60] sm:$0xff]
    %v6123 = vld [vmem:[#allocation18 + $0xb68] sm:$0xff]
    %v6124 = vld [vmem:[#allocation18 + $0xb70] sm:$0xff]
    %v6125 = vld [vmem:[#allocation18 + $0xb78] sm:$0xff]
    %v6126 = vld [vmem:[#allocation18 + $0xb80] sm:$0xff]
    %v6127 = vld [vmem:[#allocation18 + $0xb88] sm:$0xff]
    %v6128 = vld [vmem:[#allocation18 + $0xb90] sm:$0xff]
    %v6129 = vld [vmem:[#allocation18 + $0xb98] sm:$0xff]
    %v6130 = vld [vmem:[#allocation18 + $0xba0] sm:$0xff]
    %v6131 = vld [vmem:[#allocation18 + $0xba8] sm:$0xff]
    %v6132 = vld [vmem:[#allocation18 + $0xbb0] sm:$0xff]
    %v6133 = vld [vmem:[#allocation18 + $0xbb8] sm:$0xff]
    %v6134 = vld [vmem:[#allocation18 + $0xbc0] sm:$0xff]
    %v6135 = vld [vmem:[#allocation18 + $0xbc8] sm:$0xff]
    %v6136 = vld [vmem:[#allocation18 + $0xbd0] sm:$0xff]
    %v6137 = vld [vmem:[#allocation18 + $0xbd8] sm:$0xff]
    %v6138 = vld [vmem:[#allocation18 + $0xbe0] sm:$0xff]
    %v6139 = vld [vmem:[#allocation18 + $0xbe8] sm:$0xff]
    %v6140 = vld [vmem:[#allocation18 + $0xbf0] sm:$0xff]
    %v6141 = vld [vmem:[#allocation18 + $0xbf8] sm:$0xff]
    %v6142 = vld [vmem:[#allocation20] sm:$0xff]
    %v6144 = vperm.slane %v6142, 0
    %v6145 = vperm.slane %v6142, 1
    %v6146 = vperm.slane %v6142, 2
    %v6147 = vperm.slane %v6142, 3
    %v6148 = vperm.slane %v6142, 4
    %v6149 = vperm.slane %v6142, 5
    %v6150 = vperm.slane %v6142, 6
    %v6151 = vperm.slane %v6142, 7
    %v6544 = vunpack.c.l.b16 %v5758
    %v6545 = vunpack.c.h.b16 %v5758
    %v6546 = vunpack.c.l.b16 %v5759
    %v6547 = vunpack.c.h.b16 %v5759
    %v6548 = vunpack.c.l.b16 %v5760
    %v6549 = vunpack.c.h.b16 %v5760
    %v6550 = vunpack.c.l.b16 %v5761
    %v6551 = vunpack.c.h.b16 %v5761
    %v6552 = vunpack.c.l.b16 %v5762
    %v6553 = vunpack.c.h.b16 %v5762
    %v6554 = vunpack.c.l.b16 %v5763
    %v6555 = vunpack.c.h.b16 %v5763
    %v6556 = vunpack.c.l.b16 %v5764
    %v6557 = vunpack.c.h.b16 %v5764
    %v6558 = vunpack.c.l.b16 %v5765
    %v6559 = vunpack.c.h.b16 %v5765
    %v6560 = vunpack.c.l.b16 %v5766
    %v6561 = vunpack.c.h.b16 %v5766
    %v6562 = vunpack.c.l.b16 %v5767
    %v6563 = vunpack.c.h.b16 %v5767
    %v6564 = vunpack.c.l.b16 %v5768
    %v6565 = vunpack.c.h.b16 %v5768
    %v6566 = vunpack.c.l.b16 %v5769
    %v6567 = vunpack.c.h.b16 %v5769
    %v6568 = vunpack.c.l.b16 %v5770
    %v6569 = vunpack.c.h.b16 %v5770
    %v6570 = vunpack.c.l.b16 %v5771
    %v6571 = vunpack.c.h.b16 %v5771
    %v6572 = vunpack.c.l.b16 %v5772
    %v6573 = vunpack.c.h.b16 %v5772
    %v6574 = vunpack.c.l.b16 %v5773
    %v6575 = vunpack.c.h.b16 %v5773
    %v6576 = vunpack.c.l.b16 %v5774
    %v6577 = vunpack.c.h.b16 %v5774
    %v6578 = vunpack.c.l.b16 %v5775
    %v6579 = vunpack.c.h.b16 %v5775
    %v6580 = vunpack.c.l.b16 %v5776
    %v6581 = vunpack.c.h.b16 %v5776
    %v6582 = vunpack.c.l.b16 %v5777
    %v6583 = vunpack.c.h.b16 %v5777
    %v6584 = vunpack.c.l.b16 %v5778
    %v6585 = vunpack.c.h.b16 %v5778
    %v6586 = vunpack.c.l.b16 %v5779
    %v6587 = vunpack.c.h.b16 %v5779
    %v6588 = vunpack.c.l.b16 %v5780
    %v6589 = vunpack.c.h.b16 %v5780
    %v6590 = vunpack.c.l.b16 %v5781
    %v6591 = vunpack.c.h.b16 %v5781
    %v6592 = vunpack.c.l.b16 %v5782
    %v6593 = vunpack.c.h.b16 %v5782
    %v6594 = vunpack.c.l.b16 %v5783
    %v6595 = vunpack.c.h.b16 %v5783
    %v6596 = vunpack.c.l.b16 %v5784
    %v6597 = vunpack.c.h.b16 %v5784
    %v6598 = vunpack.c.l.b16 %v5785
    %v6599 = vunpack.c.h.b16 %v5785
    %v6600 = vunpack.c.l.b16 %v5786
    %v6601 = vunpack.c.h.b16 %v5786
    %v6602 = vunpack.c.l.b16 %v5787
    %v6603 = vunpack.c.h.b16 %v5787
    %v6604 = vunpack.c.l.b16 %v5788
    %v6605 = vunpack.c.h.b16 %v5788
    %v6606 = vunpack.c.l.b16 %v5789
    %v6607 = vunpack.c.h.b16 %v5789
    %v6608 = vunpack.c.l.b16 %v5790
    %v6609 = vunpack.c.h.b16 %v5790
    %v6610 = vunpack.c.l.b16 %v5791
    %v6611 = vunpack.c.h.b16 %v5791
    %v6612 = vunpack.c.l.b16 %v5792
    %v6613 = vunpack.c.h.b16 %v5792
    %v6614 = vunpack.c.l.b16 %v5793
    %v6615 = vunpack.c.h.b16 %v5793
    %v6616 = vunpack.c.l.b16 %v5794
    %v6617 = vunpack.c.h.b16 %v5794
    %v6618 = vunpack.c.l.b16 %v5795
    %v6619 = vunpack.c.h.b16 %v5795
    %v6620 = vunpack.c.l.b16 %v5796
    %v6621 = vunpack.c.h.b16 %v5796
    %v6622 = vunpack.c.l.b16 %v5797
    %v6623 = vunpack.c.h.b16 %v5797
    %v6624 = vunpack.c.l.b16 %v5798
    %v6625 = vunpack.c.h.b16 %v5798
    %v6626 = vunpack.c.l.b16 %v5799
    %v6627 = vunpack.c.h.b16 %v5799
    %v6628 = vunpack.c.l.b16 %v5800
    %v6629 = vunpack.c.h.b16 %v5800
    %v6630 = vunpack.c.l.b16 %v5801
    %v6631 = vunpack.c.h.b16 %v5801
    %v6632 = vunpack.c.l.b16 %v5802
    %v6633 = vunpack.c.h.b16 %v5802
    %v6634 = vunpack.c.l.b16 %v5803
    %v6635 = vunpack.c.h.b16 %v5803
    %v6636 = vunpack.c.l.b16 %v5804
    %v6637 = vunpack.c.h.b16 %v5804
    %v6638 = vunpack.c.l.b16 %v5805
    %v6639 = vunpack.c.h.b16 %v5805
    %v6640 = vunpack.c.l.b16 %v5806
    %v6641 = vunpack.c.h.b16 %v5806
    %v6642 = vunpack.c.l.b16 %v5807
    %v6643 = vunpack.c.h.b16 %v5807
    %v6644 = vunpack.c.l.b16 %v5808
    %v6645 = vunpack.c.h.b16 %v5808
    %v6646 = vunpack.c.l.b16 %v5809
    %v6647 = vunpack.c.h.b16 %v5809
    %v6648 = vunpack.c.l.b16 %v5810
    %v6649 = vunpack.c.h.b16 %v5810
    %v6650 = vunpack.c.l.b16 %v5811
    %v6651 = vunpack.c.h.b16 %v5811
    %v6652 = vunpack.c.l.b16 %v5812
    %v6653 = vunpack.c.h.b16 %v5812
    %v6654 = vunpack.c.l.b16 %v5813
    %v6655 = vunpack.c.h.b16 %v5813
    %v6656 = vunpack.c.l.b16 %v5814
    %v6657 = vunpack.c.h.b16 %v5814
    %v6658 = vunpack.c.l.b16 %v5815
    %v6659 = vunpack.c.h.b16 %v5815
    %v6660 = vunpack.c.l.b16 %v5816
    %v6661 = vunpack.c.h.b16 %v5816
    %v6662 = vunpack.c.l.b16 %v5817
    %v6663 = vunpack.c.h.b16 %v5817
    %v6664 = vunpack.c.l.b16 %v5818
    %v6665 = vunpack.c.h.b16 %v5818
    %v6666 = vunpack.c.l.b16 %v5819
    %v6667 = vunpack.c.h.b16 %v5819
    %v6668 = vunpack.c.l.b16 %v5820
    %v6669 = vunpack.c.h.b16 %v5820
    %v6670 = vunpack.c.l.b16 %v5821
    %v6671 = vunpack.c.h.b16 %v5821
    %v6672 = vunpack.c.l.b16 %v5822
    %v6673 = vunpack.c.h.b16 %v5822
    %v6674 = vunpack.c.l.b16 %v5823
    %v6675 = vunpack.c.h.b16 %v5823
    %v6676 = vunpack.c.l.b16 %v5824
    %v6677 = vunpack.c.h.b16 %v5824
    %v6678 = vunpack.c.l.b16 %v5825
    %v6679 = vunpack.c.h.b16 %v5825
    %v6680 = vunpack.c.l.b16 %v5826
    %v6681 = vunpack.c.h.b16 %v5826
    %v6682 = vunpack.c.l.b16 %v5827
    %v6683 = vunpack.c.h.b16 %v5827
    %v6684 = vunpack.c.l.b16 %v5828
    %v6685 = vunpack.c.h.b16 %v5828
    %v6686 = vunpack.c.l.b16 %v5829
    %v6687 = vunpack.c.h.b16 %v5829
    %v6688 = vunpack.c.l.b16 %v5830
    %v6689 = vunpack.c.h.b16 %v5830
    %v6690 = vunpack.c.l.b16 %v5831
    %v6691 = vunpack.c.h.b16 %v5831
    %v6692 = vunpack.c.l.b16 %v5832
    %v6693 = vunpack.c.h.b16 %v5832
    %v6694 = vunpack.c.l.b16 %v5833
    %v6695 = vunpack.c.h.b16 %v5833
    %v6696 = vunpack.c.l.b16 %v5834
    %v6697 = vunpack.c.h.b16 %v5834
    %v6698 = vunpack.c.l.b16 %v5835
    %v6699 = vunpack.c.h.b16 %v5835
    %v6700 = vunpack.c.l.b16 %v5836
    %v6701 = vunpack.c.h.b16 %v5836
    %v6702 = vunpack.c.l.b16 %v5837
    %v6703 = vunpack.c.h.b16 %v5837
    %v6704 = vunpack.c.l.b16 %v5838
    %v6705 = vunpack.c.h.b16 %v5838
    %v6706 = vunpack.c.l.b16 %v5839
    %v6707 = vunpack.c.h.b16 %v5839
    %v6708 = vunpack.c.l.b16 %v5840
    %v6709 = vunpack.c.h.b16 %v5840
    %v6710 = vunpack.c.l.b16 %v5841
    %v6711 = vunpack.c.h.b16 %v5841
    %v6712 = vunpack.c.l.b16 %v5842
    %v6713 = vunpack.c.h.b16 %v5842
    %v6714 = vunpack.c.l.b16 %v5843
    %v6715 = vunpack.c.h.b16 %v5843
    %v6716 = vunpack.c.l.b16 %v5844
    %v6717 = vunpack.c.h.b16 %v5844
    %v6718 = vunpack.c.l.b16 %v5845
    %v6719 = vunpack.c.h.b16 %v5845
    %v6720 = vunpack.c.l.b16 %v5846
    %v6721 = vunpack.c.h.b16 %v5846
    %v6722 = vunpack.c.l.b16 %v5847
    %v6723 = vunpack.c.h.b16 %v5847
    %v6724 = vunpack.c.l.b16 %v5848
    %v6725 = vunpack.c.h.b16 %v5848
    %v6726 = vunpack.c.l.b16 %v5849
    %v6727 = vunpack.c.h.b16 %v5849
    %v6728 = vunpack.c.l.b16 %v5850
    %v6729 = vunpack.c.h.b16 %v5850
    %v6730 = vunpack.c.l.b16 %v5851
    %v6731 = vunpack.c.h.b16 %v5851
    %v6732 = vunpack.c.l.b16 %v5852
    %v6733 = vunpack.c.h.b16 %v5852
    %v6734 = vunpack.c.l.b16 %v5853
    %v6735 = vunpack.c.h.b16 %v5853
    %v6736 = vunpack.c.l.b16 %v5854
    %v6737 = vunpack.c.h.b16 %v5854
    %v6738 = vunpack.c.l.b16 %v5855
    %v6739 = vunpack.c.h.b16 %v5855
    %v6740 = vunpack.c.l.b16 %v5856
    %v6741 = vunpack.c.h.b16 %v5856
    %v6742 = vunpack.c.l.b16 %v5857
    %v6743 = vunpack.c.h.b16 %v5857
    %v6744 = vunpack.c.l.b16 %v5858
    %v6745 = vunpack.c.h.b16 %v5858
    %v6746 = vunpack.c.l.b16 %v5859
    %v6747 = vunpack.c.h.b16 %v5859
    %v6748 = vunpack.c.l.b16 %v5860
    %v6749 = vunpack.c.h.b16 %v5860
    %v6750 = vunpack.c.l.b16 %v5861
    %v6751 = vunpack.c.h.b16 %v5861
    %v6752 = vunpack.c.l.b16 %v5862
    %v6753 = vunpack.c.h.b16 %v5862
    %v6754 = vunpack.c.l.b16 %v5863
    %v6755 = vunpack.c.h.b16 %v5863
    %v6756 = vunpack.c.l.b16 %v5864
    %v6757 = vunpack.c.h.b16 %v5864
    %v6758 = vunpack.c.l.b16 %v5865
    %v6759 = vunpack.c.h.b16 %v5865
    %v6760 = vunpack.c.l.b16 %v5866
    %v6761 = vunpack.c.h.b16 %v5866
    %v6762 = vunpack.c.l.b16 %v5867
    %v6763 = vunpack.c.h.b16 %v5867
    %v6764 = vunpack.c.l.b16 %v5868
    %v6765 = vunpack.c.h.b16 %v5868
    %v6766 = vunpack.c.l.b16 %v5869
    %v6767 = vunpack.c.h.b16 %v5869
    %v6768 = vunpack.c.l.b16 %v5870
    %v6769 = vunpack.c.h.b16 %v5870
    %v6770 = vunpack.c.l.b16 %v5871
    %v6771 = vunpack.c.h.b16 %v5871
    %v6772 = vunpack.c.l.b16 %v5872
    %v6773 = vunpack.c.h.b16 %v5872
    %v6774 = vunpack.c.l.b16 %v5873
    %v6775 = vunpack.c.h.b16 %v5873
    %v6776 = vunpack.c.l.b16 %v5874
    %v6777 = vunpack.c.h.b16 %v5874
    %v6778 = vunpack.c.l.b16 %v5875
    %v6779 = vunpack.c.h.b16 %v5875
    %v6780 = vunpack.c.l.b16 %v5876
    %v6781 = vunpack.c.h.b16 %v5876
    %v6782 = vunpack.c.l.b16 %v5877
    %v6783 = vunpack.c.h.b16 %v5877
    %v6784 = vunpack.c.l.b16 %v5878
    %v6785 = vunpack.c.h.b16 %v5878
    %v6786 = vunpack.c.l.b16 %v5879
    %v6787 = vunpack.c.h.b16 %v5879
    %v6788 = vunpack.c.l.b16 %v5880
    %v6789 = vunpack.c.h.b16 %v5880
    %v6790 = vunpack.c.l.b16 %v5881
    %v6791 = vunpack.c.h.b16 %v5881
    %v6792 = vunpack.c.l.b16 %v5882
    %v6793 = vunpack.c.h.b16 %v5882
    %v6794 = vunpack.c.l.b16 %v5883
    %v6795 = vunpack.c.h.b16 %v5883
    %v6796 = vunpack.c.l.b16 %v5884
    %v6797 = vunpack.c.h.b16 %v5884
    %v6798 = vunpack.c.l.b16 %v5885
    %v6799 = vunpack.c.h.b16 %v5885
    %v6800 = vunpack.c.l.b16 %v5886
    %v6801 = vunpack.c.h.b16 %v5886
    %v6802 = vunpack.c.l.b16 %v5887
    %v6803 = vunpack.c.h.b16 %v5887
    %v6804 = vunpack.c.l.b16 %v5888
    %v6805 = vunpack.c.h.b16 %v5888
    %v6806 = vunpack.c.l.b16 %v5889
    %v6807 = vunpack.c.h.b16 %v5889
    %v6808 = vunpack.c.l.b16 %v5890
    %v6809 = vunpack.c.h.b16 %v5890
    %v6810 = vunpack.c.l.b16 %v5891
    %v6811 = vunpack.c.h.b16 %v5891
    %v6812 = vunpack.c.l.b16 %v5892
    %v6813 = vunpack.c.h.b16 %v5892
    %v6814 = vunpack.c.l.b16 %v5893
    %v6815 = vunpack.c.h.b16 %v5893
    %v6816 = vunpack.c.l.b16 %v5894
    %v6817 = vunpack.c.h.b16 %v5894
    %v6818 = vunpack.c.l.b16 %v5895
    %v6819 = vunpack.c.h.b16 %v5895
    %v6820 = vunpack.c.l.b16 %v5896
    %v6821 = vunpack.c.h.b16 %v5896
    %v6822 = vunpack.c.l.b16 %v5897
    %v6823 = vunpack.c.h.b16 %v5897
    %v6824 = vunpack.c.l.b16 %v5898
    %v6825 = vunpack.c.h.b16 %v5898
    %v6826 = vunpack.c.l.b16 %v5899
    %v6827 = vunpack.c.h.b16 %v5899
    %v6828 = vunpack.c.l.b16 %v5900
    %v6829 = vunpack.c.h.b16 %v5900
    %v6830 = vunpack.c.l.b16 %v5901
    %v6831 = vunpack.c.h.b16 %v5901
    %v6832 = vunpack.c.l.b16 %v5902
    %v6833 = vunpack.c.h.b16 %v5902
    %v6834 = vunpack.c.l.b16 %v5903
    %v6835 = vunpack.c.h.b16 %v5903
    %v6836 = vunpack.c.l.b16 %v5904
    %v6837 = vunpack.c.h.b16 %v5904
    %v6838 = vunpack.c.l.b16 %v5905
    %v6839 = vunpack.c.h.b16 %v5905
    %v6840 = vunpack.c.l.b16 %v5906
    %v6841 = vunpack.c.h.b16 %v5906
    %v6842 = vunpack.c.l.b16 %v5907
    %v6843 = vunpack.c.h.b16 %v5907
    %v6844 = vunpack.c.l.b16 %v5908
    %v6845 = vunpack.c.h.b16 %v5908
    %v6846 = vunpack.c.l.b16 %v5909
    %v6847 = vunpack.c.h.b16 %v5909
    %v6848 = vunpack.c.l.b16 %v5910
    %v6849 = vunpack.c.h.b16 %v5910
    %v6850 = vunpack.c.l.b16 %v5911
    %v6851 = vunpack.c.h.b16 %v5911
    %v6852 = vunpack.c.l.b16 %v5912
    %v6853 = vunpack.c.h.b16 %v5912
    %v6854 = vunpack.c.l.b16 %v5913
    %v6855 = vunpack.c.h.b16 %v5913
    %v6856 = vunpack.c.l.b16 %v5914
    %v6857 = vunpack.c.h.b16 %v5914
    %v6858 = vunpack.c.l.b16 %v5915
    %v6859 = vunpack.c.h.b16 %v5915
    %v6860 = vunpack.c.l.b16 %v5916
    %v6861 = vunpack.c.h.b16 %v5916
    %v6862 = vunpack.c.l.b16 %v5917
    %v6863 = vunpack.c.h.b16 %v5917
    %v6864 = vunpack.c.l.b16 %v5918
    %v6865 = vunpack.c.h.b16 %v5918
    %v6866 = vunpack.c.l.b16 %v5919
    %v6867 = vunpack.c.h.b16 %v5919
    %v6868 = vunpack.c.l.b16 %v5920
    %v6869 = vunpack.c.h.b16 %v5920
    %v6870 = vunpack.c.l.b16 %v5921
    %v6871 = vunpack.c.h.b16 %v5921
    %v6872 = vunpack.c.l.b16 %v5922
    %v6873 = vunpack.c.h.b16 %v5922
    %v6874 = vunpack.c.l.b16 %v5923
    %v6875 = vunpack.c.h.b16 %v5923
    %v6876 = vunpack.c.l.b16 %v5924
    %v6877 = vunpack.c.h.b16 %v5924
    %v6878 = vunpack.c.l.b16 %v5925
    %v6879 = vunpack.c.h.b16 %v5925
    %v6880 = vunpack.c.l.b16 %v5926
    %v6881 = vunpack.c.h.b16 %v5926
    %v6882 = vunpack.c.l.b16 %v5927
    %v6883 = vunpack.c.h.b16 %v5927
    %v6884 = vunpack.c.l.b16 %v5928
    %v6885 = vunpack.c.h.b16 %v5928
    %v6886 = vunpack.c.l.b16 %v5929
    %v6887 = vunpack.c.h.b16 %v5929
    %v6888 = vunpack.c.l.b16 %v5930
    %v6889 = vunpack.c.h.b16 %v5930
    %v6890 = vunpack.c.l.b16 %v5931
    %v6891 = vunpack.c.h.b16 %v5931
    %v6892 = vunpack.c.l.b16 %v5932
    %v6893 = vunpack.c.h.b16 %v5932
    %v6894 = vunpack.c.l.b16 %v5933
    %v6895 = vunpack.c.h.b16 %v5933
    %v6896 = vunpack.c.l.b16 %v5934
    %v6897 = vunpack.c.h.b16 %v5934
    %v6898 = vunpack.c.l.b16 %v5935
    %v6899 = vunpack.c.h.b16 %v5935
    %v6900 = vunpack.c.l.b16 %v5936
    %v6901 = vunpack.c.h.b16 %v5936
    %v6902 = vunpack.c.l.b16 %v5937
    %v6903 = vunpack.c.h.b16 %v5937
    %v6904 = vunpack.c.l.b16 %v5938
    %v6905 = vunpack.c.h.b16 %v5938
    %v6906 = vunpack.c.l.b16 %v5939
    %v6907 = vunpack.c.h.b16 %v5939
    %v6908 = vunpack.c.l.b16 %v5940
    %v6909 = vunpack.c.h.b16 %v5940
    %v6910 = vunpack.c.l.b16 %v5941
    %v6911 = vunpack.c.h.b16 %v5941
    %v6912 = vunpack.c.l.b16 %v5942
    %v6913 = vunpack.c.h.b16 %v5942
    %v6914 = vunpack.c.l.b16 %v5943
    %v6915 = vunpack.c.h.b16 %v5943
    %v6916 = vunpack.c.l.b16 %v5944
    %v6917 = vunpack.c.h.b16 %v5944
    %v6918 = vunpack.c.l.b16 %v5945
    %v6919 = vunpack.c.h.b16 %v5945
    %v6920 = vunpack.c.l.b16 %v5946
    %v6921 = vunpack.c.h.b16 %v5946
    %v6922 = vunpack.c.l.b16 %v5947
    %v6923 = vunpack.c.h.b16 %v5947
    %v6924 = vunpack.c.l.b16 %v5948
    %v6925 = vunpack.c.h.b16 %v5948
    %v6926 = vunpack.c.l.b16 %v5949
    %v6927 = vunpack.c.h.b16 %v5949
    %v6928 = vunpack.c.l.b16 %v5950
    %v6929 = vunpack.c.h.b16 %v5950
    %v6930 = vunpack.c.l.b16 %v5951
    %v6931 = vunpack.c.h.b16 %v5951
    %v6932 = vunpack.c.l.b16 %v5952
    %v6933 = vunpack.c.h.b16 %v5952
    %v6934 = vunpack.c.l.b16 %v5953
    %v6935 = vunpack.c.h.b16 %v5953
    %v6936 = vunpack.c.l.b16 %v5954
    %v6937 = vunpack.c.h.b16 %v5954
    %v6938 = vunpack.c.l.b16 %v5955
    %v6939 = vunpack.c.h.b16 %v5955
    %v6940 = vunpack.c.l.b16 %v5956
    %v6941 = vunpack.c.h.b16 %v5956
    %v6942 = vunpack.c.l.b16 %v5957
    %v6943 = vunpack.c.h.b16 %v5957
    %v6944 = vunpack.c.l.b16 %v5958
    %v6945 = vunpack.c.h.b16 %v5958
    %v6946 = vunpack.c.l.b16 %v5959
    %v6947 = vunpack.c.h.b16 %v5959
    %v6948 = vunpack.c.l.b16 %v5960
    %v6949 = vunpack.c.h.b16 %v5960
    %v6950 = vunpack.c.l.b16 %v5961
    %v6951 = vunpack.c.h.b16 %v5961
    %v6952 = vunpack.c.l.b16 %v5962
    %v6953 = vunpack.c.h.b16 %v5962
    %v6954 = vunpack.c.l.b16 %v5963
    %v6955 = vunpack.c.h.b16 %v5963
    %v6956 = vunpack.c.l.b16 %v5964
    %v6957 = vunpack.c.h.b16 %v5964
    %v6958 = vunpack.c.l.b16 %v5965
    %v6959 = vunpack.c.h.b16 %v5965
    %v6960 = vunpack.c.l.b16 %v5966
    %v6961 = vunpack.c.h.b16 %v5966
    %v6962 = vunpack.c.l.b16 %v5967
    %v6963 = vunpack.c.h.b16 %v5967
    %v6964 = vunpack.c.l.b16 %v5968
    %v6965 = vunpack.c.h.b16 %v5968
    %v6966 = vunpack.c.l.b16 %v5969
    %v6967 = vunpack.c.h.b16 %v5969
    %v6968 = vunpack.c.l.b16 %v5970
    %v6969 = vunpack.c.h.b16 %v5970
    %v6970 = vunpack.c.l.b16 %v5971
    %v6971 = vunpack.c.h.b16 %v5971
    %v6972 = vunpack.c.l.b16 %v5972
    %v6973 = vunpack.c.h.b16 %v5972
    %v6974 = vunpack.c.l.b16 %v5973
    %v6975 = vunpack.c.h.b16 %v5973
    %v6976 = vunpack.c.l.b16 %v5974
    %v6977 = vunpack.c.h.b16 %v5974
    %v6978 = vunpack.c.l.b16 %v5975
    %v6979 = vunpack.c.h.b16 %v5975
    %v6980 = vunpack.c.l.b16 %v5976
    %v6981 = vunpack.c.h.b16 %v5976
    %v6982 = vunpack.c.l.b16 %v5977
    %v6983 = vunpack.c.h.b16 %v5977
    %v6984 = vunpack.c.l.b16 %v5978
    %v6985 = vunpack.c.h.b16 %v5978
    %v6986 = vunpack.c.l.b16 %v5979
    %v6987 = vunpack.c.h.b16 %v5979
    %v6988 = vunpack.c.l.b16 %v5980
    %v6989 = vunpack.c.h.b16 %v5980
    %v6990 = vunpack.c.l.b16 %v5981
    %v6991 = vunpack.c.h.b16 %v5981
    %v6992 = vunpack.c.l.b16 %v5982
    %v6993 = vunpack.c.h.b16 %v5982
    %v6994 = vunpack.c.l.b16 %v5983
    %v6995 = vunpack.c.h.b16 %v5983
    %v6996 = vunpack.c.l.b16 %v5984
    %v6997 = vunpack.c.h.b16 %v5984
    %v6998 = vunpack.c.l.b16 %v5985
    %v6999 = vunpack.c.h.b16 %v5985
    %v7000 = vunpack.c.l.b16 %v5986
    %v7001 = vunpack.c.h.b16 %v5986
    %v7002 = vunpack.c.l.b16 %v5987
    %v7003 = vunpack.c.h.b16 %v5987
    %v7004 = vunpack.c.l.b16 %v5988
    %v7005 = vunpack.c.h.b16 %v5988
    %v7006 = vunpack.c.l.b16 %v5989
    %v7007 = vunpack.c.h.b16 %v5989
    %v7008 = vunpack.c.l.b16 %v5990
    %v7009 = vunpack.c.h.b16 %v5990
    %v7010 = vunpack.c.l.b16 %v5991
    %v7011 = vunpack.c.h.b16 %v5991
    %v7012 = vunpack.c.l.b16 %v5992
    %v7013 = vunpack.c.h.b16 %v5992
    %v7014 = vunpack.c.l.b16 %v5993
    %v7015 = vunpack.c.h.b16 %v5993
    %v7016 = vunpack.c.l.b16 %v5994
    %v7017 = vunpack.c.h.b16 %v5994
    %v7018 = vunpack.c.l.b16 %v5995
    %v7019 = vunpack.c.h.b16 %v5995
    %v7020 = vunpack.c.l.b16 %v5996
    %v7021 = vunpack.c.h.b16 %v5996
    %v7022 = vunpack.c.l.b16 %v5997
    %v7023 = vunpack.c.h.b16 %v5997
    %v7024 = vunpack.c.l.b16 %v5998
    %v7025 = vunpack.c.h.b16 %v5998
    %v7026 = vunpack.c.l.b16 %v5999
    %v7027 = vunpack.c.h.b16 %v5999
    %v7028 = vunpack.c.l.b16 %v6000
    %v7029 = vunpack.c.h.b16 %v6000
    %v7030 = vunpack.c.l.b16 %v6001
    %v7031 = vunpack.c.h.b16 %v6001
    %v7032 = vunpack.c.l.b16 %v6002
    %v7033 = vunpack.c.h.b16 %v6002
    %v7034 = vunpack.c.l.b16 %v6003
    %v7035 = vunpack.c.h.b16 %v6003
    %v7036 = vunpack.c.l.b16 %v6004
    %v7037 = vunpack.c.h.b16 %v6004
    %v7038 = vunpack.c.l.b16 %v6005
    %v7039 = vunpack.c.h.b16 %v6005
    %v7040 = vunpack.c.l.b16 %v6006
    %v7041 = vunpack.c.h.b16 %v6006
    %v7042 = vunpack.c.l.b16 %v6007
    %v7043 = vunpack.c.h.b16 %v6007
    %v7044 = vunpack.c.l.b16 %v6008
    %v7045 = vunpack.c.h.b16 %v6008
    %v7046 = vunpack.c.l.b16 %v6009
    %v7047 = vunpack.c.h.b16 %v6009
    %v7048 = vunpack.c.l.b16 %v6010
    %v7049 = vunpack.c.h.b16 %v6010
    %v7050 = vunpack.c.l.b16 %v6011
    %v7051 = vunpack.c.h.b16 %v6011
    %v7052 = vunpack.c.l.b16 %v6012
    %v7053 = vunpack.c.h.b16 %v6012
    %v7054 = vunpack.c.l.b16 %v6013
    %v7055 = vunpack.c.h.b16 %v6013
    %v7056 = vunpack.c.l.b16 %v6014
    %v7057 = vunpack.c.h.b16 %v6014
    %v7058 = vunpack.c.l.b16 %v6015
    %v7059 = vunpack.c.h.b16 %v6015
    %v7060 = vunpack.c.l.b16 %v6016
    %v7061 = vunpack.c.h.b16 %v6016
    %v7062 = vunpack.c.l.b16 %v6017
    %v7063 = vunpack.c.h.b16 %v6017
    %v7064 = vunpack.c.l.b16 %v6018
    %v7065 = vunpack.c.h.b16 %v6018
    %v7066 = vunpack.c.l.b16 %v6019
    %v7067 = vunpack.c.h.b16 %v6019
    %v7068 = vunpack.c.l.b16 %v6020
    %v7069 = vunpack.c.h.b16 %v6020
    %v7070 = vunpack.c.l.b16 %v6021
    %v7071 = vunpack.c.h.b16 %v6021
    %v7072 = vunpack.c.l.b16 %v6022
    %v7073 = vunpack.c.h.b16 %v6022
    %v7074 = vunpack.c.l.b16 %v6023
    %v7075 = vunpack.c.h.b16 %v6023
    %v7076 = vunpack.c.l.b16 %v6024
    %v7077 = vunpack.c.h.b16 %v6024
    %v7078 = vunpack.c.l.b16 %v6025
    %v7079 = vunpack.c.h.b16 %v6025
    %v7080 = vunpack.c.l.b16 %v6026
    %v7081 = vunpack.c.h.b16 %v6026
    %v7082 = vunpack.c.l.b16 %v6027
    %v7083 = vunpack.c.h.b16 %v6027
    %v7084 = vunpack.c.l.b16 %v6028
    %v7085 = vunpack.c.h.b16 %v6028
    %v7086 = vunpack.c.l.b16 %v6029
    %v7087 = vunpack.c.h.b16 %v6029
    %v7088 = vunpack.c.l.b16 %v6030
    %v7089 = vunpack.c.h.b16 %v6030
    %v7090 = vunpack.c.l.b16 %v6031
    %v7091 = vunpack.c.h.b16 %v6031
    %v7092 = vunpack.c.l.b16 %v6032
    %v7093 = vunpack.c.h.b16 %v6032
    %v7094 = vunpack.c.l.b16 %v6033
    %v7095 = vunpack.c.h.b16 %v6033
    %v7096 = vunpack.c.l.b16 %v6034
    %v7097 = vunpack.c.h.b16 %v6034
    %v7098 = vunpack.c.l.b16 %v6035
    %v7099 = vunpack.c.h.b16 %v6035
    %v7100 = vunpack.c.l.b16 %v6036
    %v7101 = vunpack.c.h.b16 %v6036
    %v7102 = vunpack.c.l.b16 %v6037
    %v7103 = vunpack.c.h.b16 %v6037
    %v7104 = vunpack.c.l.b16 %v6038
    %v7105 = vunpack.c.h.b16 %v6038
    %v7106 = vunpack.c.l.b16 %v6039
    %v7107 = vunpack.c.h.b16 %v6039
    %v7108 = vunpack.c.l.b16 %v6040
    %v7109 = vunpack.c.h.b16 %v6040
    %v7110 = vunpack.c.l.b16 %v6041
    %v7111 = vunpack.c.h.b16 %v6041
    %v7112 = vunpack.c.l.b16 %v6042
    %v7113 = vunpack.c.h.b16 %v6042
    %v7114 = vunpack.c.l.b16 %v6043
    %v7115 = vunpack.c.h.b16 %v6043
    %v7116 = vunpack.c.l.b16 %v6044
    %v7117 = vunpack.c.h.b16 %v6044
    %v7118 = vunpack.c.l.b16 %v6045
    %v7119 = vunpack.c.h.b16 %v6045
    %v7120 = vunpack.c.l.b16 %v6046
    %v7121 = vunpack.c.h.b16 %v6046
    %v7122 = vunpack.c.l.b16 %v6047
    %v7123 = vunpack.c.h.b16 %v6047
    %v7124 = vunpack.c.l.b16 %v6048
    %v7125 = vunpack.c.h.b16 %v6048
    %v7126 = vunpack.c.l.b16 %v6049
    %v7127 = vunpack.c.h.b16 %v6049
    %v7128 = vunpack.c.l.b16 %v6050
    %v7129 = vunpack.c.h.b16 %v6050
    %v7130 = vunpack.c.l.b16 %v6051
    %v7131 = vunpack.c.h.b16 %v6051
    %v7132 = vunpack.c.l.b16 %v6052
    %v7133 = vunpack.c.h.b16 %v6052
    %v7134 = vunpack.c.l.b16 %v6053
    %v7135 = vunpack.c.h.b16 %v6053
    %v7136 = vunpack.c.l.b16 %v6054
    %v7137 = vunpack.c.h.b16 %v6054
    %v7138 = vunpack.c.l.b16 %v6055
    %v7139 = vunpack.c.h.b16 %v6055
    %v7140 = vunpack.c.l.b16 %v6056
    %v7141 = vunpack.c.h.b16 %v6056
    %v7142 = vunpack.c.l.b16 %v6057
    %v7143 = vunpack.c.h.b16 %v6057
    %v7144 = vunpack.c.l.b16 %v6058
    %v7145 = vunpack.c.h.b16 %v6058
    %v7146 = vunpack.c.l.b16 %v6059
    %v7147 = vunpack.c.h.b16 %v6059
    %v7148 = vunpack.c.l.b16 %v6060
    %v7149 = vunpack.c.h.b16 %v6060
    %v7150 = vunpack.c.l.b16 %v6061
    %v7151 = vunpack.c.h.b16 %v6061
    %v7152 = vunpack.c.l.b16 %v6062
    %v7153 = vunpack.c.h.b16 %v6062
    %v7154 = vunpack.c.l.b16 %v6063
    %v7155 = vunpack.c.h.b16 %v6063
    %v7156 = vunpack.c.l.b16 %v6064
    %v7157 = vunpack.c.h.b16 %v6064
    %v7158 = vunpack.c.l.b16 %v6065
    %v7159 = vunpack.c.h.b16 %v6065
    %v7160 = vunpack.c.l.b16 %v6066
    %v7161 = vunpack.c.h.b16 %v6066
    %v7162 = vunpack.c.l.b16 %v6067
    %v7163 = vunpack.c.h.b16 %v6067
    %v7164 = vunpack.c.l.b16 %v6068
    %v7165 = vunpack.c.h.b16 %v6068
    %v7166 = vunpack.c.l.b16 %v6069
    %v7167 = vunpack.c.h.b16 %v6069
    %v7168 = vunpack.c.l.b16 %v6070
    %v7169 = vunpack.c.h.b16 %v6070
    %v7170 = vunpack.c.l.b16 %v6071
    %v7171 = vunpack.c.h.b16 %v6071
    %v7172 = vunpack.c.l.b16 %v6072
    %v7173 = vunpack.c.h.b16 %v6072
    %v7174 = vunpack.c.l.b16 %v6073
    %v7175 = vunpack.c.h.b16 %v6073
    %v7176 = vunpack.c.l.b16 %v6074
    %v7177 = vunpack.c.h.b16 %v6074
    %v7178 = vunpack.c.l.b16 %v6075
    %v7179 = vunpack.c.h.b16 %v6075
    %v7180 = vunpack.c.l.b16 %v6076
    %v7181 = vunpack.c.h.b16 %v6076
    %v7182 = vunpack.c.l.b16 %v6077
    %v7183 = vunpack.c.h.b16 %v6077
    %v7184 = vunpack.c.l.b16 %v6078
    %v7185 = vunpack.c.h.b16 %v6078
    %v7186 = vunpack.c.l.b16 %v6079
    %v7187 = vunpack.c.h.b16 %v6079
    %v7188 = vunpack.c.l.b16 %v6080
    %v7189 = vunpack.c.h.b16 %v6080
    %v7190 = vunpack.c.l.b16 %v6081
    %v7191 = vunpack.c.h.b16 %v6081
    %v7192 = vunpack.c.l.b16 %v6082
    %v7193 = vunpack.c.h.b16 %v6082
    %v7194 = vunpack.c.l.b16 %v6083
    %v7195 = vunpack.c.h.b16 %v6083
    %v7196 = vunpack.c.l.b16 %v6084
    %v7197 = vunpack.c.h.b16 %v6084
    %v7198 = vunpack.c.l.b16 %v6085
    %v7199 = vunpack.c.h.b16 %v6085
    %v7200 = vunpack.c.l.b16 %v6086
    %v7201 = vunpack.c.h.b16 %v6086
    %v7202 = vunpack.c.l.b16 %v6087
    %v7203 = vunpack.c.h.b16 %v6087
    %v7204 = vunpack.c.l.b16 %v6088
    %v7205 = vunpack.c.h.b16 %v6088
    %v7206 = vunpack.c.l.b16 %v6089
    %v7207 = vunpack.c.h.b16 %v6089
    %v7208 = vunpack.c.l.b16 %v6090
    %v7209 = vunpack.c.h.b16 %v6090
    %v7210 = vunpack.c.l.b16 %v6091
    %v7211 = vunpack.c.h.b16 %v6091
    %v7212 = vunpack.c.l.b16 %v6092
    %v7213 = vunpack.c.h.b16 %v6092
    %v7214 = vunpack.c.l.b16 %v6093
    %v7215 = vunpack.c.h.b16 %v6093
    %v7216 = vunpack.c.l.b16 %v6094
    %v7217 = vunpack.c.h.b16 %v6094
    %v7218 = vunpack.c.l.b16 %v6095
    %v7219 = vunpack.c.h.b16 %v6095
    %v7220 = vunpack.c.l.b16 %v6096
    %v7221 = vunpack.c.h.b16 %v6096
    %v7222 = vunpack.c.l.b16 %v6097
    %v7223 = vunpack.c.h.b16 %v6097
    %v7224 = vunpack.c.l.b16 %v6098
    %v7225 = vunpack.c.h.b16 %v6098
    %v7226 = vunpack.c.l.b16 %v6099
    %v7227 = vunpack.c.h.b16 %v6099
    %v7228 = vunpack.c.l.b16 %v6100
    %v7229 = vunpack.c.h.b16 %v6100
    %v7230 = vunpack.c.l.b16 %v6101
    %v7231 = vunpack.c.h.b16 %v6101
    %v7232 = vunpack.c.l.b16 %v6102
    %v7233 = vunpack.c.h.b16 %v6102
    %v7234 = vunpack.c.l.b16 %v6103
    %v7235 = vunpack.c.h.b16 %v6103
    %v7236 = vunpack.c.l.b16 %v6104
    %v7237 = vunpack.c.h.b16 %v6104
    %v7238 = vunpack.c.l.b16 %v6105
    %v7239 = vunpack.c.h.b16 %v6105
    %v7240 = vunpack.c.l.b16 %v6106
    %v7241 = vunpack.c.h.b16 %v6106
    %v7242 = vunpack.c.l.b16 %v6107
    %v7243 = vunpack.c.h.b16 %v6107
    %v7244 = vunpack.c.l.b16 %v6108
    %v7245 = vunpack.c.h.b16 %v6108
    %v7246 = vunpack.c.l.b16 %v6109
    %v7247 = vunpack.c.h.b16 %v6109
    %v7248 = vunpack.c.l.b16 %v6110
    %v7249 = vunpack.c.h.b16 %v6110
    %v7250 = vunpack.c.l.b16 %v6111
    %v7251 = vunpack.c.h.b16 %v6111
    %v7252 = vunpack.c.l.b16 %v6112
    %v7253 = vunpack.c.h.b16 %v6112
    %v7254 = vunpack.c.l.b16 %v6113
    %v7255 = vunpack.c.h.b16 %v6113
    %v7256 = vunpack.c.l.b16 %v6114
    %v7257 = vunpack.c.h.b16 %v6114
    %v7258 = vunpack.c.l.b16 %v6115
    %v7259 = vunpack.c.h.b16 %v6115
    %v7260 = vunpack.c.l.b16 %v6116
    %v7261 = vunpack.c.h.b16 %v6116
    %v7262 = vunpack.c.l.b16 %v6117
    %v7263 = vunpack.c.h.b16 %v6117
    %v7264 = vunpack.c.l.b16 %v6118
    %v7265 = vunpack.c.h.b16 %v6118
    %v7266 = vunpack.c.l.b16 %v6119
    %v7267 = vunpack.c.h.b16 %v6119
    %v7268 = vunpack.c.l.b16 %v6120
    %v7269 = vunpack.c.h.b16 %v6120
    %v7270 = vunpack.c.l.b16 %v6121
    %v7271 = vunpack.c.h.b16 %v6121
    %v7272 = vunpack.c.l.b16 %v6122
    %v7273 = vunpack.c.h.b16 %v6122
    %v7274 = vunpack.c.l.b16 %v6123
    %v7275 = vunpack.c.h.b16 %v6123
    %v7276 = vunpack.c.l.b16 %v6124
    %v7277 = vunpack.c.h.b16 %v6124
    %v7278 = vunpack.c.l.b16 %v6125
    %v7279 = vunpack.c.h.b16 %v6125
    %v7280 = vunpack.c.l.b16 %v6126
    %v7281 = vunpack.c.h.b16 %v6126
    %v7282 = vunpack.c.l.b16 %v6127
    %v7283 = vunpack.c.h.b16 %v6127
    %v7284 = vunpack.c.l.b16 %v6128
    %v7285 = vunpack.c.h.b16 %v6128
    %v7286 = vunpack.c.l.b16 %v6129
    %v7287 = vunpack.c.h.b16 %v6129
    %v7288 = vunpack.c.l.b16 %v6130
    %v7289 = vunpack.c.h.b16 %v6130
    %v7290 = vunpack.c.l.b16 %v6131
    %v7291 = vunpack.c.h.b16 %v6131
    %v7292 = vunpack.c.l.b16 %v6132
    %v7293 = vunpack.c.h.b16 %v6132
    %v7294 = vunpack.c.l.b16 %v6133
    %v7295 = vunpack.c.h.b16 %v6133
    %v7296 = vunpack.c.l.b16 %v6134
    %v7297 = vunpack.c.h.b16 %v6134
    %v7298 = vunpack.c.l.b16 %v6135
    %v7299 = vunpack.c.h.b16 %v6135
    %v7300 = vunpack.c.l.b16 %v6136
    %v7301 = vunpack.c.h.b16 %v6136
    %v7302 = vunpack.c.l.b16 %v6137
    %v7303 = vunpack.c.h.b16 %v6137
    %v7304 = vunpack.c.l.b16 %v6138
    %v7305 = vunpack.c.h.b16 %v6138
    %v7306 = vunpack.c.l.b16 %v6139
    %v7307 = vunpack.c.h.b16 %v6139
    %v7308 = vunpack.c.l.b16 %v6140
    %v7309 = vunpack.c.h.b16 %v6140
    %v7310 = vunpack.c.l.b16 %v6141
    %v7311 = vunpack.c.h.b16 %v6141
    %v7312 = vpack.c.b16 %v6552, %v6544
    %v7313 = vpack.c.b16 %v6553, %v6545
    %v7314 = vpack.c.b16 %v6554, %v6546
    %v7315 = vpack.c.b16 %v6555, %v6547
    %v7316 = vpack.c.b16 %v6556, %v6548
    %v7317 = vpack.c.b16 %v6557, %v6549
    %v7318 = vpack.c.b16 %v6558, %v6550
    %v7319 = vpack.c.b16 %v6559, %v6551
    %v7320 = vpack.c.b16 %v6568, %v6560
    %v7321 = vpack.c.b16 %v6569, %v6561
    %v7322 = vpack.c.b16 %v6570, %v6562
    %v7323 = vpack.c.b16 %v6571, %v6563
    %v7324 = vpack.c.b16 %v6572, %v6564
    %v7325 = vpack.c.b16 %v6573, %v6565
    %v7326 = vpack.c.b16 %v6574, %v6566
    %v7327 = vpack.c.b16 %v6575, %v6567
    %v7328 = vpack.c.b16 %v6584, %v6576
    %v7329 = vpack.c.b16 %v6585, %v6577
    %v7330 = vpack.c.b16 %v6586, %v6578
    %v7331 = vpack.c.b16 %v6587, %v6579
    %v7332 = vpack.c.b16 %v6588, %v6580
    %v7333 = vpack.c.b16 %v6589, %v6581
    %v7334 = vpack.c.b16 %v6590, %v6582
    %v7335 = vpack.c.b16 %v6591, %v6583
    %v7336 = vpack.c.b16 %v6600, %v6592
    %v7337 = vpack.c.b16 %v6601, %v6593
    %v7338 = vpack.c.b16 %v6602, %v6594
    %v7339 = vpack.c.b16 %v6603, %v6595
    %v7340 = vpack.c.b16 %v6604, %v6596
    %v7341 = vpack.c.b16 %v6605, %v6597
    %v7342 = vpack.c.b16 %v6606, %v6598
    %v7343 = vpack.c.b16 %v6607, %v6599
    %v7344 = vpack.c.b16 %v6616, %v6608
    %v7345 = vpack.c.b16 %v6617, %v6609
    %v7346 = vpack.c.b16 %v6618, %v6610
    %v7347 = vpack.c.b16 %v6619, %v6611
    %v7348 = vpack.c.b16 %v6620, %v6612
    %v7349 = vpack.c.b16 %v6621, %v6613
    %v7350 = vpack.c.b16 %v6622, %v6614
    %v7351 = vpack.c.b16 %v6623, %v6615
    %v7352 = vpack.c.b16 %v6632, %v6624
    %v7353 = vpack.c.b16 %v6633, %v6625
    %v7354 = vpack.c.b16 %v6634, %v6626
    %v7355 = vpack.c.b16 %v6635, %v6627
    %v7356 = vpack.c.b16 %v6636, %v6628
    %v7357 = vpack.c.b16 %v6637, %v6629
    %v7358 = vpack.c.b16 %v6638, %v6630
    %v7359 = vpack.c.b16 %v6639, %v6631
    %v7360 = vpack.c.b16 %v6648, %v6640
    %v7361 = vpack.c.b16 %v6649, %v6641
    %v7362 = vpack.c.b16 %v6650, %v6642
    %v7363 = vpack.c.b16 %v6651, %v6643
    %v7364 = vpack.c.b16 %v6652, %v6644
    %v7365 = vpack.c.b16 %v6653, %v6645
    %v7366 = vpack.c.b16 %v6654, %v6646
    %v7367 = vpack.c.b16 %v6655, %v6647
    %v7368 = vpack.c.b16 %v6664, %v6656
    %v7369 = vpack.c.b16 %v6665, %v6657
    %v7370 = vpack.c.b16 %v6666, %v6658
    %v7371 = vpack.c.b16 %v6667, %v6659
    %v7372 = vpack.c.b16 %v6668, %v6660
    %v7373 = vpack.c.b16 %v6669, %v6661
    %v7374 = vpack.c.b16 %v6670, %v6662
    %v7375 = vpack.c.b16 %v6671, %v6663
    %v7376 = vpack.c.b16 %v6680, %v6672
    %v7377 = vpack.c.b16 %v6681, %v6673
    %v7378 = vpack.c.b16 %v6682, %v6674
    %v7379 = vpack.c.b16 %v6683, %v6675
    %v7380 = vpack.c.b16 %v6684, %v6676
    %v7381 = vpack.c.b16 %v6685, %v6677
    %v7382 = vpack.c.b16 %v6686, %v6678
    %v7383 = vpack.c.b16 %v6687, %v6679
    %v7384 = vpack.c.b16 %v6696, %v6688
    %v7385 = vpack.c.b16 %v6697, %v6689
    %v7386 = vpack.c.b16 %v6698, %v6690
    %v7387 = vpack.c.b16 %v6699, %v6691
    %v7388 = vpack.c.b16 %v6700, %v6692
    %v7389 = vpack.c.b16 %v6701, %v6693
    %v7390 = vpack.c.b16 %v6702, %v6694
    %v7391 = vpack.c.b16 %v6703, %v6695
    %v7392 = vpack.c.b16 %v6712, %v6704
    %v7393 = vpack.c.b16 %v6713, %v6705
    %v7394 = vpack.c.b16 %v6714, %v6706
    %v7395 = vpack.c.b16 %v6715, %v6707
    %v7396 = vpack.c.b16 %v6716, %v6708
    %v7397 = vpack.c.b16 %v6717, %v6709
    %v7398 = vpack.c.b16 %v6718, %v6710
    %v7399 = vpack.c.b16 %v6719, %v6711
    %v7400 = vpack.c.b16 %v6728, %v6720
    %v7401 = vpack.c.b16 %v6729, %v6721
    %v7402 = vpack.c.b16 %v6730, %v6722
    %v7403 = vpack.c.b16 %v6731, %v6723
    %v7404 = vpack.c.b16 %v6732, %v6724
    %v7405 = vpack.c.b16 %v6733, %v6725
    %v7406 = vpack.c.b16 %v6734, %v6726
    %v7407 = vpack.c.b16 %v6735, %v6727
    %v7408 = vpack.c.b16 %v6744, %v6736
    %v7409 = vpack.c.b16 %v6745, %v6737
    %v7410 = vpack.c.b16 %v6746, %v6738
    %v7411 = vpack.c.b16 %v6747, %v6739
    %v7412 = vpack.c.b16 %v6748, %v6740
    %v7413 = vpack.c.b16 %v6749, %v6741
    %v7414 = vpack.c.b16 %v6750, %v6742
    %v7415 = vpack.c.b16 %v6751, %v6743
    %v7416 = vpack.c.b16 %v6760, %v6752
    %v7417 = vpack.c.b16 %v6761, %v6753
    %v7418 = vpack.c.b16 %v6762, %v6754
    %v7419 = vpack.c.b16 %v6763, %v6755
    %v7420 = vpack.c.b16 %v6764, %v6756
    %v7421 = vpack.c.b16 %v6765, %v6757
    %v7422 = vpack.c.b16 %v6766, %v6758
    %v7423 = vpack.c.b16 %v6767, %v6759
    %v7424 = vpack.c.b16 %v6776, %v6768
    %v7425 = vpack.c.b16 %v6777, %v6769
    %v7426 = vpack.c.b16 %v6778, %v6770
    %v7427 = vpack.c.b16 %v6779, %v6771
    %v7428 = vpack.c.b16 %v6780, %v6772
    %v7429 = vpack.c.b16 %v6781, %v6773
    %v7430 = vpack.c.b16 %v6782, %v6774
    %v7431 = vpack.c.b16 %v6783, %v6775
    %v7432 = vpack.c.b16 %v6792, %v6784
    %v7433 = vpack.c.b16 %v6793, %v6785
    %v7434 = vpack.c.b16 %v6794, %v6786
    %v7435 = vpack.c.b16 %v6795, %v6787
    %v7436 = vpack.c.b16 %v6796, %v6788
    %v7437 = vpack.c.b16 %v6797, %v6789
    %v7438 = vpack.c.b16 %v6798, %v6790
    %v7439 = vpack.c.b16 %v6799, %v6791
    %v7440 = vpack.c.b16 %v6808, %v6800
    %v7441 = vpack.c.b16 %v6809, %v6801
    %v7442 = vpack.c.b16 %v6810, %v6802
    %v7443 = vpack.c.b16 %v6811, %v6803
    %v7444 = vpack.c.b16 %v6812, %v6804
    %v7445 = vpack.c.b16 %v6813, %v6805
    %v7446 = vpack.c.b16 %v6814, %v6806
    %v7447 = vpack.c.b16 %v6815, %v6807
    %v7448 = vpack.c.b16 %v6824, %v6816
    %v7449 = vpack.c.b16 %v6825, %v6817
    %v7450 = vpack.c.b16 %v6826, %v6818
    %v7451 = vpack.c.b16 %v6827, %v6819
    %v7452 = vpack.c.b16 %v6828, %v6820
    %v7453 = vpack.c.b16 %v6829, %v6821
    %v7454 = vpack.c.b16 %v6830, %v6822
    %v7455 = vpack.c.b16 %v6831, %v6823
    %v7456 = vpack.c.b16 %v6840, %v6832
    %v7457 = vpack.c.b16 %v6841, %v6833
    %v7458 = vpack.c.b16 %v6842, %v6834
    %v7459 = vpack.c.b16 %v6843, %v6835
    %v7460 = vpack.c.b16 %v6844, %v6836
    %v7461 = vpack.c.b16 %v6845, %v6837
    %v7462 = vpack.c.b16 %v6846, %v6838
    %v7463 = vpack.c.b16 %v6847, %v6839
    %v7464 = vpack.c.b16 %v6856, %v6848
    %v7465 = vpack.c.b16 %v6857, %v6849
    %v7466 = vpack.c.b16 %v6858, %v6850
    %v7467 = vpack.c.b16 %v6859, %v6851
    %v7468 = vpack.c.b16 %v6860, %v6852
    %v7469 = vpack.c.b16 %v6861, %v6853
    %v7470 = vpack.c.b16 %v6862, %v6854
    %v7471 = vpack.c.b16 %v6863, %v6855
    %v7472 = vpack.c.b16 %v6872, %v6864
    %v7473 = vpack.c.b16 %v6873, %v6865
    %v7474 = vpack.c.b16 %v6874, %v6866
    %v7475 = vpack.c.b16 %v6875, %v6867
    %v7476 = vpack.c.b16 %v6876, %v6868
    %v7477 = vpack.c.b16 %v6877, %v6869
    %v7478 = vpack.c.b16 %v6878, %v6870
    %v7479 = vpack.c.b16 %v6879, %v6871
    %v7480 = vpack.c.b16 %v6888, %v6880
    %v7481 = vpack.c.b16 %v6889, %v6881
    %v7482 = vpack.c.b16 %v6890, %v6882
    %v7483 = vpack.c.b16 %v6891, %v6883
    %v7484 = vpack.c.b16 %v6892, %v6884
    %v7485 = vpack.c.b16 %v6893, %v6885
    %v7486 = vpack.c.b16 %v6894, %v6886
    %v7487 = vpack.c.b16 %v6895, %v6887
    %v7488 = vpack.c.b16 %v6904, %v6896
    %v7489 = vpack.c.b16 %v6905, %v6897
    %v7490 = vpack.c.b16 %v6906, %v6898
    %v7491 = vpack.c.b16 %v6907, %v6899
    %v7492 = vpack.c.b16 %v6908, %v6900
    %v7493 = vpack.c.b16 %v6909, %v6901
    %v7494 = vpack.c.b16 %v6910, %v6902
    %v7495 = vpack.c.b16 %v6911, %v6903
    %v7496 = vpack.c.b16 %v6920, %v6912
    %v7497 = vpack.c.b16 %v6921, %v6913
    %v7498 = vpack.c.b16 %v6922, %v6914
    %v7499 = vpack.c.b16 %v6923, %v6915
    %v7500 = vpack.c.b16 %v6924, %v6916
    %v7501 = vpack.c.b16 %v6925, %v6917
    %v7502 = vpack.c.b16 %v6926, %v6918
    %v7503 = vpack.c.b16 %v6927, %v6919
    %v7504 = vpack.c.b16 %v6936, %v6928
    %v7505 = vpack.c.b16 %v6937, %v6929
    %v7506 = vpack.c.b16 %v6938, %v6930
    %v7507 = vpack.c.b16 %v6939, %v6931
    %v7508 = vpack.c.b16 %v6940, %v6932
    %v7509 = vpack.c.b16 %v6941, %v6933
    %v7510 = vpack.c.b16 %v6942, %v6934
    %v7511 = vpack.c.b16 %v6943, %v6935
    %v7512 = vpack.c.b16 %v6952, %v6944
    %v7513 = vpack.c.b16 %v6953, %v6945
    %v7514 = vpack.c.b16 %v6954, %v6946
    %v7515 = vpack.c.b16 %v6955, %v6947
    %v7516 = vpack.c.b16 %v6956, %v6948
    %v7517 = vpack.c.b16 %v6957, %v6949
    %v7518 = vpack.c.b16 %v6958, %v6950
    %v7519 = vpack.c.b16 %v6959, %v6951
    %v7520 = vpack.c.b16 %v6968, %v6960
    %v7521 = vpack.c.b16 %v6969, %v6961
    %v7522 = vpack.c.b16 %v6970, %v6962
    %v7523 = vpack.c.b16 %v6971, %v6963
    %v7524 = vpack.c.b16 %v6972, %v6964
    %v7525 = vpack.c.b16 %v6973, %v6965
    %v7526 = vpack.c.b16 %v6974, %v6966
    %v7527 = vpack.c.b16 %v6975, %v6967
    %v7528 = vpack.c.b16 %v6984, %v6976
    %v7529 = vpack.c.b16 %v6985, %v6977
    %v7530 = vpack.c.b16 %v6986, %v6978
    %v7531 = vpack.c.b16 %v6987, %v6979
    %v7532 = vpack.c.b16 %v6988, %v6980
    %v7533 = vpack.c.b16 %v6989, %v6981
    %v7534 = vpack.c.b16 %v6990, %v6982
    %v7535 = vpack.c.b16 %v6991, %v6983
    %v7536 = vpack.c.b16 %v7000, %v6992
    %v7537 = vpack.c.b16 %v7001, %v6993
    %v7538 = vpack.c.b16 %v7002, %v6994
    %v7539 = vpack.c.b16 %v7003, %v6995
    %v7540 = vpack.c.b16 %v7004, %v6996
    %v7541 = vpack.c.b16 %v7005, %v6997
    %v7542 = vpack.c.b16 %v7006, %v6998
    %v7543 = vpack.c.b16 %v7007, %v6999
    %v7544 = vpack.c.b16 %v7016, %v7008
    %v7545 = vpack.c.b16 %v7017, %v7009
    %v7546 = vpack.c.b16 %v7018, %v7010
    %v7547 = vpack.c.b16 %v7019, %v7011
    %v7548 = vpack.c.b16 %v7020, %v7012
    %v7549 = vpack.c.b16 %v7021, %v7013
    %v7550 = vpack.c.b16 %v7022, %v7014
    %v7551 = vpack.c.b16 %v7023, %v7015
    %v7552 = vpack.c.b16 %v7032, %v7024
    %v7553 = vpack.c.b16 %v7033, %v7025
    %v7554 = vpack.c.b16 %v7034, %v7026
    %v7555 = vpack.c.b16 %v7035, %v7027
    %v7556 = vpack.c.b16 %v7036, %v7028
    %v7557 = vpack.c.b16 %v7037, %v7029
    %v7558 = vpack.c.b16 %v7038, %v7030
    %v7559 = vpack.c.b16 %v7039, %v7031
    %v7560 = vpack.c.b16 %v7048, %v7040
    %v7561 = vpack.c.b16 %v7049, %v7041
    %v7562 = vpack.c.b16 %v7050, %v7042
    %v7563 = vpack.c.b16 %v7051, %v7043
    %v7564 = vpack.c.b16 %v7052, %v7044
    %v7565 = vpack.c.b16 %v7053, %v7045
    %v7566 = vpack.c.b16 %v7054, %v7046
    %v7567 = vpack.c.b16 %v7055, %v7047
    %v7568 = vpack.c.b16 %v7064, %v7056
    %v7569 = vpack.c.b16 %v7065, %v7057
    %v7570 = vpack.c.b16 %v7066, %v7058
    %v7571 = vpack.c.b16 %v7067, %v7059
    %v7572 = vpack.c.b16 %v7068, %v7060
    %v7573 = vpack.c.b16 %v7069, %v7061
    %v7574 = vpack.c.b16 %v7070, %v7062
    %v7575 = vpack.c.b16 %v7071, %v7063
    %v7576 = vpack.c.b16 %v7080, %v7072
    %v7577 = vpack.c.b16 %v7081, %v7073
    %v7578 = vpack.c.b16 %v7082, %v7074
    %v7579 = vpack.c.b16 %v7083, %v7075
    %v7580 = vpack.c.b16 %v7084, %v7076
    %v7581 = vpack.c.b16 %v7085, %v7077
    %v7582 = vpack.c.b16 %v7086, %v7078
    %v7583 = vpack.c.b16 %v7087, %v7079
    %v7584 = vpack.c.b16 %v7096, %v7088
    %v7585 = vpack.c.b16 %v7097, %v7089
    %v7586 = vpack.c.b16 %v7098, %v7090
    %v7587 = vpack.c.b16 %v7099, %v7091
    %v7588 = vpack.c.b16 %v7100, %v7092
    %v7589 = vpack.c.b16 %v7101, %v7093
    %v7590 = vpack.c.b16 %v7102, %v7094
    %v7591 = vpack.c.b16 %v7103, %v7095
    %v7592 = vpack.c.b16 %v7112, %v7104
    %v7593 = vpack.c.b16 %v7113, %v7105
    %v7594 = vpack.c.b16 %v7114, %v7106
    %v7595 = vpack.c.b16 %v7115, %v7107
    %v7596 = vpack.c.b16 %v7116, %v7108
    %v7597 = vpack.c.b16 %v7117, %v7109
    %v7598 = vpack.c.b16 %v7118, %v7110
    %v7599 = vpack.c.b16 %v7119, %v7111
    %v7600 = vpack.c.b16 %v7128, %v7120
    %v7601 = vpack.c.b16 %v7129, %v7121
    %v7602 = vpack.c.b16 %v7130, %v7122
    %v7603 = vpack.c.b16 %v7131, %v7123
    %v7604 = vpack.c.b16 %v7132, %v7124
    %v7605 = vpack.c.b16 %v7133, %v7125
    %v7606 = vpack.c.b16 %v7134, %v7126
    %v7607 = vpack.c.b16 %v7135, %v7127
    %v7608 = vpack.c.b16 %v7144, %v7136
    %v7609 = vpack.c.b16 %v7145, %v7137
    %v7610 = vpack.c.b16 %v7146, %v7138
    %v7611 = vpack.c.b16 %v7147, %v7139
    %v7612 = vpack.c.b16 %v7148, %v7140
    %v7613 = vpack.c.b16 %v7149, %v7141
    %v7614 = vpack.c.b16 %v7150, %v7142
    %v7615 = vpack.c.b16 %v7151, %v7143
    %v7616 = vpack.c.b16 %v7160, %v7152
    %v7617 = vpack.c.b16 %v7161, %v7153
    %v7618 = vpack.c.b16 %v7162, %v7154
    %v7619 = vpack.c.b16 %v7163, %v7155
    %v7620 = vpack.c.b16 %v7164, %v7156
    %v7621 = vpack.c.b16 %v7165, %v7157
    %v7622 = vpack.c.b16 %v7166, %v7158
    %v7623 = vpack.c.b16 %v7167, %v7159
    %v7624 = vpack.c.b16 %v7176, %v7168
    %v7625 = vpack.c.b16 %v7177, %v7169
    %v7626 = vpack.c.b16 %v7178, %v7170
    %v7627 = vpack.c.b16 %v7179, %v7171
    %v7628 = vpack.c.b16 %v7180, %v7172
    %v7629 = vpack.c.b16 %v7181, %v7173
    %v7630 = vpack.c.b16 %v7182, %v7174
    %v7631 = vpack.c.b16 %v7183, %v7175
    %v7632 = vpack.c.b16 %v7192, %v7184
    %v7633 = vpack.c.b16 %v7193, %v7185
    %v7634 = vpack.c.b16 %v7194, %v7186
    %v7635 = vpack.c.b16 %v7195, %v7187
    %v7636 = vpack.c.b16 %v7196, %v7188
    %v7637 = vpack.c.b16 %v7197, %v7189
    %v7638 = vpack.c.b16 %v7198, %v7190
    %v7639 = vpack.c.b16 %v7199, %v7191
    %v7640 = vpack.c.b16 %v7208, %v7200
    %v7641 = vpack.c.b16 %v7209, %v7201
    %v7642 = vpack.c.b16 %v7210, %v7202
    %v7643 = vpack.c.b16 %v7211, %v7203
    %v7644 = vpack.c.b16 %v7212, %v7204
    %v7645 = vpack.c.b16 %v7213, %v7205
    %v7646 = vpack.c.b16 %v7214, %v7206
    %v7647 = vpack.c.b16 %v7215, %v7207
    %v7648 = vpack.c.b16 %v7224, %v7216
    %v7649 = vpack.c.b16 %v7225, %v7217
    %v7650 = vpack.c.b16 %v7226, %v7218
    %v7651 = vpack.c.b16 %v7227, %v7219
    %v7652 = vpack.c.b16 %v7228, %v7220
    %v7653 = vpack.c.b16 %v7229, %v7221
    %v7654 = vpack.c.b16 %v7230, %v7222
    %v7655 = vpack.c.b16 %v7231, %v7223
    %v7656 = vpack.c.b16 %v7240, %v7232
    %v7657 = vpack.c.b16 %v7241, %v7233
    %v7658 = vpack.c.b16 %v7242, %v7234
    %v7659 = vpack.c.b16 %v7243, %v7235
    %v7660 = vpack.c.b16 %v7244, %v7236
    %v7661 = vpack.c.b16 %v7245, %v7237
    %v7662 = vpack.c.b16 %v7246, %v7238
    %v7663 = vpack.c.b16 %v7247, %v7239
    %v7664 = vpack.c.b16 %v7256, %v7248
    %v7665 = vpack.c.b16 %v7257, %v7249
    %v7666 = vpack.c.b16 %v7258, %v7250
    %v7667 = vpack.c.b16 %v7259, %v7251
    %v7668 = vpack.c.b16 %v7260, %v7252
    %v7669 = vpack.c.b16 %v7261, %v7253
    %v7670 = vpack.c.b16 %v7262, %v7254
    %v7671 = vpack.c.b16 %v7263, %v7255
    %v7672 = vpack.c.b16 %v7272, %v7264
    %v7673 = vpack.c.b16 %v7273, %v7265
    %v7674 = vpack.c.b16 %v7274, %v7266
    %v7675 = vpack.c.b16 %v7275, %v7267
    %v7676 = vpack.c.b16 %v7276, %v7268
    %v7677 = vpack.c.b16 %v7277, %v7269
    %v7678 = vpack.c.b16 %v7278, %v7270
    %v7679 = vpack.c.b16 %v7279, %v7271
    %v7680 = vpack.c.b16 %v7288, %v7280
    %v7681 = vpack.c.b16 %v7289, %v7281
    %v7682 = vpack.c.b16 %v7290, %v7282
    %v7683 = vpack.c.b16 %v7291, %v7283
    %v7684 = vpack.c.b16 %v7292, %v7284
    %v7685 = vpack.c.b16 %v7293, %v7285
    %v7686 = vpack.c.b16 %v7294, %v7286
    %v7687 = vpack.c.b16 %v7295, %v7287
    %v7688 = vpack.c.b16 %v7304, %v7296
    %v7689 = vpack.c.b16 %v7305, %v7297
    %v7690 = vpack.c.b16 %v7306, %v7298
    %v7691 = vpack.c.b16 %v7307, %v7299
    %v7692 = vpack.c.b16 %v7308, %v7300
    %v7693 = vpack.c.b16 %v7309, %v7301
    %v7694 = vpack.c.b16 %v7310, %v7302
    %v7695 = vpack.c.b16 %v7311, %v7303
    %8080 = vmatpush.bf16.msra.mxu0 %v7368
    %8081 = vmatpush.bf16.msra.mxu0 %v7360
    %8082 = vmatpush.bf16.msra.mxu0 %v7352
    %8083 = vmatpush.bf16.msra.mxu0 %v7344
    %8084 = vmatpush.bf16.msra.mxu0 %v7336
    %8085 = vmatpush.bf16.msra.mxu0 %v7328
    %8086 = vmatpush.bf16.msra.mxu0 %v7320
    %8087 = vmatpush.bf16.msra.mxu0 %v7312
    %8088 = vmatmul.bf16.gmra.mxu0 %v5662
    %v8089 = vpop.f32.mrf.mxu0
    %v8090 = vadd.f32 %v6144, %v8089
    %v8091 = vpop.f32.mrf.mxu0
    %8092 = vdwg.mxu0
    %8093 = vmatpush.bf16.msra.mxu0 %v7432
    %8094 = vmatpush.bf16.msra.mxu0 %v7424
    %8095 = vmatpush.bf16.msra.mxu0 %v7416
    %8096 = vmatpush.bf16.msra.mxu0 %v7408
    %8097 = vmatpush.bf16.msra.mxu0 %v7400
    %8098 = vmatpush.bf16.msra.mxu0 %v7392
    %8099 = vmatpush.bf16.msra.mxu0 %v7384
    %8100 = vmatpush.bf16.msra.mxu0 %v7376
    %8101 = vmatmul.bf16.gmra.mxu0 %v5681
    %v8102 = vpop.f32.mrf.mxu0
    %v8103 = vadd.f32 %v8090, %v8102
    %v8104 = vpop.f32.mrf.mxu0
    %8105 = vdwg.mxu0
    %8106 = vmatpush.bf16.msra.mxu0 %v7496
    %8107 = vmatpush.bf16.msra.mxu0 %v7488
    %8108 = vmatpush.bf16.msra.mxu0 %v7480
    %8109 = vmatpush.bf16.msra.mxu0 %v7472
    %8110 = vmatpush.bf16.msra.mxu0 %v7464
    %8111 = vmatpush.bf16.msra.mxu0 %v7456
    %8112 = vmatpush.bf16.msra.mxu0 %v7448
    %8113 = vmatpush.bf16.msra.mxu0 %v7440
    %8114 = vmatmul.bf16.gmra.mxu0 %v5700
    %v8115 = vpop.f32.mrf.mxu0
    %v8116 = vadd.f32 %v8103, %v8115
    %v8117 = vpop.f32.mrf.mxu0
    %8118 = vdwg.mxu0
    %8119 = vmatpush.bf16.msra.mxu0 %v7560
    %8120 = vmatpush.bf16.msra.mxu0 %v7552
    %8121 = vmatpush.bf16.msra.mxu0 %v7544
    %8122 = vmatpush.bf16.msra.mxu0 %v7536
    %8123 = vmatpush.bf16.msra.mxu0 %v7528
    %8124 = vmatpush.bf16.msra.mxu0 %v7520
    %8125 = vmatpush.bf16.msra.mxu0 %v7512
    %8126 = vmatpush.bf16.msra.mxu0 %v7504
    %8127 = vmatmul.bf16.gmra.mxu0 %v5719
    %v8128 = vpop.f32.mrf.mxu0
    %v8129 = vadd.f32 %v8116, %v8128
    %v8130 = vpop.f32.mrf.mxu0
    %8131 = vdwg.mxu0
    %8132 = vmatpush.bf16.msra.mxu0 %v7624
    %8133 = vmatpush.bf16.msra.mxu0 %v7616
    %8134 = vmatpush.bf16.msra.mxu0 %v7608
    %8135 = vmatpush.bf16.msra.mxu0 %v7600
    %8136 = vmatpush.bf16.msra.mxu0 %v7592
    %8137 = vmatpush.bf16.msra.mxu0 %v7584
    %8138 = vmatpush.bf16.msra.mxu0 %v7576
    %8139 = vmatpush.bf16.msra.mxu0 %v7568
    %8140 = vmatmul.bf16.gmra.mxu0 %v5738
    %v8141 = vpop.f32.mrf.mxu0
    %v8142 = vadd.f32 %v8129, %v8141
    %v8143 = vpop.f32.mrf.mxu0
    %8144 = vdwg.mxu0
    %8145 = vmatpush.bf16.msra.mxu0 %v7688
    %8146 = vmatpush.bf16.msra.mxu0 %v7680
    %8147 = vmatpush.bf16.msra.mxu0 %v7672
    %8148 = vmatpush.bf16.msra.mxu0 %v7664
    %8149 = vmatpush.bf16.msra.mxu0 %v7656
    %8150 = vmatpush.bf16.msra.mxu0 %v7648
    %8151 = vmatpush.bf16.msra.mxu0 %v7640
    %8152 = vmatpush.bf16.msra.mxu0 %v7632
    %8153 = vmatmul.bf16.gmra.mxu0 %v5757
    %v8154 = vpop.f32.mrf.mxu0
    %v8155 = vadd.f32 %v8142, %v8154
    %v8156 = vpop.f32.mrf.mxu0
    %8157 = vdwg.mxu0
    %8158 = vmatpush.bf16.msra.mxu0 %v7369
    %8159 = vmatpush.bf16.msra.mxu0 %v7361
    %8160 = vmatpush.bf16.msra.mxu0 %v7353
    %8161 = vmatpush.bf16.msra.mxu0 %v7345
    %8162 = vmatpush.bf16.msra.mxu0 %v7337
    %8163 = vmatpush.bf16.msra.mxu0 %v7329
    %8164 = vmatpush.bf16.msra.mxu0 %v7321
    %8165 = vmatpush.bf16.msra.mxu0 %v7313
    %8166 = vmatmul.bf16.gmra.mxu0 %v5662
    %v8167 = vpop.f32.mrf.mxu0
    %v8168 = vadd.f32 %v6145, %v8167
    %v8169 = vpop.f32.mrf.mxu0
    %8170 = vdwg.mxu0
    %8171 = vmatpush.bf16.msra.mxu0 %v7433
    %8172 = vmatpush.bf16.msra.mxu0 %v7425
    %8173 = vmatpush.bf16.msra.mxu0 %v7417
    %8174 = vmatpush.bf16.msra.mxu0 %v7409
    %8175 = vmatpush.bf16.msra.mxu0 %v7401
    %8176 = vmatpush.bf16.msra.mxu0 %v7393
    %8177 = vmatpush.bf16.msra.mxu0 %v7385
    %8178 = vmatpush.bf16.msra.mxu0 %v7377
    %8179 = vmatmul.bf16.gmra.mxu0 %v5681
    %v8180 = vpop.f32.mrf.mxu0
    %v8181 = vadd.f32 %v8168, %v8180
    %v8182 = vpop.f32.mrf.mxu0
    %8183 = vdwg.mxu0
    %8184 = vmatpush.bf16.msra.mxu0 %v7497
    %8185 = vmatpush.bf16.msra.mxu0 %v7489
    %8186 = vmatpush.bf16.msra.mxu0 %v7481
    %8187 = vmatpush.bf16.msra.mxu0 %v7473
    %8188 = vmatpush.bf16.msra.mxu0 %v7465
    %8189 = vmatpush.bf16.msra.mxu0 %v7457
    %8190 = vmatpush.bf16.msra.mxu0 %v7449
    %8191 = vmatpush.bf16.msra.mxu0 %v7441
    %8192 = vmatmul.bf16.gmra.mxu0 %v5700
    %v8193 = vpop.f32.mrf.mxu0
    %v8194 = vadd.f32 %v8181, %v8193
    %v8195 = vpop.f32.mrf.mxu0
    %8196 = vdwg.mxu0
    %8197 = vmatpush.bf16.msra.mxu0 %v7561
    %8198 = vmatpush.bf16.msra.mxu0 %v7553
    %8199 = vmatpush.bf16.msra.mxu0 %v7545
    %8200 = vmatpush.bf16.msra.mxu0 %v7537
    %8201 = vmatpush.bf16.msra.mxu0 %v7529
    %8202 = vmatpush.bf16.msra.mxu0 %v7521
    %8203 = vmatpush.bf16.msra.mxu0 %v7513
    %8204 = vmatpush.bf16.msra.mxu0 %v7505
    %8205 = vmatmul.bf16.gmra.mxu0 %v5719
    %v8206 = vpop.f32.mrf.mxu0
    %v8207 = vadd.f32 %v8194, %v8206
    %v8208 = vpop.f32.mrf.mxu0
    %8209 = vdwg.mxu0
    %8210 = vmatpush.bf16.msra.mxu0 %v7625
    %8211 = vmatpush.bf16.msra.mxu0 %v7617
    %8212 = vmatpush.bf16.msra.mxu0 %v7609
    %8213 = vmatpush.bf16.msra.mxu0 %v7601
    %8214 = vmatpush.bf16.msra.mxu0 %v7593
    %8215 = vmatpush.bf16.msra.mxu0 %v7585
    %8216 = vmatpush.bf16.msra.mxu0 %v7577
    %8217 = vmatpush.bf16.msra.mxu0 %v7569
    %8218 = vmatmul.bf16.gmra.mxu0 %v5738
    %v8219 = vpop.f32.mrf.mxu0
    %v8220 = vadd.f32 %v8207, %v8219
    %v8221 = vpop.f32.mrf.mxu0
    %8222 = vdwg.mxu0
    %8223 = vmatpush.bf16.msra.mxu0 %v7689
    %8224 = vmatpush.bf16.msra.mxu0 %v7681
    %8225 = vmatpush.bf16.msra.mxu0 %v7673
    %8226 = vmatpush.bf16.msra.mxu0 %v7665
    %8227 = vmatpush.bf16.msra.mxu0 %v7657
    %8228 = vmatpush.bf16.msra.mxu0 %v7649
    %8229 = vmatpush.bf16.msra.mxu0 %v7641
    %8230 = vmatpush.bf16.msra.mxu0 %v7633
    %8231 = vmatmul.bf16.gmra.mxu0 %v5757
    %v8232 = vpop.f32.mrf.mxu0
    %v8233 = vadd.f32 %v8220, %v8232
    %v8234 = vpop.f32.mrf.mxu0
    %8235 = vdwg.mxu0
    %8236 = vmatpush.bf16.msra.mxu0 %v7370
    %8237 = vmatpush.bf16.msra.mxu0 %v7362
    %8238 = vmatpush.bf16.msra.mxu0 %v7354
    %8239 = vmatpush.bf16.msra.mxu0 %v7346
    %8240 = vmatpush.bf16.msra.mxu0 %v7338
    %8241 = vmatpush.bf16.msra.mxu0 %v7330
    %8242 = vmatpush.bf16.msra.mxu0 %v7322
    %8243 = vmatpush.bf16.msra.mxu0 %v7314
    %8244 = vmatmul.bf16.gmra.mxu0 %v5662
    %v8245 = vpop.f32.mrf.mxu0
    %v8246 = vadd.f32 %v6146, %v8245
    %v8247 = vpop.f32.mrf.mxu0
    %8248 = vdwg.mxu0
    %8249 = vmatpush.bf16.msra.mxu0 %v7434
    %8250 = vmatpush.bf16.msra.mxu0 %v7426
    %8251 = vmatpush.bf16.msra.mxu0 %v7418
    %8252 = vmatpush.bf16.msra.mxu0 %v7410
    %8253 = vmatpush.bf16.msra.mxu0 %v7402
    %8254 = vmatpush.bf16.msra.mxu0 %v7394
    %8255 = vmatpush.bf16.msra.mxu0 %v7386
    %8256 = vmatpush.bf16.msra.mxu0 %v7378
    %8257 = vmatmul.bf16.gmra.mxu0 %v5681
    %v8258 = vpop.f32.mrf.mxu0
    %v8259 = vadd.f32 %v8246, %v8258
    %v8260 = vpop.f32.mrf.mxu0
    %8261 = vdwg.mxu0
    %8262 = vmatpush.bf16.msra.mxu0 %v7498
    %8263 = vmatpush.bf16.msra.mxu0 %v7490
    %8264 = vmatpush.bf16.msra.mxu0 %v7482
    %8265 = vmatpush.bf16.msra.mxu0 %v7474
    %8266 = vmatpush.bf16.msra.mxu0 %v7466
    %8267 = vmatpush.bf16.msra.mxu0 %v7458
    %8268 = vmatpush.bf16.msra.mxu0 %v7450
    %8269 = vmatpush.bf16.msra.mxu0 %v7442
    %8270 = vmatmul.bf16.gmra.mxu0 %v5700
    %v8271 = vpop.f32.mrf.mxu0
    %v8272 = vadd.f32 %v8259, %v8271
    %v8273 = vpop.f32.mrf.mxu0
    %8274 = vdwg.mxu0
    %8275 = vmatpush.bf16.msra.mxu0 %v7562
    %8276 = vmatpush.bf16.msra.mxu0 %v7554
    %8277 = vmatpush.bf16.msra.mxu0 %v7546
    %8278 = vmatpush.bf16.msra.mxu0 %v7538
    %8279 = vmatpush.bf16.msra.mxu0 %v7530
    %8280 = vmatpush.bf16.msra.mxu0 %v7522
    %8281 = vmatpush.bf16.msra.mxu0 %v7514
    %8282 = vmatpush.bf16.msra.mxu0 %v7506
    %8283 = vmatmul.bf16.gmra.mxu0 %v5719
    %v8284 = vpop.f32.mrf.mxu0
    %v8285 = vadd.f32 %v8272, %v8284
    %v8286 = vpop.f32.mrf.mxu0
    %8287 = vdwg.mxu0
    %8288 = vmatpush.bf16.msra.mxu0 %v7626
    %8289 = vmatpush.bf16.msra.mxu0 %v7618
    %8290 = vmatpush.bf16.msra.mxu0 %v7610
    %8291 = vmatpush.bf16.msra.mxu0 %v7602
    %8292 = vmatpush.bf16.msra.mxu0 %v7594
    %8293 = vmatpush.bf16.msra.mxu0 %v7586
    %8294 = vmatpush.bf16.msra.mxu0 %v7578
    %8295 = vmatpush.bf16.msra.mxu0 %v7570
    %8296 = vmatmul.bf16.gmra.mxu0 %v5738
    %v8297 = vpop.f32.mrf.mxu0
    %v8298 = vadd.f32 %v8285, %v8297
    %v8299 = vpop.f32.mrf.mxu0
    %8300 = vdwg.mxu0
    %8301 = vmatpush.bf16.msra.mxu0 %v7690
    %8302 = vmatpush.bf16.msra.mxu0 %v7682
    %8303 = vmatpush.bf16.msra.mxu0 %v7674
    %8304 = vmatpush.bf16.msra.mxu0 %v7666
    %8305 = vmatpush.bf16.msra.mxu0 %v7658
    %8306 = vmatpush.bf16.msra.mxu0 %v7650
    %8307 = vmatpush.bf16.msra.mxu0 %v7642
    %8308 = vmatpush.bf16.msra.mxu0 %v7634
    %8309 = vmatmul.bf16.gmra.mxu0 %v5757
    %v8310 = vpop.f32.mrf.mxu0
    %v8311 = vadd.f32 %v8298, %v8310
    %v8312 = vpop.f32.mrf.mxu0
    %8313 = vdwg.mxu0
    %8314 = vmatpush.bf16.msra.mxu0 %v7371
    %8315 = vmatpush.bf16.msra.mxu0 %v7363
    %8316 = vmatpush.bf16.msra.mxu0 %v7355
    %8317 = vmatpush.bf16.msra.mxu0 %v7347
    %8318 = vmatpush.bf16.msra.mxu0 %v7339
    %8319 = vmatpush.bf16.msra.mxu0 %v7331
    %8320 = vmatpush.bf16.msra.mxu0 %v7323
    %8321 = vmatpush.bf16.msra.mxu0 %v7315
    %8322 = vmatmul.bf16.gmra.mxu0 %v5662
    %v8323 = vpop.f32.mrf.mxu0
    %v8324 = vadd.f32 %v6147, %v8323
    %v8325 = vpop.f32.mrf.mxu0
    %8326 = vdwg.mxu0
    %8327 = vmatpush.bf16.msra.mxu0 %v7435
    %8328 = vmatpush.bf16.msra.mxu0 %v7427
    %8329 = vmatpush.bf16.msra.mxu0 %v7419
    %8330 = vmatpush.bf16.msra.mxu0 %v7411
    %8331 = vmatpush.bf16.msra.mxu0 %v7403
    %8332 = vmatpush.bf16.msra.mxu0 %v7395
    %8333 = vmatpush.bf16.msra.mxu0 %v7387
    %8334 = vmatpush.bf16.msra.mxu0 %v7379
    %8335 = vmatmul.bf16.gmra.mxu0 %v5681
    %v8336 = vpop.f32.mrf.mxu0
    %v8337 = vadd.f32 %v8324, %v8336
    %v8338 = vpop.f32.mrf.mxu0
    %8339 = vdwg.mxu0
    %8340 = vmatpush.bf16.msra.mxu0 %v7499
    %8341 = vmatpush.bf16.msra.mxu0 %v7491
    %8342 = vmatpush.bf16.msra.mxu0 %v7483
    %8343 = vmatpush.bf16.msra.mxu0 %v7475
    %8344 = vmatpush.bf16.msra.mxu0 %v7467
    %8345 = vmatpush.bf16.msra.mxu0 %v7459
    %8346 = vmatpush.bf16.msra.mxu0 %v7451
    %8347 = vmatpush.bf16.msra.mxu0 %v7443
    %8348 = vmatmul.bf16.gmra.mxu0 %v5700
    %v8349 = vpop.f32.mrf.mxu0
    %v8350 = vadd.f32 %v8337, %v8349
    %v8351 = vpop.f32.mrf.mxu0
    %8352 = vdwg.mxu0
    %8353 = vmatpush.bf16.msra.mxu0 %v7563
    %8354 = vmatpush.bf16.msra.mxu0 %v7555
    %8355 = vmatpush.bf16.msra.mxu0 %v7547
    %8356 = vmatpush.bf16.msra.mxu0 %v7539
    %8357 = vmatpush.bf16.msra.mxu0 %v7531
    %8358 = vmatpush.bf16.msra.mxu0 %v7523
    %8359 = vmatpush.bf16.msra.mxu0 %v7515
    %8360 = vmatpush.bf16.msra.mxu0 %v7507
    %8361 = vmatmul.bf16.gmra.mxu0 %v5719
    %v8362 = vpop.f32.mrf.mxu0
    %v8363 = vadd.f32 %v8350, %v8362
    %v8364 = vpop.f32.mrf.mxu0
    %8365 = vdwg.mxu0
    %8366 = vmatpush.bf16.msra.mxu0 %v7627
    %8367 = vmatpush.bf16.msra.mxu0 %v7619
    %8368 = vmatpush.bf16.msra.mxu0 %v7611
    %8369 = vmatpush.bf16.msra.mxu0 %v7603
    %8370 = vmatpush.bf16.msra.mxu0 %v7595
    %8371 = vmatpush.bf16.msra.mxu0 %v7587
    %8372 = vmatpush.bf16.msra.mxu0 %v7579
    %8373 = vmatpush.bf16.msra.mxu0 %v7571
    %8374 = vmatmul.bf16.gmra.mxu0 %v5738
    %v8375 = vpop.f32.mrf.mxu0
    %v8376 = vadd.f32 %v8363, %v8375
    %v8377 = vpop.f32.mrf.mxu0
    %8378 = vdwg.mxu0
    %8379 = vmatpush.bf16.msra.mxu0 %v7691
    %8380 = vmatpush.bf16.msra.mxu0 %v7683
    %8381 = vmatpush.bf16.msra.mxu0 %v7675
    %8382 = vmatpush.bf16.msra.mxu0 %v7667
    %8383 = vmatpush.bf16.msra.mxu0 %v7659
    %8384 = vmatpush.bf16.msra.mxu0 %v7651
    %8385 = vmatpush.bf16.msra.mxu0 %v7643
    %8386 = vmatpush.bf16.msra.mxu0 %v7635
    %8387 = vmatmul.bf16.gmra.mxu0 %v5757
    %v8388 = vpop.f32.mrf.mxu0
    %v8389 = vadd.f32 %v8376, %v8388
    %v8390 = vpop.f32.mrf.mxu0
    %8391 = vdwg.mxu0
    %8392 = vmatpush.bf16.msra.mxu0 %v7372
    %8393 = vmatpush.bf16.msra.mxu0 %v7364
    %8394 = vmatpush.bf16.msra.mxu0 %v7356
    %8395 = vmatpush.bf16.msra.mxu0 %v7348
    %8396 = vmatpush.bf16.msra.mxu0 %v7340
    %8397 = vmatpush.bf16.msra.mxu0 %v7332
    %8398 = vmatpush.bf16.msra.mxu0 %v7324
    %8399 = vmatpush.bf16.msra.mxu0 %v7316
    %8400 = vmatmul.bf16.gmra.mxu0 %v5662
    %v8401 = vpop.f32.mrf.mxu0
    %v8402 = vadd.f32 %v6148, %v8401
    %v8403 = vpop.f32.mrf.mxu0
    %8404 = vdwg.mxu0
    %8405 = vmatpush.bf16.msra.mxu0 %v7436
    %8406 = vmatpush.bf16.msra.mxu0 %v7428
    %8407 = vmatpush.bf16.msra.mxu0 %v7420
    %8408 = vmatpush.bf16.msra.mxu0 %v7412
    %8409 = vmatpush.bf16.msra.mxu0 %v7404
    %8410 = vmatpush.bf16.msra.mxu0 %v7396
    %8411 = vmatpush.bf16.msra.mxu0 %v7388
    %8412 = vmatpush.bf16.msra.mxu0 %v7380
    %8413 = vmatmul.bf16.gmra.mxu0 %v5681
    %v8414 = vpop.f32.mrf.mxu0
    %v8415 = vadd.f32 %v8402, %v8414
    %v8416 = vpop.f32.mrf.mxu0
    %8417 = vdwg.mxu0
    %8418 = vmatpush.bf16.msra.mxu0 %v7500
    %8419 = vmatpush.bf16.msra.mxu0 %v7492
    %8420 = vmatpush.bf16.msra.mxu0 %v7484
    %8421 = vmatpush.bf16.msra.mxu0 %v7476
    %8422 = vmatpush.bf16.msra.mxu0 %v7468
    %8423 = vmatpush.bf16.msra.mxu0 %v7460
    %8424 = vmatpush.bf16.msra.mxu0 %v7452
    %8425 = vmatpush.bf16.msra.mxu0 %v7444
    %8426 = vmatmul.bf16.gmra.mxu0 %v5700
    %v8427 = vpop.f32.mrf.mxu0
    %v8428 = vadd.f32 %v8415, %v8427
    %v8429 = vpop.f32.mrf.mxu0
    %8430 = vdwg.mxu0
    %8431 = vmatpush.bf16.msra.mxu0 %v7564
    %8432 = vmatpush.bf16.msra.mxu0 %v7556
    %8433 = vmatpush.bf16.msra.mxu0 %v7548
    %8434 = vmatpush.bf16.msra.mxu0 %v7540
    %8435 = vmatpush.bf16.msra.mxu0 %v7532
    %8436 = vmatpush.bf16.msra.mxu0 %v7524
    %8437 = vmatpush.bf16.msra.mxu0 %v7516
    %8438 = vmatpush.bf16.msra.mxu0 %v7508
    %8439 = vmatmul.bf16.gmra.mxu0 %v5719
    %v8440 = vpop.f32.mrf.mxu0
    %v8441 = vadd.f32 %v8428, %v8440
    %v8442 = vpop.f32.mrf.mxu0
    %8443 = vdwg.mxu0
    %8444 = vmatpush.bf16.msra.mxu0 %v7628
    %8445 = vmatpush.bf16.msra.mxu0 %v7620
    %8446 = vmatpush.bf16.msra.mxu0 %v7612
    %8447 = vmatpush.bf16.msra.mxu0 %v7604
    %8448 = vmatpush.bf16.msra.mxu0 %v7596
    %8449 = vmatpush.bf16.msra.mxu0 %v7588
    %8450 = vmatpush.bf16.msra.mxu0 %v7580
    %8451 = vmatpush.bf16.msra.mxu0 %v7572
    %8452 = vmatmul.bf16.gmra.mxu0 %v5738
    %v8453 = vpop.f32.mrf.mxu0
    %v8454 = vadd.f32 %v8441, %v8453
    %v8455 = vpop.f32.mrf.mxu0
    %8456 = vdwg.mxu0
    %8457 = vmatpush.bf16.msra.mxu0 %v7692
    %8458 = vmatpush.bf16.msra.mxu0 %v7684
    %8459 = vmatpush.bf16.msra.mxu0 %v7676
    %8460 = vmatpush.bf16.msra.mxu0 %v7668
    %8461 = vmatpush.bf16.msra.mxu0 %v7660
    %8462 = vmatpush.bf16.msra.mxu0 %v7652
    %8463 = vmatpush.bf16.msra.mxu0 %v7644
    %8464 = vmatpush.bf16.msra.mxu0 %v7636
    %8465 = vmatmul.bf16.gmra.mxu0 %v5757
    %v8466 = vpop.f32.mrf.mxu0
    %v8467 = vadd.f32 %v8454, %v8466
    %v8468 = vpop.f32.mrf.mxu0
    %8469 = vdwg.mxu0
    %8470 = vmatpush.bf16.msra.mxu0 %v7373
    %8471 = vmatpush.bf16.msra.mxu0 %v7365
    %8472 = vmatpush.bf16.msra.mxu0 %v7357
    %8473 = vmatpush.bf16.msra.mxu0 %v7349
    %8474 = vmatpush.bf16.msra.mxu0 %v7341
    %8475 = vmatpush.bf16.msra.mxu0 %v7333
    %8476 = vmatpush.bf16.msra.mxu0 %v7325
    %8477 = vmatpush.bf16.msra.mxu0 %v7317
    %8478 = vmatmul.bf16.gmra.mxu0 %v5662
    %v8479 = vpop.f32.mrf.mxu0
    %v8480 = vadd.f32 %v6149, %v8479
    %v8481 = vpop.f32.mrf.mxu0
    %8482 = vdwg.mxu0
    %8483 = vmatpush.bf16.msra.mxu0 %v7437
    %8484 = vmatpush.bf16.msra.mxu0 %v7429
    %8485 = vmatpush.bf16.msra.mxu0 %v7421
    %8486 = vmatpush.bf16.msra.mxu0 %v7413
    %8487 = vmatpush.bf16.msra.mxu0 %v7405
    %8488 = vmatpush.bf16.msra.mxu0 %v7397
    %8489 = vmatpush.bf16.msra.mxu0 %v7389
    %8490 = vmatpush.bf16.msra.mxu0 %v7381
    %8491 = vmatmul.bf16.gmra.mxu0 %v5681
    %v8492 = vpop.f32.mrf.mxu0
    %v8493 = vadd.f32 %v8480, %v8492
    %v8494 = vpop.f32.mrf.mxu0
    %8495 = vdwg.mxu0
    %8496 = vmatpush.bf16.msra.mxu0 %v7501
    %8497 = vmatpush.bf16.msra.mxu0 %v7493
    %8498 = vmatpush.bf16.msra.mxu0 %v7485
    %8499 = vmatpush.bf16.msra.mxu0 %v7477
    %8500 = vmatpush.bf16.msra.mxu0 %v7469
    %8501 = vmatpush.bf16.msra.mxu0 %v7461
    %8502 = vmatpush.bf16.msra.mxu0 %v7453
    %8503 = vmatpush.bf16.msra.mxu0 %v7445
    %8504 = vmatmul.bf16.gmra.mxu0 %v5700
    %v8505 = vpop.f32.mrf.mxu0
    %v8506 = vadd.f32 %v8493, %v8505
    %v8507 = vpop.f32.mrf.mxu0
    %8508 = vdwg.mxu0
    %8509 = vmatpush.bf16.msra.mxu0 %v7565
    %8510 = vmatpush.bf16.msra.mxu0 %v7557
    %8511 = vmatpush.bf16.msra.mxu0 %v7549
    %8512 = vmatpush.bf16.msra.mxu0 %v7541
    %8513 = vmatpush.bf16.msra.mxu0 %v7533
    %8514 = vmatpush.bf16.msra.mxu0 %v7525
    %8515 = vmatpush.bf16.msra.mxu0 %v7517
    %8516 = vmatpush.bf16.msra.mxu0 %v7509
    %8517 = vmatmul.bf16.gmra.mxu0 %v5719
    %v8518 = vpop.f32.mrf.mxu0
    %v8519 = vadd.f32 %v8506, %v8518
    %v8520 = vpop.f32.mrf.mxu0
    %8521 = vdwg.mxu0
    %8522 = vmatpush.bf16.msra.mxu0 %v7629
    %8523 = vmatpush.bf16.msra.mxu0 %v7621
    %8524 = vmatpush.bf16.msra.mxu0 %v7613
    %8525 = vmatpush.bf16.msra.mxu0 %v7605
    %8526 = vmatpush.bf16.msra.mxu0 %v7597
    %8527 = vmatpush.bf16.msra.mxu0 %v7589
    %8528 = vmatpush.bf16.msra.mxu0 %v7581
    %8529 = vmatpush.bf16.msra.mxu0 %v7573
    %8530 = vmatmul.bf16.gmra.mxu0 %v5738
    %v8531 = vpop.f32.mrf.mxu0
    %v8532 = vadd.f32 %v8519, %v8531
    %v8533 = vpop.f32.mrf.mxu0
    %8534 = vdwg.mxu0
    %8535 = vmatpush.bf16.msra.mxu0 %v7693
    %8536 = vmatpush.bf16.msra.mxu0 %v7685
    %8537 = vmatpush.bf16.msra.mxu0 %v7677
    %8538 = vmatpush.bf16.msra.mxu0 %v7669
    %8539 = vmatpush.bf16.msra.mxu0 %v7661
    %8540 = vmatpush.bf16.msra.mxu0 %v7653
    %8541 = vmatpush.bf16.msra.mxu0 %v7645
    %8542 = vmatpush.bf16.msra.mxu0 %v7637
    %8543 = vmatmul.bf16.gmra.mxu0 %v5757
    %v8544 = vpop.f32.mrf.mxu0
    %v8545 = vadd.f32 %v8532, %v8544
    %v8546 = vpop.f32.mrf.mxu0
    %8547 = vdwg.mxu0
    %8548 = vmatpush.bf16.msra.mxu0 %v7374
    %8549 = vmatpush.bf16.msra.mxu0 %v7366
    %8550 = vmatpush.bf16.msra.mxu0 %v7358
    %8551 = vmatpush.bf16.msra.mxu0 %v7350
    %8552 = vmatpush.bf16.msra.mxu0 %v7342
    %8553 = vmatpush.bf16.msra.mxu0 %v7334
    %8554 = vmatpush.bf16.msra.mxu0 %v7326
    %8555 = vmatpush.bf16.msra.mxu0 %v7318
    %8556 = vmatmul.bf16.gmra.mxu0 %v5662
    %v8557 = vpop.f32.mrf.mxu0
    %v8558 = vadd.f32 %v6150, %v8557
    %v8559 = vpop.f32.mrf.mxu0
    %8560 = vdwg.mxu0
    %8561 = vmatpush.bf16.msra.mxu0 %v7438
    %8562 = vmatpush.bf16.msra.mxu0 %v7430
    %8563 = vmatpush.bf16.msra.mxu0 %v7422
    %8564 = vmatpush.bf16.msra.mxu0 %v7414
    %8565 = vmatpush.bf16.msra.mxu0 %v7406
    %8566 = vmatpush.bf16.msra.mxu0 %v7398
    %8567 = vmatpush.bf16.msra.mxu0 %v7390
    %8568 = vmatpush.bf16.msra.mxu0 %v7382
    %8569 = vmatmul.bf16.gmra.mxu0 %v5681
    %v8570 = vpop.f32.mrf.mxu0
    %v8571 = vadd.f32 %v8558, %v8570
    %v8572 = vpop.f32.mrf.mxu0
    %8573 = vdwg.mxu0
    %8574 = vmatpush.bf16.msra.mxu0 %v7502
    %8575 = vmatpush.bf16.msra.mxu0 %v7494
    %8576 = vmatpush.bf16.msra.mxu0 %v7486
    %8577 = vmatpush.bf16.msra.mxu0 %v7478
    %8578 = vmatpush.bf16.msra.mxu0 %v7470
    %8579 = vmatpush.bf16.msra.mxu0 %v7462
    %8580 = vmatpush.bf16.msra.mxu0 %v7454
    %8581 = vmatpush.bf16.msra.mxu0 %v7446
    %8582 = vmatmul.bf16.gmra.mxu0 %v5700
    %v8583 = vpop.f32.mrf.mxu0
    %v8584 = vadd.f32 %v8571, %v8583
    %v8585 = vpop.f32.mrf.mxu0
    %8586 = vdwg.mxu0
    %8587 = vmatpush.bf16.msra.mxu0 %v7566
    %8588 = vmatpush.bf16.msra.mxu0 %v7558
    %8589 = vmatpush.bf16.msra.mxu0 %v7550
    %8590 = vmatpush.bf16.msra.mxu0 %v7542
    %8591 = vmatpush.bf16.msra.mxu0 %v7534
    %8592 = vmatpush.bf16.msra.mxu0 %v7526
    %8593 = vmatpush.bf16.msra.mxu0 %v7518
    %8594 = vmatpush.bf16.msra.mxu0 %v7510
    %8595 = vmatmul.bf16.gmra.mxu0 %v5719
    %v8596 = vpop.f32.mrf.mxu0
    %v8597 = vadd.f32 %v8584, %v8596
    %v8598 = vpop.f32.mrf.mxu0
    %8599 = vdwg.mxu0
    %8600 = vmatpush.bf16.msra.mxu0 %v7630
    %8601 = vmatpush.bf16.msra.mxu0 %v7622
    %8602 = vmatpush.bf16.msra.mxu0 %v7614
    %8603 = vmatpush.bf16.msra.mxu0 %v7606
    %8604 = vmatpush.bf16.msra.mxu0 %v7598
    %8605 = vmatpush.bf16.msra.mxu0 %v7590
    %8606 = vmatpush.bf16.msra.mxu0 %v7582
    %8607 = vmatpush.bf16.msra.mxu0 %v7574
    %8608 = vmatmul.bf16.gmra.mxu0 %v5738
    %v8609 = vpop.f32.mrf.mxu0
    %v8610 = vadd.f32 %v8597, %v8609
    %v8611 = vpop.f32.mrf.mxu0
    %8612 = vdwg.mxu0
    %8613 = vmatpush.bf16.msra.mxu0 %v7694
    %8614 = vmatpush.bf16.msra.mxu0 %v7686
    %8615 = vmatpush.bf16.msra.mxu0 %v7678
    %8616 = vmatpush.bf16.msra.mxu0 %v7670
    %8617 = vmatpush.bf16.msra.mxu0 %v7662
    %8618 = vmatpush.bf16.msra.mxu0 %v7654
    %8619 = vmatpush.bf16.msra.mxu0 %v7646
    %8620 = vmatpush.bf16.msra.mxu0 %v7638
    %8621 = vmatmul.bf16.gmra.mxu0 %v5757
    %v8622 = vpop.f32.mrf.mxu0
    %v8623 = vadd.f32 %v8610, %v8622
    %v8624 = vpop.f32.mrf.mxu0
    %8625 = vdwg.mxu0
    %8626 = vmatpush.bf16.msra.mxu0 %v7375
    %8627 = vmatpush.bf16.msra.mxu0 %v7367
    %8628 = vmatpush.bf16.msra.mxu0 %v7359
    %8629 = vmatpush.bf16.msra.mxu0 %v7351
    %8630 = vmatpush.bf16.msra.mxu0 %v7343
    %8631 = vmatpush.bf16.msra.mxu0 %v7335
    %8632 = vmatpush.bf16.msra.mxu0 %v7327
    %8633 = vmatpush.bf16.msra.mxu0 %v7319
    %8634 = vmatmul.bf16.gmra.mxu0 %v5662
    %v8635 = vpop.f32.mrf.mxu0
    %v8636 = vadd.f32 %v6151, %v8635
    %v8637 = vpop.f32.mrf.mxu0
    %8638 = vdwg.mxu0
    %8639 = vmatpush.bf16.msra.mxu0 %v7439
    %8640 = vmatpush.bf16.msra.mxu0 %v7431
    %8641 = vmatpush.bf16.msra.mxu0 %v7423
    %8642 = vmatpush.bf16.msra.mxu0 %v7415
    %8643 = vmatpush.bf16.msra.mxu0 %v7407
    %8644 = vmatpush.bf16.msra.mxu0 %v7399
    %8645 = vmatpush.bf16.msra.mxu0 %v7391
    %8646 = vmatpush.bf16.msra.mxu0 %v7383
    %8647 = vmatmul.bf16.gmra.mxu0 %v5681
    %v8648 = vpop.f32.mrf.mxu0
    %v8649 = vadd.f32 %v8636, %v8648
    %v8650 = vpop.f32.mrf.mxu0
    %8651 = vdwg.mxu0
    %8652 = vmatpush.bf16.msra.mxu0 %v7503
    %8653 = vmatpush.bf16.msra.mxu0 %v7495
    %8654 = vmatpush.bf16.msra.mxu0 %v7487
    %8655 = vmatpush.bf16.msra.mxu0 %v7479
    %8656 = vmatpush.bf16.msra.mxu0 %v7471
    %8657 = vmatpush.bf16.msra.mxu0 %v7463
    %8658 = vmatpush.bf16.msra.mxu0 %v7455
    %8659 = vmatpush.bf16.msra.mxu0 %v7447
    %8660 = vmatmul.bf16.gmra.mxu0 %v5700
    %v8661 = vpop.f32.mrf.mxu0
    %v8662 = vadd.f32 %v8649, %v8661
    %v8663 = vpop.f32.mrf.mxu0
    %8664 = vdwg.mxu0
    %8665 = vmatpush.bf16.msra.mxu0 %v7567
    %8666 = vmatpush.bf16.msra.mxu0 %v7559
    %8667 = vmatpush.bf16.msra.mxu0 %v7551
    %8668 = vmatpush.bf16.msra.mxu0 %v7543
    %8669 = vmatpush.bf16.msra.mxu0 %v7535
    %8670 = vmatpush.bf16.msra.mxu0 %v7527
    %8671 = vmatpush.bf16.msra.mxu0 %v7519
    %8672 = vmatpush.bf16.msra.mxu0 %v7511
    %8673 = vmatmul.bf16.gmra.mxu0 %v5719
    %v8674 = vpop.f32.mrf.mxu0
    %v8675 = vadd.f32 %v8662, %v8674
    %v8676 = vpop.f32.mrf.mxu0
    %8677 = vdwg.mxu0
    %8678 = vmatpush.bf16.msra.mxu0 %v7631
    %8679 = vmatpush.bf16.msra.mxu0 %v7623
    %8680 = vmatpush.bf16.msra.mxu0 %v7615
    %8681 = vmatpush.bf16.msra.mxu0 %v7607
    %8682 = vmatpush.bf16.msra.mxu0 %v7599
    %8683 = vmatpush.bf16.msra.mxu0 %v7591
    %8684 = vmatpush.bf16.msra.mxu0 %v7583
    %8685 = vmatpush.bf16.msra.mxu0 %v7575
    %8686 = vmatmul.bf16.gmra.mxu0 %v5738
    %v8687 = vpop.f32.mrf.mxu0
    %v8688 = vadd.f32 %v8675, %v8687
    %v8689 = vpop.f32.mrf.mxu0
    %8690 = vdwg.mxu0
    %8691 = vmatpush.bf16.msra.mxu0 %v7695
    %8692 = vmatpush.bf16.msra.mxu0 %v7687
    %8693 = vmatpush.bf16.msra.mxu0 %v7679
    %8694 = vmatpush.bf16.msra.mxu0 %v7671
    %8695 = vmatpush.bf16.msra.mxu0 %v7663
    %8696 = vmatpush.bf16.msra.mxu0 %v7655
    %8697 = vmatpush.bf16.msra.mxu0 %v7647
    %8698 = vmatpush.bf16.msra.mxu0 %v7639
    %8699 = vmatmul.bf16.gmra.mxu0 %v5757
    %v8700 = vpop.f32.mrf.mxu0
    %v8701 = vadd.f32 %v8688, %v8700
    %v8702 = vpop.f32.mrf.mxu0
    %8703 = vdwg.mxu0
    %v8704 = vmax.f32 %v8155, 0.0
    %v8705 = vmax.f32 %v8233, 0.0
    %v8706 = vmax.f32 %v8311, 0.0
    %v8707 = vmax.f32 %v8389, 0.0
    %v8708 = vmax.f32 %v8467, 0.0
    %v8709 = vmax.f32 %v8545, 0.0
    %v8710 = vmax.f32 %v8623, 0.0
    %v8711 = vmax.f32 %v8701, 0.0
    %8712 = vst [vmem:[%s19] sm:$0xff] %v8704
    %8713 = vst [vmem:[%s19 + $0x8] sm:$0xff] %v8705
    %8714 = vst [vmem:[%s19 + $0x10] sm:$0xff] %v8706
    %8715 = vst [vmem:[%s19 + $0x18] sm:$0xff] %v8707
    %8716 = vst [vmem:[%s19 + $0x20] sm:$0xff] %v8708
    %8717 = vst [vmem:[%s19 + $0x28] sm:$0xff] %v8709
    %8718 = vst [vmem:[%s19 + $0x30] sm:$0xff] %v8710
    %8719 = vst [vmem:[%s19 + $0x38] sm:$0xff] %v8711
    %v8720 = vpack.c.bf16 %v8704, %v8704
    %v8721 = vpack.c.bf16 %v8705, %v8705
    %v8722 = vpack.c.bf16 %v8706, %v8706
    %v8723 = vpack.c.bf16 %v8707, %v8707
    %v8724 = vpack.c.bf16 %v8708, %v8708
    %v8725 = vpack.c.bf16 %v8709, %v8709
    %v8726 = vpack.c.bf16 %v8710, %v8710
    %v8727 = vpack.c.bf16 %v8711, %v8711
    %v8728 = vld [vmem:[#allocation21] sm:$0xff]
    %v8729 = vld [vmem:[#allocation21 + $0x8] sm:$0xff]
    %v8730 = vld [vmem:[#allocation21 + $0x10] sm:$0xff]
    %v8731 = vld [vmem:[#allocation21 + $0x18] sm:$0xff]
    %v8732 = vld [vmem:[#allocation21 + $0x20] sm:$0xff]
    %v8733 = vld [vmem:[#allocation21 + $0x28] sm:$0xff]
    %v8734 = vld [vmem:[#allocation21 + $0x30] sm:$0xff]
    %v8735 = vld [vmem:[#allocation21 + $0x38] sm:$0xff]
    %v8736 = vld [vmem:[#allocation21 + $0x40] sm:$0xff]
    %v8737 = vld [vmem:[#allocation21 + $0x48] sm:$0xff]
    %v8738 = vld [vmem:[#allocation21 + $0x50] sm:$0xff]
    %v8739 = vld [vmem:[#allocation21 + $0x58] sm:$0xff]
    %v8740 = vld [vmem:[#allocation21 + $0x60] sm:$0xff]
    %v8741 = vld [vmem:[#allocation21 + $0x68] sm:$0xff]
    %v8742 = vld [vmem:[#allocation21 + $0x70] sm:$0xff]
    %v8743 = vld [vmem:[#allocation21 + $0x78] sm:$0xff]
    %v8744 = vld [vmem:[#allocation21 + $0x80] sm:$0xff]
    %v8745 = vld [vmem:[#allocation21 + $0x88] sm:$0xff]
    %v8746 = vld [vmem:[#allocation21 + $0x90] sm:$0xff]
    %v8747 = vld [vmem:[#allocation21 + $0x98] sm:$0xff]
    %v8748 = vld [vmem:[#allocation21 + $0xa0] sm:$0xff]
    %v8749 = vld [vmem:[#allocation21 + $0xa8] sm:$0xff]
    %v8750 = vld [vmem:[#allocation21 + $0xb0] sm:$0xff]
    %v8751 = vld [vmem:[#allocation21 + $0xb8] sm:$0xff]
    %v8752 = vld [vmem:[#allocation21 + $0xc0] sm:$0xff]
    %v8753 = vld [vmem:[#allocation21 + $0xc8] sm:$0xff]
    %v8754 = vld [vmem:[#allocation21 + $0xd0] sm:$0xff]
    %v8755 = vld [vmem:[#allocation21 + $0xd8] sm:$0xff]
    %v8756 = vld [vmem:[#allocation21 + $0xe0] sm:$0xff]
    %v8757 = vld [vmem:[#allocation21 + $0xe8] sm:$0xff]
    %v8758 = vld [vmem:[#allocation21 + $0xf0] sm:$0xff]
    %v8759 = vld [vmem:[#allocation21 + $0xf8] sm:$0xff]
    %v8760 = vld [vmem:[#allocation21 + $0x100] sm:$0xff]
    %v8761 = vld [vmem:[#allocation21 + $0x108] sm:$0xff]
    %v8762 = vld [vmem:[#allocation21 + $0x110] sm:$0xff]
    %v8763 = vld [vmem:[#allocation21 + $0x118] sm:$0xff]
    %v8764 = vld [vmem:[#allocation21 + $0x120] sm:$0xff]
    %v8765 = vld [vmem:[#allocation21 + $0x128] sm:$0xff]
    %v8766 = vld [vmem:[#allocation21 + $0x130] sm:$0xff]
    %v8767 = vld [vmem:[#allocation21 + $0x138] sm:$0xff]
    %v8768 = vld [vmem:[#allocation21 + $0x140] sm:$0xff]
    %v8769 = vld [vmem:[#allocation21 + $0x148] sm:$0xff]
    %v8770 = vld [vmem:[#allocation21 + $0x150] sm:$0xff]
    %v8771 = vld [vmem:[#allocation21 + $0x158] sm:$0xff]
    %v8772 = vld [vmem:[#allocation21 + $0x160] sm:$0xff]
    %v8773 = vld [vmem:[#allocation21 + $0x168] sm:$0xff]
    %v8774 = vld [vmem:[#allocation21 + $0x170] sm:$0xff]
    %v8775 = vld [vmem:[#allocation21 + $0x178] sm:$0xff]
    %v8776 = vld [vmem:[#allocation21 + $0x180] sm:$0xff]
    %v8777 = vld [vmem:[#allocation21 + $0x188] sm:$0xff]
    %v8778 = vld [vmem:[#allocation21 + $0x190] sm:$0xff]
    %v8779 = vld [vmem:[#allocation21 + $0x198] sm:$0xff]
    %v8780 = vld [vmem:[#allocation21 + $0x1a0] sm:$0xff]
    %v8781 = vld [vmem:[#allocation21 + $0x1a8] sm:$0xff]
    %v8782 = vld [vmem:[#allocation21 + $0x1b0] sm:$0xff]
    %v8783 = vld [vmem:[#allocation21 + $0x1b8] sm:$0xff]
    %v8784 = vld [vmem:[#allocation21 + $0x1c0] sm:$0xff]
    %v8785 = vld [vmem:[#allocation21 + $0x1c8] sm:$0xff]
    %v8786 = vld [vmem:[#allocation21 + $0x1d0] sm:$0xff]
    %v8787 = vld [vmem:[#allocation21 + $0x1d8] sm:$0xff]
    %v8788 = vld [vmem:[#allocation21 + $0x1e0] sm:$0xff]
    %v8789 = vld [vmem:[#allocation21 + $0x1e8] sm:$0xff]
    %v8790 = vld [vmem:[#allocation21 + $0x1f0] sm:$0xff]
    %v8791 = vld [vmem:[#allocation21 + $0x1f8] sm:$0xff]
    %v8792 = vld [vmem:[#allocation21 + $0x200] sm:$0xff]
    %v8793 = vld [vmem:[#allocation21 + $0x208] sm:$0xff]
    %v8794 = vld [vmem:[#allocation21 + $0x210] sm:$0xff]
    %v8795 = vld [vmem:[#allocation21 + $0x218] sm:$0xff]
    %v8796 = vld [vmem:[#allocation21 + $0x220] sm:$0xff]
    %v8797 = vld [vmem:[#allocation21 + $0x228] sm:$0xff]
    %v8798 = vld [vmem:[#allocation21 + $0x230] sm:$0xff]
    %v8799 = vld [vmem:[#allocation21 + $0x238] sm:$0xff]
    %v8800 = vld [vmem:[#allocation21 + $0x240] sm:$0xff]
    %v8801 = vld [vmem:[#allocation21 + $0x248] sm:$0xff]
    %v8802 = vld [vmem:[#allocation21 + $0x250] sm:$0xff]
    %v8803 = vld [vmem:[#allocation21 + $0x258] sm:$0xff]
    %v8804 = vld [vmem:[#allocation21 + $0x260] sm:$0xff]
    %v8805 = vld [vmem:[#allocation21 + $0x268] sm:$0xff]
    %v8806 = vld [vmem:[#allocation21 + $0x270] sm:$0xff]
    %v8807 = vld [vmem:[#allocation21 + $0x278] sm:$0xff]
    %v8808 = vld [vmem:[#allocation21 + $0x280] sm:$0xff]
    %v8809 = vld [vmem:[#allocation21 + $0x288] sm:$0xff]
    %v8810 = vld [vmem:[#allocation21 + $0x290] sm:$0xff]
    %v8811 = vld [vmem:[#allocation21 + $0x298] sm:$0xff]
    %v8812 = vld [vmem:[#allocation21 + $0x2a0] sm:$0xff]
    %v8813 = vld [vmem:[#allocation21 + $0x2a8] sm:$0xff]
    %v8814 = vld [vmem:[#allocation21 + $0x2b0] sm:$0xff]
    %v8815 = vld [vmem:[#allocation21 + $0x2b8] sm:$0xff]
    %v8816 = vld [vmem:[#allocation21 + $0x2c0] sm:$0xff]
    %v8817 = vld [vmem:[#allocation21 + $0x2c8] sm:$0xff]
    %v8818 = vld [vmem:[#allocation21 + $0x2d0] sm:$0xff]
    %v8819 = vld [vmem:[#allocation21 + $0x2d8] sm:$0xff]
    %v8820 = vld [vmem:[#allocation21 + $0x2e0] sm:$0xff]
    %v8821 = vld [vmem:[#allocation21 + $0x2e8] sm:$0xff]
    %v8822 = vld [vmem:[#allocation21 + $0x2f0] sm:$0xff]
    %v8823 = vld [vmem:[#allocation21 + $0x2f8] sm:$0xff]
    %v8824 = vld [vmem:[#allocation21 + $0x300] sm:$0xff]
    %v8825 = vld [vmem:[#allocation21 + $0x308] sm:$0xff]
    %v8826 = vld [vmem:[#allocation21 + $0x310] sm:$0xff]
    %v8827 = vld [vmem:[#allocation21 + $0x318] sm:$0xff]
    %v8828 = vld [vmem:[#allocation21 + $0x320] sm:$0xff]
    %v8829 = vld [vmem:[#allocation21 + $0x328] sm:$0xff]
    %v8830 = vld [vmem:[#allocation21 + $0x330] sm:$0xff]
    %v8831 = vld [vmem:[#allocation21 + $0x338] sm:$0xff]
    %v8832 = vld [vmem:[#allocation21 + $0x340] sm:$0xff]
    %v8833 = vld [vmem:[#allocation21 + $0x348] sm:$0xff]
    %v8834 = vld [vmem:[#allocation21 + $0x350] sm:$0xff]
    %v8835 = vld [vmem:[#allocation21 + $0x358] sm:$0xff]
    %v8836 = vld [vmem:[#allocation21 + $0x360] sm:$0xff]
    %v8837 = vld [vmem:[#allocation21 + $0x368] sm:$0xff]
    %v8838 = vld [vmem:[#allocation21 + $0x370] sm:$0xff]
    %v8839 = vld [vmem:[#allocation21 + $0x378] sm:$0xff]
    %v8840 = vld [vmem:[#allocation21 + $0x380] sm:$0xff]
    %v8841 = vld [vmem:[#allocation21 + $0x388] sm:$0xff]
    %v8842 = vld [vmem:[#allocation21 + $0x390] sm:$0xff]
    %v8843 = vld [vmem:[#allocation21 + $0x398] sm:$0xff]
    %v8844 = vld [vmem:[#allocation21 + $0x3a0] sm:$0xff]
    %v8845 = vld [vmem:[#allocation21 + $0x3a8] sm:$0xff]
    %v8846 = vld [vmem:[#allocation21 + $0x3b0] sm:$0xff]
    %v8847 = vld [vmem:[#allocation21 + $0x3b8] sm:$0xff]
    %v8848 = vld [vmem:[#allocation21 + $0x3c0] sm:$0xff]
    %v8849 = vld [vmem:[#allocation21 + $0x3c8] sm:$0xff]
    %v8850 = vld [vmem:[#allocation21 + $0x3d0] sm:$0xff]
    %v8851 = vld [vmem:[#allocation21 + $0x3d8] sm:$0xff]
    %v8852 = vld [vmem:[#allocation21 + $0x3e0] sm:$0xff]
    %v8853 = vld [vmem:[#allocation21 + $0x3e8] sm:$0xff]
    %v8854 = vld [vmem:[#allocation21 + $0x3f0] sm:$0xff]
    %v8855 = vld [vmem:[#allocation21 + $0x3f8] sm:$0xff]
    %v8856 = vld [vmem:[#allocation23] sm:$0x3]
    %v8858 = vperm.slane %v8856, 0
    %v8859 = vperm.slane %v8856, 1
    %v8990 = vunpack.c.l.b16 %v8728
    %v8991 = vunpack.c.h.b16 %v8728
    %v8992 = vunpack.c.l.b16 %v8729
    %v8993 = vunpack.c.h.b16 %v8729
    %v8994 = vunpack.c.l.b16 %v8730
    %v8995 = vunpack.c.h.b16 %v8730
    %v8996 = vunpack.c.l.b16 %v8731
    %v8997 = vunpack.c.h.b16 %v8731
    %v8998 = vunpack.c.l.b16 %v8732
    %v8999 = vunpack.c.h.b16 %v8732
    %v9000 = vunpack.c.l.b16 %v8733
    %v9001 = vunpack.c.h.b16 %v8733
    %v9002 = vunpack.c.l.b16 %v8734
    %v9003 = vunpack.c.h.b16 %v8734
    %v9004 = vunpack.c.l.b16 %v8735
    %v9005 = vunpack.c.h.b16 %v8735
    %v9006 = vunpack.c.l.b16 %v8736
    %v9007 = vunpack.c.h.b16 %v8736
    %v9008 = vunpack.c.l.b16 %v8737
    %v9009 = vunpack.c.h.b16 %v8737
    %v9010 = vunpack.c.l.b16 %v8738
    %v9011 = vunpack.c.h.b16 %v8738
    %v9012 = vunpack.c.l.b16 %v8739
    %v9013 = vunpack.c.h.b16 %v8739
    %v9014 = vunpack.c.l.b16 %v8740
    %v9015 = vunpack.c.h.b16 %v8740
    %v9016 = vunpack.c.l.b16 %v8741
    %v9017 = vunpack.c.h.b16 %v8741
    %v9018 = vunpack.c.l.b16 %v8742
    %v9019 = vunpack.c.h.b16 %v8742
    %v9020 = vunpack.c.l.b16 %v8743
    %v9021 = vunpack.c.h.b16 %v8743
    %v9022 = vunpack.c.l.b16 %v8744
    %v9023 = vunpack.c.h.b16 %v8744
    %v9024 = vunpack.c.l.b16 %v8745
    %v9025 = vunpack.c.h.b16 %v8745
    %v9026 = vunpack.c.l.b16 %v8746
    %v9027 = vunpack.c.h.b16 %v8746
    %v9028 = vunpack.c.l.b16 %v8747
    %v9029 = vunpack.c.h.b16 %v8747
    %v9030 = vunpack.c.l.b16 %v8748
    %v9031 = vunpack.c.h.b16 %v8748
    %v9032 = vunpack.c.l.b16 %v8749
    %v9033 = vunpack.c.h.b16 %v8749
    %v9034 = vunpack.c.l.b16 %v8750
    %v9035 = vunpack.c.h.b16 %v8750
    %v9036 = vunpack.c.l.b16 %v8751
    %v9037 = vunpack.c.h.b16 %v8751
    %v9038 = vunpack.c.l.b16 %v8752
    %v9039 = vunpack.c.h.b16 %v8752
    %v9040 = vunpack.c.l.b16 %v8753
    %v9041 = vunpack.c.h.b16 %v8753
    %v9042 = vunpack.c.l.b16 %v8754
    %v9043 = vunpack.c.h.b16 %v8754
    %v9044 = vunpack.c.l.b16 %v8755
    %v9045 = vunpack.c.h.b16 %v8755
    %v9046 = vunpack.c.l.b16 %v8756
    %v9047 = vunpack.c.h.b16 %v8756
    %v9048 = vunpack.c.l.b16 %v8757
    %v9049 = vunpack.c.h.b16 %v8757
    %v9050 = vunpack.c.l.b16 %v8758
    %v9051 = vunpack.c.h.b16 %v8758
    %v9052 = vunpack.c.l.b16 %v8759
    %v9053 = vunpack.c.h.b16 %v8759
    %v9054 = vunpack.c.l.b16 %v8760
    %v9055 = vunpack.c.h.b16 %v8760
    %v9056 = vunpack.c.l.b16 %v8761
    %v9057 = vunpack.c.h.b16 %v8761
    %v9058 = vunpack.c.l.b16 %v8762
    %v9059 = vunpack.c.h.b16 %v8762
    %v9060 = vunpack.c.l.b16 %v8763
    %v9061 = vunpack.c.h.b16 %v8763
    %v9062 = vunpack.c.l.b16 %v8764
    %v9063 = vunpack.c.h.b16 %v8764
    %v9064 = vunpack.c.l.b16 %v8765
    %v9065 = vunpack.c.h.b16 %v8765
    %v9066 = vunpack.c.l.b16 %v8766
    %v9067 = vunpack.c.h.b16 %v8766
    %v9068 = vunpack.c.l.b16 %v8767
    %v9069 = vunpack.c.h.b16 %v8767
    %v9070 = vunpack.c.l.b16 %v8768
    %v9071 = vunpack.c.h.b16 %v8768
    %v9072 = vunpack.c.l.b16 %v8769
    %v9073 = vunpack.c.h.b16 %v8769
    %v9074 = vunpack.c.l.b16 %v8770
    %v9075 = vunpack.c.h.b16 %v8770
    %v9076 = vunpack.c.l.b16 %v8771
    %v9077 = vunpack.c.h.b16 %v8771
    %v9078 = vunpack.c.l.b16 %v8772
    %v9079 = vunpack.c.h.b16 %v8772
    %v9080 = vunpack.c.l.b16 %v8773
    %v9081 = vunpack.c.h.b16 %v8773
    %v9082 = vunpack.c.l.b16 %v8774
    %v9083 = vunpack.c.h.b16 %v8774
    %v9084 = vunpack.c.l.b16 %v8775
    %v9085 = vunpack.c.h.b16 %v8775
    %v9086 = vunpack.c.l.b16 %v8776
    %v9087 = vunpack.c.h.b16 %v8776
    %v9088 = vunpack.c.l.b16 %v8777
    %v9089 = vunpack.c.h.b16 %v8777
    %v9090 = vunpack.c.l.b16 %v8778
    %v9091 = vunpack.c.h.b16 %v8778
    %v9092 = vunpack.c.l.b16 %v8779
    %v9093 = vunpack.c.h.b16 %v8779
    %v9094 = vunpack.c.l.b16 %v8780
    %v9095 = vunpack.c.h.b16 %v8780
    %v9096 = vunpack.c.l.b16 %v8781
    %v9097 = vunpack.c.h.b16 %v8781
    %v9098 = vunpack.c.l.b16 %v8782
    %v9099 = vunpack.c.h.b16 %v8782
    %v9100 = vunpack.c.l.b16 %v8783
    %v9101 = vunpack.c.h.b16 %v8783
    %v9102 = vunpack.c.l.b16 %v8784
    %v9103 = vunpack.c.h.b16 %v8784
    %v9104 = vunpack.c.l.b16 %v8785
    %v9105 = vunpack.c.h.b16 %v8785
    %v9106 = vunpack.c.l.b16 %v8786
    %v9107 = vunpack.c.h.b16 %v8786
    %v9108 = vunpack.c.l.b16 %v8787
    %v9109 = vunpack.c.h.b16 %v8787
    %v9110 = vunpack.c.l.b16 %v8788
    %v9111 = vunpack.c.h.b16 %v8788
    %v9112 = vunpack.c.l.b16 %v8789
    %v9113 = vunpack.c.h.b16 %v8789
    %v9114 = vunpack.c.l.b16 %v8790
    %v9115 = vunpack.c.h.b16 %v8790
    %v9116 = vunpack.c.l.b16 %v8791
    %v9117 = vunpack.c.h.b16 %v8791
    %v9118 = vunpack.c.l.b16 %v8792
    %v9119 = vunpack.c.h.b16 %v8792
    %v9120 = vunpack.c.l.b16 %v8793
    %v9121 = vunpack.c.h.b16 %v8793
    %v9122 = vunpack.c.l.b16 %v8794
    %v9123 = vunpack.c.h.b16 %v8794
    %v9124 = vunpack.c.l.b16 %v8795
    %v9125 = vunpack.c.h.b16 %v8795
    %v9126 = vunpack.c.l.b16 %v8796
    %v9127 = vunpack.c.h.b16 %v8796
    %v9128 = vunpack.c.l.b16 %v8797
    %v9129 = vunpack.c.h.b16 %v8797
    %v9130 = vunpack.c.l.b16 %v8798
    %v9131 = vunpack.c.h.b16 %v8798
    %v9132 = vunpack.c.l.b16 %v8799
    %v9133 = vunpack.c.h.b16 %v8799
    %v9134 = vunpack.c.l.b16 %v8800
    %v9135 = vunpack.c.h.b16 %v8800
    %v9136 = vunpack.c.l.b16 %v8801
    %v9137 = vunpack.c.h.b16 %v8801
    %v9138 = vunpack.c.l.b16 %v8802
    %v9139 = vunpack.c.h.b16 %v8802
    %v9140 = vunpack.c.l.b16 %v8803
    %v9141 = vunpack.c.h.b16 %v8803
    %v9142 = vunpack.c.l.b16 %v8804
    %v9143 = vunpack.c.h.b16 %v8804
    %v9144 = vunpack.c.l.b16 %v8805
    %v9145 = vunpack.c.h.b16 %v8805
    %v9146 = vunpack.c.l.b16 %v8806
    %v9147 = vunpack.c.h.b16 %v8806
    %v9148 = vunpack.c.l.b16 %v8807
    %v9149 = vunpack.c.h.b16 %v8807
    %v9150 = vunpack.c.l.b16 %v8808
    %v9151 = vunpack.c.h.b16 %v8808
    %v9152 = vunpack.c.l.b16 %v8809
    %v9153 = vunpack.c.h.b16 %v8809
    %v9154 = vunpack.c.l.b16 %v8810
    %v9155 = vunpack.c.h.b16 %v8810
    %v9156 = vunpack.c.l.b16 %v8811
    %v9157 = vunpack.c.h.b16 %v8811
    %v9158 = vunpack.c.l.b16 %v8812
    %v9159 = vunpack.c.h.b16 %v8812
    %v9160 = vunpack.c.l.b16 %v8813
    %v9161 = vunpack.c.h.b16 %v8813
    %v9162 = vunpack.c.l.b16 %v8814
    %v9163 = vunpack.c.h.b16 %v8814
    %v9164 = vunpack.c.l.b16 %v8815
    %v9165 = vunpack.c.h.b16 %v8815
    %v9166 = vunpack.c.l.b16 %v8816
    %v9167 = vunpack.c.h.b16 %v8816
    %v9168 = vunpack.c.l.b16 %v8817
    %v9169 = vunpack.c.h.b16 %v8817
    %v9170 = vunpack.c.l.b16 %v8818
    %v9171 = vunpack.c.h.b16 %v8818
    %v9172 = vunpack.c.l.b16 %v8819
    %v9173 = vunpack.c.h.b16 %v8819
    %v9174 = vunpack.c.l.b16 %v8820
    %v9175 = vunpack.c.h.b16 %v8820
    %v9176 = vunpack.c.l.b16 %v8821
    %v9177 = vunpack.c.h.b16 %v8821
    %v9178 = vunpack.c.l.b16 %v8822
    %v9179 = vunpack.c.h.b16 %v8822
    %v9180 = vunpack.c.l.b16 %v8823
    %v9181 = vunpack.c.h.b16 %v8823
    %v9182 = vunpack.c.l.b16 %v8824
    %v9183 = vunpack.c.h.b16 %v8824
    %v9184 = vunpack.c.l.b16 %v8825
    %v9185 = vunpack.c.h.b16 %v8825
    %v9186 = vunpack.c.l.b16 %v8826
    %v9187 = vunpack.c.h.b16 %v8826
    %v9188 = vunpack.c.l.b16 %v8827
    %v9189 = vunpack.c.h.b16 %v8827
    %v9190 = vunpack.c.l.b16 %v8828
    %v9191 = vunpack.c.h.b16 %v8828
    %v9192 = vunpack.c.l.b16 %v8829
    %v9193 = vunpack.c.h.b16 %v8829
    %v9194 = vunpack.c.l.b16 %v8830
    %v9195 = vunpack.c.h.b16 %v8830
    %v9196 = vunpack.c.l.b16 %v8831
    %v9197 = vunpack.c.h.b16 %v8831
    %v9198 = vunpack.c.l.b16 %v8832
    %v9199 = vunpack.c.h.b16 %v8832
    %v9200 = vunpack.c.l.b16 %v8833
    %v9201 = vunpack.c.h.b16 %v8833
    %v9202 = vunpack.c.l.b16 %v8834
    %v9203 = vunpack.c.h.b16 %v8834
    %v9204 = vunpack.c.l.b16 %v8835
    %v9205 = vunpack.c.h.b16 %v8835
    %v9206 = vunpack.c.l.b16 %v8836
    %v9207 = vunpack.c.h.b16 %v8836
    %v9208 = vunpack.c.l.b16 %v8837
    %v9209 = vunpack.c.h.b16 %v8837
    %v9210 = vunpack.c.l.b16 %v8838
    %v9211 = vunpack.c.h.b16 %v8838
    %v9212 = vunpack.c.l.b16 %v8839
    %v9213 = vunpack.c.h.b16 %v8839
    %v9214 = vunpack.c.l.b16 %v8840
    %v9215 = vunpack.c.h.b16 %v8840
    %v9216 = vunpack.c.l.b16 %v8841
    %v9217 = vunpack.c.h.b16 %v8841
    %v9218 = vunpack.c.l.b16 %v8842
    %v9219 = vunpack.c.h.b16 %v8842
    %v9220 = vunpack.c.l.b16 %v8843
    %v9221 = vunpack.c.h.b16 %v8843
    %v9222 = vunpack.c.l.b16 %v8844
    %v9223 = vunpack.c.h.b16 %v8844
    %v9224 = vunpack.c.l.b16 %v8845
    %v9225 = vunpack.c.h.b16 %v8845
    %v9226 = vunpack.c.l.b16 %v8846
    %v9227 = vunpack.c.h.b16 %v8846
    %v9228 = vunpack.c.l.b16 %v8847
    %v9229 = vunpack.c.h.b16 %v8847
    %v9230 = vunpack.c.l.b16 %v8848
    %v9231 = vunpack.c.h.b16 %v8848
    %v9232 = vunpack.c.l.b16 %v8849
    %v9233 = vunpack.c.h.b16 %v8849
    %v9234 = vunpack.c.l.b16 %v8850
    %v9235 = vunpack.c.h.b16 %v8850
    %v9236 = vunpack.c.l.b16 %v8851
    %v9237 = vunpack.c.h.b16 %v8851
    %v9238 = vunpack.c.l.b16 %v8852
    %v9239 = vunpack.c.h.b16 %v8852
    %v9240 = vunpack.c.l.b16 %v8853
    %v9241 = vunpack.c.h.b16 %v8853
    %v9242 = vunpack.c.l.b16 %v8854
    %v9243 = vunpack.c.h.b16 %v8854
    %v9244 = vunpack.c.l.b16 %v8855
    %v9245 = vunpack.c.h.b16 %v8855
    %v9246 = vpack.c.b16 %v8992, %v8990
    %v9247 = vpack.c.b16 %v8993, %v8991
    %v9248 = vpack.c.b16 %v8996, %v8994
    %v9249 = vpack.c.b16 %v8997, %v8995
    %v9250 = vpack.c.b16 %v9000, %v8998
    %v9251 = vpack.c.b16 %v9001, %v8999
    %v9252 = vpack.c.b16 %v9004, %v9002
    %v9253 = vpack.c.b16 %v9005, %v9003
    %v9254 = vpack.c.b16 %v9008, %v9006
    %v9255 = vpack.c.b16 %v9009, %v9007
    %v9256 = vpack.c.b16 %v9012, %v9010
    %v9257 = vpack.c.b16 %v9013, %v9011
    %v9258 = vpack.c.b16 %v9016, %v9014
    %v9259 = vpack.c.b16 %v9017, %v9015
    %v9260 = vpack.c.b16 %v9020, %v9018
    %v9261 = vpack.c.b16 %v9021, %v9019
    %v9262 = vpack.c.b16 %v9024, %v9022
    %v9263 = vpack.c.b16 %v9025, %v9023
    %v9264 = vpack.c.b16 %v9028, %v9026
    %v9265 = vpack.c.b16 %v9029, %v9027
    %v9266 = vpack.c.b16 %v9032, %v9030
    %v9267 = vpack.c.b16 %v9033, %v9031
    %v9268 = vpack.c.b16 %v9036, %v9034
    %v9269 = vpack.c.b16 %v9037, %v9035
    %v9270 = vpack.c.b16 %v9040, %v9038
    %v9271 = vpack.c.b16 %v9041, %v9039
    %v9272 = vpack.c.b16 %v9044, %v9042
    %v9273 = vpack.c.b16 %v9045, %v9043
    %v9274 = vpack.c.b16 %v9048, %v9046
    %v9275 = vpack.c.b16 %v9049, %v9047
    %v9276 = vpack.c.b16 %v9052, %v9050
    %v9277 = vpack.c.b16 %v9053, %v9051
    %v9278 = vpack.c.b16 %v9056, %v9054
    %v9279 = vpack.c.b16 %v9057, %v9055
    %v9280 = vpack.c.b16 %v9060, %v9058
    %v9281 = vpack.c.b16 %v9061, %v9059
    %v9282 = vpack.c.b16 %v9064, %v9062
    %v9283 = vpack.c.b16 %v9065, %v9063
    %v9284 = vpack.c.b16 %v9068, %v9066
    %v9285 = vpack.c.b16 %v9069, %v9067
    %v9286 = vpack.c.b16 %v9072, %v9070
    %v9287 = vpack.c.b16 %v9073, %v9071
    %v9288 = vpack.c.b16 %v9076, %v9074
    %v9289 = vpack.c.b16 %v9077, %v9075
    %v9290 = vpack.c.b16 %v9080, %v9078
    %v9291 = vpack.c.b16 %v9081, %v9079
    %v9292 = vpack.c.b16 %v9084, %v9082
    %v9293 = vpack.c.b16 %v9085, %v9083
    %v9294 = vpack.c.b16 %v9088, %v9086
    %v9295 = vpack.c.b16 %v9089, %v9087
    %v9296 = vpack.c.b16 %v9092, %v9090
    %v9297 = vpack.c.b16 %v9093, %v9091
    %v9298 = vpack.c.b16 %v9096, %v9094
    %v9299 = vpack.c.b16 %v9097, %v9095
    %v9300 = vpack.c.b16 %v9100, %v9098
    %v9301 = vpack.c.b16 %v9101, %v9099
    %v9302 = vpack.c.b16 %v9104, %v9102
    %v9303 = vpack.c.b16 %v9105, %v9103
    %v9304 = vpack.c.b16 %v9108, %v9106
    %v9305 = vpack.c.b16 %v9109, %v9107
    %v9306 = vpack.c.b16 %v9112, %v9110
    %v9307 = vpack.c.b16 %v9113, %v9111
    %v9308 = vpack.c.b16 %v9116, %v9114
    %v9309 = vpack.c.b16 %v9117, %v9115
    %v9310 = vpack.c.b16 %v9120, %v9118
    %v9311 = vpack.c.b16 %v9121, %v9119
    %v9312 = vpack.c.b16 %v9124, %v9122
    %v9313 = vpack.c.b16 %v9125, %v9123
    %v9314 = vpack.c.b16 %v9128, %v9126
    %v9315 = vpack.c.b16 %v9129, %v9127
    %v9316 = vpack.c.b16 %v9132, %v9130
    %v9317 = vpack.c.b16 %v9133, %v9131
    %v9318 = vpack.c.b16 %v9136, %v9134
    %v9319 = vpack.c.b16 %v9137, %v9135
    %v9320 = vpack.c.b16 %v9140, %v9138
    %v9321 = vpack.c.b16 %v9141, %v9139
    %v9322 = vpack.c.b16 %v9144, %v9142
    %v9323 = vpack.c.b16 %v9145, %v9143
    %v9324 = vpack.c.b16 %v9148, %v9146
    %v9325 = vpack.c.b16 %v9149, %v9147
    %v9326 = vpack.c.b16 %v9152, %v9150
    %v9327 = vpack.c.b16 %v9153, %v9151
    %v9328 = vpack.c.b16 %v9156, %v9154
    %v9329 = vpack.c.b16 %v9157, %v9155
    %v9330 = vpack.c.b16 %v9160, %v9158
    %v9331 = vpack.c.b16 %v9161, %v9159
    %v9332 = vpack.c.b16 %v9164, %v9162
    %v9333 = vpack.c.b16 %v9165, %v9163
    %v9334 = vpack.c.b16 %v9168, %v9166
    %v9335 = vpack.c.b16 %v9169, %v9167
    %v9336 = vpack.c.b16 %v9172, %v9170
    %v9337 = vpack.c.b16 %v9173, %v9171
    %v9338 = vpack.c.b16 %v9176, %v9174
    %v9339 = vpack.c.b16 %v9177, %v9175
    %v9340 = vpack.c.b16 %v9180, %v9178
    %v9341 = vpack.c.b16 %v9181, %v9179
    %v9342 = vpack.c.b16 %v9184, %v9182
    %v9343 = vpack.c.b16 %v9185, %v9183
    %v9344 = vpack.c.b16 %v9188, %v9186
    %v9345 = vpack.c.b16 %v9189, %v9187
    %v9346 = vpack.c.b16 %v9192, %v9190
    %v9347 = vpack.c.b16 %v9193, %v9191
    %v9348 = vpack.c.b16 %v9196, %v9194
    %v9349 = vpack.c.b16 %v9197, %v9195
    %v9350 = vpack.c.b16 %v9200, %v9198
    %v9351 = vpack.c.b16 %v9201, %v9199
    %v9352 = vpack.c.b16 %v9204, %v9202
    %v9353 = vpack.c.b16 %v9205, %v9203
    %v9354 = vpack.c.b16 %v9208, %v9206
    %v9355 = vpack.c.b16 %v9209, %v9207
    %v9356 = vpack.c.b16 %v9212, %v9210
    %v9357 = vpack.c.b16 %v9213, %v9211
    %v9358 = vpack.c.b16 %v9216, %v9214
    %v9359 = vpack.c.b16 %v9217, %v9215
    %v9360 = vpack.c.b16 %v9220, %v9218
    %v9361 = vpack.c.b16 %v9221, %v9219
    %v9362 = vpack.c.b16 %v9224, %v9222
    %v9363 = vpack.c.b16 %v9225, %v9223
    %v9364 = vpack.c.b16 %v9228, %v9226
    %v9365 = vpack.c.b16 %v9229, %v9227
    %v9366 = vpack.c.b16 %v9232, %v9230
    %v9367 = vpack.c.b16 %v9233, %v9231
    %v9368 = vpack.c.b16 %v9236, %v9234
    %v9369 = vpack.c.b16 %v9237, %v9235
    %v9370 = vpack.c.b16 %v9240, %v9238
    %v9371 = vpack.c.b16 %v9241, %v9239
    %v9372 = vpack.c.b16 %v9244, %v9242
    %v9373 = vpack.c.b16 %v9245, %v9243
    %9502 = vmatpush.bf16.msra.mxu0 %v9260
    %9503 = vmatpush.bf16.msra.mxu0 %v9258
    %9504 = vmatpush.bf16.msra.mxu0 %v9256
    %9505 = vmatpush.bf16.msra.mxu0 %v9254
    %9506 = vmatpush.bf16.msra.mxu0 %v9252
    %9507 = vmatpush.bf16.msra.mxu0 %v9250
    %9508 = vmatpush.bf16.msra.mxu0 %v9248
    %9509 = vmatpush.bf16.msra.mxu0 %v9246
    %9510 = vmatmul.bf16.gmra.mxu0 %v8720
    %v9511 = vpop.f32.mrf.mxu0
    %v9512 = vadd.f32 %v8858, %v9511
    %v9513 = vpop.f32.mrf.mxu0
    %9514 = vdwg.mxu0
    %9515 = vmatpush.bf16.msra.mxu0 %v9276
    %9516 = vmatpush.bf16.msra.mxu0 %v9274
    %9517 = vmatpush.bf16.msra.mxu0 %v9272
    %9518 = vmatpush.bf16.msra.mxu0 %v9270
    %9519 = vmatpush.bf16.msra.mxu0 %v9268
    %9520 = vmatpush.bf16.msra.mxu0 %v9266
    %9521 = vmatpush.bf16.msra.mxu0 %v9264
    %9522 = vmatpush.bf16.msra.mxu0 %v9262
    %9523 = vmatmul.bf16.gmra.mxu0 %v8721
    %v9524 = vpop.f32.mrf.mxu0
    %v9525 = vadd.f32 %v9512, %v9524
    %v9526 = vpop.f32.mrf.mxu0
    %9527 = vdwg.mxu0
    %9528 = vmatpush.bf16.msra.mxu0 %v9292
    %9529 = vmatpush.bf16.msra.mxu0 %v9290
    %9530 = vmatpush.bf16.msra.mxu0 %v9288
    %9531 = vmatpush.bf16.msra.mxu0 %v9286
    %9532 = vmatpush.bf16.msra.mxu0 %v9284
    %9533 = vmatpush.bf16.msra.mxu0 %v9282
    %9534 = vmatpush.bf16.msra.mxu0 %v9280
    %9535 = vmatpush.bf16.msra.mxu0 %v9278
    %9536 = vmatmul.bf16.gmra.mxu0 %v8722
    %v9537 = vpop.f32.mrf.mxu0
    %v9538 = vadd.f32 %v9525, %v9537
    %v9539 = vpop.f32.mrf.mxu0
    %9540 = vdwg.mxu0
    %9541 = vmatpush.bf16.msra.mxu0 %v9308
    %9542 = vmatpush.bf16.msra.mxu0 %v9306
    %9543 = vmatpush.bf16.msra.mxu0 %v9304
    %9544 = vmatpush.bf16.msra.mxu0 %v9302
    %9545 = vmatpush.bf16.msra.mxu0 %v9300
    %9546 = vmatpush.bf16.msra.mxu0 %v9298
    %9547 = vmatpush.bf16.msra.mxu0 %v9296
    %9548 = vmatpush.bf16.msra.mxu0 %v9294
    %9549 = vmatmul.bf16.gmra.mxu0 %v8723
    %v9550 = vpop.f32.mrf.mxu0
    %v9551 = vadd.f32 %v9538, %v9550
    %v9552 = vpop.f32.mrf.mxu0
    %9553 = vdwg.mxu0
    %9554 = vmatpush.bf16.msra.mxu0 %v9324
    %9555 = vmatpush.bf16.msra.mxu0 %v9322
    %9556 = vmatpush.bf16.msra.mxu0 %v9320
    %9557 = vmatpush.bf16.msra.mxu0 %v9318
    %9558 = vmatpush.bf16.msra.mxu0 %v9316
    %9559 = vmatpush.bf16.msra.mxu0 %v9314
    %9560 = vmatpush.bf16.msra.mxu0 %v9312
    %9561 = vmatpush.bf16.msra.mxu0 %v9310
    %9562 = vmatmul.bf16.gmra.mxu0 %v8724
    %v9563 = vpop.f32.mrf.mxu0
    %v9564 = vadd.f32 %v9551, %v9563
    %v9565 = vpop.f32.mrf.mxu0
    %9566 = vdwg.mxu0
    %9567 = vmatpush.bf16.msra.mxu0 %v9340
    %9568 = vmatpush.bf16.msra.mxu0 %v9338
    %9569 = vmatpush.bf16.msra.mxu0 %v9336
    %9570 = vmatpush.bf16.msra.mxu0 %v9334
    %9571 = vmatpush.bf16.msra.mxu0 %v9332
    %9572 = vmatpush.bf16.msra.mxu0 %v9330
    %9573 = vmatpush.bf16.msra.mxu0 %v9328
    %9574 = vmatpush.bf16.msra.mxu0 %v9326
    %9575 = vmatmul.bf16.gmra.mxu0 %v8725
    %v9576 = vpop.f32.mrf.mxu0
    %v9577 = vadd.f32 %v9564, %v9576
    %v9578 = vpop.f32.mrf.mxu0
    %9579 = vdwg.mxu0
    %9580 = vmatpush.bf16.msra.mxu0 %v9356
    %9581 = vmatpush.bf16.msra.mxu0 %v9354
    %9582 = vmatpush.bf16.msra.mxu0 %v9352
    %9583 = vmatpush.bf16.msra.mxu0 %v9350
    %9584 = vmatpush.bf16.msra.mxu0 %v9348
    %9585 = vmatpush.bf16.msra.mxu0 %v9346
    %9586 = vmatpush.bf16.msra.mxu0 %v9344
    %9587 = vmatpush.bf16.msra.mxu0 %v9342
    %9588 = vmatmul.bf16.gmra.mxu0 %v8726
    %v9589 = vpop.f32.mrf.mxu0
    %v9590 = vadd.f32 %v9577, %v9589
    %v9591 = vpop.f32.mrf.mxu0
    %9592 = vdwg.mxu0
    %9593 = vmatpush.bf16.msra.mxu0 %v9372
    %9594 = vmatpush.bf16.msra.mxu0 %v9370
    %9595 = vmatpush.bf16.msra.mxu0 %v9368
    %9596 = vmatpush.bf16.msra.mxu0 %v9366
    %9597 = vmatpush.bf16.msra.mxu0 %v9364
    %9598 = vmatpush.bf16.msra.mxu0 %v9362
    %9599 = vmatpush.bf16.msra.mxu0 %v9360
    %9600 = vmatpush.bf16.msra.mxu0 %v9358
    %9601 = vmatmul.bf16.gmra.mxu0 %v8727
    %v9602 = vpop.f32.mrf.mxu0
    %v9603 = vadd.f32 %v9590, %v9602
    %v9604 = vpop.f32.mrf.mxu0
    %9605 = vdwg.mxu0
    %9606 = vmatpush.bf16.msra.mxu0 %v9261
    %9607 = vmatpush.bf16.msra.mxu0 %v9259
    %9608 = vmatpush.bf16.msra.mxu0 %v9257
    %9609 = vmatpush.bf16.msra.mxu0 %v9255
    %9610 = vmatpush.bf16.msra.mxu0 %v9253
    %9611 = vmatpush.bf16.msra.mxu0 %v9251
    %9612 = vmatpush.bf16.msra.mxu0 %v9249
    %9613 = vmatpush.bf16.msra.mxu0 %v9247
    %9614 = vmatmul.bf16.gmra.mxu0 %v8720
    %v9615 = vpop.f32.mrf.mxu0
    %v9616 = vadd.f32 %v8859, %v9615
    %v9617 = vpop.f32.mrf.mxu0
    %9618 = vdwg.mxu0
    %9619 = vmatpush.bf16.msra.mxu0 %v9277
    %9620 = vmatpush.bf16.msra.mxu0 %v9275
    %9621 = vmatpush.bf16.msra.mxu0 %v9273
    %9622 = vmatpush.bf16.msra.mxu0 %v9271
    %9623 = vmatpush.bf16.msra.mxu0 %v9269
    %9624 = vmatpush.bf16.msra.mxu0 %v9267
    %9625 = vmatpush.bf16.msra.mxu0 %v9265
    %9626 = vmatpush.bf16.msra.mxu0 %v9263
    %9627 = vmatmul.bf16.gmra.mxu0 %v8721
    %v9628 = vpop.f32.mrf.mxu0
    %v9629 = vadd.f32 %v9616, %v9628
    %v9630 = vpop.f32.mrf.mxu0
    %9631 = vdwg.mxu0
    %9632 = vmatpush.bf16.msra.mxu0 %v9293
    %9633 = vmatpush.bf16.msra.mxu0 %v9291
    %9634 = vmatpush.bf16.msra.mxu0 %v9289
    %9635 = vmatpush.bf16.msra.mxu0 %v9287
    %9636 = vmatpush.bf16.msra.mxu0 %v9285
    %9637 = vmatpush.bf16.msra.mxu0 %v9283
    %9638 = vmatpush.bf16.msra.mxu0 %v9281
    %9639 = vmatpush.bf16.msra.mxu0 %v9279
    %9640 = vmatmul.bf16.gmra.mxu0 %v8722
    %v9641 = vpop.f32.mrf.mxu0
    %v9642 = vadd.f32 %v9629, %v9641
    %v9643 = vpop.f32.mrf.mxu0
    %9644 = vdwg.mxu0
    %9645 = vmatpush.bf16.msra.mxu0 %v9309
    %9646 = vmatpush.bf16.msra.mxu0 %v9307
    %9647 = vmatpush.bf16.msra.mxu0 %v9305
    %9648 = vmatpush.bf16.msra.mxu0 %v9303
    %9649 = vmatpush.bf16.msra.mxu0 %v9301
    %9650 = vmatpush.bf16.msra.mxu0 %v9299
    %9651 = vmatpush.bf16.msra.mxu0 %v9297
    %9652 = vmatpush.bf16.msra.mxu0 %v9295
    %9653 = vmatmul.bf16.gmra.mxu0 %v8723
    %v9654 = vpop.f32.mrf.mxu0
    %v9655 = vadd.f32 %v9642, %v9654
    %v9656 = vpop.f32.mrf.mxu0
    %9657 = vdwg.mxu0
    %9658 = vmatpush.bf16.msra.mxu0 %v9325
    %9659 = vmatpush.bf16.msra.mxu0 %v9323
    %9660 = vmatpush.bf16.msra.mxu0 %v9321
    %9661 = vmatpush.bf16.msra.mxu0 %v9319
    %9662 = vmatpush.bf16.msra.mxu0 %v9317
    %9663 = vmatpush.bf16.msra.mxu0 %v9315
    %9664 = vmatpush.bf16.msra.mxu0 %v9313
    %9665 = vmatpush.bf16.msra.mxu0 %v9311
    %9666 = vmatmul.bf16.gmra.mxu0 %v8724
    %v9667 = vpop.f32.mrf.mxu0
    %v9668 = vadd.f32 %v9655, %v9667
    %v9669 = vpop.f32.mrf.mxu0
    %9670 = vdwg.mxu0
    %9671 = vmatpush.bf16.msra.mxu0 %v9341
    %9672 = vmatpush.bf16.msra.mxu0 %v9339
    %9673 = vmatpush.bf16.msra.mxu0 %v9337
    %9674 = vmatpush.bf16.msra.mxu0 %v9335
    %9675 = vmatpush.bf16.msra.mxu0 %v9333
    %9676 = vmatpush.bf16.msra.mxu0 %v9331
    %9677 = vmatpush.bf16.msra.mxu0 %v9329
    %9678 = vmatpush.bf16.msra.mxu0 %v9327
    %9679 = vmatmul.bf16.gmra.mxu0 %v8725
    %v9680 = vpop.f32.mrf.mxu0
    %v9681 = vadd.f32 %v9668, %v9680
    %v9682 = vpop.f32.mrf.mxu0
    %9683 = vdwg.mxu0
    %9684 = vmatpush.bf16.msra.mxu0 %v9357
    %9685 = vmatpush.bf16.msra.mxu0 %v9355
    %9686 = vmatpush.bf16.msra.mxu0 %v9353
    %9687 = vmatpush.bf16.msra.mxu0 %v9351
    %9688 = vmatpush.bf16.msra.mxu0 %v9349
    %9689 = vmatpush.bf16.msra.mxu0 %v9347
    %9690 = vmatpush.bf16.msra.mxu0 %v9345
    %9691 = vmatpush.bf16.msra.mxu0 %v9343
    %9692 = vmatmul.bf16.gmra.mxu0 %v8726
    %v9693 = vpop.f32.mrf.mxu0
    %v9694 = vadd.f32 %v9681, %v9693
    %v9695 = vpop.f32.mrf.mxu0
    %9696 = vdwg.mxu0
    %9697 = vmatpush.bf16.msra.mxu0 %v9373
    %9698 = vmatpush.bf16.msra.mxu0 %v9371
    %9699 = vmatpush.bf16.msra.mxu0 %v9369
    %9700 = vmatpush.bf16.msra.mxu0 %v9367
    %9701 = vmatpush.bf16.msra.mxu0 %v9365
    %9702 = vmatpush.bf16.msra.mxu0 %v9363
    %9703 = vmatpush.bf16.msra.mxu0 %v9361
    %9704 = vmatpush.bf16.msra.mxu0 %v9359
    %9705 = vmatmul.bf16.gmra.mxu0 %v8727
    %v9706 = vpop.f32.mrf.mxu0
    %v9707 = vadd.f32 %v9694, %v9706
    %v9708 = vpop.f32.mrf.mxu0
    %9709 = vdwg.mxu0
    %v9710 = vpack.c.bf16 %v9603, %v9603
    %v9711 = vpack.c.bf16 %v9707, %v9707
    %v9712 = vld [vmem:[#allocation24] sm:$0xf]
    %v9713 = vld [vmem:[#allocation24 + $0x4] sm:$0xf]
    %v9714 = vld [vmem:[#allocation24 + $0x8] sm:$0xf]
    %v9715 = vld [vmem:[#allocation24 + $0xc] sm:$0xf]
    %v9716 = vld [vmem:[#allocation24 + $0x10] sm:$0xf]
    %v9717 = vld [vmem:[#allocation24 + $0x14] sm:$0xf]
    %v9718 = vld [vmem:[#allocation24 + $0x18] sm:$0xf]
    %v9719 = vld [vmem:[#allocation24 + $0x1c] sm:$0xf]
    %v9720 = vld [vmem:[#allocation24 + $0x20] sm:$0xf]
    %v9721 = vld [vmem:[#allocation24 + $0x24] sm:$0xf]
    %v9722 = vld [vmem:[#allocation24 + $0x28] sm:$0xf]
    %v9723 = vld [vmem:[#allocation24 + $0x2c] sm:$0xf]
    %v9724 = vld [vmem:[#allocation24 + $0x30] sm:$0xf]
    %v9725 = vld [vmem:[#allocation24 + $0x34] sm:$0xf]
    %v9726 = vld [vmem:[#allocation24 + $0x38] sm:$0xf]
    %v9727 = vld [vmem:[#allocation24 + $0x3c] sm:$0xf]
    %v9728 = vld [vmem:[#allocation24 + $0x40] sm:$0xf]
    %v9729 = vld [vmem:[#allocation24 + $0x44] sm:$0xf]
    %v9730 = vld [vmem:[#allocation24 + $0x48] sm:$0xf]
    %v9731 = vld [vmem:[#allocation24 + $0x4c] sm:$0xf]
    %v9732 = vld [vmem:[#allocation24 + $0x50] sm:$0xf]
    %v9733 = vld [vmem:[#allocation24 + $0x54] sm:$0xf]
    %v9734 = vld [vmem:[#allocation24 + $0x58] sm:$0xf]
    %v9735 = vld [vmem:[#allocation24 + $0x5c] sm:$0xf]
    %v9736 = vld [vmem:[#allocation24 + $0x60] sm:$0xf]
    %v9737 = vld [vmem:[#allocation24 + $0x64] sm:$0xf]
    %v9738 = vld [vmem:[#allocation24 + $0x68] sm:$0xf]
    %v9739 = vld [vmem:[#allocation24 + $0x6c] sm:$0xf]
    %v9740 = vld [vmem:[#allocation24 + $0x70] sm:$0xf]
    %v9741 = vld [vmem:[#allocation24 + $0x74] sm:$0xf]
    %v9742 = vld [vmem:[#allocation24 + $0x78] sm:$0xf]
    %v9743 = vld [vmem:[#allocation24 + $0x7c] sm:$0xf]
    %v9744 = vld [vmem:[#allocation26] sm:$0x1]
    %v9746 = vperm.slane %v9744, 0
    %v9780 = vunpack.c.l.b16 %v9712
    %v9781 = vunpack.c.l.b16 %v9713
    %v9782 = vunpack.c.l.b16 %v9714
    %v9783 = vunpack.c.l.b16 %v9715
    %v9784 = vunpack.c.l.b16 %v9716
    %v9785 = vunpack.c.l.b16 %v9717
    %v9786 = vunpack.c.l.b16 %v9718
    %v9787 = vunpack.c.l.b16 %v9719
    %v9788 = vunpack.c.l.b16 %v9720
    %v9789 = vunpack.c.l.b16 %v9721
    %v9790 = vunpack.c.l.b16 %v9722
    %v9791 = vunpack.c.l.b16 %v9723
    %v9792 = vunpack.c.l.b16 %v9724
    %v9793 = vunpack.c.l.b16 %v9725
    %v9794 = vunpack.c.l.b16 %v9726
    %v9795 = vunpack.c.l.b16 %v9727
    %v9796 = vunpack.c.l.b16 %v9728
    %v9797 = vunpack.c.l.b16 %v9729
    %v9798 = vunpack.c.l.b16 %v9730
    %v9799 = vunpack.c.l.b16 %v9731
    %v9800 = vunpack.c.l.b16 %v9732
    %v9801 = vunpack.c.l.b16 %v9733
    %v9802 = vunpack.c.l.b16 %v9734
    %v9803 = vunpack.c.l.b16 %v9735
    %v9804 = vunpack.c.l.b16 %v9736
    %v9805 = vunpack.c.l.b16 %v9737
    %v9806 = vunpack.c.l.b16 %v9738
    %v9807 = vunpack.c.l.b16 %v9739
    %v9808 = vunpack.c.l.b16 %v9740
    %v9809 = vunpack.c.l.b16 %v9741
    %v9810 = vunpack.c.l.b16 %v9742
    %v9811 = vunpack.c.l.b16 %v9743
    %v9812 = vpack.c.b16 %v9781, %v9780
    %v9813 = vpack.c.b16 %v9783, %v9782
    %v9814 = vpack.c.b16 %v9785, %v9784
    %v9815 = vpack.c.b16 %v9787, %v9786
    %v9816 = vpack.c.b16 %v9789, %v9788
    %v9817 = vpack.c.b16 %v9791, %v9790
    %v9818 = vpack.c.b16 %v9793, %v9792
    %v9819 = vpack.c.b16 %v9795, %v9794
    %v9820 = vpack.c.b16 %v9797, %v9796
    %v9821 = vpack.c.b16 %v9799, %v9798
    %v9822 = vpack.c.b16 %v9801, %v9800
    %v9823 = vpack.c.b16 %v9803, %v9802
    %v9824 = vpack.c.b16 %v9805, %v9804
    %v9825 = vpack.c.b16 %v9807, %v9806
    %v9826 = vpack.c.b16 %v9809, %v9808
    %v9827 = vpack.c.b16 %v9811, %v9810
    %9844 = vmatpush.bf16.msra.mxu0 %v9819
    %9845 = vmatpush.bf16.msra.mxu0 %v9818
    %9846 = vmatpush.bf16.msra.mxu0 %v9817
    %9847 = vmatpush.bf16.msra.mxu0 %v9816
    %9848 = vmatpush.bf16.msra.mxu0 %v9815
    %9849 = vmatpush.bf16.msra.mxu0 %v9814
    %9850 = vmatpush.bf16.msra.mxu0 %v9813
    %9851 = vmatpush.bf16.msra.mxu0 %v9812
    %9852 = vmatmul.bf16.gmra.mxu0 %v9710
    %v9853 = vpop.f32.mrf.mxu0
    %v9854 = vadd.f32 %v9746, %v9853
    %v9855 = vpop.f32.mrf.mxu0
    %9856 = vdwg.mxu0
    %9857 = vmatpush.bf16.msra.mxu0 %v9827
    %9858 = vmatpush.bf16.msra.mxu0 %v9826
    %9859 = vmatpush.bf16.msra.mxu0 %v9825
    %9860 = vmatpush.bf16.msra.mxu0 %v9824
    %9861 = vmatpush.bf16.msra.mxu0 %v9823
    %9862 = vmatpush.bf16.msra.mxu0 %v9822
    %9863 = vmatpush.bf16.msra.mxu0 %v9821
    %9864 = vmatpush.bf16.msra.mxu0 %v9820
    %9865 = vmatmul.bf16.gmra.mxu0 %v9711
    %v9866 = vpop.f32.mrf.mxu0
    %v9867 = vadd.f32 %v9854, %v9866
    %v9868 = vpop.f32.mrf.mxu0
    %9869 = vdwg.mxu0
    %9870 = vst [vmem:[%s18] sm:$0xff] %v9867
    // Predicated region
    $region134: #{forward.1} parent=1 // pred_check
      _
    $region135: #{forward.1} parent=1 // pred_check_branch
      %9872 = sbr.rel (0) target = $region137
    $region136: #{forward.1} parent=1 // pred_region
      _
    $region137: #{forward.1} parent=1 // pred_fallthru
      _
    // Predicated region
    $region138: #{forward.1} parent=1 // pred_check
      _
    $region139: #{forward.1} parent=1 // pred_check_branch
      %9874 = sbr.rel (0) target = $region141
    $region140: #{forward.1} parent=1 // pred_region
      _
    $region141: #{forward.1} parent=1 // pred_fallthru
      _
    // Predicated region
    $region142: #{forward.1} parent=1 // pred_check
      _
    $region143: #{forward.1} parent=1 // pred_check_branch
      %9876 = sbr.rel (0) target = $region145
    $region144: #{forward.1} parent=1 // pred_region
      _
    $region145: #{forward.1} parent=1 // pred_fallthru
      _
    // Predicated region
    $region146: #{forward.1} parent=1 // pred_check
      _
    $region147: #{forward.1} parent=1 // pred_check_branch
      %9878 = sbr.rel (0) target = $region149
    $region148: #{forward.1} parent=1 // pred_region
      _
    $region149: #{forward.1} parent=1 // pred_fallthru
      _
    %9879 = vsyncpa [#allocation5], 1
    %9880 = vsyncpa [#allocation7], 1
    %9881 = vsyncpa [#allocation10], 1
    %9882 = vsyncpa [#allocation13], 1
    %9883 = vsyncpa [#allocation16], 1
    %9884 = vsyncpa [#allocation19], 1
    %9885 = vsyncpa [#allocation22], 1
    %9886 = vsyncpa [#allocation25], 1

</llo_original>
